<compile_context>
chip_gen: v7x
topology: tpu7x:2x2x1
jax: 0.10.0
libtpu: 0.0.40
codegen_flags: <defaults>
</compile_context>

<pallas_src>
import jax
import jax.numpy as jnp
from jax.experimental import pallas as pl
from jax.experimental.pallas import tpu as pltpu


# ----------------------------------------------------------------------------
# Fused Inception kernel (one batch element per grid step)
# ----------------------------------------------------------------------------
def _inception_kernel(x_ref,
                      w1_ref, w21_ref, b21_ref, w22_ref,
                      w31_ref, b31_ref, w32_ref, w4_ref, ball_ref,
                      o_ref):
    """Fused Inception forward for one batch element (NHWC inside the kernel).

    x_ref   : (1, H, W, Cin)           input tile
    w1_ref  : (Cin, Ctot)              p1 1x1 weight, zero-placed at cols [0, c1)
    w21_ref : (Cin, C2mid), b21_ref: (1, C2mid)
    w22_ref : (9, C2mid, Ctot)         3x3 taps, zero-placed at cols [c1, c1+c2)
    w31_ref : (Cin, C3mid), b31_ref: (1, C3mid)
    w32_ref : (25, C3mid, Ctot)        5x5 taps, zero-placed at their slot
    w4_ref  : (Cin, Ctot)              p4 1x1 weight, zero-placed at last slot
    ball_ref: (1, Ctot)                concatenated biases of the 4 branch outputs
    o_ref   : (1, H, W, Ctot)          concatenated output tile
    """
    H, W, Ctot = o_ref.shape[1], o_ref.shape[2], o_ref.shape[3]
    Cin = x_ref.shape[3]
    HW = H * W

    def mm(a, b):
        # bf16 x bf16 -> f32 accumulation on the MXU.
        return jnp.dot(a.astype(jnp.bfloat16), b.astype(jnp.bfloat16),
                       preferred_element_type=jnp.float32)

    def pad_hw(v, ph, fill):
        # 'same' halo: ph rows top/bottom, 8 cols left/right (kept 8-aligned so
        # the sublane-dim concat is layout-trivial).  All in VMEM, f32.
        # Interior lands at rows [ph : ph+H], cols [8 : 8+W].
        hh, ww, cc = v.shape
        side = jnp.full((hh, 8, cc), fill, dtype=v.dtype)
        v = jnp.concatenate([side, v, side], axis=1)          # (H, W+16, C)
        row = jnp.full((ph, ww + 16, cc), fill, dtype=v.dtype)
        return jnp.concatenate([row, v, row], axis=0)         # (H+2ph, W+16, C)

    def conv_same_acc(src_hwc, wtap_ref, K, acc):
        # KxK 'same' conv of src (already ReLU'd) accumulated into acc.
        # One MXU matmul per tap; tap weights are already zero-placed into this
        # branch's column slot of the concatenated output width.
        p = (K - 1) // 2
        xp = pad_hw(src_hwc, p, 0.0)
        for kh in range(K):
            for kw in range(K):
                patch = xp[kh:kh + H, 8 - p + kw:8 - p + kw + W, :]
                acc = acc + mm(patch.reshape(HW, -1), wtap_ref[kh * K + kw])
        return acc

    x = x_ref[0]                                 # (H, W, Cin) f32
    x_flat = x.reshape(HW, Cin)

    # p1: 1x1 conv                              -> columns [0, c1)
    acc = mm(x_flat, w1_ref[...])

    # p2: 1x1 -> ReLU -> 3x3                    -> columns [c1, c1+c2)
    p2a = jnp.maximum(mm(x_flat, w21_ref[...]) + b21_ref[...], 0.0)
    acc = conv_same_acc(p2a.reshape(H, W, -1), w22_ref, 3, acc)

    # p3: 1x1 -> ReLU -> 5x5                    -> columns [c1+c2, c1+c2+c3)
    p3a = jnp.maximum(mm(x_flat, w31_ref[...]) + b31_ref[...], 0.0)
    acc = conv_same_acc(p3a.reshape(H, W, -1), w32_ref, 5, acc)

    # p4: 3x3 maxpool (stride 1, -inf halo) -> 1x1 conv -> last columns
    xm = pad_hw(x, 1, -jnp.inf)
    pooled = jnp.full((H, W, Cin), -jnp.inf, dtype=jnp.float32)
    for kh in range(3):
        for kw in range(3):
            pooled = jnp.maximum(pooled, xm[kh:kh + H, 7 + kw:7 + kw + W, :])
    acc = acc + mm(pooled.reshape(HW, Cin), w4_ref[...])

    # One bias row (the four branch biases concatenated), one ReLU, one
    # lane-dense full-block store of the already-concatenated channels.
    out = jnp.maximum(acc + ball_ref[...], 0.0)
    o_ref[...] = out.reshape(1, H, W, Ctot).astype(o_ref.dtype)


# ----------------------------------------------------------------------------
# Parameters (conv weights stored HWIO like the reference)
# ----------------------------------------------------------------------------
def init_inception_params(key, in_channels, c1, c2, c3, c4, dtype=jnp.float32):
    def conv_init(k, kh, kw, cin, cout):
        kw_key, kb_key = jax.random.split(k)
        fan_in = cin * kh * kw
        bound = 1.0 / jnp.sqrt(fan_in)
        w = jax.random.uniform(kw_key, (kh, kw, cin, cout), dtype, -bound, bound)
        b = jax.random.uniform(kb_key, (cout,), dtype, -bound, bound)
        return w, b

    keys = jax.random.split(key, 6)
    params = {}
    params["p1_1_w"], params["p1_1_b"] = conv_init(keys[0], 1, 1, in_channels, c1)
    params["p2_1_w"], params["p2_1_b"] = conv_init(keys[1], 1, 1, in_channels, c2[0])
    params["p2_2_w"], params["p2_2_b"] = conv_init(keys[2], 3, 3, c2[0], c2[1])
    params["p3_1_w"], params["p3_1_b"] = conv_init(keys[3], 1, 1, in_channels, c3[0])
    params["p3_2_w"], params["p3_2_b"] = conv_init(keys[4], 5, 5, c3[0], c3[1])
    params["p4_2_w"], params["p4_2_b"] = conv_init(keys[5], 1, 1, in_channels, c4)
    return params


# ----------------------------------------------------------------------------
# Forward wrapper: matches PyTorch Inception.forward (NCHW in, NCHW out)
# ----------------------------------------------------------------------------
@jax.jit
def inception_forward(x_nchw, params):
    x = jnp.transpose(x_nchw, (0, 2, 3, 1))      # NCHW -> NHWC (boundary only)
    N, H, W, Cin = x.shape

    c1 = params["p1_1_w"].shape[-1]
    c2m, c2o = params["p2_2_w"].shape[2], params["p2_2_w"].shape[3]
    c3m, c3o = params["p3_2_w"].shape[2], params["p3_2_w"].shape[3]
    c4 = params["p4_2_w"].shape[-1]
    ctot = c1 + c2o + c3o + c4
    off2, off3, off4 = c1, c1 + c2o, c1 + c2o + c3o

    bf16 = jnp.bfloat16

    def place(mat, off, cout):
        # Zero-place a branch-final weight into its column slot of the
        # concatenated output width -> in-kernel channel concat for free.
        pad = [(0, 0)] * (mat.ndim - 1) + [(off, ctot - off - cout)]
        return jnp.pad(mat, pad).astype(bf16)

    w1 = place(params["p1_1_w"].reshape(Cin, c1), 0, c1)
    w21 = params["p2_1_w"].reshape(Cin, c2m).astype(bf16)
    b21 = params["p2_1_b"].reshape(1, c2m).astype(jnp.float32)
    w22 = place(params["p2_2_w"].reshape(9, c2m, c2o), off2, c2o)
    w31 = params["p3_1_w"].reshape(Cin, c3m).astype(bf16)
    b31 = params["p3_1_b"].reshape(1, c3m).astype(jnp.float32)
    w32 = place(params["p3_2_w"].reshape(25, c3m, c3o), off3, c3o)
    w4 = place(params["p4_2_w"].reshape(Cin, c4), off4, c4)
    b_all = jnp.concatenate(
        [params["p1_1_b"], params["p2_2_b"], params["p3_2_b"], params["p4_2_b"]],
        axis=0).reshape(1, ctot).astype(jnp.float32)

    def full_spec(shape):
        return pl.BlockSpec(shape, lambda n: (0,) * len(shape))

    out_nhwc = pl.pallas_call(
        _inception_kernel,
        out_shape=jax.ShapeDtypeStruct((N, H, W, ctot), x.dtype),
        grid=(N,),
        in_specs=[
            pl.BlockSpec((1, H, W, Cin), lambda n: (n, 0, 0, 0)),
            full_spec((Cin, ctot)),      # w1   (p1 1x1, placed)
            full_spec((Cin, c2m)),       # w21  (p2 1x1)
            full_spec((1, c2m)),         # b21
            full_spec((9, c2m, ctot)),   # w22  (p2 3x3 taps, placed)
            full_spec((Cin, c3m)),       # w31  (p3 1x1)
            full_spec((1, c3m)),         # b31
            full_spec((25, c3m, ctot)),  # w32  (p3 5x5 taps, placed)
            full_spec((Cin, ctot)),      # w4   (p4 1x1, placed)
            full_spec((1, ctot)),        # b_all
        ],
        out_specs=pl.BlockSpec((1, H, W, ctot), lambda n: (n, 0, 0, 0)),
        compiler_params=pltpu.CompilerParams(
            dimension_semantics=("parallel",)),
    )(x, w1, w21, b21, w22, w31, b31, w32, w4, b_all)

    return jnp.transpose(out_nhwc, (0, 3, 1, 2))  # NHWC -> NCHW


# ----------------------------------------------------------------------------
# Pure-JAX f32 reference (for correctness check)
# ----------------------------------------------------------------------------
def _ref_conv_relu(x_nhwc, w, b):
    out = jax.lax.conv_general_dilated(
        x_nhwc, w,
        window_strides=(1, 1), padding="SAME",
        dimension_numbers=("NHWC", "HWIO", "NHWC"),
    )
    return jnp.maximum(out + b.reshape(1, 1, 1, -1), 0.0)


def _ref_forward(x_nchw, params):
    x = jnp.transpose(x_nchw, (0, 2, 3, 1))
    p1 = _ref_conv_relu(x, params["p1_1_w"], params["p1_1_b"])
    p2 = _ref_conv_relu(x, params["p2_1_w"], params["p2_1_b"])
    p2 = _ref_conv_relu(p2, params["p2_2_w"], params["p2_2_b"])
    p3 = _ref_conv_relu(x, params["p3_1_w"], params["p3_1_b"])
    p3 = _ref_conv_relu(p3, params["p3_2_w"], params["p3_2_b"])
    p4 = jax.lax.reduce_window(
        x, -jnp.inf, jax.lax.max,
        window_dimensions=(1, 3, 3, 1), window_strides=(1, 1, 1, 1),
        padding=((0, 0), (1, 1), (1, 1), (0, 0)),
    )
    p4 = _ref_conv_relu(p4, params["p4_2_w"], params["p4_2_b"])
    out = jnp.concatenate([p1, p2, p3, p4], axis=-1)
    return jnp.transpose(out, (0, 3, 1, 2))


if __name__ == "__main__":
    key = jax.random.PRNGKey(0)
    k_x, k_p = jax.random.split(key)

    # Small shapes: batch=2, in_channels=4, spatial=16x16
    N, Cin, H, W = 2, 4, 16, 16
    c1, c2, c3, c4 = 4, (4, 8), (2, 4), 4        # output channels = 20

    x = jax.random.normal(k_x, (N, Cin, H, W), jnp.float32)
    params = init_inception_params(k_p, Cin, c1, c2, c3, c4)

    out = jax.block_until_ready(inception_forward(x, params))
    assert out.shape == (N, c1 + c2[1] + c3[1] + c4, H, W), out.shape

    ref = jax.block_until_ready(_ref_forward(x, params))
    # bf16 MXU operands (f32 accumulation) -> loosened tolerance vs f32 ref.
    max_err = float(jnp.max(jnp.abs(out - ref)))
    assert jnp.allclose(out, ref, atol=5e-2, rtol=5e-2), max_err

    print("KERNEL_OK")
</pallas_src>

<mosaic_0001>
module attributes {stable_mosaic.version = 11 : i64} {
  func.func @_inception_kernel(%arg0: i32, %arg1: memref<1x16x16x4xf32, #tpu.memory_space<vmem>>, %arg2: memref<4x20xbf16, #tpu.memory_space<vmem>>, %arg3: memref<4x4xbf16, #tpu.memory_space<vmem>>, %arg4: memref<1x4xf32, #tpu.memory_space<vmem>>, %arg5: memref<9x4x20xbf16, #tpu.memory_space<vmem>>, %arg6: memref<4x2xbf16, #tpu.memory_space<vmem>>, %arg7: memref<1x2xf32, #tpu.memory_space<vmem>>, %arg8: memref<25x2x20xbf16, #tpu.memory_space<vmem>>, %arg9: memref<4x20xbf16, #tpu.memory_space<vmem>>, %arg10: memref<1x20xf32, #tpu.memory_space<vmem>>, %arg11: memref<1x16x16x20xf32, #tpu.memory_space<vmem>>) attributes {dimension_semantics = [#tpu.dimension_semantics<parallel>], iteration_bounds = array<i64: 2>, scalar_prefetch = 0 : i64, scratch_operands = 0 : i64, tpu.core_type = #tpu.core_type<tc>, window_params = [{transform_indices = @transform_0, window_bounds = array<i64: 1, 16, 16, 4>}, {pipeline_mode = #tpu.pipeline_mode<synchronous>, transform_indices = @transform_1, window_bounds = array<i64: 4, 20>}, {pipeline_mode = #tpu.pipeline_mode<synchronous>, transform_indices = @transform_2, window_bounds = array<i64: 4, 4>}, {pipeline_mode = #tpu.pipeline_mode<synchronous>, transform_indices = @transform_3, window_bounds = array<i64: 1, 4>}, {pipeline_mode = #tpu.pipeline_mode<synchronous>, transform_indices = @transform_4, window_bounds = array<i64: 9, 4, 20>}, {pipeline_mode = #tpu.pipeline_mode<synchronous>, transform_indices = @transform_5, window_bounds = array<i64: 4, 2>}, {pipeline_mode = #tpu.pipeline_mode<synchronous>, transform_indices = @transform_6, window_bounds = array<i64: 1, 2>}, {pipeline_mode = #tpu.pipeline_mode<synchronous>, transform_indices = @transform_7, window_bounds = array<i64: 25, 2, 20>}, {pipeline_mode = #tpu.pipeline_mode<synchronous>, transform_indices = @transform_8, window_bounds = array<i64: 4, 20>}, {pipeline_mode = #tpu.pipeline_mode<synchronous>, transform_indices = @transform_9, window_bounds = array<i64: 1, 20>}, {transform_indices = @transform_10, window_bounds = array<i64: 1, 16, 16, 20>}]} {
    %c0 = arith.constant 0 : index
    %c0_0 = arith.constant 0 : index
    %c0_1 = arith.constant 0 : index
    %c0_2 = arith.constant 0 : index
    %0 = vector.load %arg1[%c0, %c0_0, %c0_1, %c0_2] : memref<1x16x16x4xf32, #tpu.memory_space<vmem>>, vector<1x16x16x4xf32>
    %1 = vector.shape_cast %0 : vector<1x16x16x4xf32> to vector<16x16x4xf32>
    %2 = vector.shape_cast %1 : vector<16x16x4xf32> to vector<256x4xf32>
    %c0_3 = arith.constant 0 : index
    %c0_4 = arith.constant 0 : index
    %3 = vector.load %arg2[%c0_3, %c0_4] : memref<4x20xbf16, #tpu.memory_space<vmem>>, vector<4x20xbf16>
    %4 = arith.truncf %2 : vector<256x4xf32> to vector<256x4xbf16>
    %cst = arith.constant dense<0.000000e+00> : vector<256x20xf32>
    %5 = tpu.matmul %4, %3, %cst {dimension_numbers = #tpu.dot_dimension_numbers<[1], [0], [0], [1], [0, 0, 1, 1], [], []>} : vector<256x4xbf16>, vector<4x20xbf16>, vector<256x20xf32> -> vector<256x20xf32>
    %c0_5 = arith.constant 0 : index
    %c0_6 = arith.constant 0 : index
    %6 = vector.load %arg3[%c0_5, %c0_6] : memref<4x4xbf16, #tpu.memory_space<vmem>>, vector<4x4xbf16>
    %7 = arith.truncf %2 : vector<256x4xf32> to vector<256x4xbf16>
    %cst_7 = arith.constant dense<0.000000e+00> : vector<256x4xf32>
    %8 = tpu.matmul %7, %6, %cst_7 {dimension_numbers = #tpu.dot_dimension_numbers<[1], [0], [0], [1], [0, 0, 1, 1], [], []>} : vector<256x4xbf16>, vector<4x4xbf16>, vector<256x4xf32> -> vector<256x4xf32>
    %c0_8 = arith.constant 0 : index
    %c0_9 = arith.constant 0 : index
    %9 = vector.load %arg4[%c0_8, %c0_9] : memref<1x4xf32, #tpu.memory_space<vmem>>, vector<1x4xf32>
    %10 = vector.broadcast %9 : vector<1x4xf32> to vector<256x4xf32>
    %11 = arith.addf %8, %10 : vector<256x4xf32>
    %cst_10 = arith.constant 0.000000e+00 : f32
    %12 = vector.broadcast %cst_10 : f32 to vector<256x4xf32>
    %13 = arith.maximumf %11, %12 : vector<256x4xf32>
    %14 = vector.shape_cast %13 : vector<256x4xf32> to vector<16x16x4xf32>
    %cst_11 = arith.constant 0.000000e+00 : f32
    %15 = vector.broadcast %cst_11 : f32 to vector<16x8x4xf32>
    %16 = tpu.concatenate %15, %14, %15 in 1 : vector<16x8x4xf32>, vector<16x16x4xf32>, vector<16x8x4xf32> -> vector<16x32x4xf32>
    %cst_12 = arith.constant 0.000000e+00 : f32
    %17 = vector.broadcast %cst_12 : f32 to vector<1x32x4xf32>
    %18 = tpu.concatenate %17, %16, %17 in 0 : vector<1x32x4xf32>, vector<16x32x4xf32>, vector<1x32x4xf32> -> vector<18x32x4xf32>
    %19 = vector.extract_strided_slice %18 {offsets = [0, 7, 0], sizes = [16, 16, 4], strides = [1, 1, 1]} : vector<18x32x4xf32> to vector<16x16x4xf32>
    %20 = vector.shape_cast %19 : vector<16x16x4xf32> to vector<256x4xf32>
    %c0_13 = arith.constant 0 : index
    %c0_14 = arith.constant 0 : index
    %c0_15 = arith.constant 0 : index
    %21 = vector.load %arg5[%c0_13, %c0_14, %c0_15] : memref<9x4x20xbf16, #tpu.memory_space<vmem>>, vector<1x4x20xbf16>
    %22 = vector.shape_cast %21 : vector<1x4x20xbf16> to vector<4x20xbf16>
    %23 = arith.truncf %20 : vector<256x4xf32> to vector<256x4xbf16>
    %cst_16 = arith.constant dense<0.000000e+00> : vector<256x20xf32>
    %24 = tpu.matmul %23, %22, %cst_16 {dimension_numbers = #tpu.dot_dimension_numbers<[1], [0], [0], [1], [0, 0, 1, 1], [], []>} : vector<256x4xbf16>, vector<4x20xbf16>, vector<256x20xf32> -> vector<256x20xf32>
    %25 = arith.addf %5, %24 : vector<256x20xf32>
    %26 = vector.extract_strided_slice %18 {offsets = [0, 8, 0], sizes = [16, 16, 4], strides = [1, 1, 1]} : vector<18x32x4xf32> to vector<16x16x4xf32>
    %27 = vector.shape_cast %26 : vector<16x16x4xf32> to vector<256x4xf32>
    %c1 = arith.constant 1 : index
    %c0_17 = arith.constant 0 : index
    %c0_18 = arith.constant 0 : index
    %28 = vector.load %arg5[%c1, %c0_17, %c0_18] : memref<9x4x20xbf16, #tpu.memory_space<vmem>>, vector<1x4x20xbf16>
    %29 = vector.shape_cast %28 : vector<1x4x20xbf16> to vector<4x20xbf16>
    %30 = arith.truncf %27 : vector<256x4xf32> to vector<256x4xbf16>
    %cst_19 = arith.constant dense<0.000000e+00> : vector<256x20xf32>
    %31 = tpu.matmul %30, %29, %cst_19 {dimension_numbers = #tpu.dot_dimension_numbers<[1], [0], [0], [1], [0, 0, 1, 1], [], []>} : vector<256x4xbf16>, vector<4x20xbf16>, vector<256x20xf32> -> vector<256x20xf32>
    %32 = arith.addf %25, %31 : vector<256x20xf32>
    %33 = vector.extract_strided_slice %18 {offsets = [0, 9, 0], sizes = [16, 16, 4], strides = [1, 1, 1]} : vector<18x32x4xf32> to vector<16x16x4xf32>
    %34 = vector.shape_cast %33 : vector<16x16x4xf32> to vector<256x4xf32>
    %c2 = arith.constant 2 : index
    %c0_20 = arith.constant 0 : index
    %c0_21 = arith.constant 0 : index
    %35 = vector.load %arg5[%c2, %c0_20, %c0_21] : memref<9x4x20xbf16, #tpu.memory_space<vmem>>, vector<1x4x20xbf16>
    %36 = vector.shape_cast %35 : vector<1x4x20xbf16> to vector<4x20xbf16>
    %37 = arith.truncf %34 : vector<256x4xf32> to vector<256x4xbf16>
    %cst_22 = arith.constant dense<0.000000e+00> : vector<256x20xf32>
    %38 = tpu.matmul %37, %36, %cst_22 {dimension_numbers = #tpu.dot_dimension_numbers<[1], [0], [0], [1], [0, 0, 1, 1], [], []>} : vector<256x4xbf16>, vector<4x20xbf16>, vector<256x20xf32> -> vector<256x20xf32>
    %39 = arith.addf %32, %38 : vector<256x20xf32>
    %40 = vector.extract_strided_slice %18 {offsets = [1, 7, 0], sizes = [16, 16, 4], strides = [1, 1, 1]} : vector<18x32x4xf32> to vector<16x16x4xf32>
    %41 = vector.shape_cast %40 : vector<16x16x4xf32> to vector<256x4xf32>
    %c3 = arith.constant 3 : index
    %c0_23 = arith.constant 0 : index
    %c0_24 = arith.constant 0 : index
    %42 = vector.load %arg5[%c3, %c0_23, %c0_24] : memref<9x4x20xbf16, #tpu.memory_space<vmem>>, vector<1x4x20xbf16>
    %43 = vector.shape_cast %42 : vector<1x4x20xbf16> to vector<4x20xbf16>
    %44 = arith.truncf %41 : vector<256x4xf32> to vector<256x4xbf16>
    %cst_25 = arith.constant dense<0.000000e+00> : vector<256x20xf32>
    %45 = tpu.matmul %44, %43, %cst_25 {dimension_numbers = #tpu.dot_dimension_numbers<[1], [0], [0], [1], [0, 0, 1, 1], [], []>} : vector<256x4xbf16>, vector<4x20xbf16>, vector<256x20xf32> -> vector<256x20xf32>
    %46 = arith.addf %39, %45 : vector<256x20xf32>
    %47 = vector.extract_strided_slice %18 {offsets = [1, 8, 0], sizes = [16, 16, 4], strides = [1, 1, 1]} : vector<18x32x4xf32> to vector<16x16x4xf32>
    %48 = vector.shape_cast %47 : vector<16x16x4xf32> to vector<256x4xf32>
    %c4 = arith.constant 4 : index
    %c0_26 = arith.constant 0 : index
    %c0_27 = arith.constant 0 : index
    %49 = vector.load %arg5[%c4, %c0_26, %c0_27] : memref<9x4x20xbf16, #tpu.memory_space<vmem>>, vector<1x4x20xbf16>
    %50 = vector.shape_cast %49 : vector<1x4x20xbf16> to vector<4x20xbf16>
    %51 = arith.truncf %48 : vector<256x4xf32> to vector<256x4xbf16>
    %cst_28 = arith.constant dense<0.000000e+00> : vector<256x20xf32>
    %52 = tpu.matmul %51, %50, %cst_28 {dimension_numbers = #tpu.dot_dimension_numbers<[1], [0], [0], [1], [0, 0, 1, 1], [], []>} : vector<256x4xbf16>, vector<4x20xbf16>, vector<256x20xf32> -> vector<256x20xf32>
    %53 = arith.addf %46, %52 : vector<256x20xf32>
    %54 = vector.extract_strided_slice %18 {offsets = [1, 9, 0], sizes = [16, 16, 4], strides = [1, 1, 1]} : vector<18x32x4xf32> to vector<16x16x4xf32>
    %55 = vector.shape_cast %54 : vector<16x16x4xf32> to vector<256x4xf32>
    %c5 = arith.constant 5 : index
    %c0_29 = arith.constant 0 : index
    %c0_30 = arith.constant 0 : index
    %56 = vector.load %arg5[%c5, %c0_29, %c0_30] : memref<9x4x20xbf16, #tpu.memory_space<vmem>>, vector<1x4x20xbf16>
    %57 = vector.shape_cast %56 : vector<1x4x20xbf16> to vector<4x20xbf16>
    %58 = arith.truncf %55 : vector<256x4xf32> to vector<256x4xbf16>
    %cst_31 = arith.constant dense<0.000000e+00> : vector<256x20xf32>
    %59 = tpu.matmul %58, %57, %cst_31 {dimension_numbers = #tpu.dot_dimension_numbers<[1], [0], [0], [1], [0, 0, 1, 1], [], []>} : vector<256x4xbf16>, vector<4x20xbf16>, vector<256x20xf32> -> vector<256x20xf32>
    %60 = arith.addf %53, %59 : vector<256x20xf32>
    %61 = vector.extract_strided_slice %18 {offsets = [2, 7, 0], sizes = [16, 16, 4], strides = [1, 1, 1]} : vector<18x32x4xf32> to vector<16x16x4xf32>
    %62 = vector.shape_cast %61 : vector<16x16x4xf32> to vector<256x4xf32>
    %c6 = arith.constant 6 : index
    %c0_32 = arith.constant 0 : index
    %c0_33 = arith.constant 0 : index
    %63 = vector.load %arg5[%c6, %c0_32, %c0_33] : memref<9x4x20xbf16, #tpu.memory_space<vmem>>, vector<1x4x20xbf16>
    %64 = vector.shape_cast %63 : vector<1x4x20xbf16> to vector<4x20xbf16>
    %65 = arith.truncf %62 : vector<256x4xf32> to vector<256x4xbf16>
    %cst_34 = arith.constant dense<0.000000e+00> : vector<256x20xf32>
    %66 = tpu.matmul %65, %64, %cst_34 {dimension_numbers = #tpu.dot_dimension_numbers<[1], [0], [0], [1], [0, 0, 1, 1], [], []>} : vector<256x4xbf16>, vector<4x20xbf16>, vector<256x20xf32> -> vector<256x20xf32>
    %67 = arith.addf %60, %66 : vector<256x20xf32>
    %68 = vector.extract_strided_slice %18 {offsets = [2, 8, 0], sizes = [16, 16, 4], strides = [1, 1, 1]} : vector<18x32x4xf32> to vector<16x16x4xf32>
    %69 = vector.shape_cast %68 : vector<16x16x4xf32> to vector<256x4xf32>
    %c7 = arith.constant 7 : index
    %c0_35 = arith.constant 0 : index
    %c0_36 = arith.constant 0 : index
    %70 = vector.load %arg5[%c7, %c0_35, %c0_36] : memref<9x4x20xbf16, #tpu.memory_space<vmem>>, vector<1x4x20xbf16>
    %71 = vector.shape_cast %70 : vector<1x4x20xbf16> to vector<4x20xbf16>
    %72 = arith.truncf %69 : vector<256x4xf32> to vector<256x4xbf16>
    %cst_37 = arith.constant dense<0.000000e+00> : vector<256x20xf32>
    %73 = tpu.matmul %72, %71, %cst_37 {dimension_numbers = #tpu.dot_dimension_numbers<[1], [0], [0], [1], [0, 0, 1, 1], [], []>} : vector<256x4xbf16>, vector<4x20xbf16>, vector<256x20xf32> -> vector<256x20xf32>
    %74 = arith.addf %67, %73 : vector<256x20xf32>
    %75 = vector.extract_strided_slice %18 {offsets = [2, 9, 0], sizes = [16, 16, 4], strides = [1, 1, 1]} : vector<18x32x4xf32> to vector<16x16x4xf32>
    %76 = vector.shape_cast %75 : vector<16x16x4xf32> to vector<256x4xf32>
    %c8 = arith.constant 8 : index
    %c0_38 = arith.constant 0 : index
    %c0_39 = arith.constant 0 : index
    %77 = vector.load %arg5[%c8, %c0_38, %c0_39] : memref<9x4x20xbf16, #tpu.memory_space<vmem>>, vector<1x4x20xbf16>
    %78 = vector.shape_cast %77 : vector<1x4x20xbf16> to vector<4x20xbf16>
    %79 = arith.truncf %76 : vector<256x4xf32> to vector<256x4xbf16>
    %cst_40 = arith.constant dense<0.000000e+00> : vector<256x20xf32>
    %80 = tpu.matmul %79, %78, %cst_40 {dimension_numbers = #tpu.dot_dimension_numbers<[1], [0], [0], [1], [0, 0, 1, 1], [], []>} : vector<256x4xbf16>, vector<4x20xbf16>, vector<256x20xf32> -> vector<256x20xf32>
    %81 = arith.addf %74, %80 : vector<256x20xf32>
    %c0_41 = arith.constant 0 : index
    %c0_42 = arith.constant 0 : index
    %82 = vector.load %arg6[%c0_41, %c0_42] : memref<4x2xbf16, #tpu.memory_space<vmem>>, vector<4x2xbf16>
    %83 = arith.truncf %2 : vector<256x4xf32> to vector<256x4xbf16>
    %cst_43 = arith.constant dense<0.000000e+00> : vector<256x2xf32>
    %84 = tpu.matmul %83, %82, %cst_43 {dimension_numbers = #tpu.dot_dimension_numbers<[1], [0], [0], [1], [0, 0, 1, 1], [], []>} : vector<256x4xbf16>, vector<4x2xbf16>, vector<256x2xf32> -> vector<256x2xf32>
    %c0_44 = arith.constant 0 : index
    %c0_45 = arith.constant 0 : index
    %85 = vector.load %arg7[%c0_44, %c0_45] : memref<1x2xf32, #tpu.memory_space<vmem>>, vector<1x2xf32>
    %86 = vector.broadcast %85 : vector<1x2xf32> to vector<256x2xf32>
    %87 = arith.addf %84, %86 : vector<256x2xf32>
    %cst_46 = arith.constant 0.000000e+00 : f32
    %88 = vector.broadcast %cst_46 : f32 to vector<256x2xf32>
    %89 = arith.maximumf %87, %88 : vector<256x2xf32>
    %90 = vector.shape_cast %89 : vector<256x2xf32> to vector<16x16x2xf32>
    %cst_47 = arith.constant 0.000000e+00 : f32
    %91 = vector.broadcast %cst_47 : f32 to vector<16x8x2xf32>
    %92 = tpu.concatenate %91, %90, %91 in 1 : vector<16x8x2xf32>, vector<16x16x2xf32>, vector<16x8x2xf32> -> vector<16x32x2xf32>
    %cst_48 = arith.constant 0.000000e+00 : f32
    %93 = vector.broadcast %cst_48 : f32 to vector<2x32x2xf32>
    %94 = tpu.concatenate %93, %92, %93 in 0 : vector<2x32x2xf32>, vector<16x32x2xf32>, vector<2x32x2xf32> -> vector<20x32x2xf32>
    %95 = vector.extract_strided_slice %94 {offsets = [0, 6, 0], sizes = [16, 16, 2], strides = [1, 1, 1]} : vector<20x32x2xf32> to vector<16x16x2xf32>
    %96 = vector.shape_cast %95 : vector<16x16x2xf32> to vector<256x2xf32>
    %c0_49 = arith.constant 0 : index
    %c0_50 = arith.constant 0 : index
    %c0_51 = arith.constant 0 : index
    %97 = vector.load %arg8[%c0_49, %c0_50, %c0_51] : memref<25x2x20xbf16, #tpu.memory_space<vmem>>, vector<1x2x20xbf16>
    %98 = vector.shape_cast %97 : vector<1x2x20xbf16> to vector<2x20xbf16>
    %99 = arith.truncf %96 : vector<256x2xf32> to vector<256x2xbf16>
    %cst_52 = arith.constant dense<0.000000e+00> : vector<256x20xf32>
    %100 = tpu.matmul %99, %98, %cst_52 {dimension_numbers = #tpu.dot_dimension_numbers<[1], [0], [0], [1], [0, 0, 1, 1], [], []>} : vector<256x2xbf16>, vector<2x20xbf16>, vector<256x20xf32> -> vector<256x20xf32>
    %101 = arith.addf %81, %100 : vector<256x20xf32>
    %102 = vector.extract_strided_slice %94 {offsets = [0, 7, 0], sizes = [16, 16, 2], strides = [1, 1, 1]} : vector<20x32x2xf32> to vector<16x16x2xf32>
    %103 = vector.shape_cast %102 : vector<16x16x2xf32> to vector<256x2xf32>
    %c1_53 = arith.constant 1 : index
    %c0_54 = arith.constant 0 : index
    %c0_55 = arith.constant 0 : index
    %104 = vector.load %arg8[%c1_53, %c0_54, %c0_55] : memref<25x2x20xbf16, #tpu.memory_space<vmem>>, vector<1x2x20xbf16>
    %105 = vector.shape_cast %104 : vector<1x2x20xbf16> to vector<2x20xbf16>
    %106 = arith.truncf %103 : vector<256x2xf32> to vector<256x2xbf16>
    %cst_56 = arith.constant dense<0.000000e+00> : vector<256x20xf32>
    %107 = tpu.matmul %106, %105, %cst_56 {dimension_numbers = #tpu.dot_dimension_numbers<[1], [0], [0], [1], [0, 0, 1, 1], [], []>} : vector<256x2xbf16>, vector<2x20xbf16>, vector<256x20xf32> -> vector<256x20xf32>
    %108 = arith.addf %101, %107 : vector<256x20xf32>
    %109 = vector.extract_strided_slice %94 {offsets = [0, 8, 0], sizes = [16, 16, 2], strides = [1, 1, 1]} : vector<20x32x2xf32> to vector<16x16x2xf32>
    %110 = vector.shape_cast %109 : vector<16x16x2xf32> to vector<256x2xf32>
    %c2_57 = arith.constant 2 : index
    %c0_58 = arith.constant 0 : index
    %c0_59 = arith.constant 0 : index
    %111 = vector.load %arg8[%c2_57, %c0_58, %c0_59] : memref<25x2x20xbf16, #tpu.memory_space<vmem>>, vector<1x2x20xbf16>
    %112 = vector.shape_cast %111 : vector<1x2x20xbf16> to vector<2x20xbf16>
    %113 = arith.truncf %110 : vector<256x2xf32> to vector<256x2xbf16>
    %cst_60 = arith.constant dense<0.000000e+00> : vector<256x20xf32>
    %114 = tpu.matmul %113, %112, %cst_60 {dimension_numbers = #tpu.dot_dimension_numbers<[1], [0], [0], [1], [0, 0, 1, 1], [], []>} : vector<256x2xbf16>, vector<2x20xbf16>, vector<256x20xf32> -> vector<256x20xf32>
    %115 = arith.addf %108, %114 : vector<256x20xf32>
    %116 = vector.extract_strided_slice %94 {offsets = [0, 9, 0], sizes = [16, 16, 2], strides = [1, 1, 1]} : vector<20x32x2xf32> to vector<16x16x2xf32>
    %117 = vector.shape_cast %116 : vector<16x16x2xf32> to vector<256x2xf32>
    %c3_61 = arith.constant 3 : index
    %c0_62 = arith.constant 0 : index
    %c0_63 = arith.constant 0 : index
    %118 = vector.load %arg8[%c3_61, %c0_62, %c0_63] : memref<25x2x20xbf16, #tpu.memory_space<vmem>>, vector<1x2x20xbf16>
    %119 = vector.shape_cast %118 : vector<1x2x20xbf16> to vector<2x20xbf16>
    %120 = arith.truncf %117 : vector<256x2xf32> to vector<256x2xbf16>
    %cst_64 = arith.constant dense<0.000000e+00> : vector<256x20xf32>
    %121 = tpu.matmul %120, %119, %cst_64 {dimension_numbers = #tpu.dot_dimension_numbers<[1], [0], [0], [1], [0, 0, 1, 1], [], []>} : vector<256x2xbf16>, vector<2x20xbf16>, vector<256x20xf32> -> vector<256x20xf32>
    %122 = arith.addf %115, %121 : vector<256x20xf32>
    %123 = vector.extract_strided_slice %94 {offsets = [0, 10, 0], sizes = [16, 16, 2], strides = [1, 1, 1]} : vector<20x32x2xf32> to vector<16x16x2xf32>
    %124 = vector.shape_cast %123 : vector<16x16x2xf32> to vector<256x2xf32>
    %c4_65 = arith.constant 4 : index
    %c0_66 = arith.constant 0 : index
    %c0_67 = arith.constant 0 : index
    %125 = vector.load %arg8[%c4_65, %c0_66, %c0_67] : memref<25x2x20xbf16, #tpu.memory_space<vmem>>, vector<1x2x20xbf16>
    %126 = vector.shape_cast %125 : vector<1x2x20xbf16> to vector<2x20xbf16>
    %127 = arith.truncf %124 : vector<256x2xf32> to vector<256x2xbf16>
    %cst_68 = arith.constant dense<0.000000e+00> : vector<256x20xf32>
    %128 = tpu.matmul %127, %126, %cst_68 {dimension_numbers = #tpu.dot_dimension_numbers<[1], [0], [0], [1], [0, 0, 1, 1], [], []>} : vector<256x2xbf16>, vector<2x20xbf16>, vector<256x20xf32> -> vector<256x20xf32>
    %129 = arith.addf %122, %128 : vector<256x20xf32>
    %130 = vector.extract_strided_slice %94 {offsets = [1, 6, 0], sizes = [16, 16, 2], strides = [1, 1, 1]} : vector<20x32x2xf32> to vector<16x16x2xf32>
    %131 = vector.shape_cast %130 : vector<16x16x2xf32> to vector<256x2xf32>
    %c5_69 = arith.constant 5 : index
    %c0_70 = arith.constant 0 : index
    %c0_71 = arith.constant 0 : index
    %132 = vector.load %arg8[%c5_69, %c0_70, %c0_71] : memref<25x2x20xbf16, #tpu.memory_space<vmem>>, vector<1x2x20xbf16>
    %133 = vector.shape_cast %132 : vector<1x2x20xbf16> to vector<2x20xbf16>
    %134 = arith.truncf %131 : vector<256x2xf32> to vector<256x2xbf16>
    %cst_72 = arith.constant dense<0.000000e+00> : vector<256x20xf32>
    %135 = tpu.matmul %134, %133, %cst_72 {dimension_numbers = #tpu.dot_dimension_numbers<[1], [0], [0], [1], [0, 0, 1, 1], [], []>} : vector<256x2xbf16>, vector<2x20xbf16>, vector<256x20xf32> -> vector<256x20xf32>
    %136 = arith.addf %129, %135 : vector<256x20xf32>
    %137 = vector.extract_strided_slice %94 {offsets = [1, 7, 0], sizes = [16, 16, 2], strides = [1, 1, 1]} : vector<20x32x2xf32> to vector<16x16x2xf32>
    %138 = vector.shape_cast %137 : vector<16x16x2xf32> to vector<256x2xf32>
    %c6_73 = arith.constant 6 : index
    %c0_74 = arith.constant 0 : index
    %c0_75 = arith.constant 0 : index
    %139 = vector.load %arg8[%c6_73, %c0_74, %c0_75] : memref<25x2x20xbf16, #tpu.memory_space<vmem>>, vector<1x2x20xbf16>
    %140 = vector.shape_cast %139 : vector<1x2x20xbf16> to vector<2x20xbf16>
    %141 = arith.truncf %138 : vector<256x2xf32> to vector<256x2xbf16>
    %cst_76 = arith.constant dense<0.000000e+00> : vector<256x20xf32>
    %142 = tpu.matmul %141, %140, %cst_76 {dimension_numbers = #tpu.dot_dimension_numbers<[1], [0], [0], [1], [0, 0, 1, 1], [], []>} : vector<256x2xbf16>, vector<2x20xbf16>, vector<256x20xf32> -> vector<256x20xf32>
    %143 = arith.addf %136, %142 : vector<256x20xf32>
    %144 = vector.extract_strided_slice %94 {offsets = [1, 8, 0], sizes = [16, 16, 2], strides = [1, 1, 1]} : vector<20x32x2xf32> to vector<16x16x2xf32>
    %145 = vector.shape_cast %144 : vector<16x16x2xf32> to vector<256x2xf32>
    %c7_77 = arith.constant 7 : index
    %c0_78 = arith.constant 0 : index
    %c0_79 = arith.constant 0 : index
    %146 = vector.load %arg8[%c7_77, %c0_78, %c0_79] : memref<25x2x20xbf16, #tpu.memory_space<vmem>>, vector<1x2x20xbf16>
    %147 = vector.shape_cast %146 : vector<1x2x20xbf16> to vector<2x20xbf16>
    %148 = arith.truncf %145 : vector<256x2xf32> to vector<256x2xbf16>
    %cst_80 = arith.constant dense<0.000000e+00> : vector<256x20xf32>
    %149 = tpu.matmul %148, %147, %cst_80 {dimension_numbers = #tpu.dot_dimension_numbers<[1], [0], [0], [1], [0, 0, 1, 1], [], []>} : vector<256x2xbf16>, vector<2x20xbf16>, vector<256x20xf32> -> vector<256x20xf32>
    %150 = arith.addf %143, %149 : vector<256x20xf32>
    %151 = vector.extract_strided_slice %94 {offsets = [1, 9, 0], sizes = [16, 16, 2], strides = [1, 1, 1]} : vector<20x32x2xf32> to vector<16x16x2xf32>
    %152 = vector.shape_cast %151 : vector<16x16x2xf32> to vector<256x2xf32>
    %c8_81 = arith.constant 8 : index
    %c0_82 = arith.constant 0 : index
    %c0_83 = arith.constant 0 : index
    %153 = vector.load %arg8[%c8_81, %c0_82, %c0_83] : memref<25x2x20xbf16, #tpu.memory_space<vmem>>, vector<1x2x20xbf16>
    %154 = vector.shape_cast %153 : vector<1x2x20xbf16> to vector<2x20xbf16>
    %155 = arith.truncf %152 : vector<256x2xf32> to vector<256x2xbf16>
    %cst_84 = arith.constant dense<0.000000e+00> : vector<256x20xf32>
    %156 = tpu.matmul %155, %154, %cst_84 {dimension_numbers = #tpu.dot_dimension_numbers<[1], [0], [0], [1], [0, 0, 1, 1], [], []>} : vector<256x2xbf16>, vector<2x20xbf16>, vector<256x20xf32> -> vector<256x20xf32>
    %157 = arith.addf %150, %156 : vector<256x20xf32>
    %158 = vector.extract_strided_slice %94 {offsets = [1, 10, 0], sizes = [16, 16, 2], strides = [1, 1, 1]} : vector<20x32x2xf32> to vector<16x16x2xf32>
    %159 = vector.shape_cast %158 : vector<16x16x2xf32> to vector<256x2xf32>
    %c9 = arith.constant 9 : index
    %c0_85 = arith.constant 0 : index
    %c0_86 = arith.constant 0 : index
    %160 = vector.load %arg8[%c9, %c0_85, %c0_86] : memref<25x2x20xbf16, #tpu.memory_space<vmem>>, vector<1x2x20xbf16>
    %161 = vector.shape_cast %160 : vector<1x2x20xbf16> to vector<2x20xbf16>
    %162 = arith.truncf %159 : vector<256x2xf32> to vector<256x2xbf16>
    %cst_87 = arith.constant dense<0.000000e+00> : vector<256x20xf32>
    %163 = tpu.matmul %162, %161, %cst_87 {dimension_numbers = #tpu.dot_dimension_numbers<[1], [0], [0], [1], [0, 0, 1, 1], [], []>} : vector<256x2xbf16>, vector<2x20xbf16>, vector<256x20xf32> -> vector<256x20xf32>
    %164 = arith.addf %157, %163 : vector<256x20xf32>
    %165 = vector.extract_strided_slice %94 {offsets = [2, 6, 0], sizes = [16, 16, 2], strides = [1, 1, 1]} : vector<20x32x2xf32> to vector<16x16x2xf32>
    %166 = vector.shape_cast %165 : vector<16x16x2xf32> to vector<256x2xf32>
    %c10 = arith.constant 10 : index
    %c0_88 = arith.constant 0 : index
    %c0_89 = arith.constant 0 : index
    %167 = vector.load %arg8[%c10, %c0_88, %c0_89] : memref<25x2x20xbf16, #tpu.memory_space<vmem>>, vector<1x2x20xbf16>
    %168 = vector.shape_cast %167 : vector<1x2x20xbf16> to vector<2x20xbf16>
    %169 = arith.truncf %166 : vector<256x2xf32> to vector<256x2xbf16>
    %cst_90 = arith.constant dense<0.000000e+00> : vector<256x20xf32>
    %170 = tpu.matmul %169, %168, %cst_90 {dimension_numbers = #tpu.dot_dimension_numbers<[1], [0], [0], [1], [0, 0, 1, 1], [], []>} : vector<256x2xbf16>, vector<2x20xbf16>, vector<256x20xf32> -> vector<256x20xf32>
    %171 = arith.addf %164, %170 : vector<256x20xf32>
    %172 = vector.extract_strided_slice %94 {offsets = [2, 7, 0], sizes = [16, 16, 2], strides = [1, 1, 1]} : vector<20x32x2xf32> to vector<16x16x2xf32>
    %173 = vector.shape_cast %172 : vector<16x16x2xf32> to vector<256x2xf32>
    %c11 = arith.constant 11 : index
    %c0_91 = arith.constant 0 : index
    %c0_92 = arith.constant 0 : index
    %174 = vector.load %arg8[%c11, %c0_91, %c0_92] : memref<25x2x20xbf16, #tpu.memory_space<vmem>>, vector<1x2x20xbf16>
    %175 = vector.shape_cast %174 : vector<1x2x20xbf16> to vector<2x20xbf16>
    %176 = arith.truncf %173 : vector<256x2xf32> to vector<256x2xbf16>
    %cst_93 = arith.constant dense<0.000000e+00> : vector<256x20xf32>
    %177 = tpu.matmul %176, %175, %cst_93 {dimension_numbers = #tpu.dot_dimension_numbers<[1], [0], [0], [1], [0, 0, 1, 1], [], []>} : vector<256x2xbf16>, vector<2x20xbf16>, vector<256x20xf32> -> vector<256x20xf32>
    %178 = arith.addf %171, %177 : vector<256x20xf32>
    %179 = vector.extract_strided_slice %94 {offsets = [2, 8, 0], sizes = [16, 16, 2], strides = [1, 1, 1]} : vector<20x32x2xf32> to vector<16x16x2xf32>
    %180 = vector.shape_cast %179 : vector<16x16x2xf32> to vector<256x2xf32>
    %c12 = arith.constant 12 : index
    %c0_94 = arith.constant 0 : index
    %c0_95 = arith.constant 0 : index
    %181 = vector.load %arg8[%c12, %c0_94, %c0_95] : memref<25x2x20xbf16, #tpu.memory_space<vmem>>, vector<1x2x20xbf16>
    %182 = vector.shape_cast %181 : vector<1x2x20xbf16> to vector<2x20xbf16>
    %183 = arith.truncf %180 : vector<256x2xf32> to vector<256x2xbf16>
    %cst_96 = arith.constant dense<0.000000e+00> : vector<256x20xf32>
    %184 = tpu.matmul %183, %182, %cst_96 {dimension_numbers = #tpu.dot_dimension_numbers<[1], [0], [0], [1], [0, 0, 1, 1], [], []>} : vector<256x2xbf16>, vector<2x20xbf16>, vector<256x20xf32> -> vector<256x20xf32>
    %185 = arith.addf %178, %184 : vector<256x20xf32>
    %186 = vector.extract_strided_slice %94 {offsets = [2, 9, 0], sizes = [16, 16, 2], strides = [1, 1, 1]} : vector<20x32x2xf32> to vector<16x16x2xf32>
    %187 = vector.shape_cast %186 : vector<16x16x2xf32> to vector<256x2xf32>
    %c13 = arith.constant 13 : index
    %c0_97 = arith.constant 0 : index
    %c0_98 = arith.constant 0 : index
    %188 = vector.load %arg8[%c13, %c0_97, %c0_98] : memref<25x2x20xbf16, #tpu.memory_space<vmem>>, vector<1x2x20xbf16>
    %189 = vector.shape_cast %188 : vector<1x2x20xbf16> to vector<2x20xbf16>
    %190 = arith.truncf %187 : vector<256x2xf32> to vector<256x2xbf16>
    %cst_99 = arith.constant dense<0.000000e+00> : vector<256x20xf32>
    %191 = tpu.matmul %190, %189, %cst_99 {dimension_numbers = #tpu.dot_dimension_numbers<[1], [0], [0], [1], [0, 0, 1, 1], [], []>} : vector<256x2xbf16>, vector<2x20xbf16>, vector<256x20xf32> -> vector<256x20xf32>
    %192 = arith.addf %185, %191 : vector<256x20xf32>
    %193 = vector.extract_strided_slice %94 {offsets = [2, 10, 0], sizes = [16, 16, 2], strides = [1, 1, 1]} : vector<20x32x2xf32> to vector<16x16x2xf32>
    %194 = vector.shape_cast %193 : vector<16x16x2xf32> to vector<256x2xf32>
    %c14 = arith.constant 14 : index
    %c0_100 = arith.constant 0 : index
    %c0_101 = arith.constant 0 : index
    %195 = vector.load %arg8[%c14, %c0_100, %c0_101] : memref<25x2x20xbf16, #tpu.memory_space<vmem>>, vector<1x2x20xbf16>
    %196 = vector.shape_cast %195 : vector<1x2x20xbf16> to vector<2x20xbf16>
    %197 = arith.truncf %194 : vector<256x2xf32> to vector<256x2xbf16>
    %cst_102 = arith.constant dense<0.000000e+00> : vector<256x20xf32>
    %198 = tpu.matmul %197, %196, %cst_102 {dimension_numbers = #tpu.dot_dimension_numbers<[1], [0], [0], [1], [0, 0, 1, 1], [], []>} : vector<256x2xbf16>, vector<2x20xbf16>, vector<256x20xf32> -> vector<256x20xf32>
    %199 = arith.addf %192, %198 : vector<256x20xf32>
    %200 = vector.extract_strided_slice %94 {offsets = [3, 6, 0], sizes = [16, 16, 2], strides = [1, 1, 1]} : vector<20x32x2xf32> to vector<16x16x2xf32>
    %201 = vector.shape_cast %200 : vector<16x16x2xf32> to vector<256x2xf32>
    %c15 = arith.constant 15 : index
    %c0_103 = arith.constant 0 : index
    %c0_104 = arith.constant 0 : index
    %202 = vector.load %arg8[%c15, %c0_103, %c0_104] : memref<25x2x20xbf16, #tpu.memory_space<vmem>>, vector<1x2x20xbf16>
    %203 = vector.shape_cast %202 : vector<1x2x20xbf16> to vector<2x20xbf16>
    %204 = arith.truncf %201 : vector<256x2xf32> to vector<256x2xbf16>
    %cst_105 = arith.constant dense<0.000000e+00> : vector<256x20xf32>
    %205 = tpu.matmul %204, %203, %cst_105 {dimension_numbers = #tpu.dot_dimension_numbers<[1], [0], [0], [1], [0, 0, 1, 1], [], []>} : vector<256x2xbf16>, vector<2x20xbf16>, vector<256x20xf32> -> vector<256x20xf32>
    %206 = arith.addf %199, %205 : vector<256x20xf32>
    %207 = vector.extract_strided_slice %94 {offsets = [3, 7, 0], sizes = [16, 16, 2], strides = [1, 1, 1]} : vector<20x32x2xf32> to vector<16x16x2xf32>
    %208 = vector.shape_cast %207 : vector<16x16x2xf32> to vector<256x2xf32>
    %c16 = arith.constant 16 : index
    %c0_106 = arith.constant 0 : index
    %c0_107 = arith.constant 0 : index
    %209 = vector.load %arg8[%c16, %c0_106, %c0_107] : memref<25x2x20xbf16, #tpu.memory_space<vmem>>, vector<1x2x20xbf16>
    %210 = vector.shape_cast %209 : vector<1x2x20xbf16> to vector<2x20xbf16>
    %211 = arith.truncf %208 : vector<256x2xf32> to vector<256x2xbf16>
    %cst_108 = arith.constant dense<0.000000e+00> : vector<256x20xf32>
    %212 = tpu.matmul %211, %210, %cst_108 {dimension_numbers = #tpu.dot_dimension_numbers<[1], [0], [0], [1], [0, 0, 1, 1], [], []>} : vector<256x2xbf16>, vector<2x20xbf16>, vector<256x20xf32> -> vector<256x20xf32>
    %213 = arith.addf %206, %212 : vector<256x20xf32>
    %214 = vector.extract_strided_slice %94 {offsets = [3, 8, 0], sizes = [16, 16, 2], strides = [1, 1, 1]} : vector<20x32x2xf32> to vector<16x16x2xf32>
    %215 = vector.shape_cast %214 : vector<16x16x2xf32> to vector<256x2xf32>
    %c17 = arith.constant 17 : index
    %c0_109 = arith.constant 0 : index
    %c0_110 = arith.constant 0 : index
    %216 = vector.load %arg8[%c17, %c0_109, %c0_110] : memref<25x2x20xbf16, #tpu.memory_space<vmem>>, vector<1x2x20xbf16>
    %217 = vector.shape_cast %216 : vector<1x2x20xbf16> to vector<2x20xbf16>
    %218 = arith.truncf %215 : vector<256x2xf32> to vector<256x2xbf16>
    %cst_111 = arith.constant dense<0.000000e+00> : vector<256x20xf32>
    %219 = tpu.matmul %218, %217, %cst_111 {dimension_numbers = #tpu.dot_dimension_numbers<[1], [0], [0], [1], [0, 0, 1, 1], [], []>} : vector<256x2xbf16>, vector<2x20xbf16>, vector<256x20xf32> -> vector<256x20xf32>
    %220 = arith.addf %213, %219 : vector<256x20xf32>
    %221 = vector.extract_strided_slice %94 {offsets = [3, 9, 0], sizes = [16, 16, 2], strides = [1, 1, 1]} : vector<20x32x2xf32> to vector<16x16x2xf32>
    %222 = vector.shape_cast %221 : vector<16x16x2xf32> to vector<256x2xf32>
    %c18 = arith.constant 18 : index
    %c0_112 = arith.constant 0 : index
    %c0_113 = arith.constant 0 : index
    %223 = vector.load %arg8[%c18, %c0_112, %c0_113] : memref<25x2x20xbf16, #tpu.memory_space<vmem>>, vector<1x2x20xbf16>
    %224 = vector.shape_cast %223 : vector<1x2x20xbf16> to vector<2x20xbf16>
    %225 = arith.truncf %222 : vector<256x2xf32> to vector<256x2xbf16>
    %cst_114 = arith.constant dense<0.000000e+00> : vector<256x20xf32>
    %226 = tpu.matmul %225, %224, %cst_114 {dimension_numbers = #tpu.dot_dimension_numbers<[1], [0], [0], [1], [0, 0, 1, 1], [], []>} : vector<256x2xbf16>, vector<2x20xbf16>, vector<256x20xf32> -> vector<256x20xf32>
    %227 = arith.addf %220, %226 : vector<256x20xf32>
    %228 = vector.extract_strided_slice %94 {offsets = [3, 10, 0], sizes = [16, 16, 2], strides = [1, 1, 1]} : vector<20x32x2xf32> to vector<16x16x2xf32>
    %229 = vector.shape_cast %228 : vector<16x16x2xf32> to vector<256x2xf32>
    %c19 = arith.constant 19 : index
    %c0_115 = arith.constant 0 : index
    %c0_116 = arith.constant 0 : index
    %230 = vector.load %arg8[%c19, %c0_115, %c0_116] : memref<25x2x20xbf16, #tpu.memory_space<vmem>>, vector<1x2x20xbf16>
    %231 = vector.shape_cast %230 : vector<1x2x20xbf16> to vector<2x20xbf16>
    %232 = arith.truncf %229 : vector<256x2xf32> to vector<256x2xbf16>
    %cst_117 = arith.constant dense<0.000000e+00> : vector<256x20xf32>
    %233 = tpu.matmul %232, %231, %cst_117 {dimension_numbers = #tpu.dot_dimension_numbers<[1], [0], [0], [1], [0, 0, 1, 1], [], []>} : vector<256x2xbf16>, vector<2x20xbf16>, vector<256x20xf32> -> vector<256x20xf32>
    %234 = arith.addf %227, %233 : vector<256x20xf32>
    %235 = vector.extract_strided_slice %94 {offsets = [4, 6, 0], sizes = [16, 16, 2], strides = [1, 1, 1]} : vector<20x32x2xf32> to vector<16x16x2xf32>
    %236 = vector.shape_cast %235 : vector<16x16x2xf32> to vector<256x2xf32>
    %c20 = arith.constant 20 : index
    %c0_118 = arith.constant 0 : index
    %c0_119 = arith.constant 0 : index
    %237 = vector.load %arg8[%c20, %c0_118, %c0_119] : memref<25x2x20xbf16, #tpu.memory_space<vmem>>, vector<1x2x20xbf16>
    %238 = vector.shape_cast %237 : vector<1x2x20xbf16> to vector<2x20xbf16>
    %239 = arith.truncf %236 : vector<256x2xf32> to vector<256x2xbf16>
    %cst_120 = arith.constant dense<0.000000e+00> : vector<256x20xf32>
    %240 = tpu.matmul %239, %238, %cst_120 {dimension_numbers = #tpu.dot_dimension_numbers<[1], [0], [0], [1], [0, 0, 1, 1], [], []>} : vector<256x2xbf16>, vector<2x20xbf16>, vector<256x20xf32> -> vector<256x20xf32>
    %241 = arith.addf %234, %240 : vector<256x20xf32>
    %242 = vector.extract_strided_slice %94 {offsets = [4, 7, 0], sizes = [16, 16, 2], strides = [1, 1, 1]} : vector<20x32x2xf32> to vector<16x16x2xf32>
    %243 = vector.shape_cast %242 : vector<16x16x2xf32> to vector<256x2xf32>
    %c21 = arith.constant 21 : index
    %c0_121 = arith.constant 0 : index
    %c0_122 = arith.constant 0 : index
    %244 = vector.load %arg8[%c21, %c0_121, %c0_122] : memref<25x2x20xbf16, #tpu.memory_space<vmem>>, vector<1x2x20xbf16>
    %245 = vector.shape_cast %244 : vector<1x2x20xbf16> to vector<2x20xbf16>
    %246 = arith.truncf %243 : vector<256x2xf32> to vector<256x2xbf16>
    %cst_123 = arith.constant dense<0.000000e+00> : vector<256x20xf32>
    %247 = tpu.matmul %246, %245, %cst_123 {dimension_numbers = #tpu.dot_dimension_numbers<[1], [0], [0], [1], [0, 0, 1, 1], [], []>} : vector<256x2xbf16>, vector<2x20xbf16>, vector<256x20xf32> -> vector<256x20xf32>
    %248 = arith.addf %241, %247 : vector<256x20xf32>
    %249 = vector.extract_strided_slice %94 {offsets = [4, 8, 0], sizes = [16, 16, 2], strides = [1, 1, 1]} : vector<20x32x2xf32> to vector<16x16x2xf32>
    %250 = vector.shape_cast %249 : vector<16x16x2xf32> to vector<256x2xf32>
    %c22 = arith.constant 22 : index
    %c0_124 = arith.constant 0 : index
    %c0_125 = arith.constant 0 : index
    %251 = vector.load %arg8[%c22, %c0_124, %c0_125] : memref<25x2x20xbf16, #tpu.memory_space<vmem>>, vector<1x2x20xbf16>
    %252 = vector.shape_cast %251 : vector<1x2x20xbf16> to vector<2x20xbf16>
    %253 = arith.truncf %250 : vector<256x2xf32> to vector<256x2xbf16>
    %cst_126 = arith.constant dense<0.000000e+00> : vector<256x20xf32>
    %254 = tpu.matmul %253, %252, %cst_126 {dimension_numbers = #tpu.dot_dimension_numbers<[1], [0], [0], [1], [0, 0, 1, 1], [], []>} : vector<256x2xbf16>, vector<2x20xbf16>, vector<256x20xf32> -> vector<256x20xf32>
    %255 = arith.addf %248, %254 : vector<256x20xf32>
    %256 = vector.extract_strided_slice %94 {offsets = [4, 9, 0], sizes = [16, 16, 2], strides = [1, 1, 1]} : vector<20x32x2xf32> to vector<16x16x2xf32>
    %257 = vector.shape_cast %256 : vector<16x16x2xf32> to vector<256x2xf32>
    %c23 = arith.constant 23 : index
    %c0_127 = arith.constant 0 : index
    %c0_128 = arith.constant 0 : index
    %258 = vector.load %arg8[%c23, %c0_127, %c0_128] : memref<25x2x20xbf16, #tpu.memory_space<vmem>>, vector<1x2x20xbf16>
    %259 = vector.shape_cast %258 : vector<1x2x20xbf16> to vector<2x20xbf16>
    %260 = arith.truncf %257 : vector<256x2xf32> to vector<256x2xbf16>
    %cst_129 = arith.constant dense<0.000000e+00> : vector<256x20xf32>
    %261 = tpu.matmul %260, %259, %cst_129 {dimension_numbers = #tpu.dot_dimension_numbers<[1], [0], [0], [1], [0, 0, 1, 1], [], []>} : vector<256x2xbf16>, vector<2x20xbf16>, vector<256x20xf32> -> vector<256x20xf32>
    %262 = arith.addf %255, %261 : vector<256x20xf32>
    %263 = vector.extract_strided_slice %94 {offsets = [4, 10, 0], sizes = [16, 16, 2], strides = [1, 1, 1]} : vector<20x32x2xf32> to vector<16x16x2xf32>
    %264 = vector.shape_cast %263 : vector<16x16x2xf32> to vector<256x2xf32>
    %c24 = arith.constant 24 : index
    %c0_130 = arith.constant 0 : index
    %c0_131 = arith.constant 0 : index
    %265 = vector.load %arg8[%c24, %c0_130, %c0_131] : memref<25x2x20xbf16, #tpu.memory_space<vmem>>, vector<1x2x20xbf16>
    %266 = vector.shape_cast %265 : vector<1x2x20xbf16> to vector<2x20xbf16>
    %267 = arith.truncf %264 : vector<256x2xf32> to vector<256x2xbf16>
    %cst_132 = arith.constant dense<0.000000e+00> : vector<256x20xf32>
    %268 = tpu.matmul %267, %266, %cst_132 {dimension_numbers = #tpu.dot_dimension_numbers<[1], [0], [0], [1], [0, 0, 1, 1], [], []>} : vector<256x2xbf16>, vector<2x20xbf16>, vector<256x20xf32> -> vector<256x20xf32>
    %269 = arith.addf %262, %268 : vector<256x20xf32>
    %cst_133 = arith.constant 0xFF800000 : f32
    %270 = vector.broadcast %cst_133 : f32 to vector<16x8x4xf32>
    %271 = tpu.concatenate %270, %1, %270 in 1 : vector<16x8x4xf32>, vector<16x16x4xf32>, vector<16x8x4xf32> -> vector<16x32x4xf32>
    %cst_134 = arith.constant 0xFF800000 : f32
    %272 = vector.broadcast %cst_134 : f32 to vector<1x32x4xf32>
    %273 = tpu.concatenate %272, %271, %272 in 0 : vector<1x32x4xf32>, vector<16x32x4xf32>, vector<1x32x4xf32> -> vector<18x32x4xf32>
    %cst_135 = arith.constant 0xFF800000 : f32
    %274 = vector.broadcast %cst_135 : f32 to vector<16x16x4xf32>
    %275 = vector.extract_strided_slice %273 {offsets = [0, 7, 0], sizes = [16, 16, 4], strides = [1, 1, 1]} : vector<18x32x4xf32> to vector<16x16x4xf32>
    %276 = arith.maximumf %274, %275 : vector<16x16x4xf32>
    %277 = vector.extract_strided_slice %273 {offsets = [0, 8, 0], sizes = [16, 16, 4], strides = [1, 1, 1]} : vector<18x32x4xf32> to vector<16x16x4xf32>
    %278 = arith.maximumf %276, %277 : vector<16x16x4xf32>
    %279 = vector.extract_strided_slice %273 {offsets = [0, 9, 0], sizes = [16, 16, 4], strides = [1, 1, 1]} : vector<18x32x4xf32> to vector<16x16x4xf32>
    %280 = arith.maximumf %278, %279 : vector<16x16x4xf32>
    %281 = vector.extract_strided_slice %273 {offsets = [1, 7, 0], sizes = [16, 16, 4], strides = [1, 1, 1]} : vector<18x32x4xf32> to vector<16x16x4xf32>
    %282 = arith.maximumf %280, %281 : vector<16x16x4xf32>
    %283 = vector.extract_strided_slice %273 {offsets = [1, 8, 0], sizes = [16, 16, 4], strides = [1, 1, 1]} : vector<18x32x4xf32> to vector<16x16x4xf32>
    %284 = arith.maximumf %282, %283 : vector<16x16x4xf32>
    %285 = vector.extract_strided_slice %273 {offsets = [1, 9, 0], sizes = [16, 16, 4], strides = [1, 1, 1]} : vector<18x32x4xf32> to vector<16x16x4xf32>
    %286 = arith.maximumf %284, %285 : vector<16x16x4xf32>
    %287 = vector.extract_strided_slice %273 {offsets = [2, 7, 0], sizes = [16, 16, 4], strides = [1, 1, 1]} : vector<18x32x4xf32> to vector<16x16x4xf32>
    %288 = arith.maximumf %286, %287 : vector<16x16x4xf32>
    %289 = vector.extract_strided_slice %273 {offsets = [2, 8, 0], sizes = [16, 16, 4], strides = [1, 1, 1]} : vector<18x32x4xf32> to vector<16x16x4xf32>
    %290 = arith.maximumf %288, %289 : vector<16x16x4xf32>
    %291 = vector.extract_strided_slice %273 {offsets = [2, 9, 0], sizes = [16, 16, 4], strides = [1, 1, 1]} : vector<18x32x4xf32> to vector<16x16x4xf32>
    %292 = arith.maximumf %290, %291 : vector<16x16x4xf32>
    %293 = vector.shape_cast %292 : vector<16x16x4xf32> to vector<256x4xf32>
    %c0_136 = arith.constant 0 : index
    %c0_137 = arith.constant 0 : index
    %294 = vector.load %arg9[%c0_136, %c0_137] : memref<4x20xbf16, #tpu.memory_space<vmem>>, vector<4x20xbf16>
    %295 = arith.truncf %293 : vector<256x4xf32> to vector<256x4xbf16>
    %cst_138 = arith.constant dense<0.000000e+00> : vector<256x20xf32>
    %296 = tpu.matmul %295, %294, %cst_138 {dimension_numbers = #tpu.dot_dimension_numbers<[1], [0], [0], [1], [0, 0, 1, 1], [], []>} : vector<256x4xbf16>, vector<4x20xbf16>, vector<256x20xf32> -> vector<256x20xf32>
    %297 = arith.addf %269, %296 : vector<256x20xf32>
    %c0_139 = arith.constant 0 : index
    %c0_140 = arith.constant 0 : index
    %298 = vector.load %arg10[%c0_139, %c0_140] : memref<1x20xf32, #tpu.memory_space<vmem>>, vector<1x20xf32>
    %299 = vector.broadcast %298 : vector<1x20xf32> to vector<256x20xf32>
    %300 = arith.addf %297, %299 : vector<256x20xf32>
    %cst_141 = arith.constant 0.000000e+00 : f32
    %301 = vector.broadcast %cst_141 : f32 to vector<256x20xf32>
    %302 = arith.maximumf %300, %301 : vector<256x20xf32>
    %303 = vector.shape_cast %302 : vector<256x20xf32> to vector<1x16x16x20xf32>
    %c0_142 = arith.constant 0 : index
    %c0_143 = arith.constant 0 : index
    %c0_144 = arith.constant 0 : index
    %c0_145 = arith.constant 0 : index
    %304 = vector.load %arg11[%c0_142, %c0_143, %c0_144, %c0_145] : memref<1x16x16x20xf32, #tpu.memory_space<vmem>>, vector<1x16x16x20xf32>
    tpu.vector_store %arg11[%c0_142, %c0_143, %c0_144, %c0_145], %303 {strides = array<i32>} : memref<1x16x16x20xf32, #tpu.memory_space<vmem>>, vector<1x16x16x20xf32>,
    return
  }
  func.func @transform_0(%arg0: i32) -> (i32, i32, i32, i32) {
    %c0_i32 = arith.constant 0 : i32
    %c0_i32_0 = arith.constant 0 : i32
    %c0_i32_1 = arith.constant 0 : i32
    %c0_i32_2 = arith.constant 0 : i32
    return %arg0, %c0_i32, %c0_i32_0, %c0_i32_1 : i32, i32, i32, i32
  }
  func.func @transform_1(%arg0: i32) -> (i32, i32) {
    %c0_i32 = arith.constant 0 : i32
    %c0_i32_0 = arith.constant 0 : i32
    %c0_i32_1 = arith.constant 0 : i32
    return %c0_i32, %c0_i32_0 : i32, i32
  }
  func.func @transform_2(%arg0: i32) -> (i32, i32) {
    %c0_i32 = arith.constant 0 : i32
    %c0_i32_0 = arith.constant 0 : i32
    %c0_i32_1 = arith.constant 0 : i32
    return %c0_i32, %c0_i32_0 : i32, i32
  }
  func.func @transform_3(%arg0: i32) -> (i32, i32) {
    %c0_i32 = arith.constant 0 : i32
    %c0_i32_0 = arith.constant 0 : i32
    %c0_i32_1 = arith.constant 0 : i32
    return %c0_i32, %c0_i32_0 : i32, i32
  }
  func.func @transform_4(%arg0: i32) -> (i32, i32, i32) {
    %c0_i32 = arith.constant 0 : i32
    %c0_i32_0 = arith.constant 0 : i32
    %c0_i32_1 = arith.constant 0 : i32
    %c0_i32_2 = arith.constant 0 : i32
    return %c0_i32, %c0_i32_0, %c0_i32_1 : i32, i32, i32
  }
  func.func @transform_5(%arg0: i32) -> (i32, i32) {
    %c0_i32 = arith.constant 0 : i32
    %c0_i32_0 = arith.constant 0 : i32
    %c0_i32_1 = arith.constant 0 : i32
    return %c0_i32, %c0_i32_0 : i32, i32
  }
  func.func @transform_6(%arg0: i32) -> (i32, i32) {
    %c0_i32 = arith.constant 0 : i32
    %c0_i32_0 = arith.constant 0 : i32
    %c0_i32_1 = arith.constant 0 : i32
    return %c0_i32, %c0_i32_0 : i32, i32
  }
  func.func @transform_7(%arg0: i32) -> (i32, i32, i32) {
    %c0_i32 = arith.constant 0 : i32
    %c0_i32_0 = arith.constant 0 : i32
    %c0_i32_1 = arith.constant 0 : i32
    %c0_i32_2 = arith.constant 0 : i32
    return %c0_i32, %c0_i32_0, %c0_i32_1 : i32, i32, i32
  }
  func.func @transform_8(%arg0: i32) -> (i32, i32) {
    %c0_i32 = arith.constant 0 : i32
    %c0_i32_0 = arith.constant 0 : i32
    %c0_i32_1 = arith.constant 0 : i32
    return %c0_i32, %c0_i32_0 : i32, i32
  }
  func.func @transform_9(%arg0: i32) -> (i32, i32) {
    %c0_i32 = arith.constant 0 : i32
    %c0_i32_0 = arith.constant 0 : i32
    %c0_i32_1 = arith.constant 0 : i32
    return %c0_i32, %c0_i32_0 : i32, i32
  }
  func.func @transform_10(%arg0: i32) -> (i32, i32, i32, i32) {
    %c0_i32 = arith.constant 0 : i32
    %c0_i32_0 = arith.constant 0 : i32
    %c0_i32_1 = arith.constant 0 : i32
    %c0_i32_2 = arith.constant 0 : i32
    return %arg0, %c0_i32, %c0_i32_0, %c0_i32_1 : i32, i32, i32, i32
  }
}

</mosaic_0001>

<llo_original>
// kernel: inception_forward.1
$region0: #{inception_forward.1}
  #allocation0 [shape = 'u32[]', space=smem, size = 0x4, offset = 0x4, fixed_abs, tag = 'smem constant byte address 0x4 - core index']
  #allocation1 [shape = 'u32[144,128]{1,0:T(1,128)}', space=vmem, size = 0x12000, scoped, tag = 'internal scratch']
  %s0 = inlined_call_operand.vmem [shape: f32[2,16,16,4], index: 0, kind: input, shape index: {}]
  %s1 = inlined_call_operand.vmem [shape: bf16[4,20], index: 1, kind: input, shape index: {}]
  %s2 = inlined_call_operand.vmem [shape: bf16[4,4], index: 2, kind: input, shape index: {}]
  %s3 = inlined_call_operand.vmem [shape: f32[1,4], index: 3, kind: input, shape index: {}]
  %s4 = inlined_call_operand.vmem [shape: bf16[9,4,20], index: 4, kind: input, shape index: {}]
  %s5 = inlined_call_operand.vmem [shape: bf16[4,2], index: 5, kind: input, shape index: {}]
  %s6 = inlined_call_operand.vmem [shape: f32[1,2], index: 6, kind: input, shape index: {}]
  %s7 = inlined_call_operand.vmem [shape: bf16[25,2,20], index: 7, kind: input, shape index: {}]
  %s8 = inlined_call_operand.vmem [shape: bf16[4,20], index: 8, kind: input, shape index: {}]
  %s9 = inlined_call_operand.vmem [shape: f32[1,20], index: 9, kind: input, shape index: {}]
  %s10 = inlined_call_operand.hbm [shape: f32[2,16,16,20], index: 10, kind: output, shape index: {}]
  %s11 = sld [smem:[#allocation0]]
  $region73: #{inception_forward.1} parent=0
    _
  %s13 = ssub.s32 1, %s11
  %s14 = scalar_select 0, %s13, %s11
  $region1: #{inception_forward.1} parent=0
    #allocation2 [shape = 'u8[262144]{0}', space=vmem, size = 0x40000, scoped, tag = 'output window, operand 0']
    #allocation3 [shape = 's32[2]{0}', space=sflag, size = 0x8, scoped, tag = 'scoped memory for inception_forward.1']
    %15 = vsyncpa [#allocation3], 0
    %s16 = scalar_lea.sflag [#allocation3], 1
    %17 = vsyncpa %s16, 0
    loop: start=0, step=1, limit=4
    $region2: #{inception_forward.1} parent=1 // loop_pre_header
      _
    $region3: #{inception_forward.1} parent=1 // loop_header
      %s19 = sphi 0, %s23
      %p20 = scmp.ge.s32.totalorder %s19, 4
      %s29 = sphi 0, %s31
      %s32 = sphi 0, %s29
      %s33 = sphi 0, %s32
      %s49 = sphi 0, %s33
      %s53 = sphi 0, %s53
      %s55 = sphi 0, %s53
      %s56 = sphi 0, %s55
      %s70 = sphi 0, %s56
      %s74 = sphi 0, %s74
      %s76 = sphi 0, %s74
      %s77 = sphi 0, %s76
      %s91 = sphi 0, %s77
      %s95 = sphi 0, %s95
      %s97 = sphi 0, %s95
      %s98 = sphi 0, %s97
      %s112 = sphi 0, %s98
      %s116 = sphi 0, %s116
      %s118 = sphi 0, %s116
      %s119 = sphi 0, %s118
      %s133 = sphi 0, %s119
      %s137 = sphi 0, %s137
      %s139 = sphi 0, %s137
      %s140 = sphi 0, %s139
      %s154 = sphi 0, %s140
      %s158 = sphi 0, %s158
      %s160 = sphi 0, %s158
      %s161 = sphi 0, %s160
      %s175 = sphi 0, %s161
      %s179 = sphi 0, %s179
      %s181 = sphi 0, %s179
      %s182 = sphi 0, %s181
      %s196 = sphi 0, %s182
      %s200 = sphi 0, %s200
      %s202 = sphi 0, %s200
      %s203 = sphi 0, %s202
      %s217 = sphi 0, %s203
      %s221 = sphi 0, %s221
      %s223 = sphi 0, %s221
      %s224 = sphi 0, %s223
      %s238 = sphi 0, %s224
      %s244 = sphi 0, %s246
      %s247 = sphi 0, %s244
      %s248 = sphi 0, %s247
      %s264 = sphi 0, %s248
    $region4: #{inception_forward.1} parent=1 // loop_header_branch
      %22 = sbr.rel (%p20) target = $region8
    $region5: #{inception_forward.1} parent=1 // loop_body
      %s24 = ssub.s32 %s19, 1
      %s25 = ssub.s32 %s19, 2
      %s26 = sadd.s32 %s19, 1
      %s27 = ssub.s32 %s19, %s26
      %p28 = scmp.eq.s32.totalorder %s27, 0
      %s30 = sadd.s32 %s29, 1
      %s31 = scalar_select %p28, %s29, %s30
      %p34 = pneg %p28
      %p35 = scmp.eq.s32.totalorder %s19, 1
      %p36 = por %p34, %p35
      %p37 = scmp.ne.s32.totalorder %s29, %s32
      %p38 = scmp.eq.s32.totalorder %s19, 0
      %p39 = por %p37, %p38
      %p40 = scmp.ne.s32.totalorder %s29, %s32
      %p41 = scmp.eq.s32.totalorder %s24, 1
      %p42 = por %p40, %p41
      %p43 = scmp.ne.s32.totalorder %s32, %s33
      %p44 = scmp.eq.s32.totalorder %s24, 0
      %p45 = por %p43, %p44
      %p46 = scmp.ne.s32.totalorder %s32, %s33
      %p47 = scmp.eq.s32.totalorder %s25, 1
      %p48 = por %p46, %p47
      %p50 = scmp.ne.s32.totalorder %s33, %s49
      %p51 = scmp.eq.s32.totalorder %s25, 0
      %p52 = por %p50, %p51
      %s54 = sadd.s32 %s53, 1
      %p57 = scmp.eq.s32.totalorder %s19, 1
      %p58 = scmp.ne.s32.totalorder %s53, %s55
      %p59 = scmp.eq.s32.totalorder %s19, 0
      %p60 = por %p58, %p59
      %p61 = scmp.ne.s32.totalorder %s53, %s55
      %p62 = scmp.eq.s32.totalorder %s24, 1
      %p63 = por %p61, %p62
      %p64 = scmp.ne.s32.totalorder %s55, %s56
      %p65 = scmp.eq.s32.totalorder %s24, 0
      %p66 = por %p64, %p65
      %p67 = scmp.ne.s32.totalorder %s55, %s56
      %p68 = scmp.eq.s32.totalorder %s25, 1
      %p69 = por %p67, %p68
      %p71 = scmp.ne.s32.totalorder %s56, %s70
      %p72 = scmp.eq.s32.totalorder %s25, 0
      %p73 = por %p71, %p72
      %s75 = sadd.s32 %s74, 1
      %p78 = scmp.eq.s32.totalorder %s19, 1
      %p79 = scmp.ne.s32.totalorder %s74, %s76
      %p80 = scmp.eq.s32.totalorder %s19, 0
      %p81 = por %p79, %p80
      %p82 = scmp.ne.s32.totalorder %s74, %s76
      %p83 = scmp.eq.s32.totalorder %s24, 1
      %p84 = por %p82, %p83
      %p85 = scmp.ne.s32.totalorder %s76, %s77
      %p86 = scmp.eq.s32.totalorder %s24, 0
      %p87 = por %p85, %p86
      %p88 = scmp.ne.s32.totalorder %s76, %s77
      %p89 = scmp.eq.s32.totalorder %s25, 1
      %p90 = por %p88, %p89
      %p92 = scmp.ne.s32.totalorder %s77, %s91
      %p93 = scmp.eq.s32.totalorder %s25, 0
      %p94 = por %p92, %p93
      %s96 = sadd.s32 %s95, 1
      %p99 = scmp.eq.s32.totalorder %s19, 1
      %p100 = scmp.ne.s32.totalorder %s95, %s97
      %p101 = scmp.eq.s32.totalorder %s19, 0
      %p102 = por %p100, %p101
      %p103 = scmp.ne.s32.totalorder %s95, %s97
      %p104 = scmp.eq.s32.totalorder %s24, 1
      %p105 = por %p103, %p104
      %p106 = scmp.ne.s32.totalorder %s97, %s98
      %p107 = scmp.eq.s32.totalorder %s24, 0
      %p108 = por %p106, %p107
      %p109 = scmp.ne.s32.totalorder %s97, %s98
      %p110 = scmp.eq.s32.totalorder %s25, 1
      %p111 = por %p109, %p110
      %p113 = scmp.ne.s32.totalorder %s98, %s112
      %p114 = scmp.eq.s32.totalorder %s25, 0
      %p115 = por %p113, %p114
      %s117 = sadd.s32 %s116, 1
      %p120 = scmp.eq.s32.totalorder %s19, 1
      %p121 = scmp.ne.s32.totalorder %s116, %s118
      %p122 = scmp.eq.s32.totalorder %s19, 0
      %p123 = por %p121, %p122
      %p124 = scmp.ne.s32.totalorder %s116, %s118
      %p125 = scmp.eq.s32.totalorder %s24, 1
      %p126 = por %p124, %p125
      %p127 = scmp.ne.s32.totalorder %s118, %s119
      %p128 = scmp.eq.s32.totalorder %s24, 0
      %p129 = por %p127, %p128
      %p130 = scmp.ne.s32.totalorder %s118, %s119
      %p131 = scmp.eq.s32.totalorder %s25, 1
      %p132 = por %p130, %p131
      %p134 = scmp.ne.s32.totalorder %s119, %s133
      %p135 = scmp.eq.s32.totalorder %s25, 0
      %p136 = por %p134, %p135
      %s138 = sadd.s32 %s137, 1
      %p141 = scmp.eq.s32.totalorder %s19, 1
      %p142 = scmp.ne.s32.totalorder %s137, %s139
      %p143 = scmp.eq.s32.totalorder %s19, 0
      %p144 = por %p142, %p143
      %p145 = scmp.ne.s32.totalorder %s137, %s139
      %p146 = scmp.eq.s32.totalorder %s24, 1
      %p147 = por %p145, %p146
      %p148 = scmp.ne.s32.totalorder %s139, %s140
      %p149 = scmp.eq.s32.totalorder %s24, 0
      %p150 = por %p148, %p149
      %p151 = scmp.ne.s32.totalorder %s139, %s140
      %p152 = scmp.eq.s32.totalorder %s25, 1
      %p153 = por %p151, %p152
      %p155 = scmp.ne.s32.totalorder %s140, %s154
      %p156 = scmp.eq.s32.totalorder %s25, 0
      %p157 = por %p155, %p156
      %s159 = sadd.s32 %s158, 1
      %p162 = scmp.eq.s32.totalorder %s19, 1
      %p163 = scmp.ne.s32.totalorder %s158, %s160
      %p164 = scmp.eq.s32.totalorder %s19, 0
      %p165 = por %p163, %p164
      %p166 = scmp.ne.s32.totalorder %s158, %s160
      %p167 = scmp.eq.s32.totalorder %s24, 1
      %p168 = por %p166, %p167
      %p169 = scmp.ne.s32.totalorder %s160, %s161
      %p170 = scmp.eq.s32.totalorder %s24, 0
      %p171 = por %p169, %p170
      %p172 = scmp.ne.s32.totalorder %s160, %s161
      %p173 = scmp.eq.s32.totalorder %s25, 1
      %p174 = por %p172, %p173
      %p176 = scmp.ne.s32.totalorder %s161, %s175
      %p177 = scmp.eq.s32.totalorder %s25, 0
      %p178 = por %p176, %p177
      %s180 = sadd.s32 %s179, 1
      %p183 = scmp.eq.s32.totalorder %s19, 1
      %p184 = scmp.ne.s32.totalorder %s179, %s181
      %p185 = scmp.eq.s32.totalorder %s19, 0
      %p186 = por %p184, %p185
      %p187 = scmp.ne.s32.totalorder %s179, %s181
      %p188 = scmp.eq.s32.totalorder %s24, 1
      %p189 = por %p187, %p188
      %p190 = scmp.ne.s32.totalorder %s181, %s182
      %p191 = scmp.eq.s32.totalorder %s24, 0
      %p192 = por %p190, %p191
      %p193 = scmp.ne.s32.totalorder %s181, %s182
      %p194 = scmp.eq.s32.totalorder %s25, 1
      %p195 = por %p193, %p194
      %p197 = scmp.ne.s32.totalorder %s182, %s196
      %p198 = scmp.eq.s32.totalorder %s25, 0
      %p199 = por %p197, %p198
      %s201 = sadd.s32 %s200, 1
      %p204 = scmp.eq.s32.totalorder %s19, 1
      %p205 = scmp.ne.s32.totalorder %s200, %s202
      %p206 = scmp.eq.s32.totalorder %s19, 0
      %p207 = por %p205, %p206
      %p208 = scmp.ne.s32.totalorder %s200, %s202
      %p209 = scmp.eq.s32.totalorder %s24, 1
      %p210 = por %p208, %p209
      %p211 = scmp.ne.s32.totalorder %s202, %s203
      %p212 = scmp.eq.s32.totalorder %s24, 0
      %p213 = por %p211, %p212
      %p214 = scmp.ne.s32.totalorder %s202, %s203
      %p215 = scmp.eq.s32.totalorder %s25, 1
      %p216 = por %p214, %p215
      %p218 = scmp.ne.s32.totalorder %s203, %s217
      %p219 = scmp.eq.s32.totalorder %s25, 0
      %p220 = por %p218, %p219
      %s222 = sadd.s32 %s221, 1
      %p225 = scmp.eq.s32.totalorder %s19, 1
      %p226 = scmp.ne.s32.totalorder %s221, %s223
      %p227 = scmp.eq.s32.totalorder %s19, 0
      %p228 = por %p226, %p227
      %p229 = scmp.ne.s32.totalorder %s221, %s223
      %p230 = scmp.eq.s32.totalorder %s24, 1
      %p231 = por %p229, %p230
      %p232 = scmp.ne.s32.totalorder %s223, %s224
      %p233 = scmp.eq.s32.totalorder %s24, 0
      %p234 = por %p232, %p233
      %p235 = scmp.ne.s32.totalorder %s223, %s224
      %p236 = scmp.eq.s32.totalorder %s25, 1
      %p237 = por %p235, %p236
      %p239 = scmp.ne.s32.totalorder %s224, %s238
      %p240 = scmp.eq.s32.totalorder %s25, 0
      %p241 = por %p239, %p240
      %s242 = ssub.s32 %s19, %s26
      %p243 = scmp.eq.s32.totalorder %s242, 0
      %s245 = sadd.s32 %s244, 1
      %s246 = scalar_select %p243, %s244, %s245
      %p249 = pneg %p243
      %p250 = scmp.eq.s32.totalorder %s19, 1
      %p251 = por %p249, %p250
      %p252 = scmp.ne.s32.totalorder %s244, %s247
      %p253 = scmp.eq.s32.totalorder %s19, 0
      %p254 = por %p252, %p253
      %p255 = scmp.ne.s32.totalorder %s244, %s247
      %p256 = scmp.eq.s32.totalorder %s24, 1
      %p257 = por %p255, %p256
      %p258 = scmp.ne.s32.totalorder %s247, %s248
      %p259 = scmp.eq.s32.totalorder %s24, 0
      %p260 = por %p258, %p259
      %p261 = scmp.ne.s32.totalorder %s247, %s248
      %p262 = scmp.eq.s32.totalorder %s25, 1
      %p263 = por %p261, %p262
      %p265 = scmp.ne.s32.totalorder %s248, %s264
      %p266 = scmp.eq.s32.totalorder %s25, 0
      %p267 = por %p265, %p266
      %p268 = scmp.le.s32.totalorder 1, %s19
      %p269 = scmp.lt.s32.totalorder %s19, 3
      %p270 = pnand %p268, %p269
      %p271 = pneg %p270
      // Predicated region
      $region9: #{inception_forward.1} parent=5 // pred_check
        _
      $region10: #{inception_forward.1} parent=5 // pred_check_branch
        %273 = sbr.rel (%p270) target = $region12
      $region11: #{inception_forward.1} parent=5 // pred_region
        %s274 = ssub.s32 %s19, 1
        // Predicated region
        $region13: #{inception_forward.1} parent=11 // pred_check
          %p275 = pneg %p66
        $region14: #{inception_forward.1} parent=11 // pred_check_branch
          %277 = sbr.rel (%p275) target = $region16
        $region15: #{inception_forward.1} parent=11 // pred_region
          _
        $region16: #{inception_forward.1} parent=11 // pred_fallthru
          _
        // Predicated region
        $region17: #{inception_forward.1} parent=11 // pred_check
          %p278 = pneg %p87
        $region18: #{inception_forward.1} parent=11 // pred_check_branch
          %280 = sbr.rel (%p278) target = $region20
        $region19: #{inception_forward.1} parent=11 // pred_region
          _
        $region20: #{inception_forward.1} parent=11 // pred_fallthru
          _
        // Predicated region
        $region21: #{inception_forward.1} parent=11 // pred_check
          %p281 = pneg %p108
        $region22: #{inception_forward.1} parent=11 // pred_check_branch
          %283 = sbr.rel (%p281) target = $region24
        $region23: #{inception_forward.1} parent=11 // pred_region
          _
        $region24: #{inception_forward.1} parent=11 // pred_fallthru
          _
        // Predicated region
        $region25: #{inception_forward.1} parent=11 // pred_check
          %p284 = pneg %p129
        $region26: #{inception_forward.1} parent=11 // pred_check_branch
          %286 = sbr.rel (%p284) target = $region28
        $region27: #{inception_forward.1} parent=11 // pred_region
          _
        $region28: #{inception_forward.1} parent=11 // pred_fallthru
          _
        // Predicated region
        $region29: #{inception_forward.1} parent=11 // pred_check
          %p287 = pneg %p150
        $region30: #{inception_forward.1} parent=11 // pred_check_branch
          %289 = sbr.rel (%p287) target = $region32
        $region31: #{inception_forward.1} parent=11 // pred_region
          _
        $region32: #{inception_forward.1} parent=11 // pred_fallthru
          _
        // Predicated region
        $region33: #{inception_forward.1} parent=11 // pred_check
          %p290 = pneg %p171
        $region34: #{inception_forward.1} parent=11 // pred_check_branch
          %292 = sbr.rel (%p290) target = $region36
        $region35: #{inception_forward.1} parent=11 // pred_region
          _
        $region36: #{inception_forward.1} parent=11 // pred_fallthru
          _
        // Predicated region
        $region37: #{inception_forward.1} parent=11 // pred_check
          %p293 = pneg %p192
        $region38: #{inception_forward.1} parent=11 // pred_check_branch
          %295 = sbr.rel (%p293) target = $region40
        $region39: #{inception_forward.1} parent=11 // pred_region
          _
        $region40: #{inception_forward.1} parent=11 // pred_fallthru
          _
        // Predicated region
        $region41: #{inception_forward.1} parent=11 // pred_check
          %p296 = pneg %p213
        $region42: #{inception_forward.1} parent=11 // pred_check_branch
          %298 = sbr.rel (%p296) target = $region44
        $region43: #{inception_forward.1} parent=11 // pred_region
          _
        $region44: #{inception_forward.1} parent=11 // pred_fallthru
          _
        // Predicated region
        $region45: #{inception_forward.1} parent=11 // pred_check
          %p299 = pneg %p234
        $region46: #{inception_forward.1} parent=11 // pred_check_branch
          %301 = sbr.rel (%p299) target = $region48
        $region47: #{inception_forward.1} parent=11 // pred_region
          _
        $region48: #{inception_forward.1} parent=11 // pred_fallthru
          _
      $region12: #{inception_forward.1} parent=5 // pred_fallthru
        _
      %p302 = scmp.lt.s32.totalorder %s19, 2
      // Predicated region
      $region49: #{inception_forward.1} parent=5 // pred_check
        %p303 = pneg %p302
      $region50: #{inception_forward.1} parent=5 // pred_check_branch
        %305 = sbr.rel (%p303) target = $region52
      $region51: #{inception_forward.1} parent=5 // pred_region
        // Predicated region
        $region53: #{inception_forward.1} parent=51 // pred_check
          %p306 = pneg %p39
        $region54: #{inception_forward.1} parent=51 // pred_check_branch
          %308 = sbr.rel (%p306) target = $region56
        $region55: #{inception_forward.1} parent=51 // pred_region
          %p309 = scmp.lt.s32.totalorder %s19, 1
          %s310 = scalar_select %p309, %s19, 1
          %s311 = smul.addr %s310, 32
          %s312 = smul.addr %s311, 8
          %s313 = scalar_lea.vmem %s0, %s312
        $region56: #{inception_forward.1} parent=51 // pred_fallthru
          _
      $region52: #{inception_forward.1} parent=5 // pred_fallthru
        _
      %p314 = scmp.le.s32.totalorder 1, %s19
      %p315 = scmp.lt.s32.totalorder %s19, 3
      %p316 = pnand %p314, %p315
      %p317 = pneg %p316
      // Predicated region
      $region57: #{inception_forward.1} parent=5 // pred_check
        _
      $region58: #{inception_forward.1} parent=5 // pred_check_branch
        %319 = sbr.rel (%p316) target = $region60
      $region59: #{inception_forward.1} parent=5 // pred_region
        %s320 = ssub.s32 %s19, 1
        %p321 = scmp.lt.s32.totalorder %s24, 1
        %s322 = scalar_select %p321, %s24, 1
        %s323 = smul.addr %s322, 32
        %s324 = smul.addr %s323, 8
        %s325 = scalar_lea.vmem %s0, %s324
        %p326 = pneg %p45
        %p327 = pneg %p42
        %p328 = pneg %p66
        %p329 = pneg %p63
        %p330 = pneg %p87
        %p331 = pneg %p84
        %p332 = pneg %p108
        %p333 = pneg %p105
        %p334 = pneg %p129
        %p335 = pneg %p126
        %p336 = pneg %p150
        %p337 = pneg %p147
        %p338 = pneg %p171
        %p339 = pneg %p168
        %p340 = pneg %p192
        %p341 = pneg %p189
        %p342 = pneg %p213
        %p343 = pneg %p210
        %p344 = pneg %p234
        %p345 = pneg %p231
        %p346 = pneg %p260
        %p347 = pneg %p257
        %s348 = sand.u32 %s247, 1
        %s349 = scalar_lea.sflag [#allocation3], %s348
        %s350 = sand.u32 %s247, 1
        %s351 = smul.addr %s350, 256
        %s352 = scalar_lea.vmem [#allocation2], %s351
        %p353 = scmp.lt.s32.totalorder %s24, 1
        %s354 = scalar_select %p353, %s24, 1
        %s355 = smul.addr %s354, 32
        %s356 = smul.addr %s355, 8
        %s357 = scalar_lea.vmem %s0, %s356
        %v359 = vld [vmem:[%s357] sm:$0xff]
        %v360 = vld [vmem:[%s357 + $0x8] sm:$0xff]
        %v361 = vld [vmem:[%s357 + $0x10] sm:$0xff]
        %v362 = vld [vmem:[%s357 + $0x18] sm:$0xff]
        %v363 = vld [vmem:[%s357 + $0x20] sm:$0xff]
        %v364 = vld [vmem:[%s357 + $0x28] sm:$0xff]
        %v365 = vld [vmem:[%s357 + $0x30] sm:$0xff]
        %v366 = vld [vmem:[%s357 + $0x38] sm:$0xff]
        %v367 = vld [vmem:[%s357 + $0x40] sm:$0xff]
        %v368 = vld [vmem:[%s357 + $0x48] sm:$0xff]
        %v369 = vld [vmem:[%s357 + $0x50] sm:$0xff]
        %v370 = vld [vmem:[%s357 + $0x58] sm:$0xff]
        %v371 = vld [vmem:[%s357 + $0x60] sm:$0xff]
        %v372 = vld [vmem:[%s357 + $0x68] sm:$0xff]
        %v373 = vld [vmem:[%s357 + $0x70] sm:$0xff]
        %v374 = vld [vmem:[%s357 + $0x78] sm:$0xff]
        %v375 = vld [vmem:[%s357 + $0x80] sm:$0xff]
        %v376 = vld [vmem:[%s357 + $0x88] sm:$0xff]
        %v377 = vld [vmem:[%s357 + $0x90] sm:$0xff]
        %v378 = vld [vmem:[%s357 + $0x98] sm:$0xff]
        %v379 = vld [vmem:[%s357 + $0xa0] sm:$0xff]
        %v380 = vld [vmem:[%s357 + $0xa8] sm:$0xff]
        %v381 = vld [vmem:[%s357 + $0xb0] sm:$0xff]
        %v382 = vld [vmem:[%s357 + $0xb8] sm:$0xff]
        %v383 = vld [vmem:[%s357 + $0xc0] sm:$0xff]
        %v384 = vld [vmem:[%s357 + $0xc8] sm:$0xff]
        %v385 = vld [vmem:[%s357 + $0xd0] sm:$0xff]
        %v386 = vld [vmem:[%s357 + $0xd8] sm:$0xff]
        %v387 = vld [vmem:[%s357 + $0xe0] sm:$0xff]
        %v388 = vld [vmem:[%s357 + $0xe8] sm:$0xff]
        %v389 = vld [vmem:[%s357 + $0xf0] sm:$0xff]
        %v390 = vld [vmem:[%s357 + $0xf8] sm:$0xff]
        %v391 = vld [vmem:[%s1] sm:$0x3]
        %v392 = vpack.c.bf16 %v360, %v359
        %v393 = vpack.c.bf16 %v362, %v361
        %v394 = vpack.c.bf16 %v364, %v363
        %v395 = vpack.c.bf16 %v366, %v365
        %v396 = vpack.c.bf16 %v368, %v367
        %v397 = vpack.c.bf16 %v370, %v369
        %v398 = vpack.c.bf16 %v372, %v371
        %v399 = vpack.c.bf16 %v374, %v373
        %v400 = vpack.c.bf16 %v376, %v375
        %v401 = vpack.c.bf16 %v378, %v377
        %v402 = vpack.c.bf16 %v380, %v379
        %v403 = vpack.c.bf16 %v382, %v381
        %v404 = vpack.c.bf16 %v384, %v383
        %v405 = vpack.c.bf16 %v386, %v385
        %v406 = vpack.c.bf16 %v388, %v387
        %v407 = vpack.c.bf16 %v390, %v389
        %v408 = vld [vmem:[%s2] sm:$0x3]
        %v409 = vld [vmem:[%s3] sm:$0x1]
        %v411 = vlaneseq
        %v412 = vshrl.u32 %v411, 7
        %v413 = vsub.s32 0, %v412
        %v414 = vrot.slane %v409, %v413
        %vm416 = vcmask 31744
        %v418 = vsel %vm416, %v392, 0
        %v421 = vsel %vm416, %v393, 0
        %v424 = vsel %vm416, %v394, 0
        %v427 = vsel %vm416, %v395, 0
        %v430 = vsel %vm416, %v396, 0
        %v433 = vsel %vm416, %v397, 0
        %v436 = vsel %vm416, %v398, 0
        %v439 = vsel %vm416, %v399, 0
        %v442 = vsel %vm416, %v400, 0
        %v445 = vsel %vm416, %v401, 0
        %v448 = vsel %vm416, %v402, 0
        %v451 = vsel %vm416, %v403, 0
        %v454 = vsel %vm416, %v404, 0
        %v457 = vsel %vm416, %v405, 0
        %v460 = vsel %vm416, %v406, 0
        %v463 = vsel %vm416, %v407, 0
        %vm465 = vcmask 1041408
        %v467 = vsel %vm465, %v408, 0
        %469 = vmatprep.subr.bf16.mxu0 0
        %470 = vmatpush1.bf16.msra.mxu0 %v467
        %471 = vmatprep.subr.bf16.mxu0 0
        %472 = vmatpush1.bf16.msra.mxu0 0
        %473 = vmatprep.subr.bf16.mxu0 0
        %474 = vmatpush1.bf16.msra.mxu0 0
        %475 = vmatprep.subr.bf16.mxu0 0
        %476 = vmatpush1.bf16.msra.mxu0 0
        %477 = vmatprep.subr.bf16.mxu0 0
        %478 = vmatpush1.bf16.msra.mxu0 0
        %479 = vmatprep.subr.bf16.mxu0 0
        %480 = vmatpush1.bf16.msra.mxu0 0
        %481 = vmatprep.subr.bf16.mxu0 0
        %482 = vmatpush1.bf16.msra.mxu0 0
        %483 = vmatprep.subr.bf16.mxu0 0
        %484 = vmatpush1.bf16.msra.mxu0 0
        %485 = vmatprep.subr.bf16.mxu0 0
        %486 = vmatpush1.bf16.msra.mxu0 0
        %487 = vmatprep.subr.bf16.mxu0 0
        %488 = vmatpush1.bf16.msra.mxu0 0
        %489 = vmatprep.subr.bf16.mxu0 0
        %490 = vmatpush1.bf16.msra.mxu0 0
        %491 = vmatprep.subr.bf16.mxu0 0
        %492 = vmatpush1.bf16.msra.mxu0 0
        %493 = vmatprep.subr.bf16.mxu0 0
        %494 = vmatpush1.bf16.msra.mxu0 0
        %495 = vmatprep.subr.bf16.mxu0 0
        %496 = vmatpush1.bf16.msra.mxu0 0
        %497 = vmatprep.subr.bf16.mxu0 0
        %498 = vmatpush1.bf16.msra.mxu0 0
        %499 = vmatprep.subr.bf16.mxu0 0
        %500 = vmatpush1.bf16.msra.mxu0 0
        %501 = vmatprep.mubr.bf16.mxu0 0
        %502 = vmatmul.mubr.bf16.gmra.mrb[0].mxu0 %v418
        %v503 = vpop.f32.mrb[0].mxu0
        %v504 = vadd.f32 %v414, %v503
        %v505 = vpop.f32.mrb[0].mxu0
        %v506 = vpop.f32.mrb[0].mxu0
        %v507 = vadd.f32 %v414, %v506
        %v508 = vpop.f32.mrb[0].mxu0
        %509 = vmatprep.mubr.bf16.mxu0 0
        %510 = vmatmul.mubr.bf16.gmra.mrb[0].mxu0 %v421
        %v511 = vpop.f32.mrb[0].mxu0
        %v512 = vadd.f32 %v414, %v511
        %v513 = vpop.f32.mrb[0].mxu0
        %v514 = vpop.f32.mrb[0].mxu0
        %v515 = vadd.f32 %v414, %v514
        %v516 = vpop.f32.mrb[0].mxu0
        %517 = vmatprep.mubr.bf16.mxu0 0
        %518 = vmatmul.mubr.bf16.gmra.mrb[0].mxu0 %v424
        %v519 = vpop.f32.mrb[0].mxu0
        %v520 = vadd.f32 %v414, %v519
        %v521 = vpop.f32.mrb[0].mxu0
        %v522 = vpop.f32.mrb[0].mxu0
        %v523 = vadd.f32 %v414, %v522
        %v524 = vpop.f32.mrb[0].mxu0
        %525 = vmatprep.mubr.bf16.mxu0 0
        %526 = vmatmul.mubr.bf16.gmra.mrb[0].mxu0 %v427
        %v527 = vpop.f32.mrb[0].mxu0
        %v528 = vadd.f32 %v414, %v527
        %v529 = vpop.f32.mrb[0].mxu0
        %v530 = vpop.f32.mrb[0].mxu0
        %v531 = vadd.f32 %v414, %v530
        %v532 = vpop.f32.mrb[0].mxu0
        %533 = vmatprep.mubr.bf16.mxu0 0
        %534 = vmatmul.mubr.bf16.gmra.mrb[0].mxu0 %v430
        %v535 = vpop.f32.mrb[0].mxu0
        %v536 = vadd.f32 %v414, %v535
        %v537 = vpop.f32.mrb[0].mxu0
        %v538 = vpop.f32.mrb[0].mxu0
        %v539 = vadd.f32 %v414, %v538
        %v540 = vpop.f32.mrb[0].mxu0
        %541 = vmatprep.mubr.bf16.mxu0 0
        %542 = vmatmul.mubr.bf16.gmra.mrb[0].mxu0 %v433
        %v543 = vpop.f32.mrb[0].mxu0
        %v544 = vadd.f32 %v414, %v543
        %v545 = vpop.f32.mrb[0].mxu0
        %v546 = vpop.f32.mrb[0].mxu0
        %v547 = vadd.f32 %v414, %v546
        %v548 = vpop.f32.mrb[0].mxu0
        %549 = vmatprep.mubr.bf16.mxu0 0
        %550 = vmatmul.mubr.bf16.gmra.mrb[0].mxu0 %v436
        %v551 = vpop.f32.mrb[0].mxu0
        %v552 = vadd.f32 %v414, %v551
        %v553 = vpop.f32.mrb[0].mxu0
        %v554 = vpop.f32.mrb[0].mxu0
        %v555 = vadd.f32 %v414, %v554
        %v556 = vpop.f32.mrb[0].mxu0
        %557 = vmatprep.mubr.bf16.mxu0 0
        %558 = vmatmul.mubr.bf16.gmra.mrb[0].mxu0 %v439
        %v559 = vpop.f32.mrb[0].mxu0
        %v560 = vadd.f32 %v414, %v559
        %v561 = vpop.f32.mrb[0].mxu0
        %v562 = vpop.f32.mrb[0].mxu0
        %v563 = vadd.f32 %v414, %v562
        %v564 = vpop.f32.mrb[0].mxu0
        %565 = vmatprep.mubr.bf16.mxu0 0
        %566 = vmatmul.mubr.bf16.gmra.mrb[0].mxu0 %v442
        %v567 = vpop.f32.mrb[0].mxu0
        %v568 = vadd.f32 %v414, %v567
        %v569 = vpop.f32.mrb[0].mxu0
        %v570 = vpop.f32.mrb[0].mxu0
        %v571 = vadd.f32 %v414, %v570
        %v572 = vpop.f32.mrb[0].mxu0
        %573 = vmatprep.mubr.bf16.mxu0 0
        %574 = vmatmul.mubr.bf16.gmra.mrb[0].mxu0 %v445
        %v575 = vpop.f32.mrb[0].mxu0
        %v576 = vadd.f32 %v414, %v575
        %v577 = vpop.f32.mrb[0].mxu0
        %v578 = vpop.f32.mrb[0].mxu0
        %v579 = vadd.f32 %v414, %v578
        %v580 = vpop.f32.mrb[0].mxu0
        %581 = vmatprep.mubr.bf16.mxu0 0
        %582 = vmatmul.mubr.bf16.gmra.mrb[0].mxu0 %v448
        %v583 = vpop.f32.mrb[0].mxu0
        %v584 = vadd.f32 %v414, %v583
        %v585 = vpop.f32.mrb[0].mxu0
        %v586 = vpop.f32.mrb[0].mxu0
        %v587 = vadd.f32 %v414, %v586
        %v588 = vpop.f32.mrb[0].mxu0
        %589 = vmatprep.mubr.bf16.mxu0 0
        %590 = vmatmul.mubr.bf16.gmra.mrb[0].mxu0 %v451
        %v591 = vpop.f32.mrb[0].mxu0
        %v592 = vadd.f32 %v414, %v591
        %v593 = vpop.f32.mrb[0].mxu0
        %v594 = vpop.f32.mrb[0].mxu0
        %v595 = vadd.f32 %v414, %v594
        %v596 = vpop.f32.mrb[0].mxu0
        %597 = vmatprep.mubr.bf16.mxu0 0
        %598 = vmatmul.mubr.bf16.gmra.mrb[0].mxu0 %v454
        %v599 = vpop.f32.mrb[0].mxu0
        %v600 = vadd.f32 %v414, %v599
        %v601 = vpop.f32.mrb[0].mxu0
        %v602 = vpop.f32.mrb[0].mxu0
        %v603 = vadd.f32 %v414, %v602
        %v604 = vpop.f32.mrb[0].mxu0
        %605 = vmatprep.mubr.bf16.mxu0 0
        %606 = vmatmul.mubr.bf16.gmra.mrb[0].mxu0 %v457
        %v607 = vpop.f32.mrb[0].mxu0
        %v608 = vadd.f32 %v414, %v607
        %v609 = vpop.f32.mrb[0].mxu0
        %v610 = vpop.f32.mrb[0].mxu0
        %v611 = vadd.f32 %v414, %v610
        %v612 = vpop.f32.mrb[0].mxu0
        %613 = vmatprep.mubr.bf16.mxu0 0
        %614 = vmatmul.mubr.bf16.gmra.mrb[0].mxu0 %v460
        %v615 = vpop.f32.mrb[0].mxu0
        %v616 = vadd.f32 %v414, %v615
        %v617 = vpop.f32.mrb[0].mxu0
        %v618 = vpop.f32.mrb[0].mxu0
        %v619 = vadd.f32 %v414, %v618
        %v620 = vpop.f32.mrb[0].mxu0
        %621 = vmatprep.mubr.bf16.mxu0 0
        %622 = vmatmul.mubr.bf16.gmra.mrb[0].mxu0 %v463
        %v623 = vpop.f32.mrb[0].mxu0
        %v624 = vadd.f32 %v414, %v623
        %v625 = vpop.f32.mrb[0].mxu0
        %v626 = vpop.f32.mrb[0].mxu0
        %v627 = vadd.f32 %v414, %v626
        %v628 = vpop.f32.mrb[0].mxu0
        %629 = vdwg.mxu0
        %v630 = vmax.f32 %v504, 0.0
        %v631 = vmax.f32 %v507, 0.0
        %v632 = vmax.f32 %v512, 0.0
        %v633 = vmax.f32 %v515, 0.0
        %v634 = vmax.f32 %v520, 0.0
        %v635 = vmax.f32 %v523, 0.0
        %v636 = vmax.f32 %v528, 0.0
        %v637 = vmax.f32 %v531, 0.0
        %v638 = vmax.f32 %v536, 0.0
        %v639 = vmax.f32 %v539, 0.0
        %v640 = vmax.f32 %v544, 0.0
        %v641 = vmax.f32 %v547, 0.0
        %v642 = vmax.f32 %v552, 0.0
        %v643 = vmax.f32 %v555, 0.0
        %v644 = vmax.f32 %v560, 0.0
        %v645 = vmax.f32 %v563, 0.0
        %v646 = vmax.f32 %v568, 0.0
        %v647 = vmax.f32 %v571, 0.0
        %v648 = vmax.f32 %v576, 0.0
        %v649 = vmax.f32 %v579, 0.0
        %v650 = vmax.f32 %v584, 0.0
        %v651 = vmax.f32 %v587, 0.0
        %v652 = vmax.f32 %v592, 0.0
        %v653 = vmax.f32 %v595, 0.0
        %v654 = vmax.f32 %v600, 0.0
        %v655 = vmax.f32 %v603, 0.0
        %v656 = vmax.f32 %v608, 0.0
        %v657 = vmax.f32 %v611, 0.0
        %v658 = vmax.f32 %v616, 0.0
        %v659 = vmax.f32 %v619, 0.0
        %v660 = vmax.f32 %v624, 0.0
        %v661 = vmax.f32 %v627, 0.0
        %vm693 = vcmask 1040384
        %v694 = vrot.slane 0.0, 7
        %v695 = vsel %vm693, %v694, %v694
        %v696 = vrot.slane %v630, 7
        %v697 = vsel %vm693, %v694, %v696
        %v698 = vrot.slane %v631, 7
        %v699 = vsel %vm693, %v696, %v698
        %v700 = vrot.slane %v632, 7
        %v701 = vsel %vm693, %v694, %v700
        %v702 = vrot.slane %v633, 7
        %v703 = vsel %vm693, %v700, %v702
        %v704 = vrot.slane %v634, 7
        %v705 = vsel %vm693, %v694, %v704
        %v706 = vrot.slane %v635, 7
        %v707 = vsel %vm693, %v704, %v706
        %v708 = vrot.slane %v636, 7
        %v709 = vsel %vm693, %v694, %v708
        %v710 = vrot.slane %v637, 7
        %v711 = vsel %vm693, %v708, %v710
        %v712 = vrot.slane %v638, 7
        %v713 = vsel %vm693, %v694, %v712
        %v714 = vrot.slane %v639, 7
        %v715 = vsel %vm693, %v712, %v714
        %v716 = vrot.slane %v640, 7
        %v717 = vsel %vm693, %v694, %v716
        %v718 = vrot.slane %v641, 7
        %v719 = vsel %vm693, %v716, %v718
        %v720 = vrot.slane %v642, 7
        %v721 = vsel %vm693, %v694, %v720
        %v722 = vrot.slane %v643, 7
        %v723 = vsel %vm693, %v720, %v722
        %v724 = vrot.slane %v644, 7
        %v725 = vsel %vm693, %v694, %v724
        %v726 = vrot.slane %v645, 7
        %v727 = vsel %vm693, %v724, %v726
        %v728 = vrot.slane %v646, 7
        %v729 = vsel %vm693, %v694, %v728
        %v730 = vrot.slane %v647, 7
        %v731 = vsel %vm693, %v728, %v730
        %v732 = vrot.slane %v648, 7
        %v733 = vsel %vm693, %v694, %v732
        %v734 = vrot.slane %v649, 7
        %v735 = vsel %vm693, %v732, %v734
        %v736 = vrot.slane %v650, 7
        %v737 = vsel %vm693, %v694, %v736
        %v738 = vrot.slane %v651, 7
        %v739 = vsel %vm693, %v736, %v738
        %v740 = vrot.slane %v652, 7
        %v741 = vsel %vm693, %v694, %v740
        %v742 = vrot.slane %v653, 7
        %v743 = vsel %vm693, %v740, %v742
        %v744 = vrot.slane %v654, 7
        %v745 = vsel %vm693, %v694, %v744
        %v746 = vrot.slane %v655, 7
        %v747 = vsel %vm693, %v744, %v746
        %v748 = vrot.slane %v656, 7
        %v749 = vsel %vm693, %v694, %v748
        %v750 = vrot.slane %v657, 7
        %v751 = vsel %vm693, %v748, %v750
        %v752 = vrot.slane %v658, 7
        %v753 = vsel %vm693, %v694, %v752
        %v754 = vrot.slane %v659, 7
        %v755 = vsel %vm693, %v752, %v754
        %v787 = vld [vmem:[%s4] sm:$0x3]
        %v788 = vpack.c.bf16 %v695, %v695
        %v789 = vpack.c.bf16 %v699, %v697
        %v790 = vpack.c.bf16 %v703, %v701
        %v791 = vpack.c.bf16 %v707, %v705
        %v792 = vpack.c.bf16 %v711, %v709
        %v793 = vpack.c.bf16 %v715, %v713
        %v794 = vpack.c.bf16 %v719, %v717
        %v795 = vpack.c.bf16 %v723, %v721
        %v796 = vpack.c.bf16 %v727, %v725
        %v797 = vpack.c.bf16 %v731, %v729
        %v798 = vpack.c.bf16 %v735, %v733
        %v799 = vpack.c.bf16 %v739, %v737
        %v800 = vpack.c.bf16 %v743, %v741
        %v801 = vpack.c.bf16 %v747, %v745
        %v802 = vpack.c.bf16 %v751, %v749
        %v803 = vpack.c.bf16 %v755, %v753
        %v805 = vsel %vm416, %v788, 0
        %v808 = vsel %vm416, %v789, 0
        %v811 = vsel %vm416, %v790, 0
        %v814 = vsel %vm416, %v791, 0
        %v817 = vsel %vm416, %v792, 0
        %v820 = vsel %vm416, %v793, 0
        %v823 = vsel %vm416, %v794, 0
        %v826 = vsel %vm416, %v795, 0
        %v829 = vsel %vm416, %v796, 0
        %v832 = vsel %vm416, %v797, 0
        %v835 = vsel %vm416, %v798, 0
        %v838 = vsel %vm416, %v799, 0
        %v841 = vsel %vm416, %v800, 0
        %v844 = vsel %vm416, %v801, 0
        %v847 = vsel %vm416, %v802, 0
        %v850 = vsel %vm416, %v803, 0
        %v853 = vsel %vm465, %v787, 0
        %855 = vmatprep.subr.bf16.mxu0 0
        %856 = vmatpush1.bf16.msra.mxu0 %v853
        %857 = vmatprep.subr.bf16.mxu0 0
        %858 = vmatpush1.bf16.msra.mxu0 0
        %859 = vmatprep.subr.bf16.mxu0 0
        %860 = vmatpush1.bf16.msra.mxu0 0
        %861 = vmatprep.subr.bf16.mxu0 0
        %862 = vmatpush1.bf16.msra.mxu0 0
        %863 = vmatprep.subr.bf16.mxu0 0
        %864 = vmatpush1.bf16.msra.mxu0 0
        %865 = vmatprep.subr.bf16.mxu0 0
        %866 = vmatpush1.bf16.msra.mxu0 0
        %867 = vmatprep.subr.bf16.mxu0 0
        %868 = vmatpush1.bf16.msra.mxu0 0
        %869 = vmatprep.subr.bf16.mxu0 0
        %870 = vmatpush1.bf16.msra.mxu0 0
        %871 = vmatprep.subr.bf16.mxu0 0
        %872 = vmatpush1.bf16.msra.mxu0 0
        %873 = vmatprep.subr.bf16.mxu0 0
        %874 = vmatpush1.bf16.msra.mxu0 0
        %875 = vmatprep.subr.bf16.mxu0 0
        %876 = vmatpush1.bf16.msra.mxu0 0
        %877 = vmatprep.subr.bf16.mxu0 0
        %878 = vmatpush1.bf16.msra.mxu0 0
        %879 = vmatprep.subr.bf16.mxu0 0
        %880 = vmatpush1.bf16.msra.mxu0 0
        %881 = vmatprep.subr.bf16.mxu0 0
        %882 = vmatpush1.bf16.msra.mxu0 0
        %883 = vmatprep.subr.bf16.mxu0 0
        %884 = vmatpush1.bf16.msra.mxu0 0
        %885 = vmatprep.subr.bf16.mxu0 0
        %886 = vmatpush1.bf16.msra.mxu0 0
        %887 = vmatprep.mubr.bf16.mxu0 0
        %888 = vmatmul.mubr.bf16.gmra.mrb[0].mxu0 %v805
        %v889 = vpop.f32.mrb[0].mxu0
        %v890 = vadd.f32 0.0, %v889
        %v891 = vpop.f32.mrb[0].mxu0
        %v892 = vpop.f32.mrb[0].mxu0
        %v893 = vadd.f32 0.0, %v892
        %v894 = vpop.f32.mrb[0].mxu0
        %895 = vmatprep.mubr.bf16.mxu0 0
        %896 = vmatmul.mubr.bf16.gmra.mrb[0].mxu0 %v808
        %v897 = vpop.f32.mrb[0].mxu0
        %v898 = vadd.f32 0.0, %v897
        %v899 = vpop.f32.mrb[0].mxu0
        %v900 = vpop.f32.mrb[0].mxu0
        %v901 = vadd.f32 0.0, %v900
        %v902 = vpop.f32.mrb[0].mxu0
        %903 = vmatprep.mubr.bf16.mxu0 0
        %904 = vmatmul.mubr.bf16.gmra.mrb[0].mxu0 %v811
        %v905 = vpop.f32.mrb[0].mxu0
        %v906 = vadd.f32 0.0, %v905
        %v907 = vpop.f32.mrb[0].mxu0
        %v908 = vpop.f32.mrb[0].mxu0
        %v909 = vadd.f32 0.0, %v908
        %v910 = vpop.f32.mrb[0].mxu0
        %911 = vmatprep.mubr.bf16.mxu0 0
        %912 = vmatmul.mubr.bf16.gmra.mrb[0].mxu0 %v814
        %v913 = vpop.f32.mrb[0].mxu0
        %v914 = vadd.f32 0.0, %v913
        %v915 = vpop.f32.mrb[0].mxu0
        %v916 = vpop.f32.mrb[0].mxu0
        %v917 = vadd.f32 0.0, %v916
        %v918 = vpop.f32.mrb[0].mxu0
        %919 = vmatprep.mubr.bf16.mxu0 0
        %920 = vmatmul.mubr.bf16.gmra.mrb[0].mxu0 %v817
        %v921 = vpop.f32.mrb[0].mxu0
        %v922 = vadd.f32 0.0, %v921
        %v923 = vpop.f32.mrb[0].mxu0
        %v924 = vpop.f32.mrb[0].mxu0
        %v925 = vadd.f32 0.0, %v924
        %v926 = vpop.f32.mrb[0].mxu0
        %927 = vmatprep.mubr.bf16.mxu0 0
        %928 = vmatmul.mubr.bf16.gmra.mrb[0].mxu0 %v820
        %v929 = vpop.f32.mrb[0].mxu0
        %v930 = vadd.f32 0.0, %v929
        %v931 = vpop.f32.mrb[0].mxu0
        %v932 = vpop.f32.mrb[0].mxu0
        %v933 = vadd.f32 0.0, %v932
        %v934 = vpop.f32.mrb[0].mxu0
        %935 = vmatprep.mubr.bf16.mxu0 0
        %936 = vmatmul.mubr.bf16.gmra.mrb[0].mxu0 %v823
        %v937 = vpop.f32.mrb[0].mxu0
        %v938 = vadd.f32 0.0, %v937
        %v939 = vpop.f32.mrb[0].mxu0
        %v940 = vpop.f32.mrb[0].mxu0
        %v941 = vadd.f32 0.0, %v940
        %v942 = vpop.f32.mrb[0].mxu0
        %943 = vmatprep.mubr.bf16.mxu0 0
        %944 = vmatmul.mubr.bf16.gmra.mrb[0].mxu0 %v826
        %v945 = vpop.f32.mrb[0].mxu0
        %v946 = vadd.f32 0.0, %v945
        %v947 = vpop.f32.mrb[0].mxu0
        %v948 = vpop.f32.mrb[0].mxu0
        %v949 = vadd.f32 0.0, %v948
        %v950 = vpop.f32.mrb[0].mxu0
        %951 = vmatprep.mubr.bf16.mxu0 0
        %952 = vmatmul.mubr.bf16.gmra.mrb[0].mxu0 %v829
        %v953 = vpop.f32.mrb[0].mxu0
        %v954 = vadd.f32 0.0, %v953
        %v955 = vpop.f32.mrb[0].mxu0
        %v956 = vpop.f32.mrb[0].mxu0
        %v957 = vadd.f32 0.0, %v956
        %v958 = vpop.f32.mrb[0].mxu0
        %959 = vmatprep.mubr.bf16.mxu0 0
        %960 = vmatmul.mubr.bf16.gmra.mrb[0].mxu0 %v832
        %v961 = vpop.f32.mrb[0].mxu0
        %v962 = vadd.f32 0.0, %v961
        %v963 = vpop.f32.mrb[0].mxu0
        %v964 = vpop.f32.mrb[0].mxu0
        %v965 = vadd.f32 0.0, %v964
        %v966 = vpop.f32.mrb[0].mxu0
        %967 = vmatprep.mubr.bf16.mxu0 0
        %968 = vmatmul.mubr.bf16.gmra.mrb[0].mxu0 %v835
        %v969 = vpop.f32.mrb[0].mxu0
        %v970 = vadd.f32 0.0, %v969
        %v971 = vpop.f32.mrb[0].mxu0
        %v972 = vpop.f32.mrb[0].mxu0
        %v973 = vadd.f32 0.0, %v972
        %v974 = vpop.f32.mrb[0].mxu0
        %975 = vmatprep.mubr.bf16.mxu0 0
        %976 = vmatmul.mubr.bf16.gmra.mrb[0].mxu0 %v838
        %v977 = vpop.f32.mrb[0].mxu0
        %v978 = vadd.f32 0.0, %v977
        %v979 = vpop.f32.mrb[0].mxu0
        %v980 = vpop.f32.mrb[0].mxu0
        %v981 = vadd.f32 0.0, %v980
        %v982 = vpop.f32.mrb[0].mxu0
        %983 = vmatprep.mubr.bf16.mxu0 0
        %984 = vmatmul.mubr.bf16.gmra.mrb[0].mxu0 %v841
        %v985 = vpop.f32.mrb[0].mxu0
        %v986 = vadd.f32 0.0, %v985
        %v987 = vpop.f32.mrb[0].mxu0
        %v988 = vpop.f32.mrb[0].mxu0
        %v989 = vadd.f32 0.0, %v988
        %v990 = vpop.f32.mrb[0].mxu0
        %991 = vmatprep.mubr.bf16.mxu0 0
        %992 = vmatmul.mubr.bf16.gmra.mrb[0].mxu0 %v844
        %v993 = vpop.f32.mrb[0].mxu0
        %v994 = vadd.f32 0.0, %v993
        %v995 = vpop.f32.mrb[0].mxu0
        %v996 = vpop.f32.mrb[0].mxu0
        %v997 = vadd.f32 0.0, %v996
        %v998 = vpop.f32.mrb[0].mxu0
        %999 = vmatprep.mubr.bf16.mxu0 0
        %1000 = vmatmul.mubr.bf16.gmra.mrb[0].mxu0 %v847
        %v1001 = vpop.f32.mrb[0].mxu0
        %v1002 = vadd.f32 0.0, %v1001
        %v1003 = vpop.f32.mrb[0].mxu0
        %v1004 = vpop.f32.mrb[0].mxu0
        %v1005 = vadd.f32 0.0, %v1004
        %v1006 = vpop.f32.mrb[0].mxu0
        %1007 = vmatprep.mubr.bf16.mxu0 0
        %1008 = vmatmul.mubr.bf16.gmra.mrb[0].mxu0 %v850
        %v1009 = vpop.f32.mrb[0].mxu0
        %v1010 = vadd.f32 0.0, %v1009
        %v1011 = vpop.f32.mrb[0].mxu0
        %v1012 = vpop.f32.mrb[0].mxu0
        %v1013 = vadd.f32 0.0, %v1012
        %v1014 = vpop.f32.mrb[0].mxu0
        %1015 = vdwg.mxu0
        %v1017 = vsel %vm465, %v391, 0
        %1019 = vmatprep.subr.bf16.mxu0 0
        %1020 = vmatpush1.bf16.msra.mxu0 %v1017
        %1021 = vmatprep.subr.bf16.mxu0 0
        %1022 = vmatpush1.bf16.msra.mxu0 0
        %1023 = vmatprep.subr.bf16.mxu0 0
        %1024 = vmatpush1.bf16.msra.mxu0 0
        %1025 = vmatprep.subr.bf16.mxu0 0
        %1026 = vmatpush1.bf16.msra.mxu0 0
        %1027 = vmatprep.subr.bf16.mxu0 0
        %1028 = vmatpush1.bf16.msra.mxu0 0
        %1029 = vmatprep.subr.bf16.mxu0 0
        %1030 = vmatpush1.bf16.msra.mxu0 0
        %1031 = vmatprep.subr.bf16.mxu0 0
        %1032 = vmatpush1.bf16.msra.mxu0 0
        %1033 = vmatprep.subr.bf16.mxu0 0
        %1034 = vmatpush1.bf16.msra.mxu0 0
        %1035 = vmatprep.subr.bf16.mxu0 0
        %1036 = vmatpush1.bf16.msra.mxu0 0
        %1037 = vmatprep.subr.bf16.mxu0 0
        %1038 = vmatpush1.bf16.msra.mxu0 0
        %1039 = vmatprep.subr.bf16.mxu0 0
        %1040 = vmatpush1.bf16.msra.mxu0 0
        %1041 = vmatprep.subr.bf16.mxu0 0
        %1042 = vmatpush1.bf16.msra.mxu0 0
        %1043 = vmatprep.subr.bf16.mxu0 0
        %1044 = vmatpush1.bf16.msra.mxu0 0
        %1045 = vmatprep.subr.bf16.mxu0 0
        %1046 = vmatpush1.bf16.msra.mxu0 0
        %1047 = vmatprep.subr.bf16.mxu0 0
        %1048 = vmatpush1.bf16.msra.mxu0 0
        %1049 = vmatprep.subr.bf16.mxu0 0
        %1050 = vmatpush1.bf16.msra.mxu0 0
        %1051 = vmatprep.mubr.bf16.mxu0 0
        %1052 = vmatmul.mubr.bf16.gmra.mrb[0].mxu0 %v418
        %v1053 = vpop.f32.mrb[0].mxu0
        %v1054 = vadd.f32 %v890, %v1053
        %v1055 = vpop.f32.mrb[0].mxu0
        %v1056 = vpop.f32.mrb[0].mxu0
        %v1057 = vadd.f32 %v893, %v1056
        %v1058 = vpop.f32.mrb[0].mxu0
        %1059 = vmatprep.mubr.bf16.mxu0 0
        %1060 = vmatmul.mubr.bf16.gmra.mrb[0].mxu0 %v421
        %v1061 = vpop.f32.mrb[0].mxu0
        %v1062 = vadd.f32 %v898, %v1061
        %v1063 = vpop.f32.mrb[0].mxu0
        %v1064 = vpop.f32.mrb[0].mxu0
        %v1065 = vadd.f32 %v901, %v1064
        %v1066 = vpop.f32.mrb[0].mxu0
        %1067 = vmatprep.mubr.bf16.mxu0 0
        %1068 = vmatmul.mubr.bf16.gmra.mrb[0].mxu0 %v424
        %v1069 = vpop.f32.mrb[0].mxu0
        %v1070 = vadd.f32 %v906, %v1069
        %v1071 = vpop.f32.mrb[0].mxu0
        %v1072 = vpop.f32.mrb[0].mxu0
        %v1073 = vadd.f32 %v909, %v1072
        %v1074 = vpop.f32.mrb[0].mxu0
        %1075 = vmatprep.mubr.bf16.mxu0 0
        %1076 = vmatmul.mubr.bf16.gmra.mrb[0].mxu0 %v427
        %v1077 = vpop.f32.mrb[0].mxu0
        %v1078 = vadd.f32 %v914, %v1077
        %v1079 = vpop.f32.mrb[0].mxu0
        %v1080 = vpop.f32.mrb[0].mxu0
        %v1081 = vadd.f32 %v917, %v1080
        %v1082 = vpop.f32.mrb[0].mxu0
        %1083 = vmatprep.mubr.bf16.mxu0 0
        %1084 = vmatmul.mubr.bf16.gmra.mrb[0].mxu0 %v430
        %v1085 = vpop.f32.mrb[0].mxu0
        %v1086 = vadd.f32 %v922, %v1085
        %v1087 = vpop.f32.mrb[0].mxu0
        %v1088 = vpop.f32.mrb[0].mxu0
        %v1089 = vadd.f32 %v925, %v1088
        %v1090 = vpop.f32.mrb[0].mxu0
        %1091 = vmatprep.mubr.bf16.mxu0 0
        %1092 = vmatmul.mubr.bf16.gmra.mrb[0].mxu0 %v433
        %v1093 = vpop.f32.mrb[0].mxu0
        %v1094 = vadd.f32 %v930, %v1093
        %v1095 = vpop.f32.mrb[0].mxu0
        %v1096 = vpop.f32.mrb[0].mxu0
        %v1097 = vadd.f32 %v933, %v1096
        %v1098 = vpop.f32.mrb[0].mxu0
        %1099 = vmatprep.mubr.bf16.mxu0 0
        %1100 = vmatmul.mubr.bf16.gmra.mrb[0].mxu0 %v436
        %v1101 = vpop.f32.mrb[0].mxu0
        %v1102 = vadd.f32 %v938, %v1101
        %v1103 = vpop.f32.mrb[0].mxu0
        %v1104 = vpop.f32.mrb[0].mxu0
        %v1105 = vadd.f32 %v941, %v1104
        %v1106 = vpop.f32.mrb[0].mxu0
        %1107 = vmatprep.mubr.bf16.mxu0 0
        %1108 = vmatmul.mubr.bf16.gmra.mrb[0].mxu0 %v439
        %v1109 = vpop.f32.mrb[0].mxu0
        %v1110 = vadd.f32 %v946, %v1109
        %v1111 = vpop.f32.mrb[0].mxu0
        %v1112 = vpop.f32.mrb[0].mxu0
        %v1113 = vadd.f32 %v949, %v1112
        %v1114 = vpop.f32.mrb[0].mxu0
        %1115 = vmatprep.mubr.bf16.mxu0 0
        %1116 = vmatmul.mubr.bf16.gmra.mrb[0].mxu0 %v442
        %v1117 = vpop.f32.mrb[0].mxu0
        %v1118 = vadd.f32 %v954, %v1117
        %v1119 = vpop.f32.mrb[0].mxu0
        %v1120 = vpop.f32.mrb[0].mxu0
        %v1121 = vadd.f32 %v957, %v1120
        %v1122 = vpop.f32.mrb[0].mxu0
        %1123 = vmatprep.mubr.bf16.mxu0 0
        %1124 = vmatmul.mubr.bf16.gmra.mrb[0].mxu0 %v445
        %v1125 = vpop.f32.mrb[0].mxu0
        %v1126 = vadd.f32 %v962, %v1125
        %v1127 = vpop.f32.mrb[0].mxu0
        %v1128 = vpop.f32.mrb[0].mxu0
        %v1129 = vadd.f32 %v965, %v1128
        %v1130 = vpop.f32.mrb[0].mxu0
        %1131 = vmatprep.mubr.bf16.mxu0 0
        %1132 = vmatmul.mubr.bf16.gmra.mrb[0].mxu0 %v448
        %v1133 = vpop.f32.mrb[0].mxu0
        %v1134 = vadd.f32 %v970, %v1133
        %v1135 = vpop.f32.mrb[0].mxu0
        %v1136 = vpop.f32.mrb[0].mxu0
        %v1137 = vadd.f32 %v973, %v1136
        %v1138 = vpop.f32.mrb[0].mxu0
        %1139 = vmatprep.mubr.bf16.mxu0 0
        %1140 = vmatmul.mubr.bf16.gmra.mrb[0].mxu0 %v451
        %v1141 = vpop.f32.mrb[0].mxu0
        %v1142 = vadd.f32 %v978, %v1141
        %v1143 = vpop.f32.mrb[0].mxu0
        %v1144 = vpop.f32.mrb[0].mxu0
        %v1145 = vadd.f32 %v981, %v1144
        %v1146 = vpop.f32.mrb[0].mxu0
        %1147 = vmatprep.mubr.bf16.mxu0 0
        %1148 = vmatmul.mubr.bf16.gmra.mrb[0].mxu0 %v454
        %v1149 = vpop.f32.mrb[0].mxu0
        %v1150 = vadd.f32 %v986, %v1149
        %v1151 = vpop.f32.mrb[0].mxu0
        %v1152 = vpop.f32.mrb[0].mxu0
        %v1153 = vadd.f32 %v989, %v1152
        %v1154 = vpop.f32.mrb[0].mxu0
        %1155 = vmatprep.mubr.bf16.mxu0 0
        %1156 = vmatmul.mubr.bf16.gmra.mrb[0].mxu0 %v457
        %v1157 = vpop.f32.mrb[0].mxu0
        %v1158 = vadd.f32 %v994, %v1157
        %v1159 = vpop.f32.mrb[0].mxu0
        %v1160 = vpop.f32.mrb[0].mxu0
        %v1161 = vadd.f32 %v997, %v1160
        %v1162 = vpop.f32.mrb[0].mxu0
        %1163 = vmatprep.mubr.bf16.mxu0 0
        %1164 = vmatmul.mubr.bf16.gmra.mrb[0].mxu0 %v460
        %v1165 = vpop.f32.mrb[0].mxu0
        %v1166 = vadd.f32 %v1002, %v1165
        %v1167 = vpop.f32.mrb[0].mxu0
        %v1168 = vpop.f32.mrb[0].mxu0
        %v1169 = vadd.f32 %v1005, %v1168
        %v1170 = vpop.f32.mrb[0].mxu0
        %1171 = vmatprep.mubr.bf16.mxu0 0
        %1172 = vmatmul.mubr.bf16.gmra.mrb[0].mxu0 %v463
        %v1173 = vpop.f32.mrb[0].mxu0
        %v1174 = vadd.f32 %v1010, %v1173
        %v1175 = vpop.f32.mrb[0].mxu0
        %v1176 = vpop.f32.mrb[0].mxu0
        %v1177 = vadd.f32 %v1013, %v1176
        %v1178 = vpop.f32.mrb[0].mxu0
        %1179 = vdwg.mxu0
        %s1180 = scalar_lea.vmem %s4, 2
        %v1181 = vld [vmem:[%s1180] sm:$0x3]
        %v1182 = vpack.c.bf16 0.0, 0.0
        %v1183 = vpack.c.bf16 %v631, %v630
        %v1184 = vpack.c.bf16 %v633, %v632
        %v1185 = vpack.c.bf16 %v635, %v634
        %v1186 = vpack.c.bf16 %v637, %v636
        %v1187 = vpack.c.bf16 %v639, %v638
        %v1188 = vpack.c.bf16 %v641, %v640
        %v1189 = vpack.c.bf16 %v643, %v642
        %v1190 = vpack.c.bf16 %v645, %v644
        %v1191 = vpack.c.bf16 %v647, %v646
        %v1192 = vpack.c.bf16 %v649, %v648
        %v1193 = vpack.c.bf16 %v651, %v650
        %v1194 = vpack.c.bf16 %v653, %v652
        %v1195 = vpack.c.bf16 %v655, %v654
        %v1196 = vpack.c.bf16 %v657, %v656
        %v1197 = vpack.c.bf16 %v659, %v658
        %v1199 = vsel %vm416, %v1182, 0
        %v1202 = vsel %vm416, %v1183, 0
        %v1205 = vsel %vm416, %v1184, 0
        %v1208 = vsel %vm416, %v1185, 0
        %v1211 = vsel %vm416, %v1186, 0
        %v1214 = vsel %vm416, %v1187, 0
        %v1217 = vsel %vm416, %v1188, 0
        %v1220 = vsel %vm416, %v1189, 0
        %v1223 = vsel %vm416, %v1190, 0
        %v1226 = vsel %vm416, %v1191, 0
        %v1229 = vsel %vm416, %v1192, 0
        %v1232 = vsel %vm416, %v1193, 0
        %v1235 = vsel %vm416, %v1194, 0
        %v1238 = vsel %vm416, %v1195, 0
        %v1241 = vsel %vm416, %v1196, 0
        %v1244 = vsel %vm416, %v1197, 0
        %v1247 = vsel %vm465, %v1181, 0
        %1249 = vmatprep.subr.bf16.mxu0 0
        %1250 = vmatpush1.bf16.msra.mxu0 %v1247
        %1251 = vmatprep.subr.bf16.mxu0 0
        %1252 = vmatpush1.bf16.msra.mxu0 0
        %1253 = vmatprep.subr.bf16.mxu0 0
        %1254 = vmatpush1.bf16.msra.mxu0 0
        %1255 = vmatprep.subr.bf16.mxu0 0
        %1256 = vmatpush1.bf16.msra.mxu0 0
        %1257 = vmatprep.subr.bf16.mxu0 0
        %1258 = vmatpush1.bf16.msra.mxu0 0
        %1259 = vmatprep.subr.bf16.mxu0 0
        %1260 = vmatpush1.bf16.msra.mxu0 0
        %1261 = vmatprep.subr.bf16.mxu0 0
        %1262 = vmatpush1.bf16.msra.mxu0 0
        %1263 = vmatprep.subr.bf16.mxu0 0
        %1264 = vmatpush1.bf16.msra.mxu0 0
        %1265 = vmatprep.subr.bf16.mxu0 0
        %1266 = vmatpush1.bf16.msra.mxu0 0
        %1267 = vmatprep.subr.bf16.mxu0 0
        %1268 = vmatpush1.bf16.msra.mxu0 0
        %1269 = vmatprep.subr.bf16.mxu0 0
        %1270 = vmatpush1.bf16.msra.mxu0 0
        %1271 = vmatprep.subr.bf16.mxu0 0
        %1272 = vmatpush1.bf16.msra.mxu0 0
        %1273 = vmatprep.subr.bf16.mxu0 0
        %1274 = vmatpush1.bf16.msra.mxu0 0
        %1275 = vmatprep.subr.bf16.mxu0 0
        %1276 = vmatpush1.bf16.msra.mxu0 0
        %1277 = vmatprep.subr.bf16.mxu0 0
        %1278 = vmatpush1.bf16.msra.mxu0 0
        %1279 = vmatprep.subr.bf16.mxu0 0
        %1280 = vmatpush1.bf16.msra.mxu0 0
        %1281 = vmatprep.mubr.bf16.mxu0 0
        %1282 = vmatmul.mubr.bf16.gmra.mrb[0].mxu0 %v1199
        %v1283 = vpop.f32.mrb[0].mxu0
        %v1284 = vadd.f32 0.0, %v1283
        %v1285 = vpop.f32.mrb[0].mxu0
        %v1286 = vpop.f32.mrb[0].mxu0
        %v1287 = vadd.f32 0.0, %v1286
        %v1288 = vpop.f32.mrb[0].mxu0
        %1289 = vmatprep.mubr.bf16.mxu0 0
        %1290 = vmatmul.mubr.bf16.gmra.mrb[0].mxu0 %v1202
        %v1291 = vpop.f32.mrb[0].mxu0
        %v1292 = vadd.f32 0.0, %v1291
        %v1293 = vpop.f32.mrb[0].mxu0
        %v1294 = vpop.f32.mrb[0].mxu0
        %v1295 = vadd.f32 0.0, %v1294
        %v1296 = vpop.f32.mrb[0].mxu0
        %1297 = vmatprep.mubr.bf16.mxu0 0
        %1298 = vmatmul.mubr.bf16.gmra.mrb[0].mxu0 %v1205
        %v1299 = vpop.f32.mrb[0].mxu0
        %v1300 = vadd.f32 0.0, %v1299
        %v1301 = vpop.f32.mrb[0].mxu0
        %v1302 = vpop.f32.mrb[0].mxu0
        %v1303 = vadd.f32 0.0, %v1302
        %v1304 = vpop.f32.mrb[0].mxu0
        %1305 = vmatprep.mubr.bf16.mxu0 0
        %1306 = vmatmul.mubr.bf16.gmra.mrb[0].mxu0 %v1208
        %v1307 = vpop.f32.mrb[0].mxu0
        %v1308 = vadd.f32 0.0, %v1307
        %v1309 = vpop.f32.mrb[0].mxu0
        %v1310 = vpop.f32.mrb[0].mxu0
        %v1311 = vadd.f32 0.0, %v1310
        %v1312 = vpop.f32.mrb[0].mxu0
        %1313 = vmatprep.mubr.bf16.mxu0 0
        %1314 = vmatmul.mubr.bf16.gmra.mrb[0].mxu0 %v1211
        %v1315 = vpop.f32.mrb[0].mxu0
        %v1316 = vadd.f32 0.0, %v1315
        %v1317 = vpop.f32.mrb[0].mxu0
        %v1318 = vpop.f32.mrb[0].mxu0
        %v1319 = vadd.f32 0.0, %v1318
        %v1320 = vpop.f32.mrb[0].mxu0
        %1321 = vmatprep.mubr.bf16.mxu0 0
        %1322 = vmatmul.mubr.bf16.gmra.mrb[0].mxu0 %v1214
        %v1323 = vpop.f32.mrb[0].mxu0
        %v1324 = vadd.f32 0.0, %v1323
        %v1325 = vpop.f32.mrb[0].mxu0
        %v1326 = vpop.f32.mrb[0].mxu0
        %v1327 = vadd.f32 0.0, %v1326
        %v1328 = vpop.f32.mrb[0].mxu0
        %1329 = vmatprep.mubr.bf16.mxu0 0
        %1330 = vmatmul.mubr.bf16.gmra.mrb[0].mxu0 %v1217
        %v1331 = vpop.f32.mrb[0].mxu0
        %v1332 = vadd.f32 0.0, %v1331
        %v1333 = vpop.f32.mrb[0].mxu0
        %v1334 = vpop.f32.mrb[0].mxu0
        %v1335 = vadd.f32 0.0, %v1334
        %v1336 = vpop.f32.mrb[0].mxu0
        %1337 = vmatprep.mubr.bf16.mxu0 0
        %1338 = vmatmul.mubr.bf16.gmra.mrb[0].mxu0 %v1220
        %v1339 = vpop.f32.mrb[0].mxu0
        %v1340 = vadd.f32 0.0, %v1339
        %v1341 = vpop.f32.mrb[0].mxu0
        %v1342 = vpop.f32.mrb[0].mxu0
        %v1343 = vadd.f32 0.0, %v1342
        %v1344 = vpop.f32.mrb[0].mxu0
        %1345 = vmatprep.mubr.bf16.mxu0 0
        %1346 = vmatmul.mubr.bf16.gmra.mrb[0].mxu0 %v1223
        %v1347 = vpop.f32.mrb[0].mxu0
        %v1348 = vadd.f32 0.0, %v1347
        %v1349 = vpop.f32.mrb[0].mxu0
        %v1350 = vpop.f32.mrb[0].mxu0
        %v1351 = vadd.f32 0.0, %v1350
        %v1352 = vpop.f32.mrb[0].mxu0
        %1353 = vmatprep.mubr.bf16.mxu0 0
        %1354 = vmatmul.mubr.bf16.gmra.mrb[0].mxu0 %v1226
        %v1355 = vpop.f32.mrb[0].mxu0
        %v1356 = vadd.f32 0.0, %v1355
        %v1357 = vpop.f32.mrb[0].mxu0
        %v1358 = vpop.f32.mrb[0].mxu0
        %v1359 = vadd.f32 0.0, %v1358
        %v1360 = vpop.f32.mrb[0].mxu0
        %1361 = vmatprep.mubr.bf16.mxu0 0
        %1362 = vmatmul.mubr.bf16.gmra.mrb[0].mxu0 %v1229
        %v1363 = vpop.f32.mrb[0].mxu0
        %v1364 = vadd.f32 0.0, %v1363
        %v1365 = vpop.f32.mrb[0].mxu0
        %v1366 = vpop.f32.mrb[0].mxu0
        %v1367 = vadd.f32 0.0, %v1366
        %v1368 = vpop.f32.mrb[0].mxu0
        %1369 = vmatprep.mubr.bf16.mxu0 0
        %1370 = vmatmul.mubr.bf16.gmra.mrb[0].mxu0 %v1232
        %v1371 = vpop.f32.mrb[0].mxu0
        %v1372 = vadd.f32 0.0, %v1371
        %v1373 = vpop.f32.mrb[0].mxu0
        %v1374 = vpop.f32.mrb[0].mxu0
        %v1375 = vadd.f32 0.0, %v1374
        %v1376 = vpop.f32.mrb[0].mxu0
        %1377 = vmatprep.mubr.bf16.mxu0 0
        %1378 = vmatmul.mubr.bf16.gmra.mrb[0].mxu0 %v1235
        %v1379 = vpop.f32.mrb[0].mxu0
        %v1380 = vadd.f32 0.0, %v1379
        %v1381 = vpop.f32.mrb[0].mxu0
        %v1382 = vpop.f32.mrb[0].mxu0
        %v1383 = vadd.f32 0.0, %v1382
        %v1384 = vpop.f32.mrb[0].mxu0
        %1385 = vmatprep.mubr.bf16.mxu0 0
        %1386 = vmatmul.mubr.bf16.gmra.mrb[0].mxu0 %v1238
        %v1387 = vpop.f32.mrb[0].mxu0
        %v1388 = vadd.f32 0.0, %v1387
        %v1389 = vpop.f32.mrb[0].mxu0
        %v1390 = vpop.f32.mrb[0].mxu0
        %v1391 = vadd.f32 0.0, %v1390
        %v1392 = vpop.f32.mrb[0].mxu0
        %1393 = vmatprep.mubr.bf16.mxu0 0
        %1394 = vmatmul.mubr.bf16.gmra.mrb[0].mxu0 %v1241
        %v1395 = vpop.f32.mrb[0].mxu0
        %v1396 = vadd.f32 0.0, %v1395
        %v1397 = vpop.f32.mrb[0].mxu0
        %v1398 = vpop.f32.mrb[0].mxu0
        %v1399 = vadd.f32 0.0, %v1398
        %v1400 = vpop.f32.mrb[0].mxu0
        %1401 = vmatprep.mubr.bf16.mxu0 0
        %1402 = vmatmul.mubr.bf16.gmra.mrb[0].mxu0 %v1244
        %v1403 = vpop.f32.mrb[0].mxu0
        %v1404 = vadd.f32 0.0, %v1403
        %v1405 = vpop.f32.mrb[0].mxu0
        %v1406 = vpop.f32.mrb[0].mxu0
        %v1407 = vadd.f32 0.0, %v1406
        %v1408 = vpop.f32.mrb[0].mxu0
        %1409 = vdwg.mxu0
        %v1410 = vadd.f32 %v1054, %v1284
        %v1411 = vadd.f32 %v1057, %v1287
        %v1412 = vadd.f32 %v1062, %v1292
        %v1413 = vadd.f32 %v1065, %v1295
        %v1414 = vadd.f32 %v1070, %v1300
        %v1415 = vadd.f32 %v1073, %v1303
        %v1416 = vadd.f32 %v1078, %v1308
        %v1417 = vadd.f32 %v1081, %v1311
        %v1418 = vadd.f32 %v1086, %v1316
        %v1419 = vadd.f32 %v1089, %v1319
        %v1420 = vadd.f32 %v1094, %v1324
        %v1421 = vadd.f32 %v1097, %v1327
        %v1422 = vadd.f32 %v1102, %v1332
        %v1423 = vadd.f32 %v1105, %v1335
        %v1424 = vadd.f32 %v1110, %v1340
        %v1425 = vadd.f32 %v1113, %v1343
        %v1426 = vadd.f32 %v1118, %v1348
        %v1427 = vadd.f32 %v1121, %v1351
        %v1428 = vadd.f32 %v1126, %v1356
        %v1429 = vadd.f32 %v1129, %v1359
        %v1430 = vadd.f32 %v1134, %v1364
        %v1431 = vadd.f32 %v1137, %v1367
        %v1432 = vadd.f32 %v1142, %v1372
        %v1433 = vadd.f32 %v1145, %v1375
        %v1434 = vadd.f32 %v1150, %v1380
        %v1435 = vadd.f32 %v1153, %v1383
        %v1436 = vadd.f32 %v1158, %v1388
        %v1437 = vadd.f32 %v1161, %v1391
        %v1438 = vadd.f32 %v1166, %v1396
        %v1439 = vadd.f32 %v1169, %v1399
        %v1440 = vadd.f32 %v1174, %v1404
        %v1441 = vadd.f32 %v1177, %v1407
        %vm1442 = vcmask 1046528
        %v1443 = vrot.slane 0.0, 1
        %v1444 = vsel %vm1442, %v1443, %v1443
        %v1445 = vrot.slane %v630, 1
        %v1446 = vrot.slane %v631, 1
        %v1447 = vsel %vm1442, %v1445, %v1446
        %v1448 = vsel %vm1442, %v1446, %v1443
        %v1449 = vrot.slane %v632, 1
        %v1450 = vrot.slane %v633, 1
        %v1451 = vsel %vm1442, %v1449, %v1450
        %v1452 = vsel %vm1442, %v1450, %v1443
        %v1453 = vrot.slane %v634, 1
        %v1454 = vrot.slane %v635, 1
        %v1455 = vsel %vm1442, %v1453, %v1454
        %v1456 = vsel %vm1442, %v1454, %v1443
        %v1457 = vrot.slane %v636, 1
        %v1458 = vrot.slane %v637, 1
        %v1459 = vsel %vm1442, %v1457, %v1458
        %v1460 = vsel %vm1442, %v1458, %v1443
        %v1461 = vrot.slane %v638, 1
        %v1462 = vrot.slane %v639, 1
        %v1463 = vsel %vm1442, %v1461, %v1462
        %v1464 = vsel %vm1442, %v1462, %v1443
        %v1465 = vrot.slane %v640, 1
        %v1466 = vrot.slane %v641, 1
        %v1467 = vsel %vm1442, %v1465, %v1466
        %v1468 = vsel %vm1442, %v1466, %v1443
        %v1469 = vrot.slane %v642, 1
        %v1470 = vrot.slane %v643, 1
        %v1471 = vsel %vm1442, %v1469, %v1470
        %v1472 = vsel %vm1442, %v1470, %v1443
        %v1473 = vrot.slane %v644, 1
        %v1474 = vrot.slane %v645, 1
        %v1475 = vsel %vm1442, %v1473, %v1474
        %v1476 = vsel %vm1442, %v1474, %v1443
        %v1477 = vrot.slane %v646, 1
        %v1478 = vrot.slane %v647, 1
        %v1479 = vsel %vm1442, %v1477, %v1478
        %v1480 = vsel %vm1442, %v1478, %v1443
        %v1481 = vrot.slane %v648, 1
        %v1482 = vrot.slane %v649, 1
        %v1483 = vsel %vm1442, %v1481, %v1482
        %v1484 = vsel %vm1442, %v1482, %v1443
        %v1485 = vrot.slane %v650, 1
        %v1486 = vrot.slane %v651, 1
        %v1487 = vsel %vm1442, %v1485, %v1486
        %v1488 = vsel %vm1442, %v1486, %v1443
        %v1489 = vrot.slane %v652, 1
        %v1490 = vrot.slane %v653, 1
        %v1491 = vsel %vm1442, %v1489, %v1490
        %v1492 = vsel %vm1442, %v1490, %v1443
        %v1493 = vrot.slane %v654, 1
        %v1494 = vrot.slane %v655, 1
        %v1495 = vsel %vm1442, %v1493, %v1494
        %v1496 = vsel %vm1442, %v1494, %v1443
        %v1497 = vrot.slane %v656, 1
        %v1498 = vrot.slane %v657, 1
        %v1499 = vsel %vm1442, %v1497, %v1498
        %v1500 = vsel %vm1442, %v1498, %v1443
        %v1501 = vrot.slane %v658, 1
        %v1502 = vrot.slane %v659, 1
        %v1503 = vsel %vm1442, %v1501, %v1502
        %v1504 = vsel %vm1442, %v1502, %v1443
        %s1536 = scalar_lea.vmem %s4, 4
        %v1537 = vld [vmem:[%s1536] sm:$0x3]
        %v1538 = vpack.c.bf16 %v1444, %v1444
        %v1539 = vpack.c.bf16 %v1448, %v1447
        %v1540 = vpack.c.bf16 %v1452, %v1451
        %v1541 = vpack.c.bf16 %v1456, %v1455
        %v1542 = vpack.c.bf16 %v1460, %v1459
        %v1543 = vpack.c.bf16 %v1464, %v1463
        %v1544 = vpack.c.bf16 %v1468, %v1467
        %v1545 = vpack.c.bf16 %v1472, %v1471
        %v1546 = vpack.c.bf16 %v1476, %v1475
        %v1547 = vpack.c.bf16 %v1480, %v1479
        %v1548 = vpack.c.bf16 %v1484, %v1483
        %v1549 = vpack.c.bf16 %v1488, %v1487
        %v1550 = vpack.c.bf16 %v1492, %v1491
        %v1551 = vpack.c.bf16 %v1496, %v1495
        %v1552 = vpack.c.bf16 %v1500, %v1499
        %v1553 = vpack.c.bf16 %v1504, %v1503
        %v1555 = vsel %vm416, %v1538, 0
        %v1558 = vsel %vm416, %v1539, 0
        %v1561 = vsel %vm416, %v1540, 0
        %v1564 = vsel %vm416, %v1541, 0
        %v1567 = vsel %vm416, %v1542, 0
        %v1570 = vsel %vm416, %v1543, 0
        %v1573 = vsel %vm416, %v1544, 0
        %v1576 = vsel %vm416, %v1545, 0
        %v1579 = vsel %vm416, %v1546, 0
        %v1582 = vsel %vm416, %v1547, 0
        %v1585 = vsel %vm416, %v1548, 0
        %v1588 = vsel %vm416, %v1549, 0
        %v1591 = vsel %vm416, %v1550, 0
        %v1594 = vsel %vm416, %v1551, 0
        %v1597 = vsel %vm416, %v1552, 0
        %v1600 = vsel %vm416, %v1553, 0
        %v1603 = vsel %vm465, %v1537, 0
        %1605 = vmatprep.subr.bf16.mxu0 0
        %1606 = vmatpush1.bf16.msra.mxu0 %v1603
        %1607 = vmatprep.subr.bf16.mxu0 0
        %1608 = vmatpush1.bf16.msra.mxu0 0
        %1609 = vmatprep.subr.bf16.mxu0 0
        %1610 = vmatpush1.bf16.msra.mxu0 0
        %1611 = vmatprep.subr.bf16.mxu0 0
        %1612 = vmatpush1.bf16.msra.mxu0 0
        %1613 = vmatprep.subr.bf16.mxu0 0
        %1614 = vmatpush1.bf16.msra.mxu0 0
        %1615 = vmatprep.subr.bf16.mxu0 0
        %1616 = vmatpush1.bf16.msra.mxu0 0
        %1617 = vmatprep.subr.bf16.mxu0 0
        %1618 = vmatpush1.bf16.msra.mxu0 0
        %1619 = vmatprep.subr.bf16.mxu0 0
        %1620 = vmatpush1.bf16.msra.mxu0 0
        %1621 = vmatprep.subr.bf16.mxu0 0
        %1622 = vmatpush1.bf16.msra.mxu0 0
        %1623 = vmatprep.subr.bf16.mxu0 0
        %1624 = vmatpush1.bf16.msra.mxu0 0
        %1625 = vmatprep.subr.bf16.mxu0 0
        %1626 = vmatpush1.bf16.msra.mxu0 0
        %1627 = vmatprep.subr.bf16.mxu0 0
        %1628 = vmatpush1.bf16.msra.mxu0 0
        %1629 = vmatprep.subr.bf16.mxu0 0
        %1630 = vmatpush1.bf16.msra.mxu0 0
        %1631 = vmatprep.subr.bf16.mxu0 0
        %1632 = vmatpush1.bf16.msra.mxu0 0
        %1633 = vmatprep.subr.bf16.mxu0 0
        %1634 = vmatpush1.bf16.msra.mxu0 0
        %1635 = vmatprep.subr.bf16.mxu0 0
        %1636 = vmatpush1.bf16.msra.mxu0 0
        %1637 = vmatprep.mubr.bf16.mxu0 0
        %1638 = vmatmul.mubr.bf16.gmra.mrb[0].mxu0 %v1555
        %v1639 = vpop.f32.mrb[0].mxu0
        %v1640 = vadd.f32 0.0, %v1639
        %v1641 = vpop.f32.mrb[0].mxu0
        %v1642 = vpop.f32.mrb[0].mxu0
        %v1643 = vadd.f32 0.0, %v1642
        %v1644 = vpop.f32.mrb[0].mxu0
        %1645 = vmatprep.mubr.bf16.mxu0 0
        %1646 = vmatmul.mubr.bf16.gmra.mrb[0].mxu0 %v1558
        %v1647 = vpop.f32.mrb[0].mxu0
        %v1648 = vadd.f32 0.0, %v1647
        %v1649 = vpop.f32.mrb[0].mxu0
        %v1650 = vpop.f32.mrb[0].mxu0
        %v1651 = vadd.f32 0.0, %v1650
        %v1652 = vpop.f32.mrb[0].mxu0
        %1653 = vmatprep.mubr.bf16.mxu0 0
        %1654 = vmatmul.mubr.bf16.gmra.mrb[0].mxu0 %v1561
        %v1655 = vpop.f32.mrb[0].mxu0
        %v1656 = vadd.f32 0.0, %v1655
        %v1657 = vpop.f32.mrb[0].mxu0
        %v1658 = vpop.f32.mrb[0].mxu0
        %v1659 = vadd.f32 0.0, %v1658
        %v1660 = vpop.f32.mrb[0].mxu0
        %1661 = vmatprep.mubr.bf16.mxu0 0
        %1662 = vmatmul.mubr.bf16.gmra.mrb[0].mxu0 %v1564
        %v1663 = vpop.f32.mrb[0].mxu0
        %v1664 = vadd.f32 0.0, %v1663
        %v1665 = vpop.f32.mrb[0].mxu0
        %v1666 = vpop.f32.mrb[0].mxu0
        %v1667 = vadd.f32 0.0, %v1666
        %v1668 = vpop.f32.mrb[0].mxu0
        %1669 = vmatprep.mubr.bf16.mxu0 0
        %1670 = vmatmul.mubr.bf16.gmra.mrb[0].mxu0 %v1567
        %v1671 = vpop.f32.mrb[0].mxu0
        %v1672 = vadd.f32 0.0, %v1671
        %v1673 = vpop.f32.mrb[0].mxu0
        %v1674 = vpop.f32.mrb[0].mxu0
        %v1675 = vadd.f32 0.0, %v1674
        %v1676 = vpop.f32.mrb[0].mxu0
        %1677 = vmatprep.mubr.bf16.mxu0 0
        %1678 = vmatmul.mubr.bf16.gmra.mrb[0].mxu0 %v1570
        %v1679 = vpop.f32.mrb[0].mxu0
        %v1680 = vadd.f32 0.0, %v1679
        %v1681 = vpop.f32.mrb[0].mxu0
        %v1682 = vpop.f32.mrb[0].mxu0
        %v1683 = vadd.f32 0.0, %v1682
        %v1684 = vpop.f32.mrb[0].mxu0
        %1685 = vmatprep.mubr.bf16.mxu0 0
        %1686 = vmatmul.mubr.bf16.gmra.mrb[0].mxu0 %v1573
        %v1687 = vpop.f32.mrb[0].mxu0
        %v1688 = vadd.f32 0.0, %v1687
        %v1689 = vpop.f32.mrb[0].mxu0
        %v1690 = vpop.f32.mrb[0].mxu0
        %v1691 = vadd.f32 0.0, %v1690
        %v1692 = vpop.f32.mrb[0].mxu0
        %1693 = vmatprep.mubr.bf16.mxu0 0
        %1694 = vmatmul.mubr.bf16.gmra.mrb[0].mxu0 %v1576
        %v1695 = vpop.f32.mrb[0].mxu0
        %v1696 = vadd.f32 0.0, %v1695
        %v1697 = vpop.f32.mrb[0].mxu0
        %v1698 = vpop.f32.mrb[0].mxu0
        %v1699 = vadd.f32 0.0, %v1698
        %v1700 = vpop.f32.mrb[0].mxu0
        %1701 = vmatprep.mubr.bf16.mxu0 0
        %1702 = vmatmul.mubr.bf16.gmra.mrb[0].mxu0 %v1579
        %v1703 = vpop.f32.mrb[0].mxu0
        %v1704 = vadd.f32 0.0, %v1703
        %v1705 = vpop.f32.mrb[0].mxu0
        %v1706 = vpop.f32.mrb[0].mxu0
        %v1707 = vadd.f32 0.0, %v1706
        %v1708 = vpop.f32.mrb[0].mxu0
        %1709 = vmatprep.mubr.bf16.mxu0 0
        %1710 = vmatmul.mubr.bf16.gmra.mrb[0].mxu0 %v1582
        %v1711 = vpop.f32.mrb[0].mxu0
        %v1712 = vadd.f32 0.0, %v1711
        %v1713 = vpop.f32.mrb[0].mxu0
        %v1714 = vpop.f32.mrb[0].mxu0
        %v1715 = vadd.f32 0.0, %v1714
        %v1716 = vpop.f32.mrb[0].mxu0
        %1717 = vmatprep.mubr.bf16.mxu0 0
        %1718 = vmatmul.mubr.bf16.gmra.mrb[0].mxu0 %v1585
        %v1719 = vpop.f32.mrb[0].mxu0
        %v1720 = vadd.f32 0.0, %v1719
        %v1721 = vpop.f32.mrb[0].mxu0
        %v1722 = vpop.f32.mrb[0].mxu0
        %v1723 = vadd.f32 0.0, %v1722
        %v1724 = vpop.f32.mrb[0].mxu0
        %1725 = vmatprep.mubr.bf16.mxu0 0
        %1726 = vmatmul.mubr.bf16.gmra.mrb[0].mxu0 %v1588
        %v1727 = vpop.f32.mrb[0].mxu0
        %v1728 = vadd.f32 0.0, %v1727
        %v1729 = vpop.f32.mrb[0].mxu0
        %v1730 = vpop.f32.mrb[0].mxu0
        %v1731 = vadd.f32 0.0, %v1730
        %v1732 = vpop.f32.mrb[0].mxu0
        %1733 = vmatprep.mubr.bf16.mxu0 0
        %1734 = vmatmul.mubr.bf16.gmra.mrb[0].mxu0 %v1591
        %v1735 = vpop.f32.mrb[0].mxu0
        %v1736 = vadd.f32 0.0, %v1735
        %v1737 = vpop.f32.mrb[0].mxu0
        %v1738 = vpop.f32.mrb[0].mxu0
        %v1739 = vadd.f32 0.0, %v1738
        %v1740 = vpop.f32.mrb[0].mxu0
        %1741 = vmatprep.mubr.bf16.mxu0 0
        %1742 = vmatmul.mubr.bf16.gmra.mrb[0].mxu0 %v1594
        %v1743 = vpop.f32.mrb[0].mxu0
        %v1744 = vadd.f32 0.0, %v1743
        %v1745 = vpop.f32.mrb[0].mxu0
        %v1746 = vpop.f32.mrb[0].mxu0
        %v1747 = vadd.f32 0.0, %v1746
        %v1748 = vpop.f32.mrb[0].mxu0
        %1749 = vmatprep.mubr.bf16.mxu0 0
        %1750 = vmatmul.mubr.bf16.gmra.mrb[0].mxu0 %v1597
        %v1751 = vpop.f32.mrb[0].mxu0
        %v1752 = vadd.f32 0.0, %v1751
        %v1753 = vpop.f32.mrb[0].mxu0
        %v1754 = vpop.f32.mrb[0].mxu0
        %v1755 = vadd.f32 0.0, %v1754
        %v1756 = vpop.f32.mrb[0].mxu0
        %1757 = vmatprep.mubr.bf16.mxu0 0
        %1758 = vmatmul.mubr.bf16.gmra.mrb[0].mxu0 %v1600
        %v1759 = vpop.f32.mrb[0].mxu0
        %v1760 = vadd.f32 0.0, %v1759
        %v1761 = vpop.f32.mrb[0].mxu0
        %v1762 = vpop.f32.mrb[0].mxu0
        %v1763 = vadd.f32 0.0, %v1762
        %v1764 = vpop.f32.mrb[0].mxu0
        %1765 = vdwg.mxu0
        %v1766 = vadd.f32 %v1410, %v1640
        %v1767 = vadd.f32 %v1411, %v1643
        %v1768 = vadd.f32 %v1412, %v1648
        %v1769 = vadd.f32 %v1413, %v1651
        %v1770 = vadd.f32 %v1414, %v1656
        %v1771 = vadd.f32 %v1415, %v1659
        %v1772 = vadd.f32 %v1416, %v1664
        %v1773 = vadd.f32 %v1417, %v1667
        %v1774 = vadd.f32 %v1418, %v1672
        %v1775 = vadd.f32 %v1419, %v1675
        %v1776 = vadd.f32 %v1420, %v1680
        %v1777 = vadd.f32 %v1421, %v1683
        %v1778 = vadd.f32 %v1422, %v1688
        %v1779 = vadd.f32 %v1423, %v1691
        %v1780 = vadd.f32 %v1424, %v1696
        %v1781 = vadd.f32 %v1425, %v1699
        %v1782 = vadd.f32 %v1426, %v1704
        %v1783 = vadd.f32 %v1427, %v1707
        %v1784 = vadd.f32 %v1428, %v1712
        %v1785 = vadd.f32 %v1429, %v1715
        %v1786 = vadd.f32 %v1430, %v1720
        %v1787 = vadd.f32 %v1431, %v1723
        %v1788 = vadd.f32 %v1432, %v1728
        %v1789 = vadd.f32 %v1433, %v1731
        %v1790 = vadd.f32 %v1434, %v1736
        %v1791 = vadd.f32 %v1435, %v1739
        %v1792 = vadd.f32 %v1436, %v1744
        %v1793 = vadd.f32 %v1437, %v1747
        %v1794 = vadd.f32 %v1438, %v1752
        %v1795 = vadd.f32 %v1439, %v1755
        %v1796 = vadd.f32 %v1440, %v1760
        %v1797 = vadd.f32 %v1441, %v1763
        %v1800 = vrot.slane %v660, 7
        %v1801 = vsel %vm693, %v694, %v1800
        %v1802 = vrot.slane %v661, 7
        %v1803 = vsel %vm693, %v1800, %v1802
        %s1806 = scalar_lea.vmem %s4, 6
        %v1807 = vld [vmem:[%s1806] sm:$0x3]
        %v1808 = vpack.c.bf16 %v1803, %v1801
        %v1810 = vsel %vm416, %v1808, 0
        %v1813 = vsel %vm465, %v1807, 0
        %1815 = vmatprep.subr.bf16.mxu0 0
        %1816 = vmatpush1.bf16.msra.mxu0 %v1813
        %1817 = vmatprep.subr.bf16.mxu0 0
        %1818 = vmatpush1.bf16.msra.mxu0 0
        %1819 = vmatprep.subr.bf16.mxu0 0
        %1820 = vmatpush1.bf16.msra.mxu0 0
        %1821 = vmatprep.subr.bf16.mxu0 0
        %1822 = vmatpush1.bf16.msra.mxu0 0
        %1823 = vmatprep.subr.bf16.mxu0 0
        %1824 = vmatpush1.bf16.msra.mxu0 0
        %1825 = vmatprep.subr.bf16.mxu0 0
        %1826 = vmatpush1.bf16.msra.mxu0 0
        %1827 = vmatprep.subr.bf16.mxu0 0
        %1828 = vmatpush1.bf16.msra.mxu0 0
        %1829 = vmatprep.subr.bf16.mxu0 0
        %1830 = vmatpush1.bf16.msra.mxu0 0
        %1831 = vmatprep.subr.bf16.mxu0 0
        %1832 = vmatpush1.bf16.msra.mxu0 0
        %1833 = vmatprep.subr.bf16.mxu0 0
        %1834 = vmatpush1.bf16.msra.mxu0 0
        %1835 = vmatprep.subr.bf16.mxu0 0
        %1836 = vmatpush1.bf16.msra.mxu0 0
        %1837 = vmatprep.subr.bf16.mxu0 0
        %1838 = vmatpush1.bf16.msra.mxu0 0
        %1839 = vmatprep.subr.bf16.mxu0 0
        %1840 = vmatpush1.bf16.msra.mxu0 0
        %1841 = vmatprep.subr.bf16.mxu0 0
        %1842 = vmatpush1.bf16.msra.mxu0 0
        %1843 = vmatprep.subr.bf16.mxu0 0
        %1844 = vmatpush1.bf16.msra.mxu0 0
        %1845 = vmatprep.subr.bf16.mxu0 0
        %1846 = vmatpush1.bf16.msra.mxu0 0
        %1847 = vmatprep.mubr.bf16.mxu0 0
        %1848 = vmatmul.mubr.bf16.gmra.mrb[0].mxu0 %v808
        %v1849 = vpop.f32.mrb[0].mxu0
        %v1850 = vadd.f32 0.0, %v1849
        %v1851 = vpop.f32.mrb[0].mxu0
        %v1852 = vpop.f32.mrb[0].mxu0
        %v1853 = vadd.f32 0.0, %v1852
        %v1854 = vpop.f32.mrb[0].mxu0
        %1855 = vmatprep.mubr.bf16.mxu0 0
        %1856 = vmatmul.mubr.bf16.gmra.mrb[0].mxu0 %v811
        %v1857 = vpop.f32.mrb[0].mxu0
        %v1858 = vadd.f32 0.0, %v1857
        %v1859 = vpop.f32.mrb[0].mxu0
        %v1860 = vpop.f32.mrb[0].mxu0
        %v1861 = vadd.f32 0.0, %v1860
        %v1862 = vpop.f32.mrb[0].mxu0
        %1863 = vmatprep.mubr.bf16.mxu0 0
        %1864 = vmatmul.mubr.bf16.gmra.mrb[0].mxu0 %v814
        %v1865 = vpop.f32.mrb[0].mxu0
        %v1866 = vadd.f32 0.0, %v1865
        %v1867 = vpop.f32.mrb[0].mxu0
        %v1868 = vpop.f32.mrb[0].mxu0
        %v1869 = vadd.f32 0.0, %v1868
        %v1870 = vpop.f32.mrb[0].mxu0
        %1871 = vmatprep.mubr.bf16.mxu0 0
        %1872 = vmatmul.mubr.bf16.gmra.mrb[0].mxu0 %v817
        %v1873 = vpop.f32.mrb[0].mxu0
        %v1874 = vadd.f32 0.0, %v1873
        %v1875 = vpop.f32.mrb[0].mxu0
        %v1876 = vpop.f32.mrb[0].mxu0
        %v1877 = vadd.f32 0.0, %v1876
        %v1878 = vpop.f32.mrb[0].mxu0
        %1879 = vmatprep.mubr.bf16.mxu0 0
        %1880 = vmatmul.mubr.bf16.gmra.mrb[0].mxu0 %v820
        %v1881 = vpop.f32.mrb[0].mxu0
        %v1882 = vadd.f32 0.0, %v1881
        %v1883 = vpop.f32.mrb[0].mxu0
        %v1884 = vpop.f32.mrb[0].mxu0
        %v1885 = vadd.f32 0.0, %v1884
        %v1886 = vpop.f32.mrb[0].mxu0
        %1887 = vmatprep.mubr.bf16.mxu0 0
        %1888 = vmatmul.mubr.bf16.gmra.mrb[0].mxu0 %v823
        %v1889 = vpop.f32.mrb[0].mxu0
        %v1890 = vadd.f32 0.0, %v1889
        %v1891 = vpop.f32.mrb[0].mxu0
        %v1892 = vpop.f32.mrb[0].mxu0
        %v1893 = vadd.f32 0.0, %v1892
        %v1894 = vpop.f32.mrb[0].mxu0
        %1895 = vmatprep.mubr.bf16.mxu0 0
        %1896 = vmatmul.mubr.bf16.gmra.mrb[0].mxu0 %v826
        %v1897 = vpop.f32.mrb[0].mxu0
        %v1898 = vadd.f32 0.0, %v1897
        %v1899 = vpop.f32.mrb[0].mxu0
        %v1900 = vpop.f32.mrb[0].mxu0
        %v1901 = vadd.f32 0.0, %v1900
        %v1902 = vpop.f32.mrb[0].mxu0
        %1903 = vmatprep.mubr.bf16.mxu0 0
        %1904 = vmatmul.mubr.bf16.gmra.mrb[0].mxu0 %v829
        %v1905 = vpop.f32.mrb[0].mxu0
        %v1906 = vadd.f32 0.0, %v1905
        %v1907 = vpop.f32.mrb[0].mxu0
        %v1908 = vpop.f32.mrb[0].mxu0
        %v1909 = vadd.f32 0.0, %v1908
        %v1910 = vpop.f32.mrb[0].mxu0
        %1911 = vmatprep.mubr.bf16.mxu0 0
        %1912 = vmatmul.mubr.bf16.gmra.mrb[0].mxu0 %v832
        %v1913 = vpop.f32.mrb[0].mxu0
        %v1914 = vadd.f32 0.0, %v1913
        %v1915 = vpop.f32.mrb[0].mxu0
        %v1916 = vpop.f32.mrb[0].mxu0
        %v1917 = vadd.f32 0.0, %v1916
        %v1918 = vpop.f32.mrb[0].mxu0
        %1919 = vmatprep.mubr.bf16.mxu0 0
        %1920 = vmatmul.mubr.bf16.gmra.mrb[0].mxu0 %v835
        %v1921 = vpop.f32.mrb[0].mxu0
        %v1922 = vadd.f32 0.0, %v1921
        %v1923 = vpop.f32.mrb[0].mxu0
        %v1924 = vpop.f32.mrb[0].mxu0
        %v1925 = vadd.f32 0.0, %v1924
        %v1926 = vpop.f32.mrb[0].mxu0
        %1927 = vmatprep.mubr.bf16.mxu0 0
        %1928 = vmatmul.mubr.bf16.gmra.mrb[0].mxu0 %v838
        %v1929 = vpop.f32.mrb[0].mxu0
        %v1930 = vadd.f32 0.0, %v1929
        %v1931 = vpop.f32.mrb[0].mxu0
        %v1932 = vpop.f32.mrb[0].mxu0
        %v1933 = vadd.f32 0.0, %v1932
        %v1934 = vpop.f32.mrb[0].mxu0
        %1935 = vmatprep.mubr.bf16.mxu0 0
        %1936 = vmatmul.mubr.bf16.gmra.mrb[0].mxu0 %v841
        %v1937 = vpop.f32.mrb[0].mxu0
        %v1938 = vadd.f32 0.0, %v1937
        %v1939 = vpop.f32.mrb[0].mxu0
        %v1940 = vpop.f32.mrb[0].mxu0
        %v1941 = vadd.f32 0.0, %v1940
        %v1942 = vpop.f32.mrb[0].mxu0
        %1943 = vmatprep.mubr.bf16.mxu0 0
        %1944 = vmatmul.mubr.bf16.gmra.mrb[0].mxu0 %v844
        %v1945 = vpop.f32.mrb[0].mxu0
        %v1946 = vadd.f32 0.0, %v1945
        %v1947 = vpop.f32.mrb[0].mxu0
        %v1948 = vpop.f32.mrb[0].mxu0
        %v1949 = vadd.f32 0.0, %v1948
        %v1950 = vpop.f32.mrb[0].mxu0
        %1951 = vmatprep.mubr.bf16.mxu0 0
        %1952 = vmatmul.mubr.bf16.gmra.mrb[0].mxu0 %v847
        %v1953 = vpop.f32.mrb[0].mxu0
        %v1954 = vadd.f32 0.0, %v1953
        %v1955 = vpop.f32.mrb[0].mxu0
        %v1956 = vpop.f32.mrb[0].mxu0
        %v1957 = vadd.f32 0.0, %v1956
        %v1958 = vpop.f32.mrb[0].mxu0
        %1959 = vmatprep.mubr.bf16.mxu0 0
        %1960 = vmatmul.mubr.bf16.gmra.mrb[0].mxu0 %v850
        %v1961 = vpop.f32.mrb[0].mxu0
        %v1962 = vadd.f32 0.0, %v1961
        %v1963 = vpop.f32.mrb[0].mxu0
        %v1964 = vpop.f32.mrb[0].mxu0
        %v1965 = vadd.f32 0.0, %v1964
        %v1966 = vpop.f32.mrb[0].mxu0
        %1967 = vmatprep.mubr.bf16.mxu0 0
        %1968 = vmatmul.mubr.bf16.gmra.mrb[0].mxu0 %v1810
        %v1969 = vpop.f32.mrb[0].mxu0
        %v1970 = vadd.f32 0.0, %v1969
        %v1971 = vpop.f32.mrb[0].mxu0
        %v1972 = vpop.f32.mrb[0].mxu0
        %v1973 = vadd.f32 0.0, %v1972
        %v1974 = vpop.f32.mrb[0].mxu0
        %1975 = vdwg.mxu0
        %v1976 = vadd.f32 %v1766, %v1850
        %v1977 = vadd.f32 %v1767, %v1853
        %v1978 = vadd.f32 %v1768, %v1858
        %v1979 = vadd.f32 %v1769, %v1861
        %v1980 = vadd.f32 %v1770, %v1866
        %v1981 = vadd.f32 %v1771, %v1869
        %v1982 = vadd.f32 %v1772, %v1874
        %v1983 = vadd.f32 %v1773, %v1877
        %v1984 = vadd.f32 %v1774, %v1882
        %v1985 = vadd.f32 %v1775, %v1885
        %v1986 = vadd.f32 %v1776, %v1890
        %v1987 = vadd.f32 %v1777, %v1893
        %v1988 = vadd.f32 %v1778, %v1898
        %v1989 = vadd.f32 %v1779, %v1901
        %v1990 = vadd.f32 %v1780, %v1906
        %v1991 = vadd.f32 %v1781, %v1909
        %v1992 = vadd.f32 %v1782, %v1914
        %v1993 = vadd.f32 %v1783, %v1917
        %v1994 = vadd.f32 %v1784, %v1922
        %v1995 = vadd.f32 %v1785, %v1925
        %v1996 = vadd.f32 %v1786, %v1930
        %v1997 = vadd.f32 %v1787, %v1933
        %v1998 = vadd.f32 %v1788, %v1938
        %v1999 = vadd.f32 %v1789, %v1941
        %v2000 = vadd.f32 %v1790, %v1946
        %v2001 = vadd.f32 %v1791, %v1949
        %v2002 = vadd.f32 %v1792, %v1954
        %v2003 = vadd.f32 %v1793, %v1957
        %v2004 = vadd.f32 %v1794, %v1962
        %v2005 = vadd.f32 %v1795, %v1965
        %v2006 = vadd.f32 %v1796, %v1970
        %v2007 = vadd.f32 %v1797, %v1973
        %s2008 = scalar_lea.vmem %s4, 8
        %v2009 = vld [vmem:[%s2008] sm:$0x3]
        %v2010 = vpack.c.bf16 %v661, %v660
        %v2012 = vsel %vm416, %v2010, 0
        %v2015 = vsel %vm465, %v2009, 0
        %2017 = vmatprep.subr.bf16.mxu0 0
        %2018 = vmatpush1.bf16.msra.mxu0 %v2015
        %2019 = vmatprep.subr.bf16.mxu0 0
        %2020 = vmatpush1.bf16.msra.mxu0 0
        %2021 = vmatprep.subr.bf16.mxu0 0
        %2022 = vmatpush1.bf16.msra.mxu0 0
        %2023 = vmatprep.subr.bf16.mxu0 0
        %2024 = vmatpush1.bf16.msra.mxu0 0
        %2025 = vmatprep.subr.bf16.mxu0 0
        %2026 = vmatpush1.bf16.msra.mxu0 0
        %2027 = vmatprep.subr.bf16.mxu0 0
        %2028 = vmatpush1.bf16.msra.mxu0 0
        %2029 = vmatprep.subr.bf16.mxu0 0
        %2030 = vmatpush1.bf16.msra.mxu0 0
        %2031 = vmatprep.subr.bf16.mxu0 0
        %2032 = vmatpush1.bf16.msra.mxu0 0
        %2033 = vmatprep.subr.bf16.mxu0 0
        %2034 = vmatpush1.bf16.msra.mxu0 0
        %2035 = vmatprep.subr.bf16.mxu0 0
        %2036 = vmatpush1.bf16.msra.mxu0 0
        %2037 = vmatprep.subr.bf16.mxu0 0
        %2038 = vmatpush1.bf16.msra.mxu0 0
        %2039 = vmatprep.subr.bf16.mxu0 0
        %2040 = vmatpush1.bf16.msra.mxu0 0
        %2041 = vmatprep.subr.bf16.mxu0 0
        %2042 = vmatpush1.bf16.msra.mxu0 0
        %2043 = vmatprep.subr.bf16.mxu0 0
        %2044 = vmatpush1.bf16.msra.mxu0 0
        %2045 = vmatprep.subr.bf16.mxu0 0
        %2046 = vmatpush1.bf16.msra.mxu0 0
        %2047 = vmatprep.subr.bf16.mxu0 0
        %2048 = vmatpush1.bf16.msra.mxu0 0
        %2049 = vmatprep.mubr.bf16.mxu0 0
        %2050 = vmatmul.mubr.bf16.gmra.mrb[0].mxu0 %v1202
        %v2051 = vpop.f32.mrb[0].mxu0
        %v2052 = vadd.f32 0.0, %v2051
        %v2053 = vpop.f32.mrb[0].mxu0
        %v2054 = vpop.f32.mrb[0].mxu0
        %v2055 = vadd.f32 0.0, %v2054
        %v2056 = vpop.f32.mrb[0].mxu0
        %2057 = vmatprep.mubr.bf16.mxu0 0
        %2058 = vmatmul.mubr.bf16.gmra.mrb[0].mxu0 %v1205
        %v2059 = vpop.f32.mrb[0].mxu0
        %v2060 = vadd.f32 0.0, %v2059
        %v2061 = vpop.f32.mrb[0].mxu0
        %v2062 = vpop.f32.mrb[0].mxu0
        %v2063 = vadd.f32 0.0, %v2062
        %v2064 = vpop.f32.mrb[0].mxu0
        %2065 = vmatprep.mubr.bf16.mxu0 0
        %2066 = vmatmul.mubr.bf16.gmra.mrb[0].mxu0 %v1208
        %v2067 = vpop.f32.mrb[0].mxu0
        %v2068 = vadd.f32 0.0, %v2067
        %v2069 = vpop.f32.mrb[0].mxu0
        %v2070 = vpop.f32.mrb[0].mxu0
        %v2071 = vadd.f32 0.0, %v2070
        %v2072 = vpop.f32.mrb[0].mxu0
        %2073 = vmatprep.mubr.bf16.mxu0 0
        %2074 = vmatmul.mubr.bf16.gmra.mrb[0].mxu0 %v1211
        %v2075 = vpop.f32.mrb[0].mxu0
        %v2076 = vadd.f32 0.0, %v2075
        %v2077 = vpop.f32.mrb[0].mxu0
        %v2078 = vpop.f32.mrb[0].mxu0
        %v2079 = vadd.f32 0.0, %v2078
        %v2080 = vpop.f32.mrb[0].mxu0
        %2081 = vmatprep.mubr.bf16.mxu0 0
        %2082 = vmatmul.mubr.bf16.gmra.mrb[0].mxu0 %v1214
        %v2083 = vpop.f32.mrb[0].mxu0
        %v2084 = vadd.f32 0.0, %v2083
        %v2085 = vpop.f32.mrb[0].mxu0
        %v2086 = vpop.f32.mrb[0].mxu0
        %v2087 = vadd.f32 0.0, %v2086
        %v2088 = vpop.f32.mrb[0].mxu0
        %2089 = vmatprep.mubr.bf16.mxu0 0
        %2090 = vmatmul.mubr.bf16.gmra.mrb[0].mxu0 %v1217
        %v2091 = vpop.f32.mrb[0].mxu0
        %v2092 = vadd.f32 0.0, %v2091
        %v2093 = vpop.f32.mrb[0].mxu0
        %v2094 = vpop.f32.mrb[0].mxu0
        %v2095 = vadd.f32 0.0, %v2094
        %v2096 = vpop.f32.mrb[0].mxu0
        %2097 = vmatprep.mubr.bf16.mxu0 0
        %2098 = vmatmul.mubr.bf16.gmra.mrb[0].mxu0 %v1220
        %v2099 = vpop.f32.mrb[0].mxu0
        %v2100 = vadd.f32 0.0, %v2099
        %v2101 = vpop.f32.mrb[0].mxu0
        %v2102 = vpop.f32.mrb[0].mxu0
        %v2103 = vadd.f32 0.0, %v2102
        %v2104 = vpop.f32.mrb[0].mxu0
        %2105 = vmatprep.mubr.bf16.mxu0 0
        %2106 = vmatmul.mubr.bf16.gmra.mrb[0].mxu0 %v1223
        %v2107 = vpop.f32.mrb[0].mxu0
        %v2108 = vadd.f32 0.0, %v2107
        %v2109 = vpop.f32.mrb[0].mxu0
        %v2110 = vpop.f32.mrb[0].mxu0
        %v2111 = vadd.f32 0.0, %v2110
        %v2112 = vpop.f32.mrb[0].mxu0
        %2113 = vmatprep.mubr.bf16.mxu0 0
        %2114 = vmatmul.mubr.bf16.gmra.mrb[0].mxu0 %v1226
        %v2115 = vpop.f32.mrb[0].mxu0
        %v2116 = vadd.f32 0.0, %v2115
        %v2117 = vpop.f32.mrb[0].mxu0
        %v2118 = vpop.f32.mrb[0].mxu0
        %v2119 = vadd.f32 0.0, %v2118
        %v2120 = vpop.f32.mrb[0].mxu0
        %2121 = vmatprep.mubr.bf16.mxu0 0
        %2122 = vmatmul.mubr.bf16.gmra.mrb[0].mxu0 %v1229
        %v2123 = vpop.f32.mrb[0].mxu0
        %v2124 = vadd.f32 0.0, %v2123
        %v2125 = vpop.f32.mrb[0].mxu0
        %v2126 = vpop.f32.mrb[0].mxu0
        %v2127 = vadd.f32 0.0, %v2126
        %v2128 = vpop.f32.mrb[0].mxu0
        %2129 = vmatprep.mubr.bf16.mxu0 0
        %2130 = vmatmul.mubr.bf16.gmra.mrb[0].mxu0 %v1232
        %v2131 = vpop.f32.mrb[0].mxu0
        %v2132 = vadd.f32 0.0, %v2131
        %v2133 = vpop.f32.mrb[0].mxu0
        %v2134 = vpop.f32.mrb[0].mxu0
        %v2135 = vadd.f32 0.0, %v2134
        %v2136 = vpop.f32.mrb[0].mxu0
        %2137 = vmatprep.mubr.bf16.mxu0 0
        %2138 = vmatmul.mubr.bf16.gmra.mrb[0].mxu0 %v1235
        %v2139 = vpop.f32.mrb[0].mxu0
        %v2140 = vadd.f32 0.0, %v2139
        %v2141 = vpop.f32.mrb[0].mxu0
        %v2142 = vpop.f32.mrb[0].mxu0
        %v2143 = vadd.f32 0.0, %v2142
        %v2144 = vpop.f32.mrb[0].mxu0
        %2145 = vmatprep.mubr.bf16.mxu0 0
        %2146 = vmatmul.mubr.bf16.gmra.mrb[0].mxu0 %v1238
        %v2147 = vpop.f32.mrb[0].mxu0
        %v2148 = vadd.f32 0.0, %v2147
        %v2149 = vpop.f32.mrb[0].mxu0
        %v2150 = vpop.f32.mrb[0].mxu0
        %v2151 = vadd.f32 0.0, %v2150
        %v2152 = vpop.f32.mrb[0].mxu0
        %2153 = vmatprep.mubr.bf16.mxu0 0
        %2154 = vmatmul.mubr.bf16.gmra.mrb[0].mxu0 %v1241
        %v2155 = vpop.f32.mrb[0].mxu0
        %v2156 = vadd.f32 0.0, %v2155
        %v2157 = vpop.f32.mrb[0].mxu0
        %v2158 = vpop.f32.mrb[0].mxu0
        %v2159 = vadd.f32 0.0, %v2158
        %v2160 = vpop.f32.mrb[0].mxu0
        %2161 = vmatprep.mubr.bf16.mxu0 0
        %2162 = vmatmul.mubr.bf16.gmra.mrb[0].mxu0 %v1244
        %v2163 = vpop.f32.mrb[0].mxu0
        %v2164 = vadd.f32 0.0, %v2163
        %v2165 = vpop.f32.mrb[0].mxu0
        %v2166 = vpop.f32.mrb[0].mxu0
        %v2167 = vadd.f32 0.0, %v2166
        %v2168 = vpop.f32.mrb[0].mxu0
        %2169 = vmatprep.mubr.bf16.mxu0 0
        %2170 = vmatmul.mubr.bf16.gmra.mrb[0].mxu0 %v2012
        %v2171 = vpop.f32.mrb[0].mxu0
        %v2172 = vadd.f32 0.0, %v2171
        %v2173 = vpop.f32.mrb[0].mxu0
        %v2174 = vpop.f32.mrb[0].mxu0
        %v2175 = vadd.f32 0.0, %v2174
        %v2176 = vpop.f32.mrb[0].mxu0
        %2177 = vdwg.mxu0
        %v2178 = vadd.f32 %v1976, %v2052
        %v2179 = vadd.f32 %v1977, %v2055
        %v2180 = vadd.f32 %v1978, %v2060
        %v2181 = vadd.f32 %v1979, %v2063
        %v2182 = vadd.f32 %v1980, %v2068
        %v2183 = vadd.f32 %v1981, %v2071
        %v2184 = vadd.f32 %v1982, %v2076
        %v2185 = vadd.f32 %v1983, %v2079
        %v2186 = vadd.f32 %v1984, %v2084
        %v2187 = vadd.f32 %v1985, %v2087
        %v2188 = vadd.f32 %v1986, %v2092
        %v2189 = vadd.f32 %v1987, %v2095
        %v2190 = vadd.f32 %v1988, %v2100
        %v2191 = vadd.f32 %v1989, %v2103
        %v2192 = vadd.f32 %v1990, %v2108
        %v2193 = vadd.f32 %v1991, %v2111
        %v2194 = vadd.f32 %v1992, %v2116
        %v2195 = vadd.f32 %v1993, %v2119
        %v2196 = vadd.f32 %v1994, %v2124
        %v2197 = vadd.f32 %v1995, %v2127
        %v2198 = vadd.f32 %v1996, %v2132
        %v2199 = vadd.f32 %v1997, %v2135
        %v2200 = vadd.f32 %v1998, %v2140
        %v2201 = vadd.f32 %v1999, %v2143
        %v2202 = vadd.f32 %v2000, %v2148
        %v2203 = vadd.f32 %v2001, %v2151
        %v2204 = vadd.f32 %v2002, %v2156
        %v2205 = vadd.f32 %v2003, %v2159
        %v2206 = vadd.f32 %v2004, %v2164
        %v2207 = vadd.f32 %v2005, %v2167
        %v2208 = vadd.f32 %v2006, %v2172
        %v2209 = vadd.f32 %v2007, %v2175
        %v2210 = vrot.slane %v660, 1
        %v2211 = vrot.slane %v661, 1
        %v2212 = vsel %vm1442, %v2210, %v2211
        %v2213 = vsel %vm1442, %v2211, %v1443
        %s2216 = scalar_lea.vmem %s4, 10
        %v2217 = vld [vmem:[%s2216] sm:$0x3]
        %v2218 = vpack.c.bf16 %v2213, %v2212
        %v2220 = vsel %vm416, %v2218, 0
        %v2223 = vsel %vm465, %v2217, 0
        %2225 = vmatprep.subr.bf16.mxu0 0
        %2226 = vmatpush1.bf16.msra.mxu0 %v2223
        %2227 = vmatprep.subr.bf16.mxu0 0
        %2228 = vmatpush1.bf16.msra.mxu0 0
        %2229 = vmatprep.subr.bf16.mxu0 0
        %2230 = vmatpush1.bf16.msra.mxu0 0
        %2231 = vmatprep.subr.bf16.mxu0 0
        %2232 = vmatpush1.bf16.msra.mxu0 0
        %2233 = vmatprep.subr.bf16.mxu0 0
        %2234 = vmatpush1.bf16.msra.mxu0 0
        %2235 = vmatprep.subr.bf16.mxu0 0
        %2236 = vmatpush1.bf16.msra.mxu0 0
        %2237 = vmatprep.subr.bf16.mxu0 0
        %2238 = vmatpush1.bf16.msra.mxu0 0
        %2239 = vmatprep.subr.bf16.mxu0 0
        %2240 = vmatpush1.bf16.msra.mxu0 0
        %2241 = vmatprep.subr.bf16.mxu0 0
        %2242 = vmatpush1.bf16.msra.mxu0 0
        %2243 = vmatprep.subr.bf16.mxu0 0
        %2244 = vmatpush1.bf16.msra.mxu0 0
        %2245 = vmatprep.subr.bf16.mxu0 0
        %2246 = vmatpush1.bf16.msra.mxu0 0
        %2247 = vmatprep.subr.bf16.mxu0 0
        %2248 = vmatpush1.bf16.msra.mxu0 0
        %2249 = vmatprep.subr.bf16.mxu0 0
        %2250 = vmatpush1.bf16.msra.mxu0 0
        %2251 = vmatprep.subr.bf16.mxu0 0
        %2252 = vmatpush1.bf16.msra.mxu0 0
        %2253 = vmatprep.subr.bf16.mxu0 0
        %2254 = vmatpush1.bf16.msra.mxu0 0
        %2255 = vmatprep.subr.bf16.mxu0 0
        %2256 = vmatpush1.bf16.msra.mxu0 0
        %2257 = vmatprep.mubr.bf16.mxu0 0
        %2258 = vmatmul.mubr.bf16.gmra.mrb[0].mxu0 %v1558
        %v2259 = vpop.f32.mrb[0].mxu0
        %v2260 = vadd.f32 0.0, %v2259
        %v2261 = vpop.f32.mrb[0].mxu0
        %v2262 = vpop.f32.mrb[0].mxu0
        %v2263 = vadd.f32 0.0, %v2262
        %v2264 = vpop.f32.mrb[0].mxu0
        %2265 = vmatprep.mubr.bf16.mxu0 0
        %2266 = vmatmul.mubr.bf16.gmra.mrb[0].mxu0 %v1561
        %v2267 = vpop.f32.mrb[0].mxu0
        %v2268 = vadd.f32 0.0, %v2267
        %v2269 = vpop.f32.mrb[0].mxu0
        %v2270 = vpop.f32.mrb[0].mxu0
        %v2271 = vadd.f32 0.0, %v2270
        %v2272 = vpop.f32.mrb[0].mxu0
        %2273 = vmatprep.mubr.bf16.mxu0 0
        %2274 = vmatmul.mubr.bf16.gmra.mrb[0].mxu0 %v1564
        %v2275 = vpop.f32.mrb[0].mxu0
        %v2276 = vadd.f32 0.0, %v2275
        %v2277 = vpop.f32.mrb[0].mxu0
        %v2278 = vpop.f32.mrb[0].mxu0
        %v2279 = vadd.f32 0.0, %v2278
        %v2280 = vpop.f32.mrb[0].mxu0
        %2281 = vmatprep.mubr.bf16.mxu0 0
        %2282 = vmatmul.mubr.bf16.gmra.mrb[0].mxu0 %v1567
        %v2283 = vpop.f32.mrb[0].mxu0
        %v2284 = vadd.f32 0.0, %v2283
        %v2285 = vpop.f32.mrb[0].mxu0
        %v2286 = vpop.f32.mrb[0].mxu0
        %v2287 = vadd.f32 0.0, %v2286
        %v2288 = vpop.f32.mrb[0].mxu0
        %2289 = vmatprep.mubr.bf16.mxu0 0
        %2290 = vmatmul.mubr.bf16.gmra.mrb[0].mxu0 %v1570
        %v2291 = vpop.f32.mrb[0].mxu0
        %v2292 = vadd.f32 0.0, %v2291
        %v2293 = vpop.f32.mrb[0].mxu0
        %v2294 = vpop.f32.mrb[0].mxu0
        %v2295 = vadd.f32 0.0, %v2294
        %v2296 = vpop.f32.mrb[0].mxu0
        %2297 = vmatprep.mubr.bf16.mxu0 0
        %2298 = vmatmul.mubr.bf16.gmra.mrb[0].mxu0 %v1573
        %v2299 = vpop.f32.mrb[0].mxu0
        %v2300 = vadd.f32 0.0, %v2299
        %v2301 = vpop.f32.mrb[0].mxu0
        %v2302 = vpop.f32.mrb[0].mxu0
        %v2303 = vadd.f32 0.0, %v2302
        %v2304 = vpop.f32.mrb[0].mxu0
        %2305 = vmatprep.mubr.bf16.mxu0 0
        %2306 = vmatmul.mubr.bf16.gmra.mrb[0].mxu0 %v1576
        %v2307 = vpop.f32.mrb[0].mxu0
        %v2308 = vadd.f32 0.0, %v2307
        %v2309 = vpop.f32.mrb[0].mxu0
        %v2310 = vpop.f32.mrb[0].mxu0
        %v2311 = vadd.f32 0.0, %v2310
        %v2312 = vpop.f32.mrb[0].mxu0
        %2313 = vmatprep.mubr.bf16.mxu0 0
        %2314 = vmatmul.mubr.bf16.gmra.mrb[0].mxu0 %v1579
        %v2315 = vpop.f32.mrb[0].mxu0
        %v2316 = vadd.f32 0.0, %v2315
        %v2317 = vpop.f32.mrb[0].mxu0
        %v2318 = vpop.f32.mrb[0].mxu0
        %v2319 = vadd.f32 0.0, %v2318
        %v2320 = vpop.f32.mrb[0].mxu0
        %2321 = vmatprep.mubr.bf16.mxu0 0
        %2322 = vmatmul.mubr.bf16.gmra.mrb[0].mxu0 %v1582
        %v2323 = vpop.f32.mrb[0].mxu0
        %v2324 = vadd.f32 0.0, %v2323
        %v2325 = vpop.f32.mrb[0].mxu0
        %v2326 = vpop.f32.mrb[0].mxu0
        %v2327 = vadd.f32 0.0, %v2326
        %v2328 = vpop.f32.mrb[0].mxu0
        %2329 = vmatprep.mubr.bf16.mxu0 0
        %2330 = vmatmul.mubr.bf16.gmra.mrb[0].mxu0 %v1585
        %v2331 = vpop.f32.mrb[0].mxu0
        %v2332 = vadd.f32 0.0, %v2331
        %v2333 = vpop.f32.mrb[0].mxu0
        %v2334 = vpop.f32.mrb[0].mxu0
        %v2335 = vadd.f32 0.0, %v2334
        %v2336 = vpop.f32.mrb[0].mxu0
        %2337 = vmatprep.mubr.bf16.mxu0 0
        %2338 = vmatmul.mubr.bf16.gmra.mrb[0].mxu0 %v1588
        %v2339 = vpop.f32.mrb[0].mxu0
        %v2340 = vadd.f32 0.0, %v2339
        %v2341 = vpop.f32.mrb[0].mxu0
        %v2342 = vpop.f32.mrb[0].mxu0
        %v2343 = vadd.f32 0.0, %v2342
        %v2344 = vpop.f32.mrb[0].mxu0
        %2345 = vmatprep.mubr.bf16.mxu0 0
        %2346 = vmatmul.mubr.bf16.gmra.mrb[0].mxu0 %v1591
        %v2347 = vpop.f32.mrb[0].mxu0
        %v2348 = vadd.f32 0.0, %v2347
        %v2349 = vpop.f32.mrb[0].mxu0
        %v2350 = vpop.f32.mrb[0].mxu0
        %v2351 = vadd.f32 0.0, %v2350
        %v2352 = vpop.f32.mrb[0].mxu0
        %2353 = vmatprep.mubr.bf16.mxu0 0
        %2354 = vmatmul.mubr.bf16.gmra.mrb[0].mxu0 %v1594
        %v2355 = vpop.f32.mrb[0].mxu0
        %v2356 = vadd.f32 0.0, %v2355
        %v2357 = vpop.f32.mrb[0].mxu0
        %v2358 = vpop.f32.mrb[0].mxu0
        %v2359 = vadd.f32 0.0, %v2358
        %v2360 = vpop.f32.mrb[0].mxu0
        %2361 = vmatprep.mubr.bf16.mxu0 0
        %2362 = vmatmul.mubr.bf16.gmra.mrb[0].mxu0 %v1597
        %v2363 = vpop.f32.mrb[0].mxu0
        %v2364 = vadd.f32 0.0, %v2363
        %v2365 = vpop.f32.mrb[0].mxu0
        %v2366 = vpop.f32.mrb[0].mxu0
        %v2367 = vadd.f32 0.0, %v2366
        %v2368 = vpop.f32.mrb[0].mxu0
        %2369 = vmatprep.mubr.bf16.mxu0 0
        %2370 = vmatmul.mubr.bf16.gmra.mrb[0].mxu0 %v1600
        %v2371 = vpop.f32.mrb[0].mxu0
        %v2372 = vadd.f32 0.0, %v2371
        %v2373 = vpop.f32.mrb[0].mxu0
        %v2374 = vpop.f32.mrb[0].mxu0
        %v2375 = vadd.f32 0.0, %v2374
        %v2376 = vpop.f32.mrb[0].mxu0
        %2377 = vmatprep.mubr.bf16.mxu0 0
        %2378 = vmatmul.mubr.bf16.gmra.mrb[0].mxu0 %v2220
        %v2379 = vpop.f32.mrb[0].mxu0
        %v2380 = vadd.f32 0.0, %v2379
        %v2381 = vpop.f32.mrb[0].mxu0
        %v2382 = vpop.f32.mrb[0].mxu0
        %v2383 = vadd.f32 0.0, %v2382
        %v2384 = vpop.f32.mrb[0].mxu0
        %2385 = vdwg.mxu0
        %v2386 = vadd.f32 %v2178, %v2260
        %v2387 = vadd.f32 %v2179, %v2263
        %v2388 = vadd.f32 %v2180, %v2268
        %v2389 = vadd.f32 %v2181, %v2271
        %v2390 = vadd.f32 %v2182, %v2276
        %v2391 = vadd.f32 %v2183, %v2279
        %v2392 = vadd.f32 %v2184, %v2284
        %v2393 = vadd.f32 %v2185, %v2287
        %v2394 = vadd.f32 %v2186, %v2292
        %v2395 = vadd.f32 %v2187, %v2295
        %v2396 = vadd.f32 %v2188, %v2300
        %v2397 = vadd.f32 %v2189, %v2303
        %v2398 = vadd.f32 %v2190, %v2308
        %v2399 = vadd.f32 %v2191, %v2311
        %v2400 = vadd.f32 %v2192, %v2316
        %v2401 = vadd.f32 %v2193, %v2319
        %v2402 = vadd.f32 %v2194, %v2324
        %v2403 = vadd.f32 %v2195, %v2327
        %v2404 = vadd.f32 %v2196, %v2332
        %v2405 = vadd.f32 %v2197, %v2335
        %v2406 = vadd.f32 %v2198, %v2340
        %v2407 = vadd.f32 %v2199, %v2343
        %v2408 = vadd.f32 %v2200, %v2348
        %v2409 = vadd.f32 %v2201, %v2351
        %v2410 = vadd.f32 %v2202, %v2356
        %v2411 = vadd.f32 %v2203, %v2359
        %v2412 = vadd.f32 %v2204, %v2364
        %v2413 = vadd.f32 %v2205, %v2367
        %v2414 = vadd.f32 %v2206, %v2372
        %v2415 = vadd.f32 %v2207, %v2375
        %v2416 = vadd.f32 %v2208, %v2380
        %v2417 = vadd.f32 %v2209, %v2383
        %s2418 = scalar_lea.vmem %s4, 12
        %v2419 = vld [vmem:[%s2418] sm:$0x3]
        %v2421 = vsel %vm465, %v2419, 0
        %2423 = vmatprep.subr.bf16.mxu0 0
        %2424 = vmatpush1.bf16.msra.mxu0 %v2421
        %2425 = vmatprep.subr.bf16.mxu0 0
        %2426 = vmatpush1.bf16.msra.mxu0 0
        %2427 = vmatprep.subr.bf16.mxu0 0
        %2428 = vmatpush1.bf16.msra.mxu0 0
        %2429 = vmatprep.subr.bf16.mxu0 0
        %2430 = vmatpush1.bf16.msra.mxu0 0
        %2431 = vmatprep.subr.bf16.mxu0 0
        %2432 = vmatpush1.bf16.msra.mxu0 0
        %2433 = vmatprep.subr.bf16.mxu0 0
        %2434 = vmatpush1.bf16.msra.mxu0 0
        %2435 = vmatprep.subr.bf16.mxu0 0
        %2436 = vmatpush1.bf16.msra.mxu0 0
        %2437 = vmatprep.subr.bf16.mxu0 0
        %2438 = vmatpush1.bf16.msra.mxu0 0
        %2439 = vmatprep.subr.bf16.mxu0 0
        %2440 = vmatpush1.bf16.msra.mxu0 0
        %2441 = vmatprep.subr.bf16.mxu0 0
        %2442 = vmatpush1.bf16.msra.mxu0 0
        %2443 = vmatprep.subr.bf16.mxu0 0
        %2444 = vmatpush1.bf16.msra.mxu0 0
        %2445 = vmatprep.subr.bf16.mxu0 0
        %2446 = vmatpush1.bf16.msra.mxu0 0
        %2447 = vmatprep.subr.bf16.mxu0 0
        %2448 = vmatpush1.bf16.msra.mxu0 0
        %2449 = vmatprep.subr.bf16.mxu0 0
        %2450 = vmatpush1.bf16.msra.mxu0 0
        %2451 = vmatprep.subr.bf16.mxu0 0
        %2452 = vmatpush1.bf16.msra.mxu0 0
        %2453 = vmatprep.subr.bf16.mxu0 0
        %2454 = vmatpush1.bf16.msra.mxu0 0
        %2455 = vmatprep.mubr.bf16.mxu0 0
        %2456 = vmatmul.mubr.bf16.gmra.mrb[0].mxu0 %v811
        %v2457 = vpop.f32.mrb[0].mxu0
        %v2458 = vadd.f32 0.0, %v2457
        %v2459 = vpop.f32.mrb[0].mxu0
        %v2460 = vpop.f32.mrb[0].mxu0
        %v2461 = vadd.f32 0.0, %v2460
        %v2462 = vpop.f32.mrb[0].mxu0
        %2463 = vmatprep.mubr.bf16.mxu0 0
        %2464 = vmatmul.mubr.bf16.gmra.mrb[0].mxu0 %v814
        %v2465 = vpop.f32.mrb[0].mxu0
        %v2466 = vadd.f32 0.0, %v2465
        %v2467 = vpop.f32.mrb[0].mxu0
        %v2468 = vpop.f32.mrb[0].mxu0
        %v2469 = vadd.f32 0.0, %v2468
        %v2470 = vpop.f32.mrb[0].mxu0
        %2471 = vmatprep.mubr.bf16.mxu0 0
        %2472 = vmatmul.mubr.bf16.gmra.mrb[0].mxu0 %v817
        %v2473 = vpop.f32.mrb[0].mxu0
        %v2474 = vadd.f32 0.0, %v2473
        %v2475 = vpop.f32.mrb[0].mxu0
        %v2476 = vpop.f32.mrb[0].mxu0
        %v2477 = vadd.f32 0.0, %v2476
        %v2478 = vpop.f32.mrb[0].mxu0
        %2479 = vmatprep.mubr.bf16.mxu0 0
        %2480 = vmatmul.mubr.bf16.gmra.mrb[0].mxu0 %v820
        %v2481 = vpop.f32.mrb[0].mxu0
        %v2482 = vadd.f32 0.0, %v2481
        %v2483 = vpop.f32.mrb[0].mxu0
        %v2484 = vpop.f32.mrb[0].mxu0
        %v2485 = vadd.f32 0.0, %v2484
        %v2486 = vpop.f32.mrb[0].mxu0
        %2487 = vmatprep.mubr.bf16.mxu0 0
        %2488 = vmatmul.mubr.bf16.gmra.mrb[0].mxu0 %v823
        %v2489 = vpop.f32.mrb[0].mxu0
        %v2490 = vadd.f32 0.0, %v2489
        %v2491 = vpop.f32.mrb[0].mxu0
        %v2492 = vpop.f32.mrb[0].mxu0
        %v2493 = vadd.f32 0.0, %v2492
        %v2494 = vpop.f32.mrb[0].mxu0
        %2495 = vmatprep.mubr.bf16.mxu0 0
        %2496 = vmatmul.mubr.bf16.gmra.mrb[0].mxu0 %v826
        %v2497 = vpop.f32.mrb[0].mxu0
        %v2498 = vadd.f32 0.0, %v2497
        %v2499 = vpop.f32.mrb[0].mxu0
        %v2500 = vpop.f32.mrb[0].mxu0
        %v2501 = vadd.f32 0.0, %v2500
        %v2502 = vpop.f32.mrb[0].mxu0
        %2503 = vmatprep.mubr.bf16.mxu0 0
        %2504 = vmatmul.mubr.bf16.gmra.mrb[0].mxu0 %v829
        %v2505 = vpop.f32.mrb[0].mxu0
        %v2506 = vadd.f32 0.0, %v2505
        %v2507 = vpop.f32.mrb[0].mxu0
        %v2508 = vpop.f32.mrb[0].mxu0
        %v2509 = vadd.f32 0.0, %v2508
        %v2510 = vpop.f32.mrb[0].mxu0
        %2511 = vmatprep.mubr.bf16.mxu0 0
        %2512 = vmatmul.mubr.bf16.gmra.mrb[0].mxu0 %v832
        %v2513 = vpop.f32.mrb[0].mxu0
        %v2514 = vadd.f32 0.0, %v2513
        %v2515 = vpop.f32.mrb[0].mxu0
        %v2516 = vpop.f32.mrb[0].mxu0
        %v2517 = vadd.f32 0.0, %v2516
        %v2518 = vpop.f32.mrb[0].mxu0
        %2519 = vmatprep.mubr.bf16.mxu0 0
        %2520 = vmatmul.mubr.bf16.gmra.mrb[0].mxu0 %v835
        %v2521 = vpop.f32.mrb[0].mxu0
        %v2522 = vadd.f32 0.0, %v2521
        %v2523 = vpop.f32.mrb[0].mxu0
        %v2524 = vpop.f32.mrb[0].mxu0
        %v2525 = vadd.f32 0.0, %v2524
        %v2526 = vpop.f32.mrb[0].mxu0
        %2527 = vmatprep.mubr.bf16.mxu0 0
        %2528 = vmatmul.mubr.bf16.gmra.mrb[0].mxu0 %v838
        %v2529 = vpop.f32.mrb[0].mxu0
        %v2530 = vadd.f32 0.0, %v2529
        %v2531 = vpop.f32.mrb[0].mxu0
        %v2532 = vpop.f32.mrb[0].mxu0
        %v2533 = vadd.f32 0.0, %v2532
        %v2534 = vpop.f32.mrb[0].mxu0
        %2535 = vmatprep.mubr.bf16.mxu0 0
        %2536 = vmatmul.mubr.bf16.gmra.mrb[0].mxu0 %v841
        %v2537 = vpop.f32.mrb[0].mxu0
        %v2538 = vadd.f32 0.0, %v2537
        %v2539 = vpop.f32.mrb[0].mxu0
        %v2540 = vpop.f32.mrb[0].mxu0
        %v2541 = vadd.f32 0.0, %v2540
        %v2542 = vpop.f32.mrb[0].mxu0
        %2543 = vmatprep.mubr.bf16.mxu0 0
        %2544 = vmatmul.mubr.bf16.gmra.mrb[0].mxu0 %v844
        %v2545 = vpop.f32.mrb[0].mxu0
        %v2546 = vadd.f32 0.0, %v2545
        %v2547 = vpop.f32.mrb[0].mxu0
        %v2548 = vpop.f32.mrb[0].mxu0
        %v2549 = vadd.f32 0.0, %v2548
        %v2550 = vpop.f32.mrb[0].mxu0
        %2551 = vmatprep.mubr.bf16.mxu0 0
        %2552 = vmatmul.mubr.bf16.gmra.mrb[0].mxu0 %v847
        %v2553 = vpop.f32.mrb[0].mxu0
        %v2554 = vadd.f32 0.0, %v2553
        %v2555 = vpop.f32.mrb[0].mxu0
        %v2556 = vpop.f32.mrb[0].mxu0
        %v2557 = vadd.f32 0.0, %v2556
        %v2558 = vpop.f32.mrb[0].mxu0
        %2559 = vmatprep.mubr.bf16.mxu0 0
        %2560 = vmatmul.mubr.bf16.gmra.mrb[0].mxu0 %v850
        %v2561 = vpop.f32.mrb[0].mxu0
        %v2562 = vadd.f32 0.0, %v2561
        %v2563 = vpop.f32.mrb[0].mxu0
        %v2564 = vpop.f32.mrb[0].mxu0
        %v2565 = vadd.f32 0.0, %v2564
        %v2566 = vpop.f32.mrb[0].mxu0
        %2567 = vmatprep.mubr.bf16.mxu0 0
        %2568 = vmatmul.mubr.bf16.gmra.mrb[0].mxu0 %v1810
        %v2569 = vpop.f32.mrb[0].mxu0
        %v2570 = vadd.f32 0.0, %v2569
        %v2571 = vpop.f32.mrb[0].mxu0
        %v2572 = vpop.f32.mrb[0].mxu0
        %v2573 = vadd.f32 0.0, %v2572
        %v2574 = vpop.f32.mrb[0].mxu0
        %2575 = vmatprep.mubr.bf16.mxu0 0
        %2576 = vmatmul.mubr.bf16.gmra.mrb[0].mxu0 %v805
        %v2577 = vpop.f32.mrb[0].mxu0
        %v2578 = vadd.f32 0.0, %v2577
        %v2579 = vpop.f32.mrb[0].mxu0
        %v2580 = vpop.f32.mrb[0].mxu0
        %v2581 = vadd.f32 0.0, %v2580
        %v2582 = vpop.f32.mrb[0].mxu0
        %2583 = vdwg.mxu0
        %v2584 = vadd.f32 %v2386, %v2458
        %v2585 = vadd.f32 %v2387, %v2461
        %v2586 = vadd.f32 %v2388, %v2466
        %v2587 = vadd.f32 %v2389, %v2469
        %v2588 = vadd.f32 %v2390, %v2474
        %v2589 = vadd.f32 %v2391, %v2477
        %v2590 = vadd.f32 %v2392, %v2482
        %v2591 = vadd.f32 %v2393, %v2485
        %v2592 = vadd.f32 %v2394, %v2490
        %v2593 = vadd.f32 %v2395, %v2493
        %v2594 = vadd.f32 %v2396, %v2498
        %v2595 = vadd.f32 %v2397, %v2501
        %v2596 = vadd.f32 %v2398, %v2506
        %v2597 = vadd.f32 %v2399, %v2509
        %v2598 = vadd.f32 %v2400, %v2514
        %v2599 = vadd.f32 %v2401, %v2517
        %v2600 = vadd.f32 %v2402, %v2522
        %v2601 = vadd.f32 %v2403, %v2525
        %v2602 = vadd.f32 %v2404, %v2530
        %v2603 = vadd.f32 %v2405, %v2533
        %v2604 = vadd.f32 %v2406, %v2538
        %v2605 = vadd.f32 %v2407, %v2541
        %v2606 = vadd.f32 %v2408, %v2546
        %v2607 = vadd.f32 %v2409, %v2549
        %v2608 = vadd.f32 %v2410, %v2554
        %v2609 = vadd.f32 %v2411, %v2557
        %v2610 = vadd.f32 %v2412, %v2562
        %v2611 = vadd.f32 %v2413, %v2565
        %v2612 = vadd.f32 %v2414, %v2570
        %v2613 = vadd.f32 %v2415, %v2573
        %v2614 = vadd.f32 %v2416, %v2578
        %v2615 = vadd.f32 %v2417, %v2581
        %s2616 = scalar_lea.vmem %s4, 14
        %v2617 = vld [vmem:[%s2616] sm:$0x3]
        %v2619 = vsel %vm465, %v2617, 0
        %2621 = vmatprep.subr.bf16.mxu0 0
        %2622 = vmatpush1.bf16.msra.mxu0 %v2619
        %2623 = vmatprep.subr.bf16.mxu0 0
        %2624 = vmatpush1.bf16.msra.mxu0 0
        %2625 = vmatprep.subr.bf16.mxu0 0
        %2626 = vmatpush1.bf16.msra.mxu0 0
        %2627 = vmatprep.subr.bf16.mxu0 0
        %2628 = vmatpush1.bf16.msra.mxu0 0
        %2629 = vmatprep.subr.bf16.mxu0 0
        %2630 = vmatpush1.bf16.msra.mxu0 0
        %2631 = vmatprep.subr.bf16.mxu0 0
        %2632 = vmatpush1.bf16.msra.mxu0 0
        %2633 = vmatprep.subr.bf16.mxu0 0
        %2634 = vmatpush1.bf16.msra.mxu0 0
        %2635 = vmatprep.subr.bf16.mxu0 0
        %2636 = vmatpush1.bf16.msra.mxu0 0
        %2637 = vmatprep.subr.bf16.mxu0 0
        %2638 = vmatpush1.bf16.msra.mxu0 0
        %2639 = vmatprep.subr.bf16.mxu0 0
        %2640 = vmatpush1.bf16.msra.mxu0 0
        %2641 = vmatprep.subr.bf16.mxu0 0
        %2642 = vmatpush1.bf16.msra.mxu0 0
        %2643 = vmatprep.subr.bf16.mxu0 0
        %2644 = vmatpush1.bf16.msra.mxu0 0
        %2645 = vmatprep.subr.bf16.mxu0 0
        %2646 = vmatpush1.bf16.msra.mxu0 0
        %2647 = vmatprep.subr.bf16.mxu0 0
        %2648 = vmatpush1.bf16.msra.mxu0 0
        %2649 = vmatprep.subr.bf16.mxu0 0
        %2650 = vmatpush1.bf16.msra.mxu0 0
        %2651 = vmatprep.subr.bf16.mxu0 0
        %2652 = vmatpush1.bf16.msra.mxu0 0
        %2653 = vmatprep.mubr.bf16.mxu0 0
        %2654 = vmatmul.mubr.bf16.gmra.mrb[0].mxu0 %v1205
        %v2655 = vpop.f32.mrb[0].mxu0
        %v2656 = vadd.f32 0.0, %v2655
        %v2657 = vpop.f32.mrb[0].mxu0
        %v2658 = vpop.f32.mrb[0].mxu0
        %v2659 = vadd.f32 0.0, %v2658
        %v2660 = vpop.f32.mrb[0].mxu0
        %2661 = vmatprep.mubr.bf16.mxu0 0
        %2662 = vmatmul.mubr.bf16.gmra.mrb[0].mxu0 %v1208
        %v2663 = vpop.f32.mrb[0].mxu0
        %v2664 = vadd.f32 0.0, %v2663
        %v2665 = vpop.f32.mrb[0].mxu0
        %v2666 = vpop.f32.mrb[0].mxu0
        %v2667 = vadd.f32 0.0, %v2666
        %v2668 = vpop.f32.mrb[0].mxu0
        %2669 = vmatprep.mubr.bf16.mxu0 0
        %2670 = vmatmul.mubr.bf16.gmra.mrb[0].mxu0 %v1211
        %v2671 = vpop.f32.mrb[0].mxu0
        %v2672 = vadd.f32 0.0, %v2671
        %v2673 = vpop.f32.mrb[0].mxu0
        %v2674 = vpop.f32.mrb[0].mxu0
        %v2675 = vadd.f32 0.0, %v2674
        %v2676 = vpop.f32.mrb[0].mxu0
        %2677 = vmatprep.mubr.bf16.mxu0 0
        %2678 = vmatmul.mubr.bf16.gmra.mrb[0].mxu0 %v1214
        %v2679 = vpop.f32.mrb[0].mxu0
        %v2680 = vadd.f32 0.0, %v2679
        %v2681 = vpop.f32.mrb[0].mxu0
        %v2682 = vpop.f32.mrb[0].mxu0
        %v2683 = vadd.f32 0.0, %v2682
        %v2684 = vpop.f32.mrb[0].mxu0
        %2685 = vmatprep.mubr.bf16.mxu0 0
        %2686 = vmatmul.mubr.bf16.gmra.mrb[0].mxu0 %v1217
        %v2687 = vpop.f32.mrb[0].mxu0
        %v2688 = vadd.f32 0.0, %v2687
        %v2689 = vpop.f32.mrb[0].mxu0
        %v2690 = vpop.f32.mrb[0].mxu0
        %v2691 = vadd.f32 0.0, %v2690
        %v2692 = vpop.f32.mrb[0].mxu0
        %2693 = vmatprep.mubr.bf16.mxu0 0
        %2694 = vmatmul.mubr.bf16.gmra.mrb[0].mxu0 %v1220
        %v2695 = vpop.f32.mrb[0].mxu0
        %v2696 = vadd.f32 0.0, %v2695
        %v2697 = vpop.f32.mrb[0].mxu0
        %v2698 = vpop.f32.mrb[0].mxu0
        %v2699 = vadd.f32 0.0, %v2698
        %v2700 = vpop.f32.mrb[0].mxu0
        %2701 = vmatprep.mubr.bf16.mxu0 0
        %2702 = vmatmul.mubr.bf16.gmra.mrb[0].mxu0 %v1223
        %v2703 = vpop.f32.mrb[0].mxu0
        %v2704 = vadd.f32 0.0, %v2703
        %v2705 = vpop.f32.mrb[0].mxu0
        %v2706 = vpop.f32.mrb[0].mxu0
        %v2707 = vadd.f32 0.0, %v2706
        %v2708 = vpop.f32.mrb[0].mxu0
        %2709 = vmatprep.mubr.bf16.mxu0 0
        %2710 = vmatmul.mubr.bf16.gmra.mrb[0].mxu0 %v1226
        %v2711 = vpop.f32.mrb[0].mxu0
        %v2712 = vadd.f32 0.0, %v2711
        %v2713 = vpop.f32.mrb[0].mxu0
        %v2714 = vpop.f32.mrb[0].mxu0
        %v2715 = vadd.f32 0.0, %v2714
        %v2716 = vpop.f32.mrb[0].mxu0
        %2717 = vmatprep.mubr.bf16.mxu0 0
        %2718 = vmatmul.mubr.bf16.gmra.mrb[0].mxu0 %v1229
        %v2719 = vpop.f32.mrb[0].mxu0
        %v2720 = vadd.f32 0.0, %v2719
        %v2721 = vpop.f32.mrb[0].mxu0
        %v2722 = vpop.f32.mrb[0].mxu0
        %v2723 = vadd.f32 0.0, %v2722
        %v2724 = vpop.f32.mrb[0].mxu0
        %2725 = vmatprep.mubr.bf16.mxu0 0
        %2726 = vmatmul.mubr.bf16.gmra.mrb[0].mxu0 %v1232
        %v2727 = vpop.f32.mrb[0].mxu0
        %v2728 = vadd.f32 0.0, %v2727
        %v2729 = vpop.f32.mrb[0].mxu0
        %v2730 = vpop.f32.mrb[0].mxu0
        %v2731 = vadd.f32 0.0, %v2730
        %v2732 = vpop.f32.mrb[0].mxu0
        %2733 = vmatprep.mubr.bf16.mxu0 0
        %2734 = vmatmul.mubr.bf16.gmra.mrb[0].mxu0 %v1235
        %v2735 = vpop.f32.mrb[0].mxu0
        %v2736 = vadd.f32 0.0, %v2735
        %v2737 = vpop.f32.mrb[0].mxu0
        %v2738 = vpop.f32.mrb[0].mxu0
        %v2739 = vadd.f32 0.0, %v2738
        %v2740 = vpop.f32.mrb[0].mxu0
        %2741 = vmatprep.mubr.bf16.mxu0 0
        %2742 = vmatmul.mubr.bf16.gmra.mrb[0].mxu0 %v1238
        %v2743 = vpop.f32.mrb[0].mxu0
        %v2744 = vadd.f32 0.0, %v2743
        %v2745 = vpop.f32.mrb[0].mxu0
        %v2746 = vpop.f32.mrb[0].mxu0
        %v2747 = vadd.f32 0.0, %v2746
        %v2748 = vpop.f32.mrb[0].mxu0
        %2749 = vmatprep.mubr.bf16.mxu0 0
        %2750 = vmatmul.mubr.bf16.gmra.mrb[0].mxu0 %v1241
        %v2751 = vpop.f32.mrb[0].mxu0
        %v2752 = vadd.f32 0.0, %v2751
        %v2753 = vpop.f32.mrb[0].mxu0
        %v2754 = vpop.f32.mrb[0].mxu0
        %v2755 = vadd.f32 0.0, %v2754
        %v2756 = vpop.f32.mrb[0].mxu0
        %2757 = vmatprep.mubr.bf16.mxu0 0
        %2758 = vmatmul.mubr.bf16.gmra.mrb[0].mxu0 %v1244
        %v2759 = vpop.f32.mrb[0].mxu0
        %v2760 = vadd.f32 0.0, %v2759
        %v2761 = vpop.f32.mrb[0].mxu0
        %v2762 = vpop.f32.mrb[0].mxu0
        %v2763 = vadd.f32 0.0, %v2762
        %v2764 = vpop.f32.mrb[0].mxu0
        %2765 = vmatprep.mubr.bf16.mxu0 0
        %2766 = vmatmul.mubr.bf16.gmra.mrb[0].mxu0 %v2012
        %v2767 = vpop.f32.mrb[0].mxu0
        %v2768 = vadd.f32 0.0, %v2767
        %v2769 = vpop.f32.mrb[0].mxu0
        %v2770 = vpop.f32.mrb[0].mxu0
        %v2771 = vadd.f32 0.0, %v2770
        %v2772 = vpop.f32.mrb[0].mxu0
        %2773 = vmatprep.mubr.bf16.mxu0 0
        %2774 = vmatmul.mubr.bf16.gmra.mrb[0].mxu0 %v1199
        %v2775 = vpop.f32.mrb[0].mxu0
        %v2776 = vadd.f32 0.0, %v2775
        %v2777 = vpop.f32.mrb[0].mxu0
        %v2778 = vpop.f32.mrb[0].mxu0
        %v2779 = vadd.f32 0.0, %v2778
        %v2780 = vpop.f32.mrb[0].mxu0
        %2781 = vdwg.mxu0
        %v2782 = vadd.f32 %v2584, %v2656
        %v2783 = vadd.f32 %v2585, %v2659
        %v2784 = vadd.f32 %v2586, %v2664
        %v2785 = vadd.f32 %v2587, %v2667
        %v2786 = vadd.f32 %v2588, %v2672
        %v2787 = vadd.f32 %v2589, %v2675
        %v2788 = vadd.f32 %v2590, %v2680
        %v2789 = vadd.f32 %v2591, %v2683
        %v2790 = vadd.f32 %v2592, %v2688
        %v2791 = vadd.f32 %v2593, %v2691
        %v2792 = vadd.f32 %v2594, %v2696
        %v2793 = vadd.f32 %v2595, %v2699
        %v2794 = vadd.f32 %v2596, %v2704
        %v2795 = vadd.f32 %v2597, %v2707
        %v2796 = vadd.f32 %v2598, %v2712
        %v2797 = vadd.f32 %v2599, %v2715
        %v2798 = vadd.f32 %v2600, %v2720
        %v2799 = vadd.f32 %v2601, %v2723
        %v2800 = vadd.f32 %v2602, %v2728
        %v2801 = vadd.f32 %v2603, %v2731
        %v2802 = vadd.f32 %v2604, %v2736
        %v2803 = vadd.f32 %v2605, %v2739
        %v2804 = vadd.f32 %v2606, %v2744
        %v2805 = vadd.f32 %v2607, %v2747
        %v2806 = vadd.f32 %v2608, %v2752
        %v2807 = vadd.f32 %v2609, %v2755
        %v2808 = vadd.f32 %v2610, %v2760
        %v2809 = vadd.f32 %v2611, %v2763
        %v2810 = vadd.f32 %v2612, %v2768
        %v2811 = vadd.f32 %v2613, %v2771
        %v2812 = vadd.f32 %v2614, %v2776
        %v2813 = vadd.f32 %v2615, %v2779
        %s2814 = scalar_lea.vmem %s4, 16
        %v2815 = vld [vmem:[%s2814] sm:$0x3]
        %v2817 = vsel %vm465, %v2815, 0
        %2819 = vmatprep.subr.bf16.mxu0 0
        %2820 = vmatpush1.bf16.msra.mxu0 %v2817
        %2821 = vmatprep.subr.bf16.mxu0 0
        %2822 = vmatpush1.bf16.msra.mxu0 0
        %2823 = vmatprep.subr.bf16.mxu0 0
        %2824 = vmatpush1.bf16.msra.mxu0 0
        %2825 = vmatprep.subr.bf16.mxu0 0
        %2826 = vmatpush1.bf16.msra.mxu0 0
        %2827 = vmatprep.subr.bf16.mxu0 0
        %2828 = vmatpush1.bf16.msra.mxu0 0
        %2829 = vmatprep.subr.bf16.mxu0 0
        %2830 = vmatpush1.bf16.msra.mxu0 0
        %2831 = vmatprep.subr.bf16.mxu0 0
        %2832 = vmatpush1.bf16.msra.mxu0 0
        %2833 = vmatprep.subr.bf16.mxu0 0
        %2834 = vmatpush1.bf16.msra.mxu0 0
        %2835 = vmatprep.subr.bf16.mxu0 0
        %2836 = vmatpush1.bf16.msra.mxu0 0
        %2837 = vmatprep.subr.bf16.mxu0 0
        %2838 = vmatpush1.bf16.msra.mxu0 0
        %2839 = vmatprep.subr.bf16.mxu0 0
        %2840 = vmatpush1.bf16.msra.mxu0 0
        %2841 = vmatprep.subr.bf16.mxu0 0
        %2842 = vmatpush1.bf16.msra.mxu0 0
        %2843 = vmatprep.subr.bf16.mxu0 0
        %2844 = vmatpush1.bf16.msra.mxu0 0
        %2845 = vmatprep.subr.bf16.mxu0 0
        %2846 = vmatpush1.bf16.msra.mxu0 0
        %2847 = vmatprep.subr.bf16.mxu0 0
        %2848 = vmatpush1.bf16.msra.mxu0 0
        %2849 = vmatprep.subr.bf16.mxu0 0
        %2850 = vmatpush1.bf16.msra.mxu0 0
        %2851 = vmatprep.mubr.bf16.mxu0 0
        %2852 = vmatmul.mubr.bf16.gmra.mrb[0].mxu0 %v1561
        %v2853 = vpop.f32.mrb[0].mxu0
        %v2854 = vadd.f32 0.0, %v2853
        %v2855 = vpop.f32.mrb[0].mxu0
        %v2856 = vpop.f32.mrb[0].mxu0
        %v2857 = vadd.f32 0.0, %v2856
        %v2858 = vpop.f32.mrb[0].mxu0
        %2859 = vmatprep.mubr.bf16.mxu0 0
        %2860 = vmatmul.mubr.bf16.gmra.mrb[0].mxu0 %v1564
        %v2861 = vpop.f32.mrb[0].mxu0
        %v2862 = vadd.f32 0.0, %v2861
        %v2863 = vpop.f32.mrb[0].mxu0
        %v2864 = vpop.f32.mrb[0].mxu0
        %v2865 = vadd.f32 0.0, %v2864
        %v2866 = vpop.f32.mrb[0].mxu0
        %2867 = vmatprep.mubr.bf16.mxu0 0
        %2868 = vmatmul.mubr.bf16.gmra.mrb[0].mxu0 %v1567
        %v2869 = vpop.f32.mrb[0].mxu0
        %v2870 = vadd.f32 0.0, %v2869
        %v2871 = vpop.f32.mrb[0].mxu0
        %v2872 = vpop.f32.mrb[0].mxu0
        %v2873 = vadd.f32 0.0, %v2872
        %v2874 = vpop.f32.mrb[0].mxu0
        %2875 = vmatprep.mubr.bf16.mxu0 0
        %2876 = vmatmul.mubr.bf16.gmra.mrb[0].mxu0 %v1570
        %v2877 = vpop.f32.mrb[0].mxu0
        %v2878 = vadd.f32 0.0, %v2877
        %v2879 = vpop.f32.mrb[0].mxu0
        %v2880 = vpop.f32.mrb[0].mxu0
        %v2881 = vadd.f32 0.0, %v2880
        %v2882 = vpop.f32.mrb[0].mxu0
        %2883 = vmatprep.mubr.bf16.mxu0 0
        %2884 = vmatmul.mubr.bf16.gmra.mrb[0].mxu0 %v1573
        %v2885 = vpop.f32.mrb[0].mxu0
        %v2886 = vadd.f32 0.0, %v2885
        %v2887 = vpop.f32.mrb[0].mxu0
        %v2888 = vpop.f32.mrb[0].mxu0
        %v2889 = vadd.f32 0.0, %v2888
        %v2890 = vpop.f32.mrb[0].mxu0
        %2891 = vmatprep.mubr.bf16.mxu0 0
        %2892 = vmatmul.mubr.bf16.gmra.mrb[0].mxu0 %v1576
        %v2893 = vpop.f32.mrb[0].mxu0
        %v2894 = vadd.f32 0.0, %v2893
        %v2895 = vpop.f32.mrb[0].mxu0
        %v2896 = vpop.f32.mrb[0].mxu0
        %v2897 = vadd.f32 0.0, %v2896
        %v2898 = vpop.f32.mrb[0].mxu0
        %2899 = vmatprep.mubr.bf16.mxu0 0
        %2900 = vmatmul.mubr.bf16.gmra.mrb[0].mxu0 %v1579
        %v2901 = vpop.f32.mrb[0].mxu0
        %v2902 = vadd.f32 0.0, %v2901
        %v2903 = vpop.f32.mrb[0].mxu0
        %v2904 = vpop.f32.mrb[0].mxu0
        %v2905 = vadd.f32 0.0, %v2904
        %v2906 = vpop.f32.mrb[0].mxu0
        %2907 = vmatprep.mubr.bf16.mxu0 0
        %2908 = vmatmul.mubr.bf16.gmra.mrb[0].mxu0 %v1582
        %v2909 = vpop.f32.mrb[0].mxu0
        %v2910 = vadd.f32 0.0, %v2909
        %v2911 = vpop.f32.mrb[0].mxu0
        %v2912 = vpop.f32.mrb[0].mxu0
        %v2913 = vadd.f32 0.0, %v2912
        %v2914 = vpop.f32.mrb[0].mxu0
        %2915 = vmatprep.mubr.bf16.mxu0 0
        %2916 = vmatmul.mubr.bf16.gmra.mrb[0].mxu0 %v1585
        %v2917 = vpop.f32.mrb[0].mxu0
        %v2918 = vadd.f32 0.0, %v2917
        %v2919 = vpop.f32.mrb[0].mxu0
        %v2920 = vpop.f32.mrb[0].mxu0
        %v2921 = vadd.f32 0.0, %v2920
        %v2922 = vpop.f32.mrb[0].mxu0
        %2923 = vmatprep.mubr.bf16.mxu0 0
        %2924 = vmatmul.mubr.bf16.gmra.mrb[0].mxu0 %v1588
        %v2925 = vpop.f32.mrb[0].mxu0
        %v2926 = vadd.f32 0.0, %v2925
        %v2927 = vpop.f32.mrb[0].mxu0
        %v2928 = vpop.f32.mrb[0].mxu0
        %v2929 = vadd.f32 0.0, %v2928
        %v2930 = vpop.f32.mrb[0].mxu0
        %2931 = vmatprep.mubr.bf16.mxu0 0
        %2932 = vmatmul.mubr.bf16.gmra.mrb[0].mxu0 %v1591
        %v2933 = vpop.f32.mrb[0].mxu0
        %v2934 = vadd.f32 0.0, %v2933
        %v2935 = vpop.f32.mrb[0].mxu0
        %v2936 = vpop.f32.mrb[0].mxu0
        %v2937 = vadd.f32 0.0, %v2936
        %v2938 = vpop.f32.mrb[0].mxu0
        %2939 = vmatprep.mubr.bf16.mxu0 0
        %2940 = vmatmul.mubr.bf16.gmra.mrb[0].mxu0 %v1594
        %v2941 = vpop.f32.mrb[0].mxu0
        %v2942 = vadd.f32 0.0, %v2941
        %v2943 = vpop.f32.mrb[0].mxu0
        %v2944 = vpop.f32.mrb[0].mxu0
        %v2945 = vadd.f32 0.0, %v2944
        %v2946 = vpop.f32.mrb[0].mxu0
        %2947 = vmatprep.mubr.bf16.mxu0 0
        %2948 = vmatmul.mubr.bf16.gmra.mrb[0].mxu0 %v1597
        %v2949 = vpop.f32.mrb[0].mxu0
        %v2950 = vadd.f32 0.0, %v2949
        %v2951 = vpop.f32.mrb[0].mxu0
        %v2952 = vpop.f32.mrb[0].mxu0
        %v2953 = vadd.f32 0.0, %v2952
        %v2954 = vpop.f32.mrb[0].mxu0
        %2955 = vmatprep.mubr.bf16.mxu0 0
        %2956 = vmatmul.mubr.bf16.gmra.mrb[0].mxu0 %v1600
        %v2957 = vpop.f32.mrb[0].mxu0
        %v2958 = vadd.f32 0.0, %v2957
        %v2959 = vpop.f32.mrb[0].mxu0
        %v2960 = vpop.f32.mrb[0].mxu0
        %v2961 = vadd.f32 0.0, %v2960
        %v2962 = vpop.f32.mrb[0].mxu0
        %2963 = vmatprep.mubr.bf16.mxu0 0
        %2964 = vmatmul.mubr.bf16.gmra.mrb[0].mxu0 %v2220
        %v2965 = vpop.f32.mrb[0].mxu0
        %v2966 = vadd.f32 0.0, %v2965
        %v2967 = vpop.f32.mrb[0].mxu0
        %v2968 = vpop.f32.mrb[0].mxu0
        %v2969 = vadd.f32 0.0, %v2968
        %v2970 = vpop.f32.mrb[0].mxu0
        %2971 = vmatprep.mubr.bf16.mxu0 0
        %2972 = vmatmul.mubr.bf16.gmra.mrb[0].mxu0 %v1555
        %v2973 = vpop.f32.mrb[0].mxu0
        %v2974 = vadd.f32 0.0, %v2973
        %v2975 = vpop.f32.mrb[0].mxu0
        %v2976 = vpop.f32.mrb[0].mxu0
        %v2977 = vadd.f32 0.0, %v2976
        %v2978 = vpop.f32.mrb[0].mxu0
        %2979 = vdwg.mxu0
        %v2980 = vadd.f32 %v2782, %v2854
        %v2981 = vadd.f32 %v2783, %v2857
        %v2982 = vadd.f32 %v2784, %v2862
        %v2983 = vadd.f32 %v2785, %v2865
        %v2984 = vadd.f32 %v2786, %v2870
        %v2985 = vadd.f32 %v2787, %v2873
        %v2986 = vadd.f32 %v2788, %v2878
        %v2987 = vadd.f32 %v2789, %v2881
        %v2988 = vadd.f32 %v2790, %v2886
        %v2989 = vadd.f32 %v2791, %v2889
        %v2990 = vadd.f32 %v2792, %v2894
        %v2991 = vadd.f32 %v2793, %v2897
        %v2992 = vadd.f32 %v2794, %v2902
        %v2993 = vadd.f32 %v2795, %v2905
        %v2994 = vadd.f32 %v2796, %v2910
        %v2995 = vadd.f32 %v2797, %v2913
        %v2996 = vadd.f32 %v2798, %v2918
        %v2997 = vadd.f32 %v2799, %v2921
        %v2998 = vadd.f32 %v2800, %v2926
        %v2999 = vadd.f32 %v2801, %v2929
        %v3000 = vadd.f32 %v2802, %v2934
        %v3001 = vadd.f32 %v2803, %v2937
        %v3002 = vadd.f32 %v2804, %v2942
        %v3003 = vadd.f32 %v2805, %v2945
        %v3004 = vadd.f32 %v2806, %v2950
        %v3005 = vadd.f32 %v2807, %v2953
        %v3006 = vadd.f32 %v2808, %v2958
        %v3007 = vadd.f32 %v2809, %v2961
        %v3008 = vadd.f32 %v2810, %v2966
        %v3009 = vadd.f32 %v2811, %v2969
        %v3010 = vadd.f32 %v2812, %v2974
        %v3011 = vadd.f32 %v2813, %v2977
        %v3012 = vld [vmem:[%s5] sm:$0x3]
        %v3013 = vld [vmem:[%s6] sm:$0x1]
        %v3015 = vlaneseq
        %v3016 = vshrl.u32 %v3015, 7
        %v3017 = vsub.s32 0, %v3016
        %v3018 = vrot.slane %v3013, %v3017
        %v3021 = vsel %vm465, %v3012, 0
        %3023 = vmatprep.subr.bf16.mxu0 0
        %3024 = vmatpush1.bf16.msra.mxu0 %v3021
        %3025 = vmatprep.subr.bf16.mxu0 0
        %3026 = vmatpush1.bf16.msra.mxu0 0
        %3027 = vmatprep.subr.bf16.mxu0 0
        %3028 = vmatpush1.bf16.msra.mxu0 0
        %3029 = vmatprep.subr.bf16.mxu0 0
        %3030 = vmatpush1.bf16.msra.mxu0 0
        %3031 = vmatprep.subr.bf16.mxu0 0
        %3032 = vmatpush1.bf16.msra.mxu0 0
        %3033 = vmatprep.subr.bf16.mxu0 0
        %3034 = vmatpush1.bf16.msra.mxu0 0
        %3035 = vmatprep.subr.bf16.mxu0 0
        %3036 = vmatpush1.bf16.msra.mxu0 0
        %3037 = vmatprep.subr.bf16.mxu0 0
        %3038 = vmatpush1.bf16.msra.mxu0 0
        %3039 = vmatprep.subr.bf16.mxu0 0
        %3040 = vmatpush1.bf16.msra.mxu0 0
        %3041 = vmatprep.subr.bf16.mxu0 0
        %3042 = vmatpush1.bf16.msra.mxu0 0
        %3043 = vmatprep.subr.bf16.mxu0 0
        %3044 = vmatpush1.bf16.msra.mxu0 0
        %3045 = vmatprep.subr.bf16.mxu0 0
        %3046 = vmatpush1.bf16.msra.mxu0 0
        %3047 = vmatprep.subr.bf16.mxu0 0
        %3048 = vmatpush1.bf16.msra.mxu0 0
        %3049 = vmatprep.subr.bf16.mxu0 0
        %3050 = vmatpush1.bf16.msra.mxu0 0
        %3051 = vmatprep.subr.bf16.mxu0 0
        %3052 = vmatpush1.bf16.msra.mxu0 0
        %3053 = vmatprep.subr.bf16.mxu0 0
        %3054 = vmatpush1.bf16.msra.mxu0 0
        %3055 = vmatprep.mubr.bf16.mxu0 0
        %3056 = vmatmul.mubr.bf16.gmra.mrb[0].mxu0 %v418
        %v3057 = vpop.f32.mrb[0].mxu0
        %v3058 = vadd.f32 %v3018, %v3057
        %v3059 = vpop.f32.mrb[0].mxu0
        %v3060 = vpop.f32.mrb[0].mxu0
        %v3061 = vadd.f32 %v3018, %v3060
        %v3062 = vpop.f32.mrb[0].mxu0
        %3063 = vmatprep.mubr.bf16.mxu0 0
        %3064 = vmatmul.mubr.bf16.gmra.mrb[0].mxu0 %v421
        %v3065 = vpop.f32.mrb[0].mxu0
        %v3066 = vadd.f32 %v3018, %v3065
        %v3067 = vpop.f32.mrb[0].mxu0
        %v3068 = vpop.f32.mrb[0].mxu0
        %v3069 = vadd.f32 %v3018, %v3068
        %v3070 = vpop.f32.mrb[0].mxu0
        %3071 = vmatprep.mubr.bf16.mxu0 0
        %3072 = vmatmul.mubr.bf16.gmra.mrb[0].mxu0 %v424
        %v3073 = vpop.f32.mrb[0].mxu0
        %v3074 = vadd.f32 %v3018, %v3073
        %v3075 = vpop.f32.mrb[0].mxu0
        %v3076 = vpop.f32.mrb[0].mxu0
        %v3077 = vadd.f32 %v3018, %v3076
        %v3078 = vpop.f32.mrb[0].mxu0
        %3079 = vmatprep.mubr.bf16.mxu0 0
        %3080 = vmatmul.mubr.bf16.gmra.mrb[0].mxu0 %v427
        %v3081 = vpop.f32.mrb[0].mxu0
        %v3082 = vadd.f32 %v3018, %v3081
        %v3083 = vpop.f32.mrb[0].mxu0
        %v3084 = vpop.f32.mrb[0].mxu0
        %v3085 = vadd.f32 %v3018, %v3084
        %v3086 = vpop.f32.mrb[0].mxu0
        %3087 = vmatprep.mubr.bf16.mxu0 0
        %3088 = vmatmul.mubr.bf16.gmra.mrb[0].mxu0 %v430
        %v3089 = vpop.f32.mrb[0].mxu0
        %v3090 = vadd.f32 %v3018, %v3089
        %v3091 = vpop.f32.mrb[0].mxu0
        %v3092 = vpop.f32.mrb[0].mxu0
        %v3093 = vadd.f32 %v3018, %v3092
        %v3094 = vpop.f32.mrb[0].mxu0
        %3095 = vmatprep.mubr.bf16.mxu0 0
        %3096 = vmatmul.mubr.bf16.gmra.mrb[0].mxu0 %v433
        %v3097 = vpop.f32.mrb[0].mxu0
        %v3098 = vadd.f32 %v3018, %v3097
        %v3099 = vpop.f32.mrb[0].mxu0
        %v3100 = vpop.f32.mrb[0].mxu0
        %v3101 = vadd.f32 %v3018, %v3100
        %v3102 = vpop.f32.mrb[0].mxu0
        %3103 = vmatprep.mubr.bf16.mxu0 0
        %3104 = vmatmul.mubr.bf16.gmra.mrb[0].mxu0 %v436
        %v3105 = vpop.f32.mrb[0].mxu0
        %v3106 = vadd.f32 %v3018, %v3105
        %v3107 = vpop.f32.mrb[0].mxu0
        %v3108 = vpop.f32.mrb[0].mxu0
        %v3109 = vadd.f32 %v3018, %v3108
        %v3110 = vpop.f32.mrb[0].mxu0
        %3111 = vmatprep.mubr.bf16.mxu0 0
        %3112 = vmatmul.mubr.bf16.gmra.mrb[0].mxu0 %v439
        %v3113 = vpop.f32.mrb[0].mxu0
        %v3114 = vadd.f32 %v3018, %v3113
        %v3115 = vpop.f32.mrb[0].mxu0
        %v3116 = vpop.f32.mrb[0].mxu0
        %v3117 = vadd.f32 %v3018, %v3116
        %v3118 = vpop.f32.mrb[0].mxu0
        %3119 = vmatprep.mubr.bf16.mxu0 0
        %3120 = vmatmul.mubr.bf16.gmra.mrb[0].mxu0 %v442
        %v3121 = vpop.f32.mrb[0].mxu0
        %v3122 = vadd.f32 %v3018, %v3121
        %v3123 = vpop.f32.mrb[0].mxu0
        %v3124 = vpop.f32.mrb[0].mxu0
        %v3125 = vadd.f32 %v3018, %v3124
        %v3126 = vpop.f32.mrb[0].mxu0
        %3127 = vmatprep.mubr.bf16.mxu0 0
        %3128 = vmatmul.mubr.bf16.gmra.mrb[0].mxu0 %v445
        %v3129 = vpop.f32.mrb[0].mxu0
        %v3130 = vadd.f32 %v3018, %v3129
        %v3131 = vpop.f32.mrb[0].mxu0
        %v3132 = vpop.f32.mrb[0].mxu0
        %v3133 = vadd.f32 %v3018, %v3132
        %v3134 = vpop.f32.mrb[0].mxu0
        %3135 = vmatprep.mubr.bf16.mxu0 0
        %3136 = vmatmul.mubr.bf16.gmra.mrb[0].mxu0 %v448
        %v3137 = vpop.f32.mrb[0].mxu0
        %v3138 = vadd.f32 %v3018, %v3137
        %v3139 = vpop.f32.mrb[0].mxu0
        %v3140 = vpop.f32.mrb[0].mxu0
        %v3141 = vadd.f32 %v3018, %v3140
        %v3142 = vpop.f32.mrb[0].mxu0
        %3143 = vmatprep.mubr.bf16.mxu0 0
        %3144 = vmatmul.mubr.bf16.gmra.mrb[0].mxu0 %v451
        %v3145 = vpop.f32.mrb[0].mxu0
        %v3146 = vadd.f32 %v3018, %v3145
        %v3147 = vpop.f32.mrb[0].mxu0
        %v3148 = vpop.f32.mrb[0].mxu0
        %v3149 = vadd.f32 %v3018, %v3148
        %v3150 = vpop.f32.mrb[0].mxu0
        %3151 = vmatprep.mubr.bf16.mxu0 0
        %3152 = vmatmul.mubr.bf16.gmra.mrb[0].mxu0 %v454
        %v3153 = vpop.f32.mrb[0].mxu0
        %v3154 = vadd.f32 %v3018, %v3153
        %v3155 = vpop.f32.mrb[0].mxu0
        %v3156 = vpop.f32.mrb[0].mxu0
        %v3157 = vadd.f32 %v3018, %v3156
        %v3158 = vpop.f32.mrb[0].mxu0
        %3159 = vmatprep.mubr.bf16.mxu0 0
        %3160 = vmatmul.mubr.bf16.gmra.mrb[0].mxu0 %v457
        %v3161 = vpop.f32.mrb[0].mxu0
        %v3162 = vadd.f32 %v3018, %v3161
        %v3163 = vpop.f32.mrb[0].mxu0
        %v3164 = vpop.f32.mrb[0].mxu0
        %v3165 = vadd.f32 %v3018, %v3164
        %v3166 = vpop.f32.mrb[0].mxu0
        %3167 = vmatprep.mubr.bf16.mxu0 0
        %3168 = vmatmul.mubr.bf16.gmra.mrb[0].mxu0 %v460
        %v3169 = vpop.f32.mrb[0].mxu0
        %v3170 = vadd.f32 %v3018, %v3169
        %v3171 = vpop.f32.mrb[0].mxu0
        %v3172 = vpop.f32.mrb[0].mxu0
        %v3173 = vadd.f32 %v3018, %v3172
        %v3174 = vpop.f32.mrb[0].mxu0
        %3175 = vmatprep.mubr.bf16.mxu0 0
        %3176 = vmatmul.mubr.bf16.gmra.mrb[0].mxu0 %v463
        %v3177 = vpop.f32.mrb[0].mxu0
        %v3178 = vadd.f32 %v3018, %v3177
        %v3179 = vpop.f32.mrb[0].mxu0
        %v3180 = vpop.f32.mrb[0].mxu0
        %v3181 = vadd.f32 %v3018, %v3180
        %v3182 = vpop.f32.mrb[0].mxu0
        %3183 = vdwg.mxu0
        %v3184 = vmax.f32 %v3058, 0.0
        %v3185 = vmax.f32 %v3061, 0.0
        %v3186 = vmax.f32 %v3066, 0.0
        %v3187 = vmax.f32 %v3069, 0.0
        %v3188 = vmax.f32 %v3074, 0.0
        %v3189 = vmax.f32 %v3077, 0.0
        %v3190 = vmax.f32 %v3082, 0.0
        %v3191 = vmax.f32 %v3085, 0.0
        %v3192 = vmax.f32 %v3090, 0.0
        %v3193 = vmax.f32 %v3093, 0.0
        %v3194 = vmax.f32 %v3098, 0.0
        %v3195 = vmax.f32 %v3101, 0.0
        %v3196 = vmax.f32 %v3106, 0.0
        %v3197 = vmax.f32 %v3109, 0.0
        %v3198 = vmax.f32 %v3114, 0.0
        %v3199 = vmax.f32 %v3117, 0.0
        %v3200 = vmax.f32 %v3122, 0.0
        %v3201 = vmax.f32 %v3125, 0.0
        %v3202 = vmax.f32 %v3130, 0.0
        %v3203 = vmax.f32 %v3133, 0.0
        %v3204 = vmax.f32 %v3138, 0.0
        %v3205 = vmax.f32 %v3141, 0.0
        %v3206 = vmax.f32 %v3146, 0.0
        %v3207 = vmax.f32 %v3149, 0.0
        %v3208 = vmax.f32 %v3154, 0.0
        %v3209 = vmax.f32 %v3157, 0.0
        %v3210 = vmax.f32 %v3162, 0.0
        %v3211 = vmax.f32 %v3165, 0.0
        %v3212 = vmax.f32 %v3170, 0.0
        %v3213 = vmax.f32 %v3173, 0.0
        %v3214 = vmax.f32 %v3178, 0.0
        %v3215 = vmax.f32 %v3181, 0.0
        %v3244 = vrot.slane 0.0, 6
        %v3245 = vsel %vm465, %v3244, %v3244
        %v3246 = vrot.slane %v3184, 6
        %v3247 = vsel %vm465, %v3244, %v3246
        %v3248 = vrot.slane %v3185, 6
        %v3249 = vsel %vm465, %v3246, %v3248
        %v3250 = vrot.slane %v3186, 6
        %v3251 = vsel %vm465, %v3244, %v3250
        %v3252 = vrot.slane %v3187, 6
        %v3253 = vsel %vm465, %v3250, %v3252
        %v3254 = vrot.slane %v3188, 6
        %v3255 = vsel %vm465, %v3244, %v3254
        %v3256 = vrot.slane %v3189, 6
        %v3257 = vsel %vm465, %v3254, %v3256
        %v3258 = vrot.slane %v3190, 6
        %v3259 = vsel %vm465, %v3244, %v3258
        %v3260 = vrot.slane %v3191, 6
        %v3261 = vsel %vm465, %v3258, %v3260
        %v3262 = vrot.slane %v3192, 6
        %v3263 = vsel %vm465, %v3244, %v3262
        %v3264 = vrot.slane %v3193, 6
        %v3265 = vsel %vm465, %v3262, %v3264
        %v3266 = vrot.slane %v3194, 6
        %v3267 = vsel %vm465, %v3244, %v3266
        %v3268 = vrot.slane %v3195, 6
        %v3269 = vsel %vm465, %v3266, %v3268
        %v3270 = vrot.slane %v3196, 6
        %v3271 = vsel %vm465, %v3244, %v3270
        %v3272 = vrot.slane %v3197, 6
        %v3273 = vsel %vm465, %v3270, %v3272
        %v3274 = vrot.slane %v3198, 6
        %v3275 = vsel %vm465, %v3244, %v3274
        %v3276 = vrot.slane %v3199, 6
        %v3277 = vsel %vm465, %v3274, %v3276
        %v3278 = vrot.slane %v3200, 6
        %v3279 = vsel %vm465, %v3244, %v3278
        %v3280 = vrot.slane %v3201, 6
        %v3281 = vsel %vm465, %v3278, %v3280
        %v3282 = vrot.slane %v3202, 6
        %v3283 = vsel %vm465, %v3244, %v3282
        %v3284 = vrot.slane %v3203, 6
        %v3285 = vsel %vm465, %v3282, %v3284
        %v3286 = vrot.slane %v3204, 6
        %v3287 = vsel %vm465, %v3244, %v3286
        %v3288 = vrot.slane %v3205, 6
        %v3289 = vsel %vm465, %v3286, %v3288
        %v3290 = vrot.slane %v3206, 6
        %v3291 = vsel %vm465, %v3244, %v3290
        %v3292 = vrot.slane %v3207, 6
        %v3293 = vsel %vm465, %v3290, %v3292
        %v3294 = vrot.slane %v3208, 6
        %v3295 = vsel %vm465, %v3244, %v3294
        %v3296 = vrot.slane %v3209, 6
        %v3297 = vsel %vm465, %v3294, %v3296
        %v3298 = vrot.slane %v3210, 6
        %v3299 = vsel %vm465, %v3244, %v3298
        %v3300 = vrot.slane %v3211, 6
        %v3301 = vsel %vm465, %v3298, %v3300
        %v3331 = vld [vmem:[%s7] sm:$0x1]
        %v3332 = vpack.c.bf16 %v3245, %v3245
        %v3333 = vpack.c.bf16 %v3249, %v3247
        %v3334 = vpack.c.bf16 %v3253, %v3251
        %v3335 = vpack.c.bf16 %v3257, %v3255
        %v3336 = vpack.c.bf16 %v3261, %v3259
        %v3337 = vpack.c.bf16 %v3265, %v3263
        %v3338 = vpack.c.bf16 %v3269, %v3267
        %v3339 = vpack.c.bf16 %v3273, %v3271
        %v3340 = vpack.c.bf16 %v3277, %v3275
        %v3341 = vpack.c.bf16 %v3281, %v3279
        %v3342 = vpack.c.bf16 %v3285, %v3283
        %v3343 = vpack.c.bf16 %v3289, %v3287
        %v3344 = vpack.c.bf16 %v3293, %v3291
        %v3345 = vpack.c.bf16 %v3297, %v3295
        %v3346 = vpack.c.bf16 %v3301, %v3299
        %vm3347 = vcmask 15360
        %v3349 = vsel %vm3347, %v3332, 0
        %v3352 = vsel %vm3347, %v3333, 0
        %v3355 = vsel %vm3347, %v3334, 0
        %v3358 = vsel %vm3347, %v3335, 0
        %v3361 = vsel %vm3347, %v3336, 0
        %v3364 = vsel %vm3347, %v3337, 0
        %v3367 = vsel %vm3347, %v3338, 0
        %v3370 = vsel %vm3347, %v3339, 0
        %v3373 = vsel %vm3347, %v3340, 0
        %v3376 = vsel %vm3347, %v3341, 0
        %v3379 = vsel %vm3347, %v3342, 0
        %v3382 = vsel %vm3347, %v3343, 0
        %v3385 = vsel %vm3347, %v3344, 0
        %v3388 = vsel %vm3347, %v3345, 0
        %v3391 = vsel %vm3347, %v3346, 0
        %v3394 = vsel %vm693, %v3331, 0
        %3396 = vmatprep.subr.bf16.mxu0 0
        %3397 = vmatpush1.bf16.msra.mxu0 %v3394
        %3398 = vmatprep.subr.bf16.mxu0 0
        %3399 = vmatpush1.bf16.msra.mxu0 0
        %3400 = vmatprep.subr.bf16.mxu0 0
        %3401 = vmatpush1.bf16.msra.mxu0 0
        %3402 = vmatprep.subr.bf16.mxu0 0
        %3403 = vmatpush1.bf16.msra.mxu0 0
        %3404 = vmatprep.subr.bf16.mxu0 0
        %3405 = vmatpush1.bf16.msra.mxu0 0
        %3406 = vmatprep.subr.bf16.mxu0 0
        %3407 = vmatpush1.bf16.msra.mxu0 0
        %3408 = vmatprep.subr.bf16.mxu0 0
        %3409 = vmatpush1.bf16.msra.mxu0 0
        %3410 = vmatprep.subr.bf16.mxu0 0
        %3411 = vmatpush1.bf16.msra.mxu0 0
        %3412 = vmatprep.subr.bf16.mxu0 0
        %3413 = vmatpush1.bf16.msra.mxu0 0
        %3414 = vmatprep.subr.bf16.mxu0 0
        %3415 = vmatpush1.bf16.msra.mxu0 0
        %3416 = vmatprep.subr.bf16.mxu0 0
        %3417 = vmatpush1.bf16.msra.mxu0 0
        %3418 = vmatprep.subr.bf16.mxu0 0
        %3419 = vmatpush1.bf16.msra.mxu0 0
        %3420 = vmatprep.subr.bf16.mxu0 0
        %3421 = vmatpush1.bf16.msra.mxu0 0
        %3422 = vmatprep.subr.bf16.mxu0 0
        %3423 = vmatpush1.bf16.msra.mxu0 0
        %3424 = vmatprep.subr.bf16.mxu0 0
        %3425 = vmatpush1.bf16.msra.mxu0 0
        %3426 = vmatprep.subr.bf16.mxu0 0
        %3427 = vmatpush1.bf16.msra.mxu0 0
        %3428 = vmatprep.mubr.bf16.mxu0 0
        %3429 = vmatmul.mubr.bf16.gmra.mrb[0].mxu0 %v3349
        %v3430 = vpop.f32.mrb[0].mxu0
        %v3431 = vadd.f32 0.0, %v3430
        %v3432 = vpop.f32.mrb[0].mxu0
        %v3433 = vpop.f32.mrb[0].mxu0
        %v3434 = vadd.f32 0.0, %v3433
        %v3435 = vpop.f32.mrb[0].mxu0
        %3436 = vmatprep.mubr.bf16.mxu0 0
        %3437 = vmatmul.mubr.bf16.gmra.mrb[0].mxu0 %v3349
        %v3438 = vpop.f32.mrb[0].mxu0
        %v3439 = vadd.f32 0.0, %v3438
        %v3440 = vpop.f32.mrb[0].mxu0
        %v3441 = vpop.f32.mrb[0].mxu0
        %v3442 = vadd.f32 0.0, %v3441
        %v3443 = vpop.f32.mrb[0].mxu0
        %3444 = vmatprep.mubr.bf16.mxu0 0
        %3445 = vmatmul.mubr.bf16.gmra.mrb[0].mxu0 %v3352
        %v3446 = vpop.f32.mrb[0].mxu0
        %v3447 = vadd.f32 0.0, %v3446
        %v3448 = vpop.f32.mrb[0].mxu0
        %v3449 = vpop.f32.mrb[0].mxu0
        %v3450 = vadd.f32 0.0, %v3449
        %v3451 = vpop.f32.mrb[0].mxu0
        %3452 = vmatprep.mubr.bf16.mxu0 0
        %3453 = vmatmul.mubr.bf16.gmra.mrb[0].mxu0 %v3355
        %v3454 = vpop.f32.mrb[0].mxu0
        %v3455 = vadd.f32 0.0, %v3454
        %v3456 = vpop.f32.mrb[0].mxu0
        %v3457 = vpop.f32.mrb[0].mxu0
        %v3458 = vadd.f32 0.0, %v3457
        %v3459 = vpop.f32.mrb[0].mxu0
        %3460 = vmatprep.mubr.bf16.mxu0 0
        %3461 = vmatmul.mubr.bf16.gmra.mrb[0].mxu0 %v3358
        %v3462 = vpop.f32.mrb[0].mxu0
        %v3463 = vadd.f32 0.0, %v3462
        %v3464 = vpop.f32.mrb[0].mxu0
        %v3465 = vpop.f32.mrb[0].mxu0
        %v3466 = vadd.f32 0.0, %v3465
        %v3467 = vpop.f32.mrb[0].mxu0
        %3468 = vmatprep.mubr.bf16.mxu0 0
        %3469 = vmatmul.mubr.bf16.gmra.mrb[0].mxu0 %v3361
        %v3470 = vpop.f32.mrb[0].mxu0
        %v3471 = vadd.f32 0.0, %v3470
        %v3472 = vpop.f32.mrb[0].mxu0
        %v3473 = vpop.f32.mrb[0].mxu0
        %v3474 = vadd.f32 0.0, %v3473
        %v3475 = vpop.f32.mrb[0].mxu0
        %3476 = vmatprep.mubr.bf16.mxu0 0
        %3477 = vmatmul.mubr.bf16.gmra.mrb[0].mxu0 %v3364
        %v3478 = vpop.f32.mrb[0].mxu0
        %v3479 = vadd.f32 0.0, %v3478
        %v3480 = vpop.f32.mrb[0].mxu0
        %v3481 = vpop.f32.mrb[0].mxu0
        %v3482 = vadd.f32 0.0, %v3481
        %v3483 = vpop.f32.mrb[0].mxu0
        %3484 = vmatprep.mubr.bf16.mxu0 0
        %3485 = vmatmul.mubr.bf16.gmra.mrb[0].mxu0 %v3367
        %v3486 = vpop.f32.mrb[0].mxu0
        %v3487 = vadd.f32 0.0, %v3486
        %v3488 = vpop.f32.mrb[0].mxu0
        %v3489 = vpop.f32.mrb[0].mxu0
        %v3490 = vadd.f32 0.0, %v3489
        %v3491 = vpop.f32.mrb[0].mxu0
        %3492 = vmatprep.mubr.bf16.mxu0 0
        %3493 = vmatmul.mubr.bf16.gmra.mrb[0].mxu0 %v3370
        %v3494 = vpop.f32.mrb[0].mxu0
        %v3495 = vadd.f32 0.0, %v3494
        %v3496 = vpop.f32.mrb[0].mxu0
        %v3497 = vpop.f32.mrb[0].mxu0
        %v3498 = vadd.f32 0.0, %v3497
        %v3499 = vpop.f32.mrb[0].mxu0
        %3500 = vmatprep.mubr.bf16.mxu0 0
        %3501 = vmatmul.mubr.bf16.gmra.mrb[0].mxu0 %v3373
        %v3502 = vpop.f32.mrb[0].mxu0
        %v3503 = vadd.f32 0.0, %v3502
        %v3504 = vpop.f32.mrb[0].mxu0
        %v3505 = vpop.f32.mrb[0].mxu0
        %v3506 = vadd.f32 0.0, %v3505
        %v3507 = vpop.f32.mrb[0].mxu0
        %3508 = vmatprep.mubr.bf16.mxu0 0
        %3509 = vmatmul.mubr.bf16.gmra.mrb[0].mxu0 %v3376
        %v3510 = vpop.f32.mrb[0].mxu0
        %v3511 = vadd.f32 0.0, %v3510
        %v3512 = vpop.f32.mrb[0].mxu0
        %v3513 = vpop.f32.mrb[0].mxu0
        %v3514 = vadd.f32 0.0, %v3513
        %v3515 = vpop.f32.mrb[0].mxu0
        %3516 = vmatprep.mubr.bf16.mxu0 0
        %3517 = vmatmul.mubr.bf16.gmra.mrb[0].mxu0 %v3379
        %v3518 = vpop.f32.mrb[0].mxu0
        %v3519 = vadd.f32 0.0, %v3518
        %v3520 = vpop.f32.mrb[0].mxu0
        %v3521 = vpop.f32.mrb[0].mxu0
        %v3522 = vadd.f32 0.0, %v3521
        %v3523 = vpop.f32.mrb[0].mxu0
        %3524 = vmatprep.mubr.bf16.mxu0 0
        %3525 = vmatmul.mubr.bf16.gmra.mrb[0].mxu0 %v3382
        %v3526 = vpop.f32.mrb[0].mxu0
        %v3527 = vadd.f32 0.0, %v3526
        %v3528 = vpop.f32.mrb[0].mxu0
        %v3529 = vpop.f32.mrb[0].mxu0
        %v3530 = vadd.f32 0.0, %v3529
        %v3531 = vpop.f32.mrb[0].mxu0
        %3532 = vmatprep.mubr.bf16.mxu0 0
        %3533 = vmatmul.mubr.bf16.gmra.mrb[0].mxu0 %v3385
        %v3534 = vpop.f32.mrb[0].mxu0
        %v3535 = vadd.f32 0.0, %v3534
        %v3536 = vpop.f32.mrb[0].mxu0
        %v3537 = vpop.f32.mrb[0].mxu0
        %v3538 = vadd.f32 0.0, %v3537
        %v3539 = vpop.f32.mrb[0].mxu0
        %3540 = vmatprep.mubr.bf16.mxu0 0
        %3541 = vmatmul.mubr.bf16.gmra.mrb[0].mxu0 %v3388
        %v3542 = vpop.f32.mrb[0].mxu0
        %v3543 = vadd.f32 0.0, %v3542
        %v3544 = vpop.f32.mrb[0].mxu0
        %v3545 = vpop.f32.mrb[0].mxu0
        %v3546 = vadd.f32 0.0, %v3545
        %v3547 = vpop.f32.mrb[0].mxu0
        %3548 = vmatprep.mubr.bf16.mxu0 0
        %3549 = vmatmul.mubr.bf16.gmra.mrb[0].mxu0 %v3391
        %v3550 = vpop.f32.mrb[0].mxu0
        %v3551 = vadd.f32 0.0, %v3550
        %v3552 = vpop.f32.mrb[0].mxu0
        %v3553 = vpop.f32.mrb[0].mxu0
        %v3554 = vadd.f32 0.0, %v3553
        %v3555 = vpop.f32.mrb[0].mxu0
        %3556 = vdwg.mxu0
        %v3557 = vadd.f32 %v2980, %v3431
        %v3558 = vadd.f32 %v2981, %v3434
        %v3559 = vadd.f32 %v2982, %v3439
        %v3560 = vadd.f32 %v2983, %v3442
        %v3561 = vadd.f32 %v2984, %v3447
        %v3562 = vadd.f32 %v2985, %v3450
        %v3563 = vadd.f32 %v2986, %v3455
        %v3564 = vadd.f32 %v2987, %v3458
        %v3565 = vadd.f32 %v2988, %v3463
        %v3566 = vadd.f32 %v2989, %v3466
        %v3567 = vadd.f32 %v2990, %v3471
        %v3568 = vadd.f32 %v2991, %v3474
        %v3569 = vadd.f32 %v2992, %v3479
        %v3570 = vadd.f32 %v2993, %v3482
        %v3571 = vadd.f32 %v2994, %v3487
        %v3572 = vadd.f32 %v2995, %v3490
        %v3573 = vadd.f32 %v2996, %v3495
        %v3574 = vadd.f32 %v2997, %v3498
        %v3575 = vadd.f32 %v2998, %v3503
        %v3576 = vadd.f32 %v2999, %v3506
        %v3577 = vadd.f32 %v3000, %v3511
        %v3578 = vadd.f32 %v3001, %v3514
        %v3579 = vadd.f32 %v3002, %v3519
        %v3580 = vadd.f32 %v3003, %v3522
        %v3581 = vadd.f32 %v3004, %v3527
        %v3582 = vadd.f32 %v3005, %v3530
        %v3583 = vadd.f32 %v3006, %v3535
        %v3584 = vadd.f32 %v3007, %v3538
        %v3585 = vadd.f32 %v3008, %v3543
        %v3586 = vadd.f32 %v3009, %v3546
        %v3587 = vadd.f32 %v3010, %v3551
        %v3588 = vadd.f32 %v3011, %v3554
        %v3589 = vrot.slane %v3184, 7
        %v3590 = vsel %vm693, %v694, %v3589
        %v3591 = vrot.slane %v3185, 7
        %v3592 = vsel %vm693, %v3589, %v3591
        %v3593 = vrot.slane %v3186, 7
        %v3594 = vsel %vm693, %v694, %v3593
        %v3595 = vrot.slane %v3187, 7
        %v3596 = vsel %vm693, %v3593, %v3595
        %v3597 = vrot.slane %v3188, 7
        %v3598 = vsel %vm693, %v694, %v3597
        %v3599 = vrot.slane %v3189, 7
        %v3600 = vsel %vm693, %v3597, %v3599
        %v3601 = vrot.slane %v3190, 7
        %v3602 = vsel %vm693, %v694, %v3601
        %v3603 = vrot.slane %v3191, 7
        %v3604 = vsel %vm693, %v3601, %v3603
        %v3605 = vrot.slane %v3192, 7
        %v3606 = vsel %vm693, %v694, %v3605
        %v3607 = vrot.slane %v3193, 7
        %v3608 = vsel %vm693, %v3605, %v3607
        %v3609 = vrot.slane %v3194, 7
        %v3610 = vsel %vm693, %v694, %v3609
        %v3611 = vrot.slane %v3195, 7
        %v3612 = vsel %vm693, %v3609, %v3611
        %v3613 = vrot.slane %v3196, 7
        %v3614 = vsel %vm693, %v694, %v3613
        %v3615 = vrot.slane %v3197, 7
        %v3616 = vsel %vm693, %v3613, %v3615
        %v3617 = vrot.slane %v3198, 7
        %v3618 = vsel %vm693, %v694, %v3617
        %v3619 = vrot.slane %v3199, 7
        %v3620 = vsel %vm693, %v3617, %v3619
        %v3621 = vrot.slane %v3200, 7
        %v3622 = vsel %vm693, %v694, %v3621
        %v3623 = vrot.slane %v3201, 7
        %v3624 = vsel %vm693, %v3621, %v3623
        %v3625 = vrot.slane %v3202, 7
        %v3626 = vsel %vm693, %v694, %v3625
        %v3627 = vrot.slane %v3203, 7
        %v3628 = vsel %vm693, %v3625, %v3627
        %v3629 = vrot.slane %v3204, 7
        %v3630 = vsel %vm693, %v694, %v3629
        %v3631 = vrot.slane %v3205, 7
        %v3632 = vsel %vm693, %v3629, %v3631
        %v3633 = vrot.slane %v3206, 7
        %v3634 = vsel %vm693, %v694, %v3633
        %v3635 = vrot.slane %v3207, 7
        %v3636 = vsel %vm693, %v3633, %v3635
        %v3637 = vrot.slane %v3208, 7
        %v3638 = vsel %vm693, %v694, %v3637
        %v3639 = vrot.slane %v3209, 7
        %v3640 = vsel %vm693, %v3637, %v3639
        %v3641 = vrot.slane %v3210, 7
        %v3642 = vsel %vm693, %v694, %v3641
        %v3643 = vrot.slane %v3211, 7
        %v3644 = vsel %vm693, %v3641, %v3643
        %s3673 = scalar_lea.vmem %s7, 1
        %v3674 = vld [vmem:[%s3673] sm:$0x1]
        %v3675 = vpack.c.bf16 %v3592, %v3590
        %v3676 = vpack.c.bf16 %v3596, %v3594
        %v3677 = vpack.c.bf16 %v3600, %v3598
        %v3678 = vpack.c.bf16 %v3604, %v3602
        %v3679 = vpack.c.bf16 %v3608, %v3606
        %v3680 = vpack.c.bf16 %v3612, %v3610
        %v3681 = vpack.c.bf16 %v3616, %v3614
        %v3682 = vpack.c.bf16 %v3620, %v3618
        %v3683 = vpack.c.bf16 %v3624, %v3622
        %v3684 = vpack.c.bf16 %v3628, %v3626
        %v3685 = vpack.c.bf16 %v3632, %v3630
        %v3686 = vpack.c.bf16 %v3636, %v3634
        %v3687 = vpack.c.bf16 %v3640, %v3638
        %v3688 = vpack.c.bf16 %v3644, %v3642
        %v3689 = vsel %vm3347, %v788, 0
        %v3692 = vsel %vm3347, %v3675, 0
        %v3695 = vsel %vm3347, %v3676, 0
        %v3698 = vsel %vm3347, %v3677, 0
        %v3701 = vsel %vm3347, %v3678, 0
        %v3704 = vsel %vm3347, %v3679, 0
        %v3707 = vsel %vm3347, %v3680, 0
        %v3710 = vsel %vm3347, %v3681, 0
        %v3713 = vsel %vm3347, %v3682, 0
        %v3716 = vsel %vm3347, %v3683, 0
        %v3719 = vsel %vm3347, %v3684, 0
        %v3722 = vsel %vm3347, %v3685, 0
        %v3725 = vsel %vm3347, %v3686, 0
        %v3728 = vsel %vm3347, %v3687, 0
        %v3731 = vsel %vm3347, %v3688, 0
        %v3734 = vsel %vm693, %v3674, 0
        %3736 = vmatprep.subr.bf16.mxu0 0
        %3737 = vmatpush1.bf16.msra.mxu0 %v3734
        %3738 = vmatprep.subr.bf16.mxu0 0
        %3739 = vmatpush1.bf16.msra.mxu0 0
        %3740 = vmatprep.subr.bf16.mxu0 0
        %3741 = vmatpush1.bf16.msra.mxu0 0
        %3742 = vmatprep.subr.bf16.mxu0 0
        %3743 = vmatpush1.bf16.msra.mxu0 0
        %3744 = vmatprep.subr.bf16.mxu0 0
        %3745 = vmatpush1.bf16.msra.mxu0 0
        %3746 = vmatprep.subr.bf16.mxu0 0
        %3747 = vmatpush1.bf16.msra.mxu0 0
        %3748 = vmatprep.subr.bf16.mxu0 0
        %3749 = vmatpush1.bf16.msra.mxu0 0
        %3750 = vmatprep.subr.bf16.mxu0 0
        %3751 = vmatpush1.bf16.msra.mxu0 0
        %3752 = vmatprep.subr.bf16.mxu0 0
        %3753 = vmatpush1.bf16.msra.mxu0 0
        %3754 = vmatprep.subr.bf16.mxu0 0
        %3755 = vmatpush1.bf16.msra.mxu0 0
        %3756 = vmatprep.subr.bf16.mxu0 0
        %3757 = vmatpush1.bf16.msra.mxu0 0
        %3758 = vmatprep.subr.bf16.mxu0 0
        %3759 = vmatpush1.bf16.msra.mxu0 0
        %3760 = vmatprep.subr.bf16.mxu0 0
        %3761 = vmatpush1.bf16.msra.mxu0 0
        %3762 = vmatprep.subr.bf16.mxu0 0
        %3763 = vmatpush1.bf16.msra.mxu0 0
        %3764 = vmatprep.subr.bf16.mxu0 0
        %3765 = vmatpush1.bf16.msra.mxu0 0
        %3766 = vmatprep.subr.bf16.mxu0 0
        %3767 = vmatpush1.bf16.msra.mxu0 0
        %3768 = vmatprep.mubr.bf16.mxu0 0
        %3769 = vmatmul.mubr.bf16.gmra.mrb[0].mxu0 %v3689
        %v3770 = vpop.f32.mrb[0].mxu0
        %v3771 = vadd.f32 0.0, %v3770
        %v3772 = vpop.f32.mrb[0].mxu0
        %v3773 = vpop.f32.mrb[0].mxu0
        %v3774 = vadd.f32 0.0, %v3773
        %v3775 = vpop.f32.mrb[0].mxu0
        %3776 = vmatprep.mubr.bf16.mxu0 0
        %3777 = vmatmul.mubr.bf16.gmra.mrb[0].mxu0 %v3689
        %v3778 = vpop.f32.mrb[0].mxu0
        %v3779 = vadd.f32 0.0, %v3778
        %v3780 = vpop.f32.mrb[0].mxu0
        %v3781 = vpop.f32.mrb[0].mxu0
        %v3782 = vadd.f32 0.0, %v3781
        %v3783 = vpop.f32.mrb[0].mxu0
        %3784 = vmatprep.mubr.bf16.mxu0 0
        %3785 = vmatmul.mubr.bf16.gmra.mrb[0].mxu0 %v3692
        %v3786 = vpop.f32.mrb[0].mxu0
        %v3787 = vadd.f32 0.0, %v3786
        %v3788 = vpop.f32.mrb[0].mxu0
        %v3789 = vpop.f32.mrb[0].mxu0
        %v3790 = vadd.f32 0.0, %v3789
        %v3791 = vpop.f32.mrb[0].mxu0
        %3792 = vmatprep.mubr.bf16.mxu0 0
        %3793 = vmatmul.mubr.bf16.gmra.mrb[0].mxu0 %v3695
        %v3794 = vpop.f32.mrb[0].mxu0
        %v3795 = vadd.f32 0.0, %v3794
        %v3796 = vpop.f32.mrb[0].mxu0
        %v3797 = vpop.f32.mrb[0].mxu0
        %v3798 = vadd.f32 0.0, %v3797
        %v3799 = vpop.f32.mrb[0].mxu0
        %3800 = vmatprep.mubr.bf16.mxu0 0
        %3801 = vmatmul.mubr.bf16.gmra.mrb[0].mxu0 %v3698
        %v3802 = vpop.f32.mrb[0].mxu0
        %v3803 = vadd.f32 0.0, %v3802
        %v3804 = vpop.f32.mrb[0].mxu0
        %v3805 = vpop.f32.mrb[0].mxu0
        %v3806 = vadd.f32 0.0, %v3805
        %v3807 = vpop.f32.mrb[0].mxu0
        %3808 = vmatprep.mubr.bf16.mxu0 0
        %3809 = vmatmul.mubr.bf16.gmra.mrb[0].mxu0 %v3701
        %v3810 = vpop.f32.mrb[0].mxu0
        %v3811 = vadd.f32 0.0, %v3810
        %v3812 = vpop.f32.mrb[0].mxu0
        %v3813 = vpop.f32.mrb[0].mxu0
        %v3814 = vadd.f32 0.0, %v3813
        %v3815 = vpop.f32.mrb[0].mxu0
        %3816 = vmatprep.mubr.bf16.mxu0 0
        %3817 = vmatmul.mubr.bf16.gmra.mrb[0].mxu0 %v3704
        %v3818 = vpop.f32.mrb[0].mxu0
        %v3819 = vadd.f32 0.0, %v3818
        %v3820 = vpop.f32.mrb[0].mxu0
        %v3821 = vpop.f32.mrb[0].mxu0
        %v3822 = vadd.f32 0.0, %v3821
        %v3823 = vpop.f32.mrb[0].mxu0
        %3824 = vmatprep.mubr.bf16.mxu0 0
        %3825 = vmatmul.mubr.bf16.gmra.mrb[0].mxu0 %v3707
        %v3826 = vpop.f32.mrb[0].mxu0
        %v3827 = vadd.f32 0.0, %v3826
        %v3828 = vpop.f32.mrb[0].mxu0
        %v3829 = vpop.f32.mrb[0].mxu0
        %v3830 = vadd.f32 0.0, %v3829
        %v3831 = vpop.f32.mrb[0].mxu0
        %3832 = vmatprep.mubr.bf16.mxu0 0
        %3833 = vmatmul.mubr.bf16.gmra.mrb[0].mxu0 %v3710
        %v3834 = vpop.f32.mrb[0].mxu0
        %v3835 = vadd.f32 0.0, %v3834
        %v3836 = vpop.f32.mrb[0].mxu0
        %v3837 = vpop.f32.mrb[0].mxu0
        %v3838 = vadd.f32 0.0, %v3837
        %v3839 = vpop.f32.mrb[0].mxu0
        %3840 = vmatprep.mubr.bf16.mxu0 0
        %3841 = vmatmul.mubr.bf16.gmra.mrb[0].mxu0 %v3713
        %v3842 = vpop.f32.mrb[0].mxu0
        %v3843 = vadd.f32 0.0, %v3842
        %v3844 = vpop.f32.mrb[0].mxu0
        %v3845 = vpop.f32.mrb[0].mxu0
        %v3846 = vadd.f32 0.0, %v3845
        %v3847 = vpop.f32.mrb[0].mxu0
        %3848 = vmatprep.mubr.bf16.mxu0 0
        %3849 = vmatmul.mubr.bf16.gmra.mrb[0].mxu0 %v3716
        %v3850 = vpop.f32.mrb[0].mxu0
        %v3851 = vadd.f32 0.0, %v3850
        %v3852 = vpop.f32.mrb[0].mxu0
        %v3853 = vpop.f32.mrb[0].mxu0
        %v3854 = vadd.f32 0.0, %v3853
        %v3855 = vpop.f32.mrb[0].mxu0
        %3856 = vmatprep.mubr.bf16.mxu0 0
        %3857 = vmatmul.mubr.bf16.gmra.mrb[0].mxu0 %v3719
        %v3858 = vpop.f32.mrb[0].mxu0
        %v3859 = vadd.f32 0.0, %v3858
        %v3860 = vpop.f32.mrb[0].mxu0
        %v3861 = vpop.f32.mrb[0].mxu0
        %v3862 = vadd.f32 0.0, %v3861
        %v3863 = vpop.f32.mrb[0].mxu0
        %3864 = vmatprep.mubr.bf16.mxu0 0
        %3865 = vmatmul.mubr.bf16.gmra.mrb[0].mxu0 %v3722
        %v3866 = vpop.f32.mrb[0].mxu0
        %v3867 = vadd.f32 0.0, %v3866
        %v3868 = vpop.f32.mrb[0].mxu0
        %v3869 = vpop.f32.mrb[0].mxu0
        %v3870 = vadd.f32 0.0, %v3869
        %v3871 = vpop.f32.mrb[0].mxu0
        %3872 = vmatprep.mubr.bf16.mxu0 0
        %3873 = vmatmul.mubr.bf16.gmra.mrb[0].mxu0 %v3725
        %v3874 = vpop.f32.mrb[0].mxu0
        %v3875 = vadd.f32 0.0, %v3874
        %v3876 = vpop.f32.mrb[0].mxu0
        %v3877 = vpop.f32.mrb[0].mxu0
        %v3878 = vadd.f32 0.0, %v3877
        %v3879 = vpop.f32.mrb[0].mxu0
        %3880 = vmatprep.mubr.bf16.mxu0 0
        %3881 = vmatmul.mubr.bf16.gmra.mrb[0].mxu0 %v3728
        %v3882 = vpop.f32.mrb[0].mxu0
        %v3883 = vadd.f32 0.0, %v3882
        %v3884 = vpop.f32.mrb[0].mxu0
        %v3885 = vpop.f32.mrb[0].mxu0
        %v3886 = vadd.f32 0.0, %v3885
        %v3887 = vpop.f32.mrb[0].mxu0
        %3888 = vmatprep.mubr.bf16.mxu0 0
        %3889 = vmatmul.mubr.bf16.gmra.mrb[0].mxu0 %v3731
        %v3890 = vpop.f32.mrb[0].mxu0
        %v3891 = vadd.f32 0.0, %v3890
        %v3892 = vpop.f32.mrb[0].mxu0
        %v3893 = vpop.f32.mrb[0].mxu0
        %v3894 = vadd.f32 0.0, %v3893
        %v3895 = vpop.f32.mrb[0].mxu0
        %3896 = vdwg.mxu0
        %v3897 = vadd.f32 %v3557, %v3771
        %v3898 = vadd.f32 %v3558, %v3774
        %v3899 = vadd.f32 %v3559, %v3779
        %v3900 = vadd.f32 %v3560, %v3782
        %v3901 = vadd.f32 %v3561, %v3787
        %v3902 = vadd.f32 %v3562, %v3790
        %v3903 = vadd.f32 %v3563, %v3795
        %v3904 = vadd.f32 %v3564, %v3798
        %v3905 = vadd.f32 %v3565, %v3803
        %v3906 = vadd.f32 %v3566, %v3806
        %v3907 = vadd.f32 %v3567, %v3811
        %v3908 = vadd.f32 %v3568, %v3814
        %v3909 = vadd.f32 %v3569, %v3819
        %v3910 = vadd.f32 %v3570, %v3822
        %v3911 = vadd.f32 %v3571, %v3827
        %v3912 = vadd.f32 %v3572, %v3830
        %v3913 = vadd.f32 %v3573, %v3835
        %v3914 = vadd.f32 %v3574, %v3838
        %v3915 = vadd.f32 %v3575, %v3843
        %v3916 = vadd.f32 %v3576, %v3846
        %v3917 = vadd.f32 %v3577, %v3851
        %v3918 = vadd.f32 %v3578, %v3854
        %v3919 = vadd.f32 %v3579, %v3859
        %v3920 = vadd.f32 %v3580, %v3862
        %v3921 = vadd.f32 %v3581, %v3867
        %v3922 = vadd.f32 %v3582, %v3870
        %v3923 = vadd.f32 %v3583, %v3875
        %v3924 = vadd.f32 %v3584, %v3878
        %v3925 = vadd.f32 %v3585, %v3883
        %v3926 = vadd.f32 %v3586, %v3886
        %v3927 = vadd.f32 %v3587, %v3891
        %v3928 = vadd.f32 %v3588, %v3894
        %s3929 = scalar_lea.vmem %s7, 2
        %v3930 = vld [vmem:[%s3929] sm:$0x1]
        %v3931 = vpack.c.bf16 %v3185, %v3184
        %v3932 = vpack.c.bf16 %v3187, %v3186
        %v3933 = vpack.c.bf16 %v3189, %v3188
        %v3934 = vpack.c.bf16 %v3191, %v3190
        %v3935 = vpack.c.bf16 %v3193, %v3192
        %v3936 = vpack.c.bf16 %v3195, %v3194
        %v3937 = vpack.c.bf16 %v3197, %v3196
        %v3938 = vpack.c.bf16 %v3199, %v3198
        %v3939 = vpack.c.bf16 %v3201, %v3200
        %v3940 = vpack.c.bf16 %v3203, %v3202
        %v3941 = vpack.c.bf16 %v3205, %v3204
        %v3942 = vpack.c.bf16 %v3207, %v3206
        %v3943 = vpack.c.bf16 %v3209, %v3208
        %v3944 = vpack.c.bf16 %v3211, %v3210
        %v3945 = vsel %vm3347, %v1182, 0
        %v3948 = vsel %vm3347, %v3931, 0
        %v3951 = vsel %vm3347, %v3932, 0
        %v3954 = vsel %vm3347, %v3933, 0
        %v3957 = vsel %vm3347, %v3934, 0
        %v3960 = vsel %vm3347, %v3935, 0
        %v3963 = vsel %vm3347, %v3936, 0
        %v3966 = vsel %vm3347, %v3937, 0
        %v3969 = vsel %vm3347, %v3938, 0
        %v3972 = vsel %vm3347, %v3939, 0
        %v3975 = vsel %vm3347, %v3940, 0
        %v3978 = vsel %vm3347, %v3941, 0
        %v3981 = vsel %vm3347, %v3942, 0
        %v3984 = vsel %vm3347, %v3943, 0
        %v3987 = vsel %vm3347, %v3944, 0
        %v3990 = vsel %vm693, %v3930, 0
        %3992 = vmatprep.subr.bf16.mxu0 0
        %3993 = vmatpush1.bf16.msra.mxu0 %v3990
        %3994 = vmatprep.subr.bf16.mxu0 0
        %3995 = vmatpush1.bf16.msra.mxu0 0
        %3996 = vmatprep.subr.bf16.mxu0 0
        %3997 = vmatpush1.bf16.msra.mxu0 0
        %3998 = vmatprep.subr.bf16.mxu0 0
        %3999 = vmatpush1.bf16.msra.mxu0 0
        %4000 = vmatprep.subr.bf16.mxu0 0
        %4001 = vmatpush1.bf16.msra.mxu0 0
        %4002 = vmatprep.subr.bf16.mxu0 0
        %4003 = vmatpush1.bf16.msra.mxu0 0
        %4004 = vmatprep.subr.bf16.mxu0 0
        %4005 = vmatpush1.bf16.msra.mxu0 0
        %4006 = vmatprep.subr.bf16.mxu0 0
        %4007 = vmatpush1.bf16.msra.mxu0 0
        %4008 = vmatprep.subr.bf16.mxu0 0
        %4009 = vmatpush1.bf16.msra.mxu0 0
        %4010 = vmatprep.subr.bf16.mxu0 0
        %4011 = vmatpush1.bf16.msra.mxu0 0
        %4012 = vmatprep.subr.bf16.mxu0 0
        %4013 = vmatpush1.bf16.msra.mxu0 0
        %4014 = vmatprep.subr.bf16.mxu0 0
        %4015 = vmatpush1.bf16.msra.mxu0 0
        %4016 = vmatprep.subr.bf16.mxu0 0
        %4017 = vmatpush1.bf16.msra.mxu0 0
        %4018 = vmatprep.subr.bf16.mxu0 0
        %4019 = vmatpush1.bf16.msra.mxu0 0
        %4020 = vmatprep.subr.bf16.mxu0 0
        %4021 = vmatpush1.bf16.msra.mxu0 0
        %4022 = vmatprep.subr.bf16.mxu0 0
        %4023 = vmatpush1.bf16.msra.mxu0 0
        %4024 = vmatprep.mubr.bf16.mxu0 0
        %4025 = vmatmul.mubr.bf16.gmra.mrb[0].mxu0 %v3945
        %v4026 = vpop.f32.mrb[0].mxu0
        %v4027 = vadd.f32 0.0, %v4026
        %v4028 = vpop.f32.mrb[0].mxu0
        %v4029 = vpop.f32.mrb[0].mxu0
        %v4030 = vadd.f32 0.0, %v4029
        %v4031 = vpop.f32.mrb[0].mxu0
        %4032 = vmatprep.mubr.bf16.mxu0 0
        %4033 = vmatmul.mubr.bf16.gmra.mrb[0].mxu0 %v3945
        %v4034 = vpop.f32.mrb[0].mxu0
        %v4035 = vadd.f32 0.0, %v4034
        %v4036 = vpop.f32.mrb[0].mxu0
        %v4037 = vpop.f32.mrb[0].mxu0
        %v4038 = vadd.f32 0.0, %v4037
        %v4039 = vpop.f32.mrb[0].mxu0
        %4040 = vmatprep.mubr.bf16.mxu0 0
        %4041 = vmatmul.mubr.bf16.gmra.mrb[0].mxu0 %v3948
        %v4042 = vpop.f32.mrb[0].mxu0
        %v4043 = vadd.f32 0.0, %v4042
        %v4044 = vpop.f32.mrb[0].mxu0
        %v4045 = vpop.f32.mrb[0].mxu0
        %v4046 = vadd.f32 0.0, %v4045
        %v4047 = vpop.f32.mrb[0].mxu0
        %4048 = vmatprep.mubr.bf16.mxu0 0
        %4049 = vmatmul.mubr.bf16.gmra.mrb[0].mxu0 %v3951
        %v4050 = vpop.f32.mrb[0].mxu0
        %v4051 = vadd.f32 0.0, %v4050
        %v4052 = vpop.f32.mrb[0].mxu0
        %v4053 = vpop.f32.mrb[0].mxu0
        %v4054 = vadd.f32 0.0, %v4053
        %v4055 = vpop.f32.mrb[0].mxu0
        %4056 = vmatprep.mubr.bf16.mxu0 0
        %4057 = vmatmul.mubr.bf16.gmra.mrb[0].mxu0 %v3954
        %v4058 = vpop.f32.mrb[0].mxu0
        %v4059 = vadd.f32 0.0, %v4058
        %v4060 = vpop.f32.mrb[0].mxu0
        %v4061 = vpop.f32.mrb[0].mxu0
        %v4062 = vadd.f32 0.0, %v4061
        %v4063 = vpop.f32.mrb[0].mxu0
        %4064 = vmatprep.mubr.bf16.mxu0 0
        %4065 = vmatmul.mubr.bf16.gmra.mrb[0].mxu0 %v3957
        %v4066 = vpop.f32.mrb[0].mxu0
        %v4067 = vadd.f32 0.0, %v4066
        %v4068 = vpop.f32.mrb[0].mxu0
        %v4069 = vpop.f32.mrb[0].mxu0
        %v4070 = vadd.f32 0.0, %v4069
        %v4071 = vpop.f32.mrb[0].mxu0
        %4072 = vmatprep.mubr.bf16.mxu0 0
        %4073 = vmatmul.mubr.bf16.gmra.mrb[0].mxu0 %v3960
        %v4074 = vpop.f32.mrb[0].mxu0
        %v4075 = vadd.f32 0.0, %v4074
        %v4076 = vpop.f32.mrb[0].mxu0
        %v4077 = vpop.f32.mrb[0].mxu0
        %v4078 = vadd.f32 0.0, %v4077
        %v4079 = vpop.f32.mrb[0].mxu0
        %4080 = vmatprep.mubr.bf16.mxu0 0
        %4081 = vmatmul.mubr.bf16.gmra.mrb[0].mxu0 %v3963
        %v4082 = vpop.f32.mrb[0].mxu0
        %v4083 = vadd.f32 0.0, %v4082
        %v4084 = vpop.f32.mrb[0].mxu0
        %v4085 = vpop.f32.mrb[0].mxu0
        %v4086 = vadd.f32 0.0, %v4085
        %v4087 = vpop.f32.mrb[0].mxu0
        %4088 = vmatprep.mubr.bf16.mxu0 0
        %4089 = vmatmul.mubr.bf16.gmra.mrb[0].mxu0 %v3966
        %v4090 = vpop.f32.mrb[0].mxu0
        %v4091 = vadd.f32 0.0, %v4090
        %v4092 = vpop.f32.mrb[0].mxu0
        %v4093 = vpop.f32.mrb[0].mxu0
        %v4094 = vadd.f32 0.0, %v4093
        %v4095 = vpop.f32.mrb[0].mxu0
        %4096 = vmatprep.mubr.bf16.mxu0 0
        %4097 = vmatmul.mubr.bf16.gmra.mrb[0].mxu0 %v3969
        %v4098 = vpop.f32.mrb[0].mxu0
        %v4099 = vadd.f32 0.0, %v4098
        %v4100 = vpop.f32.mrb[0].mxu0
        %v4101 = vpop.f32.mrb[0].mxu0
        %v4102 = vadd.f32 0.0, %v4101
        %v4103 = vpop.f32.mrb[0].mxu0
        %4104 = vmatprep.mubr.bf16.mxu0 0
        %4105 = vmatmul.mubr.bf16.gmra.mrb[0].mxu0 %v3972
        %v4106 = vpop.f32.mrb[0].mxu0
        %v4107 = vadd.f32 0.0, %v4106
        %v4108 = vpop.f32.mrb[0].mxu0
        %v4109 = vpop.f32.mrb[0].mxu0
        %v4110 = vadd.f32 0.0, %v4109
        %v4111 = vpop.f32.mrb[0].mxu0
        %4112 = vmatprep.mubr.bf16.mxu0 0
        %4113 = vmatmul.mubr.bf16.gmra.mrb[0].mxu0 %v3975
        %v4114 = vpop.f32.mrb[0].mxu0
        %v4115 = vadd.f32 0.0, %v4114
        %v4116 = vpop.f32.mrb[0].mxu0
        %v4117 = vpop.f32.mrb[0].mxu0
        %v4118 = vadd.f32 0.0, %v4117
        %v4119 = vpop.f32.mrb[0].mxu0
        %4120 = vmatprep.mubr.bf16.mxu0 0
        %4121 = vmatmul.mubr.bf16.gmra.mrb[0].mxu0 %v3978
        %v4122 = vpop.f32.mrb[0].mxu0
        %v4123 = vadd.f32 0.0, %v4122
        %v4124 = vpop.f32.mrb[0].mxu0
        %v4125 = vpop.f32.mrb[0].mxu0
        %v4126 = vadd.f32 0.0, %v4125
        %v4127 = vpop.f32.mrb[0].mxu0
        %4128 = vmatprep.mubr.bf16.mxu0 0
        %4129 = vmatmul.mubr.bf16.gmra.mrb[0].mxu0 %v3981
        %v4130 = vpop.f32.mrb[0].mxu0
        %v4131 = vadd.f32 0.0, %v4130
        %v4132 = vpop.f32.mrb[0].mxu0
        %v4133 = vpop.f32.mrb[0].mxu0
        %v4134 = vadd.f32 0.0, %v4133
        %v4135 = vpop.f32.mrb[0].mxu0
        %4136 = vmatprep.mubr.bf16.mxu0 0
        %4137 = vmatmul.mubr.bf16.gmra.mrb[0].mxu0 %v3984
        %v4138 = vpop.f32.mrb[0].mxu0
        %v4139 = vadd.f32 0.0, %v4138
        %v4140 = vpop.f32.mrb[0].mxu0
        %v4141 = vpop.f32.mrb[0].mxu0
        %v4142 = vadd.f32 0.0, %v4141
        %v4143 = vpop.f32.mrb[0].mxu0
        %4144 = vmatprep.mubr.bf16.mxu0 0
        %4145 = vmatmul.mubr.bf16.gmra.mrb[0].mxu0 %v3987
        %v4146 = vpop.f32.mrb[0].mxu0
        %v4147 = vadd.f32 0.0, %v4146
        %v4148 = vpop.f32.mrb[0].mxu0
        %v4149 = vpop.f32.mrb[0].mxu0
        %v4150 = vadd.f32 0.0, %v4149
        %v4151 = vpop.f32.mrb[0].mxu0
        %4152 = vdwg.mxu0
        %v4153 = vadd.f32 %v3897, %v4027
        %v4154 = vadd.f32 %v3898, %v4030
        %v4155 = vadd.f32 %v3899, %v4035
        %v4156 = vadd.f32 %v3900, %v4038
        %v4157 = vadd.f32 %v3901, %v4043
        %v4158 = vadd.f32 %v3902, %v4046
        %v4159 = vadd.f32 %v3903, %v4051
        %v4160 = vadd.f32 %v3904, %v4054
        %v4161 = vadd.f32 %v3905, %v4059
        %v4162 = vadd.f32 %v3906, %v4062
        %v4163 = vadd.f32 %v3907, %v4067
        %v4164 = vadd.f32 %v3908, %v4070
        %v4165 = vadd.f32 %v3909, %v4075
        %v4166 = vadd.f32 %v3910, %v4078
        %v4167 = vadd.f32 %v3911, %v4083
        %v4168 = vadd.f32 %v3912, %v4086
        %v4169 = vadd.f32 %v3913, %v4091
        %v4170 = vadd.f32 %v3914, %v4094
        %v4171 = vadd.f32 %v3915, %v4099
        %v4172 = vadd.f32 %v3916, %v4102
        %v4173 = vadd.f32 %v3917, %v4107
        %v4174 = vadd.f32 %v3918, %v4110
        %v4175 = vadd.f32 %v3919, %v4115
        %v4176 = vadd.f32 %v3920, %v4118
        %v4177 = vadd.f32 %v3921, %v4123
        %v4178 = vadd.f32 %v3922, %v4126
        %v4179 = vadd.f32 %v3923, %v4131
        %v4180 = vadd.f32 %v3924, %v4134
        %v4181 = vadd.f32 %v3925, %v4139
        %v4182 = vadd.f32 %v3926, %v4142
        %v4183 = vadd.f32 %v3927, %v4147
        %v4184 = vadd.f32 %v3928, %v4150
        %v4185 = vrot.slane %v3184, 1
        %v4186 = vrot.slane %v3185, 1
        %v4187 = vsel %vm1442, %v4185, %v4186
        %v4188 = vsel %vm1442, %v4186, %v1443
        %v4189 = vrot.slane %v3186, 1
        %v4190 = vrot.slane %v3187, 1
        %v4191 = vsel %vm1442, %v4189, %v4190
        %v4192 = vsel %vm1442, %v4190, %v1443
        %v4193 = vrot.slane %v3188, 1
        %v4194 = vrot.slane %v3189, 1
        %v4195 = vsel %vm1442, %v4193, %v4194
        %v4196 = vsel %vm1442, %v4194, %v1443
        %v4197 = vrot.slane %v3190, 1
        %v4198 = vrot.slane %v3191, 1
        %v4199 = vsel %vm1442, %v4197, %v4198
        %v4200 = vsel %vm1442, %v4198, %v1443
        %v4201 = vrot.slane %v3192, 1
        %v4202 = vrot.slane %v3193, 1
        %v4203 = vsel %vm1442, %v4201, %v4202
        %v4204 = vsel %vm1442, %v4202, %v1443
        %v4205 = vrot.slane %v3194, 1
        %v4206 = vrot.slane %v3195, 1
        %v4207 = vsel %vm1442, %v4205, %v4206
        %v4208 = vsel %vm1442, %v4206, %v1443
        %v4209 = vrot.slane %v3196, 1
        %v4210 = vrot.slane %v3197, 1
        %v4211 = vsel %vm1442, %v4209, %v4210
        %v4212 = vsel %vm1442, %v4210, %v1443
        %v4213 = vrot.slane %v3198, 1
        %v4214 = vrot.slane %v3199, 1
        %v4215 = vsel %vm1442, %v4213, %v4214
        %v4216 = vsel %vm1442, %v4214, %v1443
        %v4217 = vrot.slane %v3200, 1
        %v4218 = vrot.slane %v3201, 1
        %v4219 = vsel %vm1442, %v4217, %v4218
        %v4220 = vsel %vm1442, %v4218, %v1443
        %v4221 = vrot.slane %v3202, 1
        %v4222 = vrot.slane %v3203, 1
        %v4223 = vsel %vm1442, %v4221, %v4222
        %v4224 = vsel %vm1442, %v4222, %v1443
        %v4225 = vrot.slane %v3204, 1
        %v4226 = vrot.slane %v3205, 1
        %v4227 = vsel %vm1442, %v4225, %v4226
        %v4228 = vsel %vm1442, %v4226, %v1443
        %v4229 = vrot.slane %v3206, 1
        %v4230 = vrot.slane %v3207, 1
        %v4231 = vsel %vm1442, %v4229, %v4230
        %v4232 = vsel %vm1442, %v4230, %v1443
        %v4233 = vrot.slane %v3208, 1
        %v4234 = vrot.slane %v3209, 1
        %v4235 = vsel %vm1442, %v4233, %v4234
        %v4236 = vsel %vm1442, %v4234, %v1443
        %v4237 = vrot.slane %v3210, 1
        %v4238 = vrot.slane %v3211, 1
        %v4239 = vsel %vm1442, %v4237, %v4238
        %v4240 = vsel %vm1442, %v4238, %v1443
        %s4269 = scalar_lea.vmem %s7, 3
        %v4270 = vld [vmem:[%s4269] sm:$0x1]
        %v4271 = vpack.c.bf16 %v4188, %v4187
        %v4272 = vpack.c.bf16 %v4192, %v4191
        %v4273 = vpack.c.bf16 %v4196, %v4195
        %v4274 = vpack.c.bf16 %v4200, %v4199
        %v4275 = vpack.c.bf16 %v4204, %v4203
        %v4276 = vpack.c.bf16 %v4208, %v4207
        %v4277 = vpack.c.bf16 %v4212, %v4211
        %v4278 = vpack.c.bf16 %v4216, %v4215
        %v4279 = vpack.c.bf16 %v4220, %v4219
        %v4280 = vpack.c.bf16 %v4224, %v4223
        %v4281 = vpack.c.bf16 %v4228, %v4227
        %v4282 = vpack.c.bf16 %v4232, %v4231
        %v4283 = vpack.c.bf16 %v4236, %v4235
        %v4284 = vpack.c.bf16 %v4240, %v4239
        %v4285 = vsel %vm3347, %v1538, 0
        %v4288 = vsel %vm3347, %v4271, 0
        %v4291 = vsel %vm3347, %v4272, 0
        %v4294 = vsel %vm3347, %v4273, 0
        %v4297 = vsel %vm3347, %v4274, 0
        %v4300 = vsel %vm3347, %v4275, 0
        %v4303 = vsel %vm3347, %v4276, 0
        %v4306 = vsel %vm3347, %v4277, 0
        %v4309 = vsel %vm3347, %v4278, 0
        %v4312 = vsel %vm3347, %v4279, 0
        %v4315 = vsel %vm3347, %v4280, 0
        %v4318 = vsel %vm3347, %v4281, 0
        %v4321 = vsel %vm3347, %v4282, 0
        %v4324 = vsel %vm3347, %v4283, 0
        %v4327 = vsel %vm3347, %v4284, 0
        %v4330 = vsel %vm693, %v4270, 0
        %4332 = vmatprep.subr.bf16.mxu0 0
        %4333 = vmatpush1.bf16.msra.mxu0 %v4330
        %4334 = vmatprep.subr.bf16.mxu0 0
        %4335 = vmatpush1.bf16.msra.mxu0 0
        %4336 = vmatprep.subr.bf16.mxu0 0
        %4337 = vmatpush1.bf16.msra.mxu0 0
        %4338 = vmatprep.subr.bf16.mxu0 0
        %4339 = vmatpush1.bf16.msra.mxu0 0
        %4340 = vmatprep.subr.bf16.mxu0 0
        %4341 = vmatpush1.bf16.msra.mxu0 0
        %4342 = vmatprep.subr.bf16.mxu0 0
        %4343 = vmatpush1.bf16.msra.mxu0 0
        %4344 = vmatprep.subr.bf16.mxu0 0
        %4345 = vmatpush1.bf16.msra.mxu0 0
        %4346 = vmatprep.subr.bf16.mxu0 0
        %4347 = vmatpush1.bf16.msra.mxu0 0
        %4348 = vmatprep.subr.bf16.mxu0 0
        %4349 = vmatpush1.bf16.msra.mxu0 0
        %4350 = vmatprep.subr.bf16.mxu0 0
        %4351 = vmatpush1.bf16.msra.mxu0 0
        %4352 = vmatprep.subr.bf16.mxu0 0
        %4353 = vmatpush1.bf16.msra.mxu0 0
        %4354 = vmatprep.subr.bf16.mxu0 0
        %4355 = vmatpush1.bf16.msra.mxu0 0
        %4356 = vmatprep.subr.bf16.mxu0 0
        %4357 = vmatpush1.bf16.msra.mxu0 0
        %4358 = vmatprep.subr.bf16.mxu0 0
        %4359 = vmatpush1.bf16.msra.mxu0 0
        %4360 = vmatprep.subr.bf16.mxu0 0
        %4361 = vmatpush1.bf16.msra.mxu0 0
        %4362 = vmatprep.subr.bf16.mxu0 0
        %4363 = vmatpush1.bf16.msra.mxu0 0
        %4364 = vmatprep.mubr.bf16.mxu0 0
        %4365 = vmatmul.mubr.bf16.gmra.mrb[0].mxu0 %v4285
        %v4366 = vpop.f32.mrb[0].mxu0
        %v4367 = vadd.f32 0.0, %v4366
        %v4368 = vpop.f32.mrb[0].mxu0
        %v4369 = vpop.f32.mrb[0].mxu0
        %v4370 = vadd.f32 0.0, %v4369
        %v4371 = vpop.f32.mrb[0].mxu0
        %4372 = vmatprep.mubr.bf16.mxu0 0
        %4373 = vmatmul.mubr.bf16.gmra.mrb[0].mxu0 %v4285
        %v4374 = vpop.f32.mrb[0].mxu0
        %v4375 = vadd.f32 0.0, %v4374
        %v4376 = vpop.f32.mrb[0].mxu0
        %v4377 = vpop.f32.mrb[0].mxu0
        %v4378 = vadd.f32 0.0, %v4377
        %v4379 = vpop.f32.mrb[0].mxu0
        %4380 = vmatprep.mubr.bf16.mxu0 0
        %4381 = vmatmul.mubr.bf16.gmra.mrb[0].mxu0 %v4288
        %v4382 = vpop.f32.mrb[0].mxu0
        %v4383 = vadd.f32 0.0, %v4382
        %v4384 = vpop.f32.mrb[0].mxu0
        %v4385 = vpop.f32.mrb[0].mxu0
        %v4386 = vadd.f32 0.0, %v4385
        %v4387 = vpop.f32.mrb[0].mxu0
        %4388 = vmatprep.mubr.bf16.mxu0 0
        %4389 = vmatmul.mubr.bf16.gmra.mrb[0].mxu0 %v4291
        %v4390 = vpop.f32.mrb[0].mxu0
        %v4391 = vadd.f32 0.0, %v4390
        %v4392 = vpop.f32.mrb[0].mxu0
        %v4393 = vpop.f32.mrb[0].mxu0
        %v4394 = vadd.f32 0.0, %v4393
        %v4395 = vpop.f32.mrb[0].mxu0
        %4396 = vmatprep.mubr.bf16.mxu0 0
        %4397 = vmatmul.mubr.bf16.gmra.mrb[0].mxu0 %v4294
        %v4398 = vpop.f32.mrb[0].mxu0
        %v4399 = vadd.f32 0.0, %v4398
        %v4400 = vpop.f32.mrb[0].mxu0
        %v4401 = vpop.f32.mrb[0].mxu0
        %v4402 = vadd.f32 0.0, %v4401
        %v4403 = vpop.f32.mrb[0].mxu0
        %4404 = vmatprep.mubr.bf16.mxu0 0
        %4405 = vmatmul.mubr.bf16.gmra.mrb[0].mxu0 %v4297
        %v4406 = vpop.f32.mrb[0].mxu0
        %v4407 = vadd.f32 0.0, %v4406
        %v4408 = vpop.f32.mrb[0].mxu0
        %v4409 = vpop.f32.mrb[0].mxu0
        %v4410 = vadd.f32 0.0, %v4409
        %v4411 = vpop.f32.mrb[0].mxu0
        %4412 = vmatprep.mubr.bf16.mxu0 0
        %4413 = vmatmul.mubr.bf16.gmra.mrb[0].mxu0 %v4300
        %v4414 = vpop.f32.mrb[0].mxu0
        %v4415 = vadd.f32 0.0, %v4414
        %v4416 = vpop.f32.mrb[0].mxu0
        %v4417 = vpop.f32.mrb[0].mxu0
        %v4418 = vadd.f32 0.0, %v4417
        %v4419 = vpop.f32.mrb[0].mxu0
        %4420 = vmatprep.mubr.bf16.mxu0 0
        %4421 = vmatmul.mubr.bf16.gmra.mrb[0].mxu0 %v4303
        %v4422 = vpop.f32.mrb[0].mxu0
        %v4423 = vadd.f32 0.0, %v4422
        %v4424 = vpop.f32.mrb[0].mxu0
        %v4425 = vpop.f32.mrb[0].mxu0
        %v4426 = vadd.f32 0.0, %v4425
        %v4427 = vpop.f32.mrb[0].mxu0
        %4428 = vmatprep.mubr.bf16.mxu0 0
        %4429 = vmatmul.mubr.bf16.gmra.mrb[0].mxu0 %v4306
        %v4430 = vpop.f32.mrb[0].mxu0
        %v4431 = vadd.f32 0.0, %v4430
        %v4432 = vpop.f32.mrb[0].mxu0
        %v4433 = vpop.f32.mrb[0].mxu0
        %v4434 = vadd.f32 0.0, %v4433
        %v4435 = vpop.f32.mrb[0].mxu0
        %4436 = vmatprep.mubr.bf16.mxu0 0
        %4437 = vmatmul.mubr.bf16.gmra.mrb[0].mxu0 %v4309
        %v4438 = vpop.f32.mrb[0].mxu0
        %v4439 = vadd.f32 0.0, %v4438
        %v4440 = vpop.f32.mrb[0].mxu0
        %v4441 = vpop.f32.mrb[0].mxu0
        %v4442 = vadd.f32 0.0, %v4441
        %v4443 = vpop.f32.mrb[0].mxu0
        %4444 = vmatprep.mubr.bf16.mxu0 0
        %4445 = vmatmul.mubr.bf16.gmra.mrb[0].mxu0 %v4312
        %v4446 = vpop.f32.mrb[0].mxu0
        %v4447 = vadd.f32 0.0, %v4446
        %v4448 = vpop.f32.mrb[0].mxu0
        %v4449 = vpop.f32.mrb[0].mxu0
        %v4450 = vadd.f32 0.0, %v4449
        %v4451 = vpop.f32.mrb[0].mxu0
        %4452 = vmatprep.mubr.bf16.mxu0 0
        %4453 = vmatmul.mubr.bf16.gmra.mrb[0].mxu0 %v4315
        %v4454 = vpop.f32.mrb[0].mxu0
        %v4455 = vadd.f32 0.0, %v4454
        %v4456 = vpop.f32.mrb[0].mxu0
        %v4457 = vpop.f32.mrb[0].mxu0
        %v4458 = vadd.f32 0.0, %v4457
        %v4459 = vpop.f32.mrb[0].mxu0
        %4460 = vmatprep.mubr.bf16.mxu0 0
        %4461 = vmatmul.mubr.bf16.gmra.mrb[0].mxu0 %v4318
        %v4462 = vpop.f32.mrb[0].mxu0
        %v4463 = vadd.f32 0.0, %v4462
        %v4464 = vpop.f32.mrb[0].mxu0
        %v4465 = vpop.f32.mrb[0].mxu0
        %v4466 = vadd.f32 0.0, %v4465
        %v4467 = vpop.f32.mrb[0].mxu0
        %4468 = vmatprep.mubr.bf16.mxu0 0
        %4469 = vmatmul.mubr.bf16.gmra.mrb[0].mxu0 %v4321
        %v4470 = vpop.f32.mrb[0].mxu0
        %v4471 = vadd.f32 0.0, %v4470
        %v4472 = vpop.f32.mrb[0].mxu0
        %v4473 = vpop.f32.mrb[0].mxu0
        %v4474 = vadd.f32 0.0, %v4473
        %v4475 = vpop.f32.mrb[0].mxu0
        %4476 = vmatprep.mubr.bf16.mxu0 0
        %4477 = vmatmul.mubr.bf16.gmra.mrb[0].mxu0 %v4324
        %v4478 = vpop.f32.mrb[0].mxu0
        %v4479 = vadd.f32 0.0, %v4478
        %v4480 = vpop.f32.mrb[0].mxu0
        %v4481 = vpop.f32.mrb[0].mxu0
        %v4482 = vadd.f32 0.0, %v4481
        %v4483 = vpop.f32.mrb[0].mxu0
        %4484 = vmatprep.mubr.bf16.mxu0 0
        %4485 = vmatmul.mubr.bf16.gmra.mrb[0].mxu0 %v4327
        %v4486 = vpop.f32.mrb[0].mxu0
        %v4487 = vadd.f32 0.0, %v4486
        %v4488 = vpop.f32.mrb[0].mxu0
        %v4489 = vpop.f32.mrb[0].mxu0
        %v4490 = vadd.f32 0.0, %v4489
        %v4491 = vpop.f32.mrb[0].mxu0
        %4492 = vdwg.mxu0
        %v4493 = vadd.f32 %v4153, %v4367
        %v4494 = vadd.f32 %v4154, %v4370
        %v4495 = vadd.f32 %v4155, %v4375
        %v4496 = vadd.f32 %v4156, %v4378
        %v4497 = vadd.f32 %v4157, %v4383
        %v4498 = vadd.f32 %v4158, %v4386
        %v4499 = vadd.f32 %v4159, %v4391
        %v4500 = vadd.f32 %v4160, %v4394
        %v4501 = vadd.f32 %v4161, %v4399
        %v4502 = vadd.f32 %v4162, %v4402
        %v4503 = vadd.f32 %v4163, %v4407
        %v4504 = vadd.f32 %v4164, %v4410
        %v4505 = vadd.f32 %v4165, %v4415
        %v4506 = vadd.f32 %v4166, %v4418
        %v4507 = vadd.f32 %v4167, %v4423
        %v4508 = vadd.f32 %v4168, %v4426
        %v4509 = vadd.f32 %v4169, %v4431
        %v4510 = vadd.f32 %v4170, %v4434
        %v4511 = vadd.f32 %v4171, %v4439
        %v4512 = vadd.f32 %v4172, %v4442
        %v4513 = vadd.f32 %v4173, %v4447
        %v4514 = vadd.f32 %v4174, %v4450
        %v4515 = vadd.f32 %v4175, %v4455
        %v4516 = vadd.f32 %v4176, %v4458
        %v4517 = vadd.f32 %v4177, %v4463
        %v4518 = vadd.f32 %v4178, %v4466
        %v4519 = vadd.f32 %v4179, %v4471
        %v4520 = vadd.f32 %v4180, %v4474
        %v4521 = vadd.f32 %v4181, %v4479
        %v4522 = vadd.f32 %v4182, %v4482
        %v4523 = vadd.f32 %v4183, %v4487
        %v4524 = vadd.f32 %v4184, %v4490
        %vm4525 = vcmask 1045504
        %v4526 = vrot.slane 0.0, 2
        %v4527 = vsel %vm4525, %v4526, %v4526
        %v4528 = vrot.slane %v3184, 2
        %v4529 = vrot.slane %v3185, 2
        %v4530 = vsel %vm4525, %v4528, %v4529
        %v4531 = vsel %vm4525, %v4529, %v4526
        %v4532 = vrot.slane %v3186, 2
        %v4533 = vrot.slane %v3187, 2
        %v4534 = vsel %vm4525, %v4532, %v4533
        %v4535 = vsel %vm4525, %v4533, %v4526
        %v4536 = vrot.slane %v3188, 2
        %v4537 = vrot.slane %v3189, 2
        %v4538 = vsel %vm4525, %v4536, %v4537
        %v4539 = vsel %vm4525, %v4537, %v4526
        %v4540 = vrot.slane %v3190, 2
        %v4541 = vrot.slane %v3191, 2
        %v4542 = vsel %vm4525, %v4540, %v4541
        %v4543 = vsel %vm4525, %v4541, %v4526
        %v4544 = vrot.slane %v3192, 2
        %v4545 = vrot.slane %v3193, 2
        %v4546 = vsel %vm4525, %v4544, %v4545
        %v4547 = vsel %vm4525, %v4545, %v4526
        %v4548 = vrot.slane %v3194, 2
        %v4549 = vrot.slane %v3195, 2
        %v4550 = vsel %vm4525, %v4548, %v4549
        %v4551 = vsel %vm4525, %v4549, %v4526
        %v4552 = vrot.slane %v3196, 2
        %v4553 = vrot.slane %v3197, 2
        %v4554 = vsel %vm4525, %v4552, %v4553
        %v4555 = vsel %vm4525, %v4553, %v4526
        %v4556 = vrot.slane %v3198, 2
        %v4557 = vrot.slane %v3199, 2
        %v4558 = vsel %vm4525, %v4556, %v4557
        %v4559 = vsel %vm4525, %v4557, %v4526
        %v4560 = vrot.slane %v3200, 2
        %v4561 = vrot.slane %v3201, 2
        %v4562 = vsel %vm4525, %v4560, %v4561
        %v4563 = vsel %vm4525, %v4561, %v4526
        %v4564 = vrot.slane %v3202, 2
        %v4565 = vrot.slane %v3203, 2
        %v4566 = vsel %vm4525, %v4564, %v4565
        %v4567 = vsel %vm4525, %v4565, %v4526
        %v4568 = vrot.slane %v3204, 2
        %v4569 = vrot.slane %v3205, 2
        %v4570 = vsel %vm4525, %v4568, %v4569
        %v4571 = vsel %vm4525, %v4569, %v4526
        %v4572 = vrot.slane %v3206, 2
        %v4573 = vrot.slane %v3207, 2
        %v4574 = vsel %vm4525, %v4572, %v4573
        %v4575 = vsel %vm4525, %v4573, %v4526
        %v4576 = vrot.slane %v3208, 2
        %v4577 = vrot.slane %v3209, 2
        %v4578 = vsel %vm4525, %v4576, %v4577
        %v4579 = vsel %vm4525, %v4577, %v4526
        %v4580 = vrot.slane %v3210, 2
        %v4581 = vrot.slane %v3211, 2
        %v4582 = vsel %vm4525, %v4580, %v4581
        %v4583 = vsel %vm4525, %v4581, %v4526
        %s4613 = scalar_lea.vmem %s7, 4
        %v4614 = vld [vmem:[%s4613] sm:$0x1]
        %v4615 = vpack.c.bf16 %v4527, %v4527
        %v4616 = vpack.c.bf16 %v4531, %v4530
        %v4617 = vpack.c.bf16 %v4535, %v4534
        %v4618 = vpack.c.bf16 %v4539, %v4538
        %v4619 = vpack.c.bf16 %v4543, %v4542
        %v4620 = vpack.c.bf16 %v4547, %v4546
        %v4621 = vpack.c.bf16 %v4551, %v4550
        %v4622 = vpack.c.bf16 %v4555, %v4554
        %v4623 = vpack.c.bf16 %v4559, %v4558
        %v4624 = vpack.c.bf16 %v4563, %v4562
        %v4625 = vpack.c.bf16 %v4567, %v4566
        %v4626 = vpack.c.bf16 %v4571, %v4570
        %v4627 = vpack.c.bf16 %v4575, %v4574
        %v4628 = vpack.c.bf16 %v4579, %v4578
        %v4629 = vpack.c.bf16 %v4583, %v4582
        %v4631 = vsel %vm3347, %v4615, 0
        %v4634 = vsel %vm3347, %v4616, 0
        %v4637 = vsel %vm3347, %v4617, 0
        %v4640 = vsel %vm3347, %v4618, 0
        %v4643 = vsel %vm3347, %v4619, 0
        %v4646 = vsel %vm3347, %v4620, 0
        %v4649 = vsel %vm3347, %v4621, 0
        %v4652 = vsel %vm3347, %v4622, 0
        %v4655 = vsel %vm3347, %v4623, 0
        %v4658 = vsel %vm3347, %v4624, 0
        %v4661 = vsel %vm3347, %v4625, 0
        %v4664 = vsel %vm3347, %v4626, 0
        %v4667 = vsel %vm3347, %v4627, 0
        %v4670 = vsel %vm3347, %v4628, 0
        %v4673 = vsel %vm3347, %v4629, 0
        %v4676 = vsel %vm693, %v4614, 0
        %4678 = vmatprep.subr.bf16.mxu0 0
        %4679 = vmatpush1.bf16.msra.mxu0 %v4676
        %4680 = vmatprep.subr.bf16.mxu0 0
        %4681 = vmatpush1.bf16.msra.mxu0 0
        %4682 = vmatprep.subr.bf16.mxu0 0
        %4683 = vmatpush1.bf16.msra.mxu0 0
        %4684 = vmatprep.subr.bf16.mxu0 0
        %4685 = vmatpush1.bf16.msra.mxu0 0
        %4686 = vmatprep.subr.bf16.mxu0 0
        %4687 = vmatpush1.bf16.msra.mxu0 0
        %4688 = vmatprep.subr.bf16.mxu0 0
        %4689 = vmatpush1.bf16.msra.mxu0 0
        %4690 = vmatprep.subr.bf16.mxu0 0
        %4691 = vmatpush1.bf16.msra.mxu0 0
        %4692 = vmatprep.subr.bf16.mxu0 0
        %4693 = vmatpush1.bf16.msra.mxu0 0
        %4694 = vmatprep.subr.bf16.mxu0 0
        %4695 = vmatpush1.bf16.msra.mxu0 0
        %4696 = vmatprep.subr.bf16.mxu0 0
        %4697 = vmatpush1.bf16.msra.mxu0 0
        %4698 = vmatprep.subr.bf16.mxu0 0
        %4699 = vmatpush1.bf16.msra.mxu0 0
        %4700 = vmatprep.subr.bf16.mxu0 0
        %4701 = vmatpush1.bf16.msra.mxu0 0
        %4702 = vmatprep.subr.bf16.mxu0 0
        %4703 = vmatpush1.bf16.msra.mxu0 0
        %4704 = vmatprep.subr.bf16.mxu0 0
        %4705 = vmatpush1.bf16.msra.mxu0 0
        %4706 = vmatprep.subr.bf16.mxu0 0
        %4707 = vmatpush1.bf16.msra.mxu0 0
        %4708 = vmatprep.subr.bf16.mxu0 0
        %4709 = vmatpush1.bf16.msra.mxu0 0
        %4710 = vmatprep.mubr.bf16.mxu0 0
        %4711 = vmatmul.mubr.bf16.gmra.mrb[0].mxu0 %v4631
        %v4712 = vpop.f32.mrb[0].mxu0
        %v4713 = vadd.f32 0.0, %v4712
        %v4714 = vpop.f32.mrb[0].mxu0
        %v4715 = vpop.f32.mrb[0].mxu0
        %v4716 = vadd.f32 0.0, %v4715
        %v4717 = vpop.f32.mrb[0].mxu0
        %4718 = vmatprep.mubr.bf16.mxu0 0
        %4719 = vmatmul.mubr.bf16.gmra.mrb[0].mxu0 %v4631
        %v4720 = vpop.f32.mrb[0].mxu0
        %v4721 = vadd.f32 0.0, %v4720
        %v4722 = vpop.f32.mrb[0].mxu0
        %v4723 = vpop.f32.mrb[0].mxu0
        %v4724 = vadd.f32 0.0, %v4723
        %v4725 = vpop.f32.mrb[0].mxu0
        %4726 = vmatprep.mubr.bf16.mxu0 0
        %4727 = vmatmul.mubr.bf16.gmra.mrb[0].mxu0 %v4634
        %v4728 = vpop.f32.mrb[0].mxu0
        %v4729 = vadd.f32 0.0, %v4728
        %v4730 = vpop.f32.mrb[0].mxu0
        %v4731 = vpop.f32.mrb[0].mxu0
        %v4732 = vadd.f32 0.0, %v4731
        %v4733 = vpop.f32.mrb[0].mxu0
        %4734 = vmatprep.mubr.bf16.mxu0 0
        %4735 = vmatmul.mubr.bf16.gmra.mrb[0].mxu0 %v4637
        %v4736 = vpop.f32.mrb[0].mxu0
        %v4737 = vadd.f32 0.0, %v4736
        %v4738 = vpop.f32.mrb[0].mxu0
        %v4739 = vpop.f32.mrb[0].mxu0
        %v4740 = vadd.f32 0.0, %v4739
        %v4741 = vpop.f32.mrb[0].mxu0
        %4742 = vmatprep.mubr.bf16.mxu0 0
        %4743 = vmatmul.mubr.bf16.gmra.mrb[0].mxu0 %v4640
        %v4744 = vpop.f32.mrb[0].mxu0
        %v4745 = vadd.f32 0.0, %v4744
        %v4746 = vpop.f32.mrb[0].mxu0
        %v4747 = vpop.f32.mrb[0].mxu0
        %v4748 = vadd.f32 0.0, %v4747
        %v4749 = vpop.f32.mrb[0].mxu0
        %4750 = vmatprep.mubr.bf16.mxu0 0
        %4751 = vmatmul.mubr.bf16.gmra.mrb[0].mxu0 %v4643
        %v4752 = vpop.f32.mrb[0].mxu0
        %v4753 = vadd.f32 0.0, %v4752
        %v4754 = vpop.f32.mrb[0].mxu0
        %v4755 = vpop.f32.mrb[0].mxu0
        %v4756 = vadd.f32 0.0, %v4755
        %v4757 = vpop.f32.mrb[0].mxu0
        %4758 = vmatprep.mubr.bf16.mxu0 0
        %4759 = vmatmul.mubr.bf16.gmra.mrb[0].mxu0 %v4646
        %v4760 = vpop.f32.mrb[0].mxu0
        %v4761 = vadd.f32 0.0, %v4760
        %v4762 = vpop.f32.mrb[0].mxu0
        %v4763 = vpop.f32.mrb[0].mxu0
        %v4764 = vadd.f32 0.0, %v4763
        %v4765 = vpop.f32.mrb[0].mxu0
        %4766 = vmatprep.mubr.bf16.mxu0 0
        %4767 = vmatmul.mubr.bf16.gmra.mrb[0].mxu0 %v4649
        %v4768 = vpop.f32.mrb[0].mxu0
        %v4769 = vadd.f32 0.0, %v4768
        %v4770 = vpop.f32.mrb[0].mxu0
        %v4771 = vpop.f32.mrb[0].mxu0
        %v4772 = vadd.f32 0.0, %v4771
        %v4773 = vpop.f32.mrb[0].mxu0
        %4774 = vmatprep.mubr.bf16.mxu0 0
        %4775 = vmatmul.mubr.bf16.gmra.mrb[0].mxu0 %v4652
        %v4776 = vpop.f32.mrb[0].mxu0
        %v4777 = vadd.f32 0.0, %v4776
        %v4778 = vpop.f32.mrb[0].mxu0
        %v4779 = vpop.f32.mrb[0].mxu0
        %v4780 = vadd.f32 0.0, %v4779
        %v4781 = vpop.f32.mrb[0].mxu0
        %4782 = vmatprep.mubr.bf16.mxu0 0
        %4783 = vmatmul.mubr.bf16.gmra.mrb[0].mxu0 %v4655
        %v4784 = vpop.f32.mrb[0].mxu0
        %v4785 = vadd.f32 0.0, %v4784
        %v4786 = vpop.f32.mrb[0].mxu0
        %v4787 = vpop.f32.mrb[0].mxu0
        %v4788 = vadd.f32 0.0, %v4787
        %v4789 = vpop.f32.mrb[0].mxu0
        %4790 = vmatprep.mubr.bf16.mxu0 0
        %4791 = vmatmul.mubr.bf16.gmra.mrb[0].mxu0 %v4658
        %v4792 = vpop.f32.mrb[0].mxu0
        %v4793 = vadd.f32 0.0, %v4792
        %v4794 = vpop.f32.mrb[0].mxu0
        %v4795 = vpop.f32.mrb[0].mxu0
        %v4796 = vadd.f32 0.0, %v4795
        %v4797 = vpop.f32.mrb[0].mxu0
        %4798 = vmatprep.mubr.bf16.mxu0 0
        %4799 = vmatmul.mubr.bf16.gmra.mrb[0].mxu0 %v4661
        %v4800 = vpop.f32.mrb[0].mxu0
        %v4801 = vadd.f32 0.0, %v4800
        %v4802 = vpop.f32.mrb[0].mxu0
        %v4803 = vpop.f32.mrb[0].mxu0
        %v4804 = vadd.f32 0.0, %v4803
        %v4805 = vpop.f32.mrb[0].mxu0
        %4806 = vmatprep.mubr.bf16.mxu0 0
        %4807 = vmatmul.mubr.bf16.gmra.mrb[0].mxu0 %v4664
        %v4808 = vpop.f32.mrb[0].mxu0
        %v4809 = vadd.f32 0.0, %v4808
        %v4810 = vpop.f32.mrb[0].mxu0
        %v4811 = vpop.f32.mrb[0].mxu0
        %v4812 = vadd.f32 0.0, %v4811
        %v4813 = vpop.f32.mrb[0].mxu0
        %4814 = vmatprep.mubr.bf16.mxu0 0
        %4815 = vmatmul.mubr.bf16.gmra.mrb[0].mxu0 %v4667
        %v4816 = vpop.f32.mrb[0].mxu0
        %v4817 = vadd.f32 0.0, %v4816
        %v4818 = vpop.f32.mrb[0].mxu0
        %v4819 = vpop.f32.mrb[0].mxu0
        %v4820 = vadd.f32 0.0, %v4819
        %v4821 = vpop.f32.mrb[0].mxu0
        %4822 = vmatprep.mubr.bf16.mxu0 0
        %4823 = vmatmul.mubr.bf16.gmra.mrb[0].mxu0 %v4670
        %v4824 = vpop.f32.mrb[0].mxu0
        %v4825 = vadd.f32 0.0, %v4824
        %v4826 = vpop.f32.mrb[0].mxu0
        %v4827 = vpop.f32.mrb[0].mxu0
        %v4828 = vadd.f32 0.0, %v4827
        %v4829 = vpop.f32.mrb[0].mxu0
        %4830 = vmatprep.mubr.bf16.mxu0 0
        %4831 = vmatmul.mubr.bf16.gmra.mrb[0].mxu0 %v4673
        %v4832 = vpop.f32.mrb[0].mxu0
        %v4833 = vadd.f32 0.0, %v4832
        %v4834 = vpop.f32.mrb[0].mxu0
        %v4835 = vpop.f32.mrb[0].mxu0
        %v4836 = vadd.f32 0.0, %v4835
        %v4837 = vpop.f32.mrb[0].mxu0
        %4838 = vdwg.mxu0
        %v4839 = vadd.f32 %v4493, %v4713
        %v4840 = vadd.f32 %v4494, %v4716
        %v4841 = vadd.f32 %v4495, %v4721
        %v4842 = vadd.f32 %v4496, %v4724
        %v4843 = vadd.f32 %v4497, %v4729
        %v4844 = vadd.f32 %v4498, %v4732
        %v4845 = vadd.f32 %v4499, %v4737
        %v4846 = vadd.f32 %v4500, %v4740
        %v4847 = vadd.f32 %v4501, %v4745
        %v4848 = vadd.f32 %v4502, %v4748
        %v4849 = vadd.f32 %v4503, %v4753
        %v4850 = vadd.f32 %v4504, %v4756
        %v4851 = vadd.f32 %v4505, %v4761
        %v4852 = vadd.f32 %v4506, %v4764
        %v4853 = vadd.f32 %v4507, %v4769
        %v4854 = vadd.f32 %v4508, %v4772
        %v4855 = vadd.f32 %v4509, %v4777
        %v4856 = vadd.f32 %v4510, %v4780
        %v4857 = vadd.f32 %v4511, %v4785
        %v4858 = vadd.f32 %v4512, %v4788
        %v4859 = vadd.f32 %v4513, %v4793
        %v4860 = vadd.f32 %v4514, %v4796
        %v4861 = vadd.f32 %v4515, %v4801
        %v4862 = vadd.f32 %v4516, %v4804
        %v4863 = vadd.f32 %v4517, %v4809
        %v4864 = vadd.f32 %v4518, %v4812
        %v4865 = vadd.f32 %v4519, %v4817
        %v4866 = vadd.f32 %v4520, %v4820
        %v4867 = vadd.f32 %v4521, %v4825
        %v4868 = vadd.f32 %v4522, %v4828
        %v4869 = vadd.f32 %v4523, %v4833
        %v4870 = vadd.f32 %v4524, %v4836
        %v4873 = vrot.slane %v3212, 6
        %v4874 = vsel %vm465, %v3244, %v4873
        %v4875 = vrot.slane %v3213, 6
        %v4876 = vsel %vm465, %v4873, %v4875
        %s4879 = scalar_lea.vmem %s7, 5
        %v4880 = vld [vmem:[%s4879] sm:$0x1]
        %v4881 = vpack.c.bf16 %v4876, %v4874
        %v4883 = vsel %vm3347, %v4881, 0
        %v4886 = vsel %vm693, %v4880, 0
        %4888 = vmatprep.subr.bf16.mxu0 0
        %4889 = vmatpush1.bf16.msra.mxu0 %v4886
        %4890 = vmatprep.subr.bf16.mxu0 0
        %4891 = vmatpush1.bf16.msra.mxu0 0
        %4892 = vmatprep.subr.bf16.mxu0 0
        %4893 = vmatpush1.bf16.msra.mxu0 0
        %4894 = vmatprep.subr.bf16.mxu0 0
        %4895 = vmatpush1.bf16.msra.mxu0 0
        %4896 = vmatprep.subr.bf16.mxu0 0
        %4897 = vmatpush1.bf16.msra.mxu0 0
        %4898 = vmatprep.subr.bf16.mxu0 0
        %4899 = vmatpush1.bf16.msra.mxu0 0
        %4900 = vmatprep.subr.bf16.mxu0 0
        %4901 = vmatpush1.bf16.msra.mxu0 0
        %4902 = vmatprep.subr.bf16.mxu0 0
        %4903 = vmatpush1.bf16.msra.mxu0 0
        %4904 = vmatprep.subr.bf16.mxu0 0
        %4905 = vmatpush1.bf16.msra.mxu0 0
        %4906 = vmatprep.subr.bf16.mxu0 0
        %4907 = vmatpush1.bf16.msra.mxu0 0
        %4908 = vmatprep.subr.bf16.mxu0 0
        %4909 = vmatpush1.bf16.msra.mxu0 0
        %4910 = vmatprep.subr.bf16.mxu0 0
        %4911 = vmatpush1.bf16.msra.mxu0 0
        %4912 = vmatprep.subr.bf16.mxu0 0
        %4913 = vmatpush1.bf16.msra.mxu0 0
        %4914 = vmatprep.subr.bf16.mxu0 0
        %4915 = vmatpush1.bf16.msra.mxu0 0
        %4916 = vmatprep.subr.bf16.mxu0 0
        %4917 = vmatpush1.bf16.msra.mxu0 0
        %4918 = vmatprep.subr.bf16.mxu0 0
        %4919 = vmatpush1.bf16.msra.mxu0 0
        %4920 = vmatprep.mubr.bf16.mxu0 0
        %4921 = vmatmul.mubr.bf16.gmra.mrb[0].mxu0 %v3349
        %v4922 = vpop.f32.mrb[0].mxu0
        %v4923 = vadd.f32 0.0, %v4922
        %v4924 = vpop.f32.mrb[0].mxu0
        %v4925 = vpop.f32.mrb[0].mxu0
        %v4926 = vadd.f32 0.0, %v4925
        %v4927 = vpop.f32.mrb[0].mxu0
        %4928 = vmatprep.mubr.bf16.mxu0 0
        %4929 = vmatmul.mubr.bf16.gmra.mrb[0].mxu0 %v3352
        %v4930 = vpop.f32.mrb[0].mxu0
        %v4931 = vadd.f32 0.0, %v4930
        %v4932 = vpop.f32.mrb[0].mxu0
        %v4933 = vpop.f32.mrb[0].mxu0
        %v4934 = vadd.f32 0.0, %v4933
        %v4935 = vpop.f32.mrb[0].mxu0
        %4936 = vmatprep.mubr.bf16.mxu0 0
        %4937 = vmatmul.mubr.bf16.gmra.mrb[0].mxu0 %v3355
        %v4938 = vpop.f32.mrb[0].mxu0
        %v4939 = vadd.f32 0.0, %v4938
        %v4940 = vpop.f32.mrb[0].mxu0
        %v4941 = vpop.f32.mrb[0].mxu0
        %v4942 = vadd.f32 0.0, %v4941
        %v4943 = vpop.f32.mrb[0].mxu0
        %4944 = vmatprep.mubr.bf16.mxu0 0
        %4945 = vmatmul.mubr.bf16.gmra.mrb[0].mxu0 %v3358
        %v4946 = vpop.f32.mrb[0].mxu0
        %v4947 = vadd.f32 0.0, %v4946
        %v4948 = vpop.f32.mrb[0].mxu0
        %v4949 = vpop.f32.mrb[0].mxu0
        %v4950 = vadd.f32 0.0, %v4949
        %v4951 = vpop.f32.mrb[0].mxu0
        %4952 = vmatprep.mubr.bf16.mxu0 0
        %4953 = vmatmul.mubr.bf16.gmra.mrb[0].mxu0 %v3361
        %v4954 = vpop.f32.mrb[0].mxu0
        %v4955 = vadd.f32 0.0, %v4954
        %v4956 = vpop.f32.mrb[0].mxu0
        %v4957 = vpop.f32.mrb[0].mxu0
        %v4958 = vadd.f32 0.0, %v4957
        %v4959 = vpop.f32.mrb[0].mxu0
        %4960 = vmatprep.mubr.bf16.mxu0 0
        %4961 = vmatmul.mubr.bf16.gmra.mrb[0].mxu0 %v3364
        %v4962 = vpop.f32.mrb[0].mxu0
        %v4963 = vadd.f32 0.0, %v4962
        %v4964 = vpop.f32.mrb[0].mxu0
        %v4965 = vpop.f32.mrb[0].mxu0
        %v4966 = vadd.f32 0.0, %v4965
        %v4967 = vpop.f32.mrb[0].mxu0
        %4968 = vmatprep.mubr.bf16.mxu0 0
        %4969 = vmatmul.mubr.bf16.gmra.mrb[0].mxu0 %v3367
        %v4970 = vpop.f32.mrb[0].mxu0
        %v4971 = vadd.f32 0.0, %v4970
        %v4972 = vpop.f32.mrb[0].mxu0
        %v4973 = vpop.f32.mrb[0].mxu0
        %v4974 = vadd.f32 0.0, %v4973
        %v4975 = vpop.f32.mrb[0].mxu0
        %4976 = vmatprep.mubr.bf16.mxu0 0
        %4977 = vmatmul.mubr.bf16.gmra.mrb[0].mxu0 %v3370
        %v4978 = vpop.f32.mrb[0].mxu0
        %v4979 = vadd.f32 0.0, %v4978
        %v4980 = vpop.f32.mrb[0].mxu0
        %v4981 = vpop.f32.mrb[0].mxu0
        %v4982 = vadd.f32 0.0, %v4981
        %v4983 = vpop.f32.mrb[0].mxu0
        %4984 = vmatprep.mubr.bf16.mxu0 0
        %4985 = vmatmul.mubr.bf16.gmra.mrb[0].mxu0 %v3373
        %v4986 = vpop.f32.mrb[0].mxu0
        %v4987 = vadd.f32 0.0, %v4986
        %v4988 = vpop.f32.mrb[0].mxu0
        %v4989 = vpop.f32.mrb[0].mxu0
        %v4990 = vadd.f32 0.0, %v4989
        %v4991 = vpop.f32.mrb[0].mxu0
        %4992 = vmatprep.mubr.bf16.mxu0 0
        %4993 = vmatmul.mubr.bf16.gmra.mrb[0].mxu0 %v3376
        %v4994 = vpop.f32.mrb[0].mxu0
        %v4995 = vadd.f32 0.0, %v4994
        %v4996 = vpop.f32.mrb[0].mxu0
        %v4997 = vpop.f32.mrb[0].mxu0
        %v4998 = vadd.f32 0.0, %v4997
        %v4999 = vpop.f32.mrb[0].mxu0
        %5000 = vmatprep.mubr.bf16.mxu0 0
        %5001 = vmatmul.mubr.bf16.gmra.mrb[0].mxu0 %v3379
        %v5002 = vpop.f32.mrb[0].mxu0
        %v5003 = vadd.f32 0.0, %v5002
        %v5004 = vpop.f32.mrb[0].mxu0
        %v5005 = vpop.f32.mrb[0].mxu0
        %v5006 = vadd.f32 0.0, %v5005
        %v5007 = vpop.f32.mrb[0].mxu0
        %5008 = vmatprep.mubr.bf16.mxu0 0
        %5009 = vmatmul.mubr.bf16.gmra.mrb[0].mxu0 %v3382
        %v5010 = vpop.f32.mrb[0].mxu0
        %v5011 = vadd.f32 0.0, %v5010
        %v5012 = vpop.f32.mrb[0].mxu0
        %v5013 = vpop.f32.mrb[0].mxu0
        %v5014 = vadd.f32 0.0, %v5013
        %v5015 = vpop.f32.mrb[0].mxu0
        %5016 = vmatprep.mubr.bf16.mxu0 0
        %5017 = vmatmul.mubr.bf16.gmra.mrb[0].mxu0 %v3385
        %v5018 = vpop.f32.mrb[0].mxu0
        %v5019 = vadd.f32 0.0, %v5018
        %v5020 = vpop.f32.mrb[0].mxu0
        %v5021 = vpop.f32.mrb[0].mxu0
        %v5022 = vadd.f32 0.0, %v5021
        %v5023 = vpop.f32.mrb[0].mxu0
        %5024 = vmatprep.mubr.bf16.mxu0 0
        %5025 = vmatmul.mubr.bf16.gmra.mrb[0].mxu0 %v3388
        %v5026 = vpop.f32.mrb[0].mxu0
        %v5027 = vadd.f32 0.0, %v5026
        %v5028 = vpop.f32.mrb[0].mxu0
        %v5029 = vpop.f32.mrb[0].mxu0
        %v5030 = vadd.f32 0.0, %v5029
        %v5031 = vpop.f32.mrb[0].mxu0
        %5032 = vmatprep.mubr.bf16.mxu0 0
        %5033 = vmatmul.mubr.bf16.gmra.mrb[0].mxu0 %v3391
        %v5034 = vpop.f32.mrb[0].mxu0
        %v5035 = vadd.f32 0.0, %v5034
        %v5036 = vpop.f32.mrb[0].mxu0
        %v5037 = vpop.f32.mrb[0].mxu0
        %v5038 = vadd.f32 0.0, %v5037
        %v5039 = vpop.f32.mrb[0].mxu0
        %5040 = vmatprep.mubr.bf16.mxu0 0
        %5041 = vmatmul.mubr.bf16.gmra.mrb[0].mxu0 %v4883
        %v5042 = vpop.f32.mrb[0].mxu0
        %v5043 = vadd.f32 0.0, %v5042
        %v5044 = vpop.f32.mrb[0].mxu0
        %v5045 = vpop.f32.mrb[0].mxu0
        %v5046 = vadd.f32 0.0, %v5045
        %v5047 = vpop.f32.mrb[0].mxu0
        %5048 = vdwg.mxu0
        %v5049 = vadd.f32 %v4839, %v4923
        %v5050 = vadd.f32 %v4840, %v4926
        %v5051 = vadd.f32 %v4841, %v4931
        %v5052 = vadd.f32 %v4842, %v4934
        %v5053 = vadd.f32 %v4843, %v4939
        %v5054 = vadd.f32 %v4844, %v4942
        %v5055 = vadd.f32 %v4845, %v4947
        %v5056 = vadd.f32 %v4846, %v4950
        %v5057 = vadd.f32 %v4847, %v4955
        %v5058 = vadd.f32 %v4848, %v4958
        %v5059 = vadd.f32 %v4849, %v4963
        %v5060 = vadd.f32 %v4850, %v4966
        %v5061 = vadd.f32 %v4851, %v4971
        %v5062 = vadd.f32 %v4852, %v4974
        %v5063 = vadd.f32 %v4853, %v4979
        %v5064 = vadd.f32 %v4854, %v4982
        %v5065 = vadd.f32 %v4855, %v4987
        %v5066 = vadd.f32 %v4856, %v4990
        %v5067 = vadd.f32 %v4857, %v4995
        %v5068 = vadd.f32 %v4858, %v4998
        %v5069 = vadd.f32 %v4859, %v5003
        %v5070 = vadd.f32 %v4860, %v5006
        %v5071 = vadd.f32 %v4861, %v5011
        %v5072 = vadd.f32 %v4862, %v5014
        %v5073 = vadd.f32 %v4863, %v5019
        %v5074 = vadd.f32 %v4864, %v5022
        %v5075 = vadd.f32 %v4865, %v5027
        %v5076 = vadd.f32 %v4866, %v5030
        %v5077 = vadd.f32 %v4867, %v5035
        %v5078 = vadd.f32 %v4868, %v5038
        %v5079 = vadd.f32 %v4869, %v5043
        %v5080 = vadd.f32 %v4870, %v5046
        %v5081 = vrot.slane %v3212, 7
        %v5082 = vsel %vm693, %v694, %v5081
        %v5083 = vrot.slane %v3213, 7
        %v5084 = vsel %vm693, %v5081, %v5083
        %s5087 = scalar_lea.vmem %s7, 6
        %v5088 = vld [vmem:[%s5087] sm:$0x1]
        %v5089 = vpack.c.bf16 %v5084, %v5082
        %v5091 = vsel %vm3347, %v5089, 0
        %v5094 = vsel %vm693, %v5088, 0
        %5096 = vmatprep.subr.bf16.mxu0 0
        %5097 = vmatpush1.bf16.msra.mxu0 %v5094
        %5098 = vmatprep.subr.bf16.mxu0 0
        %5099 = vmatpush1.bf16.msra.mxu0 0
        %5100 = vmatprep.subr.bf16.mxu0 0
        %5101 = vmatpush1.bf16.msra.mxu0 0
        %5102 = vmatprep.subr.bf16.mxu0 0
        %5103 = vmatpush1.bf16.msra.mxu0 0
        %5104 = vmatprep.subr.bf16.mxu0 0
        %5105 = vmatpush1.bf16.msra.mxu0 0
        %5106 = vmatprep.subr.bf16.mxu0 0
        %5107 = vmatpush1.bf16.msra.mxu0 0
        %5108 = vmatprep.subr.bf16.mxu0 0
        %5109 = vmatpush1.bf16.msra.mxu0 0
        %5110 = vmatprep.subr.bf16.mxu0 0
        %5111 = vmatpush1.bf16.msra.mxu0 0
        %5112 = vmatprep.subr.bf16.mxu0 0
        %5113 = vmatpush1.bf16.msra.mxu0 0
        %5114 = vmatprep.subr.bf16.mxu0 0
        %5115 = vmatpush1.bf16.msra.mxu0 0
        %5116 = vmatprep.subr.bf16.mxu0 0
        %5117 = vmatpush1.bf16.msra.mxu0 0
        %5118 = vmatprep.subr.bf16.mxu0 0
        %5119 = vmatpush1.bf16.msra.mxu0 0
        %5120 = vmatprep.subr.bf16.mxu0 0
        %5121 = vmatpush1.bf16.msra.mxu0 0
        %5122 = vmatprep.subr.bf16.mxu0 0
        %5123 = vmatpush1.bf16.msra.mxu0 0
        %5124 = vmatprep.subr.bf16.mxu0 0
        %5125 = vmatpush1.bf16.msra.mxu0 0
        %5126 = vmatprep.subr.bf16.mxu0 0
        %5127 = vmatpush1.bf16.msra.mxu0 0
        %5128 = vmatprep.mubr.bf16.mxu0 0
        %5129 = vmatmul.mubr.bf16.gmra.mrb[0].mxu0 %v3689
        %v5130 = vpop.f32.mrb[0].mxu0
        %v5131 = vadd.f32 0.0, %v5130
        %v5132 = vpop.f32.mrb[0].mxu0
        %v5133 = vpop.f32.mrb[0].mxu0
        %v5134 = vadd.f32 0.0, %v5133
        %v5135 = vpop.f32.mrb[0].mxu0
        %5136 = vmatprep.mubr.bf16.mxu0 0
        %5137 = vmatmul.mubr.bf16.gmra.mrb[0].mxu0 %v3692
        %v5138 = vpop.f32.mrb[0].mxu0
        %v5139 = vadd.f32 0.0, %v5138
        %v5140 = vpop.f32.mrb[0].mxu0
        %v5141 = vpop.f32.mrb[0].mxu0
        %v5142 = vadd.f32 0.0, %v5141
        %v5143 = vpop.f32.mrb[0].mxu0
        %5144 = vmatprep.mubr.bf16.mxu0 0
        %5145 = vmatmul.mubr.bf16.gmra.mrb[0].mxu0 %v3695
        %v5146 = vpop.f32.mrb[0].mxu0
        %v5147 = vadd.f32 0.0, %v5146
        %v5148 = vpop.f32.mrb[0].mxu0
        %v5149 = vpop.f32.mrb[0].mxu0
        %v5150 = vadd.f32 0.0, %v5149
        %v5151 = vpop.f32.mrb[0].mxu0
        %5152 = vmatprep.mubr.bf16.mxu0 0
        %5153 = vmatmul.mubr.bf16.gmra.mrb[0].mxu0 %v3698
        %v5154 = vpop.f32.mrb[0].mxu0
        %v5155 = vadd.f32 0.0, %v5154
        %v5156 = vpop.f32.mrb[0].mxu0
        %v5157 = vpop.f32.mrb[0].mxu0
        %v5158 = vadd.f32 0.0, %v5157
        %v5159 = vpop.f32.mrb[0].mxu0
        %5160 = vmatprep.mubr.bf16.mxu0 0
        %5161 = vmatmul.mubr.bf16.gmra.mrb[0].mxu0 %v3701
        %v5162 = vpop.f32.mrb[0].mxu0
        %v5163 = vadd.f32 0.0, %v5162
        %v5164 = vpop.f32.mrb[0].mxu0
        %v5165 = vpop.f32.mrb[0].mxu0
        %v5166 = vadd.f32 0.0, %v5165
        %v5167 = vpop.f32.mrb[0].mxu0
        %5168 = vmatprep.mubr.bf16.mxu0 0
        %5169 = vmatmul.mubr.bf16.gmra.mrb[0].mxu0 %v3704
        %v5170 = vpop.f32.mrb[0].mxu0
        %v5171 = vadd.f32 0.0, %v5170
        %v5172 = vpop.f32.mrb[0].mxu0
        %v5173 = vpop.f32.mrb[0].mxu0
        %v5174 = vadd.f32 0.0, %v5173
        %v5175 = vpop.f32.mrb[0].mxu0
        %5176 = vmatprep.mubr.bf16.mxu0 0
        %5177 = vmatmul.mubr.bf16.gmra.mrb[0].mxu0 %v3707
        %v5178 = vpop.f32.mrb[0].mxu0
        %v5179 = vadd.f32 0.0, %v5178
        %v5180 = vpop.f32.mrb[0].mxu0
        %v5181 = vpop.f32.mrb[0].mxu0
        %v5182 = vadd.f32 0.0, %v5181
        %v5183 = vpop.f32.mrb[0].mxu0
        %5184 = vmatprep.mubr.bf16.mxu0 0
        %5185 = vmatmul.mubr.bf16.gmra.mrb[0].mxu0 %v3710
        %v5186 = vpop.f32.mrb[0].mxu0
        %v5187 = vadd.f32 0.0, %v5186
        %v5188 = vpop.f32.mrb[0].mxu0
        %v5189 = vpop.f32.mrb[0].mxu0
        %v5190 = vadd.f32 0.0, %v5189
        %v5191 = vpop.f32.mrb[0].mxu0
        %5192 = vmatprep.mubr.bf16.mxu0 0
        %5193 = vmatmul.mubr.bf16.gmra.mrb[0].mxu0 %v3713
        %v5194 = vpop.f32.mrb[0].mxu0
        %v5195 = vadd.f32 0.0, %v5194
        %v5196 = vpop.f32.mrb[0].mxu0
        %v5197 = vpop.f32.mrb[0].mxu0
        %v5198 = vadd.f32 0.0, %v5197
        %v5199 = vpop.f32.mrb[0].mxu0
        %5200 = vmatprep.mubr.bf16.mxu0 0
        %5201 = vmatmul.mubr.bf16.gmra.mrb[0].mxu0 %v3716
        %v5202 = vpop.f32.mrb[0].mxu0
        %v5203 = vadd.f32 0.0, %v5202
        %v5204 = vpop.f32.mrb[0].mxu0
        %v5205 = vpop.f32.mrb[0].mxu0
        %v5206 = vadd.f32 0.0, %v5205
        %v5207 = vpop.f32.mrb[0].mxu0
        %5208 = vmatprep.mubr.bf16.mxu0 0
        %5209 = vmatmul.mubr.bf16.gmra.mrb[0].mxu0 %v3719
        %v5210 = vpop.f32.mrb[0].mxu0
        %v5211 = vadd.f32 0.0, %v5210
        %v5212 = vpop.f32.mrb[0].mxu0
        %v5213 = vpop.f32.mrb[0].mxu0
        %v5214 = vadd.f32 0.0, %v5213
        %v5215 = vpop.f32.mrb[0].mxu0
        %5216 = vmatprep.mubr.bf16.mxu0 0
        %5217 = vmatmul.mubr.bf16.gmra.mrb[0].mxu0 %v3722
        %v5218 = vpop.f32.mrb[0].mxu0
        %v5219 = vadd.f32 0.0, %v5218
        %v5220 = vpop.f32.mrb[0].mxu0
        %v5221 = vpop.f32.mrb[0].mxu0
        %v5222 = vadd.f32 0.0, %v5221
        %v5223 = vpop.f32.mrb[0].mxu0
        %5224 = vmatprep.mubr.bf16.mxu0 0
        %5225 = vmatmul.mubr.bf16.gmra.mrb[0].mxu0 %v3725
        %v5226 = vpop.f32.mrb[0].mxu0
        %v5227 = vadd.f32 0.0, %v5226
        %v5228 = vpop.f32.mrb[0].mxu0
        %v5229 = vpop.f32.mrb[0].mxu0
        %v5230 = vadd.f32 0.0, %v5229
        %v5231 = vpop.f32.mrb[0].mxu0
        %5232 = vmatprep.mubr.bf16.mxu0 0
        %5233 = vmatmul.mubr.bf16.gmra.mrb[0].mxu0 %v3728
        %v5234 = vpop.f32.mrb[0].mxu0
        %v5235 = vadd.f32 0.0, %v5234
        %v5236 = vpop.f32.mrb[0].mxu0
        %v5237 = vpop.f32.mrb[0].mxu0
        %v5238 = vadd.f32 0.0, %v5237
        %v5239 = vpop.f32.mrb[0].mxu0
        %5240 = vmatprep.mubr.bf16.mxu0 0
        %5241 = vmatmul.mubr.bf16.gmra.mrb[0].mxu0 %v3731
        %v5242 = vpop.f32.mrb[0].mxu0
        %v5243 = vadd.f32 0.0, %v5242
        %v5244 = vpop.f32.mrb[0].mxu0
        %v5245 = vpop.f32.mrb[0].mxu0
        %v5246 = vadd.f32 0.0, %v5245
        %v5247 = vpop.f32.mrb[0].mxu0
        %5248 = vmatprep.mubr.bf16.mxu0 0
        %5249 = vmatmul.mubr.bf16.gmra.mrb[0].mxu0 %v5091
        %v5250 = vpop.f32.mrb[0].mxu0
        %v5251 = vadd.f32 0.0, %v5250
        %v5252 = vpop.f32.mrb[0].mxu0
        %v5253 = vpop.f32.mrb[0].mxu0
        %v5254 = vadd.f32 0.0, %v5253
        %v5255 = vpop.f32.mrb[0].mxu0
        %5256 = vdwg.mxu0
        %v5257 = vadd.f32 %v5049, %v5131
        %v5258 = vadd.f32 %v5050, %v5134
        %v5259 = vadd.f32 %v5051, %v5139
        %v5260 = vadd.f32 %v5052, %v5142
        %v5261 = vadd.f32 %v5053, %v5147
        %v5262 = vadd.f32 %v5054, %v5150
        %v5263 = vadd.f32 %v5055, %v5155
        %v5264 = vadd.f32 %v5056, %v5158
        %v5265 = vadd.f32 %v5057, %v5163
        %v5266 = vadd.f32 %v5058, %v5166
        %v5267 = vadd.f32 %v5059, %v5171
        %v5268 = vadd.f32 %v5060, %v5174
        %v5269 = vadd.f32 %v5061, %v5179
        %v5270 = vadd.f32 %v5062, %v5182
        %v5271 = vadd.f32 %v5063, %v5187
        %v5272 = vadd.f32 %v5064, %v5190
        %v5273 = vadd.f32 %v5065, %v5195
        %v5274 = vadd.f32 %v5066, %v5198
        %v5275 = vadd.f32 %v5067, %v5203
        %v5276 = vadd.f32 %v5068, %v5206
        %v5277 = vadd.f32 %v5069, %v5211
        %v5278 = vadd.f32 %v5070, %v5214
        %v5279 = vadd.f32 %v5071, %v5219
        %v5280 = vadd.f32 %v5072, %v5222
        %v5281 = vadd.f32 %v5073, %v5227
        %v5282 = vadd.f32 %v5074, %v5230
        %v5283 = vadd.f32 %v5075, %v5235
        %v5284 = vadd.f32 %v5076, %v5238
        %v5285 = vadd.f32 %v5077, %v5243
        %v5286 = vadd.f32 %v5078, %v5246
        %v5287 = vadd.f32 %v5079, %v5251
        %v5288 = vadd.f32 %v5080, %v5254
        %s5289 = scalar_lea.vmem %s7, 7
        %v5290 = vld [vmem:[%s5289] sm:$0x1]
        %v5291 = vpack.c.bf16 %v3213, %v3212
        %v5293 = vsel %vm3347, %v5291, 0
        %v5296 = vsel %vm693, %v5290, 0
        %5298 = vmatprep.subr.bf16.mxu0 0
        %5299 = vmatpush1.bf16.msra.mxu0 %v5296
        %5300 = vmatprep.subr.bf16.mxu0 0
        %5301 = vmatpush1.bf16.msra.mxu0 0
        %5302 = vmatprep.subr.bf16.mxu0 0
        %5303 = vmatpush1.bf16.msra.mxu0 0
        %5304 = vmatprep.subr.bf16.mxu0 0
        %5305 = vmatpush1.bf16.msra.mxu0 0
        %5306 = vmatprep.subr.bf16.mxu0 0
        %5307 = vmatpush1.bf16.msra.mxu0 0
        %5308 = vmatprep.subr.bf16.mxu0 0
        %5309 = vmatpush1.bf16.msra.mxu0 0
        %5310 = vmatprep.subr.bf16.mxu0 0
        %5311 = vmatpush1.bf16.msra.mxu0 0
        %5312 = vmatprep.subr.bf16.mxu0 0
        %5313 = vmatpush1.bf16.msra.mxu0 0
        %5314 = vmatprep.subr.bf16.mxu0 0
        %5315 = vmatpush1.bf16.msra.mxu0 0
        %5316 = vmatprep.subr.bf16.mxu0 0
        %5317 = vmatpush1.bf16.msra.mxu0 0
        %5318 = vmatprep.subr.bf16.mxu0 0
        %5319 = vmatpush1.bf16.msra.mxu0 0
        %5320 = vmatprep.subr.bf16.mxu0 0
        %5321 = vmatpush1.bf16.msra.mxu0 0
        %5322 = vmatprep.subr.bf16.mxu0 0
        %5323 = vmatpush1.bf16.msra.mxu0 0
        %5324 = vmatprep.subr.bf16.mxu0 0
        %5325 = vmatpush1.bf16.msra.mxu0 0
        %5326 = vmatprep.subr.bf16.mxu0 0
        %5327 = vmatpush1.bf16.msra.mxu0 0
        %5328 = vmatprep.subr.bf16.mxu0 0
        %5329 = vmatpush1.bf16.msra.mxu0 0
        %5330 = vmatprep.mubr.bf16.mxu0 0
        %5331 = vmatmul.mubr.bf16.gmra.mrb[0].mxu0 %v3945
        %v5332 = vpop.f32.mrb[0].mxu0
        %v5333 = vadd.f32 0.0, %v5332
        %v5334 = vpop.f32.mrb[0].mxu0
        %v5335 = vpop.f32.mrb[0].mxu0
        %v5336 = vadd.f32 0.0, %v5335
        %v5337 = vpop.f32.mrb[0].mxu0
        %5338 = vmatprep.mubr.bf16.mxu0 0
        %5339 = vmatmul.mubr.bf16.gmra.mrb[0].mxu0 %v3948
        %v5340 = vpop.f32.mrb[0].mxu0
        %v5341 = vadd.f32 0.0, %v5340
        %v5342 = vpop.f32.mrb[0].mxu0
        %v5343 = vpop.f32.mrb[0].mxu0
        %v5344 = vadd.f32 0.0, %v5343
        %v5345 = vpop.f32.mrb[0].mxu0
        %5346 = vmatprep.mubr.bf16.mxu0 0
        %5347 = vmatmul.mubr.bf16.gmra.mrb[0].mxu0 %v3951
        %v5348 = vpop.f32.mrb[0].mxu0
        %v5349 = vadd.f32 0.0, %v5348
        %v5350 = vpop.f32.mrb[0].mxu0
        %v5351 = vpop.f32.mrb[0].mxu0
        %v5352 = vadd.f32 0.0, %v5351
        %v5353 = vpop.f32.mrb[0].mxu0
        %5354 = vmatprep.mubr.bf16.mxu0 0
        %5355 = vmatmul.mubr.bf16.gmra.mrb[0].mxu0 %v3954
        %v5356 = vpop.f32.mrb[0].mxu0
        %v5357 = vadd.f32 0.0, %v5356
        %v5358 = vpop.f32.mrb[0].mxu0
        %v5359 = vpop.f32.mrb[0].mxu0
        %v5360 = vadd.f32 0.0, %v5359
        %v5361 = vpop.f32.mrb[0].mxu0
        %5362 = vmatprep.mubr.bf16.mxu0 0
        %5363 = vmatmul.mubr.bf16.gmra.mrb[0].mxu0 %v3957
        %v5364 = vpop.f32.mrb[0].mxu0
        %v5365 = vadd.f32 0.0, %v5364
        %v5366 = vpop.f32.mrb[0].mxu0
        %v5367 = vpop.f32.mrb[0].mxu0
        %v5368 = vadd.f32 0.0, %v5367
        %v5369 = vpop.f32.mrb[0].mxu0
        %5370 = vmatprep.mubr.bf16.mxu0 0
        %5371 = vmatmul.mubr.bf16.gmra.mrb[0].mxu0 %v3960
        %v5372 = vpop.f32.mrb[0].mxu0
        %v5373 = vadd.f32 0.0, %v5372
        %v5374 = vpop.f32.mrb[0].mxu0
        %v5375 = vpop.f32.mrb[0].mxu0
        %v5376 = vadd.f32 0.0, %v5375
        %v5377 = vpop.f32.mrb[0].mxu0
        %5378 = vmatprep.mubr.bf16.mxu0 0
        %5379 = vmatmul.mubr.bf16.gmra.mrb[0].mxu0 %v3963
        %v5380 = vpop.f32.mrb[0].mxu0
        %v5381 = vadd.f32 0.0, %v5380
        %v5382 = vpop.f32.mrb[0].mxu0
        %v5383 = vpop.f32.mrb[0].mxu0
        %v5384 = vadd.f32 0.0, %v5383
        %v5385 = vpop.f32.mrb[0].mxu0
        %5386 = vmatprep.mubr.bf16.mxu0 0
        %5387 = vmatmul.mubr.bf16.gmra.mrb[0].mxu0 %v3966
        %v5388 = vpop.f32.mrb[0].mxu0
        %v5389 = vadd.f32 0.0, %v5388
        %v5390 = vpop.f32.mrb[0].mxu0
        %v5391 = vpop.f32.mrb[0].mxu0
        %v5392 = vadd.f32 0.0, %v5391
        %v5393 = vpop.f32.mrb[0].mxu0
        %5394 = vmatprep.mubr.bf16.mxu0 0
        %5395 = vmatmul.mubr.bf16.gmra.mrb[0].mxu0 %v3969
        %v5396 = vpop.f32.mrb[0].mxu0
        %v5397 = vadd.f32 0.0, %v5396
        %v5398 = vpop.f32.mrb[0].mxu0
        %v5399 = vpop.f32.mrb[0].mxu0
        %v5400 = vadd.f32 0.0, %v5399
        %v5401 = vpop.f32.mrb[0].mxu0
        %5402 = vmatprep.mubr.bf16.mxu0 0
        %5403 = vmatmul.mubr.bf16.gmra.mrb[0].mxu0 %v3972
        %v5404 = vpop.f32.mrb[0].mxu0
        %v5405 = vadd.f32 0.0, %v5404
        %v5406 = vpop.f32.mrb[0].mxu0
        %v5407 = vpop.f32.mrb[0].mxu0
        %v5408 = vadd.f32 0.0, %v5407
        %v5409 = vpop.f32.mrb[0].mxu0
        %5410 = vmatprep.mubr.bf16.mxu0 0
        %5411 = vmatmul.mubr.bf16.gmra.mrb[0].mxu0 %v3975
        %v5412 = vpop.f32.mrb[0].mxu0
        %v5413 = vadd.f32 0.0, %v5412
        %v5414 = vpop.f32.mrb[0].mxu0
        %v5415 = vpop.f32.mrb[0].mxu0
        %v5416 = vadd.f32 0.0, %v5415
        %v5417 = vpop.f32.mrb[0].mxu0
        %5418 = vmatprep.mubr.bf16.mxu0 0
        %5419 = vmatmul.mubr.bf16.gmra.mrb[0].mxu0 %v3978
        %v5420 = vpop.f32.mrb[0].mxu0
        %v5421 = vadd.f32 0.0, %v5420
        %v5422 = vpop.f32.mrb[0].mxu0
        %v5423 = vpop.f32.mrb[0].mxu0
        %v5424 = vadd.f32 0.0, %v5423
        %v5425 = vpop.f32.mrb[0].mxu0
        %5426 = vmatprep.mubr.bf16.mxu0 0
        %5427 = vmatmul.mubr.bf16.gmra.mrb[0].mxu0 %v3981
        %v5428 = vpop.f32.mrb[0].mxu0
        %v5429 = vadd.f32 0.0, %v5428
        %v5430 = vpop.f32.mrb[0].mxu0
        %v5431 = vpop.f32.mrb[0].mxu0
        %v5432 = vadd.f32 0.0, %v5431
        %v5433 = vpop.f32.mrb[0].mxu0
        %5434 = vmatprep.mubr.bf16.mxu0 0
        %5435 = vmatmul.mubr.bf16.gmra.mrb[0].mxu0 %v3984
        %v5436 = vpop.f32.mrb[0].mxu0
        %v5437 = vadd.f32 0.0, %v5436
        %v5438 = vpop.f32.mrb[0].mxu0
        %v5439 = vpop.f32.mrb[0].mxu0
        %v5440 = vadd.f32 0.0, %v5439
        %v5441 = vpop.f32.mrb[0].mxu0
        %5442 = vmatprep.mubr.bf16.mxu0 0
        %5443 = vmatmul.mubr.bf16.gmra.mrb[0].mxu0 %v3987
        %v5444 = vpop.f32.mrb[0].mxu0
        %v5445 = vadd.f32 0.0, %v5444
        %v5446 = vpop.f32.mrb[0].mxu0
        %v5447 = vpop.f32.mrb[0].mxu0
        %v5448 = vadd.f32 0.0, %v5447
        %v5449 = vpop.f32.mrb[0].mxu0
        %5450 = vmatprep.mubr.bf16.mxu0 0
        %5451 = vmatmul.mubr.bf16.gmra.mrb[0].mxu0 %v5293
        %v5452 = vpop.f32.mrb[0].mxu0
        %v5453 = vadd.f32 0.0, %v5452
        %v5454 = vpop.f32.mrb[0].mxu0
        %v5455 = vpop.f32.mrb[0].mxu0
        %v5456 = vadd.f32 0.0, %v5455
        %v5457 = vpop.f32.mrb[0].mxu0
        %5458 = vdwg.mxu0
        %v5459 = vadd.f32 %v5257, %v5333
        %v5460 = vadd.f32 %v5258, %v5336
        %v5461 = vadd.f32 %v5259, %v5341
        %v5462 = vadd.f32 %v5260, %v5344
        %v5463 = vadd.f32 %v5261, %v5349
        %v5464 = vadd.f32 %v5262, %v5352
        %v5465 = vadd.f32 %v5263, %v5357
        %v5466 = vadd.f32 %v5264, %v5360
        %v5467 = vadd.f32 %v5265, %v5365
        %v5468 = vadd.f32 %v5266, %v5368
        %v5469 = vadd.f32 %v5267, %v5373
        %v5470 = vadd.f32 %v5268, %v5376
        %v5471 = vadd.f32 %v5269, %v5381
        %v5472 = vadd.f32 %v5270, %v5384
        %v5473 = vadd.f32 %v5271, %v5389
        %v5474 = vadd.f32 %v5272, %v5392
        %v5475 = vadd.f32 %v5273, %v5397
        %v5476 = vadd.f32 %v5274, %v5400
        %v5477 = vadd.f32 %v5275, %v5405
        %v5478 = vadd.f32 %v5276, %v5408
        %v5479 = vadd.f32 %v5277, %v5413
        %v5480 = vadd.f32 %v5278, %v5416
        %v5481 = vadd.f32 %v5279, %v5421
        %v5482 = vadd.f32 %v5280, %v5424
        %v5483 = vadd.f32 %v5281, %v5429
        %v5484 = vadd.f32 %v5282, %v5432
        %v5485 = vadd.f32 %v5283, %v5437
        %v5486 = vadd.f32 %v5284, %v5440
        %v5487 = vadd.f32 %v5285, %v5445
        %v5488 = vadd.f32 %v5286, %v5448
        %v5489 = vadd.f32 %v5287, %v5453
        %v5490 = vadd.f32 %v5288, %v5456
        %v5491 = vrot.slane %v3212, 1
        %v5492 = vrot.slane %v3213, 1
        %v5493 = vsel %vm1442, %v5491, %v5492
        %v5494 = vsel %vm1442, %v5492, %v1443
        %s5497 = scalar_lea.vmem %s7, 8
        %v5498 = vld [vmem:[%s5497] sm:$0x1]
        %v5499 = vpack.c.bf16 %v5494, %v5493
        %v5501 = vsel %vm3347, %v5499, 0
        %v5504 = vsel %vm693, %v5498, 0
        %5506 = vmatprep.subr.bf16.mxu0 0
        %5507 = vmatpush1.bf16.msra.mxu0 %v5504
        %5508 = vmatprep.subr.bf16.mxu0 0
        %5509 = vmatpush1.bf16.msra.mxu0 0
        %5510 = vmatprep.subr.bf16.mxu0 0
        %5511 = vmatpush1.bf16.msra.mxu0 0
        %5512 = vmatprep.subr.bf16.mxu0 0
        %5513 = vmatpush1.bf16.msra.mxu0 0
        %5514 = vmatprep.subr.bf16.mxu0 0
        %5515 = vmatpush1.bf16.msra.mxu0 0
        %5516 = vmatprep.subr.bf16.mxu0 0
        %5517 = vmatpush1.bf16.msra.mxu0 0
        %5518 = vmatprep.subr.bf16.mxu0 0
        %5519 = vmatpush1.bf16.msra.mxu0 0
        %5520 = vmatprep.subr.bf16.mxu0 0
        %5521 = vmatpush1.bf16.msra.mxu0 0
        %5522 = vmatprep.subr.bf16.mxu0 0
        %5523 = vmatpush1.bf16.msra.mxu0 0
        %5524 = vmatprep.subr.bf16.mxu0 0
        %5525 = vmatpush1.bf16.msra.mxu0 0
        %5526 = vmatprep.subr.bf16.mxu0 0
        %5527 = vmatpush1.bf16.msra.mxu0 0
        %5528 = vmatprep.subr.bf16.mxu0 0
        %5529 = vmatpush1.bf16.msra.mxu0 0
        %5530 = vmatprep.subr.bf16.mxu0 0
        %5531 = vmatpush1.bf16.msra.mxu0 0
        %5532 = vmatprep.subr.bf16.mxu0 0
        %5533 = vmatpush1.bf16.msra.mxu0 0
        %5534 = vmatprep.subr.bf16.mxu0 0
        %5535 = vmatpush1.bf16.msra.mxu0 0
        %5536 = vmatprep.subr.bf16.mxu0 0
        %5537 = vmatpush1.bf16.msra.mxu0 0
        %5538 = vmatprep.mubr.bf16.mxu0 0
        %5539 = vmatmul.mubr.bf16.gmra.mrb[0].mxu0 %v4285
        %v5540 = vpop.f32.mrb[0].mxu0
        %v5541 = vadd.f32 0.0, %v5540
        %v5542 = vpop.f32.mrb[0].mxu0
        %v5543 = vpop.f32.mrb[0].mxu0
        %v5544 = vadd.f32 0.0, %v5543
        %v5545 = vpop.f32.mrb[0].mxu0
        %5546 = vmatprep.mubr.bf16.mxu0 0
        %5547 = vmatmul.mubr.bf16.gmra.mrb[0].mxu0 %v4288
        %v5548 = vpop.f32.mrb[0].mxu0
        %v5549 = vadd.f32 0.0, %v5548
        %v5550 = vpop.f32.mrb[0].mxu0
        %v5551 = vpop.f32.mrb[0].mxu0
        %v5552 = vadd.f32 0.0, %v5551
        %v5553 = vpop.f32.mrb[0].mxu0
        %5554 = vmatprep.mubr.bf16.mxu0 0
        %5555 = vmatmul.mubr.bf16.gmra.mrb[0].mxu0 %v4291
        %v5556 = vpop.f32.mrb[0].mxu0
        %v5557 = vadd.f32 0.0, %v5556
        %v5558 = vpop.f32.mrb[0].mxu0
        %v5559 = vpop.f32.mrb[0].mxu0
        %v5560 = vadd.f32 0.0, %v5559
        %v5561 = vpop.f32.mrb[0].mxu0
        %5562 = vmatprep.mubr.bf16.mxu0 0
        %5563 = vmatmul.mubr.bf16.gmra.mrb[0].mxu0 %v4294
        %v5564 = vpop.f32.mrb[0].mxu0
        %v5565 = vadd.f32 0.0, %v5564
        %v5566 = vpop.f32.mrb[0].mxu0
        %v5567 = vpop.f32.mrb[0].mxu0
        %v5568 = vadd.f32 0.0, %v5567
        %v5569 = vpop.f32.mrb[0].mxu0
        %5570 = vmatprep.mubr.bf16.mxu0 0
        %5571 = vmatmul.mubr.bf16.gmra.mrb[0].mxu0 %v4297
        %v5572 = vpop.f32.mrb[0].mxu0
        %v5573 = vadd.f32 0.0, %v5572
        %v5574 = vpop.f32.mrb[0].mxu0
        %v5575 = vpop.f32.mrb[0].mxu0
        %v5576 = vadd.f32 0.0, %v5575
        %v5577 = vpop.f32.mrb[0].mxu0
        %5578 = vmatprep.mubr.bf16.mxu0 0
        %5579 = vmatmul.mubr.bf16.gmra.mrb[0].mxu0 %v4300
        %v5580 = vpop.f32.mrb[0].mxu0
        %v5581 = vadd.f32 0.0, %v5580
        %v5582 = vpop.f32.mrb[0].mxu0
        %v5583 = vpop.f32.mrb[0].mxu0
        %v5584 = vadd.f32 0.0, %v5583
        %v5585 = vpop.f32.mrb[0].mxu0
        %5586 = vmatprep.mubr.bf16.mxu0 0
        %5587 = vmatmul.mubr.bf16.gmra.mrb[0].mxu0 %v4303
        %v5588 = vpop.f32.mrb[0].mxu0
        %v5589 = vadd.f32 0.0, %v5588
        %v5590 = vpop.f32.mrb[0].mxu0
        %v5591 = vpop.f32.mrb[0].mxu0
        %v5592 = vadd.f32 0.0, %v5591
        %v5593 = vpop.f32.mrb[0].mxu0
        %5594 = vmatprep.mubr.bf16.mxu0 0
        %5595 = vmatmul.mubr.bf16.gmra.mrb[0].mxu0 %v4306
        %v5596 = vpop.f32.mrb[0].mxu0
        %v5597 = vadd.f32 0.0, %v5596
        %v5598 = vpop.f32.mrb[0].mxu0
        %v5599 = vpop.f32.mrb[0].mxu0
        %v5600 = vadd.f32 0.0, %v5599
        %v5601 = vpop.f32.mrb[0].mxu0
        %5602 = vmatprep.mubr.bf16.mxu0 0
        %5603 = vmatmul.mubr.bf16.gmra.mrb[0].mxu0 %v4309
        %v5604 = vpop.f32.mrb[0].mxu0
        %v5605 = vadd.f32 0.0, %v5604
        %v5606 = vpop.f32.mrb[0].mxu0
        %v5607 = vpop.f32.mrb[0].mxu0
        %v5608 = vadd.f32 0.0, %v5607
        %v5609 = vpop.f32.mrb[0].mxu0
        %5610 = vmatprep.mubr.bf16.mxu0 0
        %5611 = vmatmul.mubr.bf16.gmra.mrb[0].mxu0 %v4312
        %v5612 = vpop.f32.mrb[0].mxu0
        %v5613 = vadd.f32 0.0, %v5612
        %v5614 = vpop.f32.mrb[0].mxu0
        %v5615 = vpop.f32.mrb[0].mxu0
        %v5616 = vadd.f32 0.0, %v5615
        %v5617 = vpop.f32.mrb[0].mxu0
        %5618 = vmatprep.mubr.bf16.mxu0 0
        %5619 = vmatmul.mubr.bf16.gmra.mrb[0].mxu0 %v4315
        %v5620 = vpop.f32.mrb[0].mxu0
        %v5621 = vadd.f32 0.0, %v5620
        %v5622 = vpop.f32.mrb[0].mxu0
        %v5623 = vpop.f32.mrb[0].mxu0
        %v5624 = vadd.f32 0.0, %v5623
        %v5625 = vpop.f32.mrb[0].mxu0
        %5626 = vmatprep.mubr.bf16.mxu0 0
        %5627 = vmatmul.mubr.bf16.gmra.mrb[0].mxu0 %v4318
        %v5628 = vpop.f32.mrb[0].mxu0
        %v5629 = vadd.f32 0.0, %v5628
        %v5630 = vpop.f32.mrb[0].mxu0
        %v5631 = vpop.f32.mrb[0].mxu0
        %v5632 = vadd.f32 0.0, %v5631
        %v5633 = vpop.f32.mrb[0].mxu0
        %5634 = vmatprep.mubr.bf16.mxu0 0
        %5635 = vmatmul.mubr.bf16.gmra.mrb[0].mxu0 %v4321
        %v5636 = vpop.f32.mrb[0].mxu0
        %v5637 = vadd.f32 0.0, %v5636
        %v5638 = vpop.f32.mrb[0].mxu0
        %v5639 = vpop.f32.mrb[0].mxu0
        %v5640 = vadd.f32 0.0, %v5639
        %v5641 = vpop.f32.mrb[0].mxu0
        %5642 = vmatprep.mubr.bf16.mxu0 0
        %5643 = vmatmul.mubr.bf16.gmra.mrb[0].mxu0 %v4324
        %v5644 = vpop.f32.mrb[0].mxu0
        %v5645 = vadd.f32 0.0, %v5644
        %v5646 = vpop.f32.mrb[0].mxu0
        %v5647 = vpop.f32.mrb[0].mxu0
        %v5648 = vadd.f32 0.0, %v5647
        %v5649 = vpop.f32.mrb[0].mxu0
        %5650 = vmatprep.mubr.bf16.mxu0 0
        %5651 = vmatmul.mubr.bf16.gmra.mrb[0].mxu0 %v4327
        %v5652 = vpop.f32.mrb[0].mxu0
        %v5653 = vadd.f32 0.0, %v5652
        %v5654 = vpop.f32.mrb[0].mxu0
        %v5655 = vpop.f32.mrb[0].mxu0
        %v5656 = vadd.f32 0.0, %v5655
        %v5657 = vpop.f32.mrb[0].mxu0
        %5658 = vmatprep.mubr.bf16.mxu0 0
        %5659 = vmatmul.mubr.bf16.gmra.mrb[0].mxu0 %v5501
        %v5660 = vpop.f32.mrb[0].mxu0
        %v5661 = vadd.f32 0.0, %v5660
        %v5662 = vpop.f32.mrb[0].mxu0
        %v5663 = vpop.f32.mrb[0].mxu0
        %v5664 = vadd.f32 0.0, %v5663
        %v5665 = vpop.f32.mrb[0].mxu0
        %5666 = vdwg.mxu0
        %v5667 = vadd.f32 %v5459, %v5541
        %v5668 = vadd.f32 %v5460, %v5544
        %v5669 = vadd.f32 %v5461, %v5549
        %v5670 = vadd.f32 %v5462, %v5552
        %v5671 = vadd.f32 %v5463, %v5557
        %v5672 = vadd.f32 %v5464, %v5560
        %v5673 = vadd.f32 %v5465, %v5565
        %v5674 = vadd.f32 %v5466, %v5568
        %v5675 = vadd.f32 %v5467, %v5573
        %v5676 = vadd.f32 %v5468, %v5576
        %v5677 = vadd.f32 %v5469, %v5581
        %v5678 = vadd.f32 %v5470, %v5584
        %v5679 = vadd.f32 %v5471, %v5589
        %v5680 = vadd.f32 %v5472, %v5592
        %v5681 = vadd.f32 %v5473, %v5597
        %v5682 = vadd.f32 %v5474, %v5600
        %v5683 = vadd.f32 %v5475, %v5605
        %v5684 = vadd.f32 %v5476, %v5608
        %v5685 = vadd.f32 %v5477, %v5613
        %v5686 = vadd.f32 %v5478, %v5616
        %v5687 = vadd.f32 %v5479, %v5621
        %v5688 = vadd.f32 %v5480, %v5624
        %v5689 = vadd.f32 %v5481, %v5629
        %v5690 = vadd.f32 %v5482, %v5632
        %v5691 = vadd.f32 %v5483, %v5637
        %v5692 = vadd.f32 %v5484, %v5640
        %v5693 = vadd.f32 %v5485, %v5645
        %v5694 = vadd.f32 %v5486, %v5648
        %v5695 = vadd.f32 %v5487, %v5653
        %v5696 = vadd.f32 %v5488, %v5656
        %v5697 = vadd.f32 %v5489, %v5661
        %v5698 = vadd.f32 %v5490, %v5664
        %v5699 = vrot.slane %v3212, 2
        %v5700 = vrot.slane %v3213, 2
        %v5701 = vsel %vm4525, %v5699, %v5700
        %v5702 = vsel %vm4525, %v5700, %v4526
        %s5705 = scalar_lea.vmem %s7, 9
        %v5706 = vld [vmem:[%s5705] sm:$0x1]
        %v5707 = vpack.c.bf16 %v5702, %v5701
        %v5709 = vsel %vm3347, %v5707, 0
        %v5712 = vsel %vm693, %v5706, 0
        %5714 = vmatprep.subr.bf16.mxu0 0
        %5715 = vmatpush1.bf16.msra.mxu0 %v5712
        %5716 = vmatprep.subr.bf16.mxu0 0
        %5717 = vmatpush1.bf16.msra.mxu0 0
        %5718 = vmatprep.subr.bf16.mxu0 0
        %5719 = vmatpush1.bf16.msra.mxu0 0
        %5720 = vmatprep.subr.bf16.mxu0 0
        %5721 = vmatpush1.bf16.msra.mxu0 0
        %5722 = vmatprep.subr.bf16.mxu0 0
        %5723 = vmatpush1.bf16.msra.mxu0 0
        %5724 = vmatprep.subr.bf16.mxu0 0
        %5725 = vmatpush1.bf16.msra.mxu0 0
        %5726 = vmatprep.subr.bf16.mxu0 0
        %5727 = vmatpush1.bf16.msra.mxu0 0
        %5728 = vmatprep.subr.bf16.mxu0 0
        %5729 = vmatpush1.bf16.msra.mxu0 0
        %5730 = vmatprep.subr.bf16.mxu0 0
        %5731 = vmatpush1.bf16.msra.mxu0 0
        %5732 = vmatprep.subr.bf16.mxu0 0
        %5733 = vmatpush1.bf16.msra.mxu0 0
        %5734 = vmatprep.subr.bf16.mxu0 0
        %5735 = vmatpush1.bf16.msra.mxu0 0
        %5736 = vmatprep.subr.bf16.mxu0 0
        %5737 = vmatpush1.bf16.msra.mxu0 0
        %5738 = vmatprep.subr.bf16.mxu0 0
        %5739 = vmatpush1.bf16.msra.mxu0 0
        %5740 = vmatprep.subr.bf16.mxu0 0
        %5741 = vmatpush1.bf16.msra.mxu0 0
        %5742 = vmatprep.subr.bf16.mxu0 0
        %5743 = vmatpush1.bf16.msra.mxu0 0
        %5744 = vmatprep.subr.bf16.mxu0 0
        %5745 = vmatpush1.bf16.msra.mxu0 0
        %5746 = vmatprep.mubr.bf16.mxu0 0
        %5747 = vmatmul.mubr.bf16.gmra.mrb[0].mxu0 %v4631
        %v5748 = vpop.f32.mrb[0].mxu0
        %v5749 = vadd.f32 0.0, %v5748
        %v5750 = vpop.f32.mrb[0].mxu0
        %v5751 = vpop.f32.mrb[0].mxu0
        %v5752 = vadd.f32 0.0, %v5751
        %v5753 = vpop.f32.mrb[0].mxu0
        %5754 = vmatprep.mubr.bf16.mxu0 0
        %5755 = vmatmul.mubr.bf16.gmra.mrb[0].mxu0 %v4634
        %v5756 = vpop.f32.mrb[0].mxu0
        %v5757 = vadd.f32 0.0, %v5756
        %v5758 = vpop.f32.mrb[0].mxu0
        %v5759 = vpop.f32.mrb[0].mxu0
        %v5760 = vadd.f32 0.0, %v5759
        %v5761 = vpop.f32.mrb[0].mxu0
        %5762 = vmatprep.mubr.bf16.mxu0 0
        %5763 = vmatmul.mubr.bf16.gmra.mrb[0].mxu0 %v4637
        %v5764 = vpop.f32.mrb[0].mxu0
        %v5765 = vadd.f32 0.0, %v5764
        %v5766 = vpop.f32.mrb[0].mxu0
        %v5767 = vpop.f32.mrb[0].mxu0
        %v5768 = vadd.f32 0.0, %v5767
        %v5769 = vpop.f32.mrb[0].mxu0
        %5770 = vmatprep.mubr.bf16.mxu0 0
        %5771 = vmatmul.mubr.bf16.gmra.mrb[0].mxu0 %v4640
        %v5772 = vpop.f32.mrb[0].mxu0
        %v5773 = vadd.f32 0.0, %v5772
        %v5774 = vpop.f32.mrb[0].mxu0
        %v5775 = vpop.f32.mrb[0].mxu0
        %v5776 = vadd.f32 0.0, %v5775
        %v5777 = vpop.f32.mrb[0].mxu0
        %5778 = vmatprep.mubr.bf16.mxu0 0
        %5779 = vmatmul.mubr.bf16.gmra.mrb[0].mxu0 %v4643
        %v5780 = vpop.f32.mrb[0].mxu0
        %v5781 = vadd.f32 0.0, %v5780
        %v5782 = vpop.f32.mrb[0].mxu0
        %v5783 = vpop.f32.mrb[0].mxu0
        %v5784 = vadd.f32 0.0, %v5783
        %v5785 = vpop.f32.mrb[0].mxu0
        %5786 = vmatprep.mubr.bf16.mxu0 0
        %5787 = vmatmul.mubr.bf16.gmra.mrb[0].mxu0 %v4646
        %v5788 = vpop.f32.mrb[0].mxu0
        %v5789 = vadd.f32 0.0, %v5788
        %v5790 = vpop.f32.mrb[0].mxu0
        %v5791 = vpop.f32.mrb[0].mxu0
        %v5792 = vadd.f32 0.0, %v5791
        %v5793 = vpop.f32.mrb[0].mxu0
        %5794 = vmatprep.mubr.bf16.mxu0 0
        %5795 = vmatmul.mubr.bf16.gmra.mrb[0].mxu0 %v4649
        %v5796 = vpop.f32.mrb[0].mxu0
        %v5797 = vadd.f32 0.0, %v5796
        %v5798 = vpop.f32.mrb[0].mxu0
        %v5799 = vpop.f32.mrb[0].mxu0
        %v5800 = vadd.f32 0.0, %v5799
        %v5801 = vpop.f32.mrb[0].mxu0
        %5802 = vmatprep.mubr.bf16.mxu0 0
        %5803 = vmatmul.mubr.bf16.gmra.mrb[0].mxu0 %v4652
        %v5804 = vpop.f32.mrb[0].mxu0
        %v5805 = vadd.f32 0.0, %v5804
        %v5806 = vpop.f32.mrb[0].mxu0
        %v5807 = vpop.f32.mrb[0].mxu0
        %v5808 = vadd.f32 0.0, %v5807
        %v5809 = vpop.f32.mrb[0].mxu0
        %5810 = vmatprep.mubr.bf16.mxu0 0
        %5811 = vmatmul.mubr.bf16.gmra.mrb[0].mxu0 %v4655
        %v5812 = vpop.f32.mrb[0].mxu0
        %v5813 = vadd.f32 0.0, %v5812
        %v5814 = vpop.f32.mrb[0].mxu0
        %v5815 = vpop.f32.mrb[0].mxu0
        %v5816 = vadd.f32 0.0, %v5815
        %v5817 = vpop.f32.mrb[0].mxu0
        %5818 = vmatprep.mubr.bf16.mxu0 0
        %5819 = vmatmul.mubr.bf16.gmra.mrb[0].mxu0 %v4658
        %v5820 = vpop.f32.mrb[0].mxu0
        %v5821 = vadd.f32 0.0, %v5820
        %v5822 = vpop.f32.mrb[0].mxu0
        %v5823 = vpop.f32.mrb[0].mxu0
        %v5824 = vadd.f32 0.0, %v5823
        %v5825 = vpop.f32.mrb[0].mxu0
        %5826 = vmatprep.mubr.bf16.mxu0 0
        %5827 = vmatmul.mubr.bf16.gmra.mrb[0].mxu0 %v4661
        %v5828 = vpop.f32.mrb[0].mxu0
        %v5829 = vadd.f32 0.0, %v5828
        %v5830 = vpop.f32.mrb[0].mxu0
        %v5831 = vpop.f32.mrb[0].mxu0
        %v5832 = vadd.f32 0.0, %v5831
        %v5833 = vpop.f32.mrb[0].mxu0
        %5834 = vmatprep.mubr.bf16.mxu0 0
        %5835 = vmatmul.mubr.bf16.gmra.mrb[0].mxu0 %v4664
        %v5836 = vpop.f32.mrb[0].mxu0
        %v5837 = vadd.f32 0.0, %v5836
        %v5838 = vpop.f32.mrb[0].mxu0
        %v5839 = vpop.f32.mrb[0].mxu0
        %v5840 = vadd.f32 0.0, %v5839
        %v5841 = vpop.f32.mrb[0].mxu0
        %5842 = vmatprep.mubr.bf16.mxu0 0
        %5843 = vmatmul.mubr.bf16.gmra.mrb[0].mxu0 %v4667
        %v5844 = vpop.f32.mrb[0].mxu0
        %v5845 = vadd.f32 0.0, %v5844
        %v5846 = vpop.f32.mrb[0].mxu0
        %v5847 = vpop.f32.mrb[0].mxu0
        %v5848 = vadd.f32 0.0, %v5847
        %v5849 = vpop.f32.mrb[0].mxu0
        %5850 = vmatprep.mubr.bf16.mxu0 0
        %5851 = vmatmul.mubr.bf16.gmra.mrb[0].mxu0 %v4670
        %v5852 = vpop.f32.mrb[0].mxu0
        %v5853 = vadd.f32 0.0, %v5852
        %v5854 = vpop.f32.mrb[0].mxu0
        %v5855 = vpop.f32.mrb[0].mxu0
        %v5856 = vadd.f32 0.0, %v5855
        %v5857 = vpop.f32.mrb[0].mxu0
        %5858 = vmatprep.mubr.bf16.mxu0 0
        %5859 = vmatmul.mubr.bf16.gmra.mrb[0].mxu0 %v4673
        %v5860 = vpop.f32.mrb[0].mxu0
        %v5861 = vadd.f32 0.0, %v5860
        %v5862 = vpop.f32.mrb[0].mxu0
        %v5863 = vpop.f32.mrb[0].mxu0
        %v5864 = vadd.f32 0.0, %v5863
        %v5865 = vpop.f32.mrb[0].mxu0
        %5866 = vmatprep.mubr.bf16.mxu0 0
        %5867 = vmatmul.mubr.bf16.gmra.mrb[0].mxu0 %v5709
        %v5868 = vpop.f32.mrb[0].mxu0
        %v5869 = vadd.f32 0.0, %v5868
        %v5870 = vpop.f32.mrb[0].mxu0
        %v5871 = vpop.f32.mrb[0].mxu0
        %v5872 = vadd.f32 0.0, %v5871
        %v5873 = vpop.f32.mrb[0].mxu0
        %5874 = vdwg.mxu0
        %v5875 = vadd.f32 %v5667, %v5749
        %v5876 = vadd.f32 %v5668, %v5752
        %v5877 = vadd.f32 %v5669, %v5757
        %v5878 = vadd.f32 %v5670, %v5760
        %v5879 = vadd.f32 %v5671, %v5765
        %v5880 = vadd.f32 %v5672, %v5768
        %v5881 = vadd.f32 %v5673, %v5773
        %v5882 = vadd.f32 %v5674, %v5776
        %v5883 = vadd.f32 %v5675, %v5781
        %v5884 = vadd.f32 %v5676, %v5784
        %v5885 = vadd.f32 %v5677, %v5789
        %v5886 = vadd.f32 %v5678, %v5792
        %v5887 = vadd.f32 %v5679, %v5797
        %v5888 = vadd.f32 %v5680, %v5800
        %v5889 = vadd.f32 %v5681, %v5805
        %v5890 = vadd.f32 %v5682, %v5808
        %v5891 = vadd.f32 %v5683, %v5813
        %v5892 = vadd.f32 %v5684, %v5816
        %v5893 = vadd.f32 %v5685, %v5821
        %v5894 = vadd.f32 %v5686, %v5824
        %v5895 = vadd.f32 %v5687, %v5829
        %v5896 = vadd.f32 %v5688, %v5832
        %v5897 = vadd.f32 %v5689, %v5837
        %v5898 = vadd.f32 %v5690, %v5840
        %v5899 = vadd.f32 %v5691, %v5845
        %v5900 = vadd.f32 %v5692, %v5848
        %v5901 = vadd.f32 %v5693, %v5853
        %v5902 = vadd.f32 %v5694, %v5856
        %v5903 = vadd.f32 %v5695, %v5861
        %v5904 = vadd.f32 %v5696, %v5864
        %v5905 = vadd.f32 %v5697, %v5869
        %v5906 = vadd.f32 %v5698, %v5872
        %v5909 = vrot.slane %v3214, 6
        %v5910 = vsel %vm465, %v3244, %v5909
        %v5911 = vrot.slane %v3215, 6
        %v5912 = vsel %vm465, %v5909, %v5911
        %s5915 = scalar_lea.vmem %s7, 10
        %v5916 = vld [vmem:[%s5915] sm:$0x1]
        %v5917 = vpack.c.bf16 %v5912, %v5910
        %v5919 = vsel %vm3347, %v5917, 0
        %v5922 = vsel %vm693, %v5916, 0
        %5924 = vmatprep.subr.bf16.mxu0 0
        %5925 = vmatpush1.bf16.msra.mxu0 %v5922
        %5926 = vmatprep.subr.bf16.mxu0 0
        %5927 = vmatpush1.bf16.msra.mxu0 0
        %5928 = vmatprep.subr.bf16.mxu0 0
        %5929 = vmatpush1.bf16.msra.mxu0 0
        %5930 = vmatprep.subr.bf16.mxu0 0
        %5931 = vmatpush1.bf16.msra.mxu0 0
        %5932 = vmatprep.subr.bf16.mxu0 0
        %5933 = vmatpush1.bf16.msra.mxu0 0
        %5934 = vmatprep.subr.bf16.mxu0 0
        %5935 = vmatpush1.bf16.msra.mxu0 0
        %5936 = vmatprep.subr.bf16.mxu0 0
        %5937 = vmatpush1.bf16.msra.mxu0 0
        %5938 = vmatprep.subr.bf16.mxu0 0
        %5939 = vmatpush1.bf16.msra.mxu0 0
        %5940 = vmatprep.subr.bf16.mxu0 0
        %5941 = vmatpush1.bf16.msra.mxu0 0
        %5942 = vmatprep.subr.bf16.mxu0 0
        %5943 = vmatpush1.bf16.msra.mxu0 0
        %5944 = vmatprep.subr.bf16.mxu0 0
        %5945 = vmatpush1.bf16.msra.mxu0 0
        %5946 = vmatprep.subr.bf16.mxu0 0
        %5947 = vmatpush1.bf16.msra.mxu0 0
        %5948 = vmatprep.subr.bf16.mxu0 0
        %5949 = vmatpush1.bf16.msra.mxu0 0
        %5950 = vmatprep.subr.bf16.mxu0 0
        %5951 = vmatpush1.bf16.msra.mxu0 0
        %5952 = vmatprep.subr.bf16.mxu0 0
        %5953 = vmatpush1.bf16.msra.mxu0 0
        %5954 = vmatprep.subr.bf16.mxu0 0
        %5955 = vmatpush1.bf16.msra.mxu0 0
        %5956 = vmatprep.mubr.bf16.mxu0 0
        %5957 = vmatmul.mubr.bf16.gmra.mrb[0].mxu0 %v3352
        %v5958 = vpop.f32.mrb[0].mxu0
        %v5959 = vadd.f32 0.0, %v5958
        %v5960 = vpop.f32.mrb[0].mxu0
        %v5961 = vpop.f32.mrb[0].mxu0
        %v5962 = vadd.f32 0.0, %v5961
        %v5963 = vpop.f32.mrb[0].mxu0
        %5964 = vmatprep.mubr.bf16.mxu0 0
        %5965 = vmatmul.mubr.bf16.gmra.mrb[0].mxu0 %v3355
        %v5966 = vpop.f32.mrb[0].mxu0
        %v5967 = vadd.f32 0.0, %v5966
        %v5968 = vpop.f32.mrb[0].mxu0
        %v5969 = vpop.f32.mrb[0].mxu0
        %v5970 = vadd.f32 0.0, %v5969
        %v5971 = vpop.f32.mrb[0].mxu0
        %5972 = vmatprep.mubr.bf16.mxu0 0
        %5973 = vmatmul.mubr.bf16.gmra.mrb[0].mxu0 %v3358
        %v5974 = vpop.f32.mrb[0].mxu0
        %v5975 = vadd.f32 0.0, %v5974
        %v5976 = vpop.f32.mrb[0].mxu0
        %v5977 = vpop.f32.mrb[0].mxu0
        %v5978 = vadd.f32 0.0, %v5977
        %v5979 = vpop.f32.mrb[0].mxu0
        %5980 = vmatprep.mubr.bf16.mxu0 0
        %5981 = vmatmul.mubr.bf16.gmra.mrb[0].mxu0 %v3361
        %v5982 = vpop.f32.mrb[0].mxu0
        %v5983 = vadd.f32 0.0, %v5982
        %v5984 = vpop.f32.mrb[0].mxu0
        %v5985 = vpop.f32.mrb[0].mxu0
        %v5986 = vadd.f32 0.0, %v5985
        %v5987 = vpop.f32.mrb[0].mxu0
        %5988 = vmatprep.mubr.bf16.mxu0 0
        %5989 = vmatmul.mubr.bf16.gmra.mrb[0].mxu0 %v3364
        %v5990 = vpop.f32.mrb[0].mxu0
        %v5991 = vadd.f32 0.0, %v5990
        %v5992 = vpop.f32.mrb[0].mxu0
        %v5993 = vpop.f32.mrb[0].mxu0
        %v5994 = vadd.f32 0.0, %v5993
        %v5995 = vpop.f32.mrb[0].mxu0
        %5996 = vmatprep.mubr.bf16.mxu0 0
        %5997 = vmatmul.mubr.bf16.gmra.mrb[0].mxu0 %v3367
        %v5998 = vpop.f32.mrb[0].mxu0
        %v5999 = vadd.f32 0.0, %v5998
        %v6000 = vpop.f32.mrb[0].mxu0
        %v6001 = vpop.f32.mrb[0].mxu0
        %v6002 = vadd.f32 0.0, %v6001
        %v6003 = vpop.f32.mrb[0].mxu0
        %6004 = vmatprep.mubr.bf16.mxu0 0
        %6005 = vmatmul.mubr.bf16.gmra.mrb[0].mxu0 %v3370
        %v6006 = vpop.f32.mrb[0].mxu0
        %v6007 = vadd.f32 0.0, %v6006
        %v6008 = vpop.f32.mrb[0].mxu0
        %v6009 = vpop.f32.mrb[0].mxu0
        %v6010 = vadd.f32 0.0, %v6009
        %v6011 = vpop.f32.mrb[0].mxu0
        %6012 = vmatprep.mubr.bf16.mxu0 0
        %6013 = vmatmul.mubr.bf16.gmra.mrb[0].mxu0 %v3373
        %v6014 = vpop.f32.mrb[0].mxu0
        %v6015 = vadd.f32 0.0, %v6014
        %v6016 = vpop.f32.mrb[0].mxu0
        %v6017 = vpop.f32.mrb[0].mxu0
        %v6018 = vadd.f32 0.0, %v6017
        %v6019 = vpop.f32.mrb[0].mxu0
        %6020 = vmatprep.mubr.bf16.mxu0 0
        %6021 = vmatmul.mubr.bf16.gmra.mrb[0].mxu0 %v3376
        %v6022 = vpop.f32.mrb[0].mxu0
        %v6023 = vadd.f32 0.0, %v6022
        %v6024 = vpop.f32.mrb[0].mxu0
        %v6025 = vpop.f32.mrb[0].mxu0
        %v6026 = vadd.f32 0.0, %v6025
        %v6027 = vpop.f32.mrb[0].mxu0
        %6028 = vmatprep.mubr.bf16.mxu0 0
        %6029 = vmatmul.mubr.bf16.gmra.mrb[0].mxu0 %v3379
        %v6030 = vpop.f32.mrb[0].mxu0
        %v6031 = vadd.f32 0.0, %v6030
        %v6032 = vpop.f32.mrb[0].mxu0
        %v6033 = vpop.f32.mrb[0].mxu0
        %v6034 = vadd.f32 0.0, %v6033
        %v6035 = vpop.f32.mrb[0].mxu0
        %6036 = vmatprep.mubr.bf16.mxu0 0
        %6037 = vmatmul.mubr.bf16.gmra.mrb[0].mxu0 %v3382
        %v6038 = vpop.f32.mrb[0].mxu0
        %v6039 = vadd.f32 0.0, %v6038
        %v6040 = vpop.f32.mrb[0].mxu0
        %v6041 = vpop.f32.mrb[0].mxu0
        %v6042 = vadd.f32 0.0, %v6041
        %v6043 = vpop.f32.mrb[0].mxu0
        %6044 = vmatprep.mubr.bf16.mxu0 0
        %6045 = vmatmul.mubr.bf16.gmra.mrb[0].mxu0 %v3385
        %v6046 = vpop.f32.mrb[0].mxu0
        %v6047 = vadd.f32 0.0, %v6046
        %v6048 = vpop.f32.mrb[0].mxu0
        %v6049 = vpop.f32.mrb[0].mxu0
        %v6050 = vadd.f32 0.0, %v6049
        %v6051 = vpop.f32.mrb[0].mxu0
        %6052 = vmatprep.mubr.bf16.mxu0 0
        %6053 = vmatmul.mubr.bf16.gmra.mrb[0].mxu0 %v3388
        %v6054 = vpop.f32.mrb[0].mxu0
        %v6055 = vadd.f32 0.0, %v6054
        %v6056 = vpop.f32.mrb[0].mxu0
        %v6057 = vpop.f32.mrb[0].mxu0
        %v6058 = vadd.f32 0.0, %v6057
        %v6059 = vpop.f32.mrb[0].mxu0
        %6060 = vmatprep.mubr.bf16.mxu0 0
        %6061 = vmatmul.mubr.bf16.gmra.mrb[0].mxu0 %v3391
        %v6062 = vpop.f32.mrb[0].mxu0
        %v6063 = vadd.f32 0.0, %v6062
        %v6064 = vpop.f32.mrb[0].mxu0
        %v6065 = vpop.f32.mrb[0].mxu0
        %v6066 = vadd.f32 0.0, %v6065
        %v6067 = vpop.f32.mrb[0].mxu0
        %6068 = vmatprep.mubr.bf16.mxu0 0
        %6069 = vmatmul.mubr.bf16.gmra.mrb[0].mxu0 %v4883
        %v6070 = vpop.f32.mrb[0].mxu0
        %v6071 = vadd.f32 0.0, %v6070
        %v6072 = vpop.f32.mrb[0].mxu0
        %v6073 = vpop.f32.mrb[0].mxu0
        %v6074 = vadd.f32 0.0, %v6073
        %v6075 = vpop.f32.mrb[0].mxu0
        %6076 = vmatprep.mubr.bf16.mxu0 0
        %6077 = vmatmul.mubr.bf16.gmra.mrb[0].mxu0 %v5919
        %v6078 = vpop.f32.mrb[0].mxu0
        %v6079 = vadd.f32 0.0, %v6078
        %v6080 = vpop.f32.mrb[0].mxu0
        %v6081 = vpop.f32.mrb[0].mxu0
        %v6082 = vadd.f32 0.0, %v6081
        %v6083 = vpop.f32.mrb[0].mxu0
        %6084 = vdwg.mxu0
        %v6085 = vadd.f32 %v5875, %v5959
        %v6086 = vadd.f32 %v5876, %v5962
        %v6087 = vadd.f32 %v5877, %v5967
        %v6088 = vadd.f32 %v5878, %v5970
        %v6089 = vadd.f32 %v5879, %v5975
        %v6090 = vadd.f32 %v5880, %v5978
        %v6091 = vadd.f32 %v5881, %v5983
        %v6092 = vadd.f32 %v5882, %v5986
        %v6093 = vadd.f32 %v5883, %v5991
        %v6094 = vadd.f32 %v5884, %v5994
        %v6095 = vadd.f32 %v5885, %v5999
        %v6096 = vadd.f32 %v5886, %v6002
        %v6097 = vadd.f32 %v5887, %v6007
        %v6098 = vadd.f32 %v5888, %v6010
        %v6099 = vadd.f32 %v5889, %v6015
        %v6100 = vadd.f32 %v5890, %v6018
        %v6101 = vadd.f32 %v5891, %v6023
        %v6102 = vadd.f32 %v5892, %v6026
        %v6103 = vadd.f32 %v5893, %v6031
        %v6104 = vadd.f32 %v5894, %v6034
        %v6105 = vadd.f32 %v5895, %v6039
        %v6106 = vadd.f32 %v5896, %v6042
        %v6107 = vadd.f32 %v5897, %v6047
        %v6108 = vadd.f32 %v5898, %v6050
        %v6109 = vadd.f32 %v5899, %v6055
        %v6110 = vadd.f32 %v5900, %v6058
        %v6111 = vadd.f32 %v5901, %v6063
        %v6112 = vadd.f32 %v5902, %v6066
        %v6113 = vadd.f32 %v5903, %v6071
        %v6114 = vadd.f32 %v5904, %v6074
        %v6115 = vadd.f32 %v5905, %v6079
        %v6116 = vadd.f32 %v5906, %v6082
        %v6117 = vrot.slane %v3214, 7
        %v6118 = vsel %vm693, %v694, %v6117
        %v6119 = vrot.slane %v3215, 7
        %v6120 = vsel %vm693, %v6117, %v6119
        %s6123 = scalar_lea.vmem %s7, 11
        %v6124 = vld [vmem:[%s6123] sm:$0x1]
        %v6125 = vpack.c.bf16 %v6120, %v6118
        %v6127 = vsel %vm3347, %v6125, 0
        %v6130 = vsel %vm693, %v6124, 0
        %6132 = vmatprep.subr.bf16.mxu0 0
        %6133 = vmatpush1.bf16.msra.mxu0 %v6130
        %6134 = vmatprep.subr.bf16.mxu0 0
        %6135 = vmatpush1.bf16.msra.mxu0 0
        %6136 = vmatprep.subr.bf16.mxu0 0
        %6137 = vmatpush1.bf16.msra.mxu0 0
        %6138 = vmatprep.subr.bf16.mxu0 0
        %6139 = vmatpush1.bf16.msra.mxu0 0
        %6140 = vmatprep.subr.bf16.mxu0 0
        %6141 = vmatpush1.bf16.msra.mxu0 0
        %6142 = vmatprep.subr.bf16.mxu0 0
        %6143 = vmatpush1.bf16.msra.mxu0 0
        %6144 = vmatprep.subr.bf16.mxu0 0
        %6145 = vmatpush1.bf16.msra.mxu0 0
        %6146 = vmatprep.subr.bf16.mxu0 0
        %6147 = vmatpush1.bf16.msra.mxu0 0
        %6148 = vmatprep.subr.bf16.mxu0 0
        %6149 = vmatpush1.bf16.msra.mxu0 0
        %6150 = vmatprep.subr.bf16.mxu0 0
        %6151 = vmatpush1.bf16.msra.mxu0 0
        %6152 = vmatprep.subr.bf16.mxu0 0
        %6153 = vmatpush1.bf16.msra.mxu0 0
        %6154 = vmatprep.subr.bf16.mxu0 0
        %6155 = vmatpush1.bf16.msra.mxu0 0
        %6156 = vmatprep.subr.bf16.mxu0 0
        %6157 = vmatpush1.bf16.msra.mxu0 0
        %6158 = vmatprep.subr.bf16.mxu0 0
        %6159 = vmatpush1.bf16.msra.mxu0 0
        %6160 = vmatprep.subr.bf16.mxu0 0
        %6161 = vmatpush1.bf16.msra.mxu0 0
        %6162 = vmatprep.subr.bf16.mxu0 0
        %6163 = vmatpush1.bf16.msra.mxu0 0
        %6164 = vmatprep.mubr.bf16.mxu0 0
        %6165 = vmatmul.mubr.bf16.gmra.mrb[0].mxu0 %v3692
        %v6166 = vpop.f32.mrb[0].mxu0
        %v6167 = vadd.f32 0.0, %v6166
        %v6168 = vpop.f32.mrb[0].mxu0
        %v6169 = vpop.f32.mrb[0].mxu0
        %v6170 = vadd.f32 0.0, %v6169
        %v6171 = vpop.f32.mrb[0].mxu0
        %6172 = vmatprep.mubr.bf16.mxu0 0
        %6173 = vmatmul.mubr.bf16.gmra.mrb[0].mxu0 %v3695
        %v6174 = vpop.f32.mrb[0].mxu0
        %v6175 = vadd.f32 0.0, %v6174
        %v6176 = vpop.f32.mrb[0].mxu0
        %v6177 = vpop.f32.mrb[0].mxu0
        %v6178 = vadd.f32 0.0, %v6177
        %v6179 = vpop.f32.mrb[0].mxu0
        %6180 = vmatprep.mubr.bf16.mxu0 0
        %6181 = vmatmul.mubr.bf16.gmra.mrb[0].mxu0 %v3698
        %v6182 = vpop.f32.mrb[0].mxu0
        %v6183 = vadd.f32 0.0, %v6182
        %v6184 = vpop.f32.mrb[0].mxu0
        %v6185 = vpop.f32.mrb[0].mxu0
        %v6186 = vadd.f32 0.0, %v6185
        %v6187 = vpop.f32.mrb[0].mxu0
        %6188 = vmatprep.mubr.bf16.mxu0 0
        %6189 = vmatmul.mubr.bf16.gmra.mrb[0].mxu0 %v3701
        %v6190 = vpop.f32.mrb[0].mxu0
        %v6191 = vadd.f32 0.0, %v6190
        %v6192 = vpop.f32.mrb[0].mxu0
        %v6193 = vpop.f32.mrb[0].mxu0
        %v6194 = vadd.f32 0.0, %v6193
        %v6195 = vpop.f32.mrb[0].mxu0
        %6196 = vmatprep.mubr.bf16.mxu0 0
        %6197 = vmatmul.mubr.bf16.gmra.mrb[0].mxu0 %v3704
        %v6198 = vpop.f32.mrb[0].mxu0
        %v6199 = vadd.f32 0.0, %v6198
        %v6200 = vpop.f32.mrb[0].mxu0
        %v6201 = vpop.f32.mrb[0].mxu0
        %v6202 = vadd.f32 0.0, %v6201
        %v6203 = vpop.f32.mrb[0].mxu0
        %6204 = vmatprep.mubr.bf16.mxu0 0
        %6205 = vmatmul.mubr.bf16.gmra.mrb[0].mxu0 %v3707
        %v6206 = vpop.f32.mrb[0].mxu0
        %v6207 = vadd.f32 0.0, %v6206
        %v6208 = vpop.f32.mrb[0].mxu0
        %v6209 = vpop.f32.mrb[0].mxu0
        %v6210 = vadd.f32 0.0, %v6209
        %v6211 = vpop.f32.mrb[0].mxu0
        %6212 = vmatprep.mubr.bf16.mxu0 0
        %6213 = vmatmul.mubr.bf16.gmra.mrb[0].mxu0 %v3710
        %v6214 = vpop.f32.mrb[0].mxu0
        %v6215 = vadd.f32 0.0, %v6214
        %v6216 = vpop.f32.mrb[0].mxu0
        %v6217 = vpop.f32.mrb[0].mxu0
        %v6218 = vadd.f32 0.0, %v6217
        %v6219 = vpop.f32.mrb[0].mxu0
        %6220 = vmatprep.mubr.bf16.mxu0 0
        %6221 = vmatmul.mubr.bf16.gmra.mrb[0].mxu0 %v3713
        %v6222 = vpop.f32.mrb[0].mxu0
        %v6223 = vadd.f32 0.0, %v6222
        %v6224 = vpop.f32.mrb[0].mxu0
        %v6225 = vpop.f32.mrb[0].mxu0
        %v6226 = vadd.f32 0.0, %v6225
        %v6227 = vpop.f32.mrb[0].mxu0
        %6228 = vmatprep.mubr.bf16.mxu0 0
        %6229 = vmatmul.mubr.bf16.gmra.mrb[0].mxu0 %v3716
        %v6230 = vpop.f32.mrb[0].mxu0
        %v6231 = vadd.f32 0.0, %v6230
        %v6232 = vpop.f32.mrb[0].mxu0
        %v6233 = vpop.f32.mrb[0].mxu0
        %v6234 = vadd.f32 0.0, %v6233
        %v6235 = vpop.f32.mrb[0].mxu0
        %6236 = vmatprep.mubr.bf16.mxu0 0
        %6237 = vmatmul.mubr.bf16.gmra.mrb[0].mxu0 %v3719
        %v6238 = vpop.f32.mrb[0].mxu0
        %v6239 = vadd.f32 0.0, %v6238
        %v6240 = vpop.f32.mrb[0].mxu0
        %v6241 = vpop.f32.mrb[0].mxu0
        %v6242 = vadd.f32 0.0, %v6241
        %v6243 = vpop.f32.mrb[0].mxu0
        %6244 = vmatprep.mubr.bf16.mxu0 0
        %6245 = vmatmul.mubr.bf16.gmra.mrb[0].mxu0 %v3722
        %v6246 = vpop.f32.mrb[0].mxu0
        %v6247 = vadd.f32 0.0, %v6246
        %v6248 = vpop.f32.mrb[0].mxu0
        %v6249 = vpop.f32.mrb[0].mxu0
        %v6250 = vadd.f32 0.0, %v6249
        %v6251 = vpop.f32.mrb[0].mxu0
        %6252 = vmatprep.mubr.bf16.mxu0 0
        %6253 = vmatmul.mubr.bf16.gmra.mrb[0].mxu0 %v3725
        %v6254 = vpop.f32.mrb[0].mxu0
        %v6255 = vadd.f32 0.0, %v6254
        %v6256 = vpop.f32.mrb[0].mxu0
        %v6257 = vpop.f32.mrb[0].mxu0
        %v6258 = vadd.f32 0.0, %v6257
        %v6259 = vpop.f32.mrb[0].mxu0
        %6260 = vmatprep.mubr.bf16.mxu0 0
        %6261 = vmatmul.mubr.bf16.gmra.mrb[0].mxu0 %v3728
        %v6262 = vpop.f32.mrb[0].mxu0
        %v6263 = vadd.f32 0.0, %v6262
        %v6264 = vpop.f32.mrb[0].mxu0
        %v6265 = vpop.f32.mrb[0].mxu0
        %v6266 = vadd.f32 0.0, %v6265
        %v6267 = vpop.f32.mrb[0].mxu0
        %6268 = vmatprep.mubr.bf16.mxu0 0
        %6269 = vmatmul.mubr.bf16.gmra.mrb[0].mxu0 %v3731
        %v6270 = vpop.f32.mrb[0].mxu0
        %v6271 = vadd.f32 0.0, %v6270
        %v6272 = vpop.f32.mrb[0].mxu0
        %v6273 = vpop.f32.mrb[0].mxu0
        %v6274 = vadd.f32 0.0, %v6273
        %v6275 = vpop.f32.mrb[0].mxu0
        %6276 = vmatprep.mubr.bf16.mxu0 0
        %6277 = vmatmul.mubr.bf16.gmra.mrb[0].mxu0 %v5091
        %v6278 = vpop.f32.mrb[0].mxu0
        %v6279 = vadd.f32 0.0, %v6278
        %v6280 = vpop.f32.mrb[0].mxu0
        %v6281 = vpop.f32.mrb[0].mxu0
        %v6282 = vadd.f32 0.0, %v6281
        %v6283 = vpop.f32.mrb[0].mxu0
        %6284 = vmatprep.mubr.bf16.mxu0 0
        %6285 = vmatmul.mubr.bf16.gmra.mrb[0].mxu0 %v6127
        %v6286 = vpop.f32.mrb[0].mxu0
        %v6287 = vadd.f32 0.0, %v6286
        %v6288 = vpop.f32.mrb[0].mxu0
        %v6289 = vpop.f32.mrb[0].mxu0
        %v6290 = vadd.f32 0.0, %v6289
        %v6291 = vpop.f32.mrb[0].mxu0
        %6292 = vdwg.mxu0
        %v6293 = vadd.f32 %v6085, %v6167
        %v6294 = vadd.f32 %v6086, %v6170
        %v6295 = vadd.f32 %v6087, %v6175
        %v6296 = vadd.f32 %v6088, %v6178
        %v6297 = vadd.f32 %v6089, %v6183
        %v6298 = vadd.f32 %v6090, %v6186
        %v6299 = vadd.f32 %v6091, %v6191
        %v6300 = vadd.f32 %v6092, %v6194
        %v6301 = vadd.f32 %v6093, %v6199
        %v6302 = vadd.f32 %v6094, %v6202
        %v6303 = vadd.f32 %v6095, %v6207
        %v6304 = vadd.f32 %v6096, %v6210
        %v6305 = vadd.f32 %v6097, %v6215
        %v6306 = vadd.f32 %v6098, %v6218
        %v6307 = vadd.f32 %v6099, %v6223
        %v6308 = vadd.f32 %v6100, %v6226
        %v6309 = vadd.f32 %v6101, %v6231
        %v6310 = vadd.f32 %v6102, %v6234
        %v6311 = vadd.f32 %v6103, %v6239
        %v6312 = vadd.f32 %v6104, %v6242
        %v6313 = vadd.f32 %v6105, %v6247
        %v6314 = vadd.f32 %v6106, %v6250
        %v6315 = vadd.f32 %v6107, %v6255
        %v6316 = vadd.f32 %v6108, %v6258
        %v6317 = vadd.f32 %v6109, %v6263
        %v6318 = vadd.f32 %v6110, %v6266
        %v6319 = vadd.f32 %v6111, %v6271
        %v6320 = vadd.f32 %v6112, %v6274
        %v6321 = vadd.f32 %v6113, %v6279
        %v6322 = vadd.f32 %v6114, %v6282
        %v6323 = vadd.f32 %v6115, %v6287
        %v6324 = vadd.f32 %v6116, %v6290
        %s6325 = scalar_lea.vmem %s7, 12
        %v6326 = vld [vmem:[%s6325] sm:$0x1]
        %v6327 = vpack.c.bf16 %v3215, %v3214
        %v6329 = vsel %vm3347, %v6327, 0
        %v6332 = vsel %vm693, %v6326, 0
        %6334 = vmatprep.subr.bf16.mxu0 0
        %6335 = vmatpush1.bf16.msra.mxu0 %v6332
        %6336 = vmatprep.subr.bf16.mxu0 0
        %6337 = vmatpush1.bf16.msra.mxu0 0
        %6338 = vmatprep.subr.bf16.mxu0 0
        %6339 = vmatpush1.bf16.msra.mxu0 0
        %6340 = vmatprep.subr.bf16.mxu0 0
        %6341 = vmatpush1.bf16.msra.mxu0 0
        %6342 = vmatprep.subr.bf16.mxu0 0
        %6343 = vmatpush1.bf16.msra.mxu0 0
        %6344 = vmatprep.subr.bf16.mxu0 0
        %6345 = vmatpush1.bf16.msra.mxu0 0
        %6346 = vmatprep.subr.bf16.mxu0 0
        %6347 = vmatpush1.bf16.msra.mxu0 0
        %6348 = vmatprep.subr.bf16.mxu0 0
        %6349 = vmatpush1.bf16.msra.mxu0 0
        %6350 = vmatprep.subr.bf16.mxu0 0
        %6351 = vmatpush1.bf16.msra.mxu0 0
        %6352 = vmatprep.subr.bf16.mxu0 0
        %6353 = vmatpush1.bf16.msra.mxu0 0
        %6354 = vmatprep.subr.bf16.mxu0 0
        %6355 = vmatpush1.bf16.msra.mxu0 0
        %6356 = vmatprep.subr.bf16.mxu0 0
        %6357 = vmatpush1.bf16.msra.mxu0 0
        %6358 = vmatprep.subr.bf16.mxu0 0
        %6359 = vmatpush1.bf16.msra.mxu0 0
        %6360 = vmatprep.subr.bf16.mxu0 0
        %6361 = vmatpush1.bf16.msra.mxu0 0
        %6362 = vmatprep.subr.bf16.mxu0 0
        %6363 = vmatpush1.bf16.msra.mxu0 0
        %6364 = vmatprep.subr.bf16.mxu0 0
        %6365 = vmatpush1.bf16.msra.mxu0 0
        %6366 = vmatprep.mubr.bf16.mxu0 0
        %6367 = vmatmul.mubr.bf16.gmra.mrb[0].mxu0 %v3948
        %v6368 = vpop.f32.mrb[0].mxu0
        %v6369 = vadd.f32 0.0, %v6368
        %v6370 = vpop.f32.mrb[0].mxu0
        %v6371 = vpop.f32.mrb[0].mxu0
        %v6372 = vadd.f32 0.0, %v6371
        %v6373 = vpop.f32.mrb[0].mxu0
        %6374 = vmatprep.mubr.bf16.mxu0 0
        %6375 = vmatmul.mubr.bf16.gmra.mrb[0].mxu0 %v3951
        %v6376 = vpop.f32.mrb[0].mxu0
        %v6377 = vadd.f32 0.0, %v6376
        %v6378 = vpop.f32.mrb[0].mxu0
        %v6379 = vpop.f32.mrb[0].mxu0
        %v6380 = vadd.f32 0.0, %v6379
        %v6381 = vpop.f32.mrb[0].mxu0
        %6382 = vmatprep.mubr.bf16.mxu0 0
        %6383 = vmatmul.mubr.bf16.gmra.mrb[0].mxu0 %v3954
        %v6384 = vpop.f32.mrb[0].mxu0
        %v6385 = vadd.f32 0.0, %v6384
        %v6386 = vpop.f32.mrb[0].mxu0
        %v6387 = vpop.f32.mrb[0].mxu0
        %v6388 = vadd.f32 0.0, %v6387
        %v6389 = vpop.f32.mrb[0].mxu0
        %6390 = vmatprep.mubr.bf16.mxu0 0
        %6391 = vmatmul.mubr.bf16.gmra.mrb[0].mxu0 %v3957
        %v6392 = vpop.f32.mrb[0].mxu0
        %v6393 = vadd.f32 0.0, %v6392
        %v6394 = vpop.f32.mrb[0].mxu0
        %v6395 = vpop.f32.mrb[0].mxu0
        %v6396 = vadd.f32 0.0, %v6395
        %v6397 = vpop.f32.mrb[0].mxu0
        %6398 = vmatprep.mubr.bf16.mxu0 0
        %6399 = vmatmul.mubr.bf16.gmra.mrb[0].mxu0 %v3960
        %v6400 = vpop.f32.mrb[0].mxu0
        %v6401 = vadd.f32 0.0, %v6400
        %v6402 = vpop.f32.mrb[0].mxu0
        %v6403 = vpop.f32.mrb[0].mxu0
        %v6404 = vadd.f32 0.0, %v6403
        %v6405 = vpop.f32.mrb[0].mxu0
        %6406 = vmatprep.mubr.bf16.mxu0 0
        %6407 = vmatmul.mubr.bf16.gmra.mrb[0].mxu0 %v3963
        %v6408 = vpop.f32.mrb[0].mxu0
        %v6409 = vadd.f32 0.0, %v6408
        %v6410 = vpop.f32.mrb[0].mxu0
        %v6411 = vpop.f32.mrb[0].mxu0
        %v6412 = vadd.f32 0.0, %v6411
        %v6413 = vpop.f32.mrb[0].mxu0
        %6414 = vmatprep.mubr.bf16.mxu0 0
        %6415 = vmatmul.mubr.bf16.gmra.mrb[0].mxu0 %v3966
        %v6416 = vpop.f32.mrb[0].mxu0
        %v6417 = vadd.f32 0.0, %v6416
        %v6418 = vpop.f32.mrb[0].mxu0
        %v6419 = vpop.f32.mrb[0].mxu0
        %v6420 = vadd.f32 0.0, %v6419
        %v6421 = vpop.f32.mrb[0].mxu0
        %6422 = vmatprep.mubr.bf16.mxu0 0
        %6423 = vmatmul.mubr.bf16.gmra.mrb[0].mxu0 %v3969
        %v6424 = vpop.f32.mrb[0].mxu0
        %v6425 = vadd.f32 0.0, %v6424
        %v6426 = vpop.f32.mrb[0].mxu0
        %v6427 = vpop.f32.mrb[0].mxu0
        %v6428 = vadd.f32 0.0, %v6427
        %v6429 = vpop.f32.mrb[0].mxu0
        %6430 = vmatprep.mubr.bf16.mxu0 0
        %6431 = vmatmul.mubr.bf16.gmra.mrb[0].mxu0 %v3972
        %v6432 = vpop.f32.mrb[0].mxu0
        %v6433 = vadd.f32 0.0, %v6432
        %v6434 = vpop.f32.mrb[0].mxu0
        %v6435 = vpop.f32.mrb[0].mxu0
        %v6436 = vadd.f32 0.0, %v6435
        %v6437 = vpop.f32.mrb[0].mxu0
        %6438 = vmatprep.mubr.bf16.mxu0 0
        %6439 = vmatmul.mubr.bf16.gmra.mrb[0].mxu0 %v3975
        %v6440 = vpop.f32.mrb[0].mxu0
        %v6441 = vadd.f32 0.0, %v6440
        %v6442 = vpop.f32.mrb[0].mxu0
        %v6443 = vpop.f32.mrb[0].mxu0
        %v6444 = vadd.f32 0.0, %v6443
        %v6445 = vpop.f32.mrb[0].mxu0
        %6446 = vmatprep.mubr.bf16.mxu0 0
        %6447 = vmatmul.mubr.bf16.gmra.mrb[0].mxu0 %v3978
        %v6448 = vpop.f32.mrb[0].mxu0
        %v6449 = vadd.f32 0.0, %v6448
        %v6450 = vpop.f32.mrb[0].mxu0
        %v6451 = vpop.f32.mrb[0].mxu0
        %v6452 = vadd.f32 0.0, %v6451
        %v6453 = vpop.f32.mrb[0].mxu0
        %6454 = vmatprep.mubr.bf16.mxu0 0
        %6455 = vmatmul.mubr.bf16.gmra.mrb[0].mxu0 %v3981
        %v6456 = vpop.f32.mrb[0].mxu0
        %v6457 = vadd.f32 0.0, %v6456
        %v6458 = vpop.f32.mrb[0].mxu0
        %v6459 = vpop.f32.mrb[0].mxu0
        %v6460 = vadd.f32 0.0, %v6459
        %v6461 = vpop.f32.mrb[0].mxu0
        %6462 = vmatprep.mubr.bf16.mxu0 0
        %6463 = vmatmul.mubr.bf16.gmra.mrb[0].mxu0 %v3984
        %v6464 = vpop.f32.mrb[0].mxu0
        %v6465 = vadd.f32 0.0, %v6464
        %v6466 = vpop.f32.mrb[0].mxu0
        %v6467 = vpop.f32.mrb[0].mxu0
        %v6468 = vadd.f32 0.0, %v6467
        %v6469 = vpop.f32.mrb[0].mxu0
        %6470 = vmatprep.mubr.bf16.mxu0 0
        %6471 = vmatmul.mubr.bf16.gmra.mrb[0].mxu0 %v3987
        %v6472 = vpop.f32.mrb[0].mxu0
        %v6473 = vadd.f32 0.0, %v6472
        %v6474 = vpop.f32.mrb[0].mxu0
        %v6475 = vpop.f32.mrb[0].mxu0
        %v6476 = vadd.f32 0.0, %v6475
        %v6477 = vpop.f32.mrb[0].mxu0
        %6478 = vmatprep.mubr.bf16.mxu0 0
        %6479 = vmatmul.mubr.bf16.gmra.mrb[0].mxu0 %v5293
        %v6480 = vpop.f32.mrb[0].mxu0
        %v6481 = vadd.f32 0.0, %v6480
        %v6482 = vpop.f32.mrb[0].mxu0
        %v6483 = vpop.f32.mrb[0].mxu0
        %v6484 = vadd.f32 0.0, %v6483
        %v6485 = vpop.f32.mrb[0].mxu0
        %6486 = vmatprep.mubr.bf16.mxu0 0
        %6487 = vmatmul.mubr.bf16.gmra.mrb[0].mxu0 %v6329
        %v6488 = vpop.f32.mrb[0].mxu0
        %v6489 = vadd.f32 0.0, %v6488
        %v6490 = vpop.f32.mrb[0].mxu0
        %v6491 = vpop.f32.mrb[0].mxu0
        %v6492 = vadd.f32 0.0, %v6491
        %v6493 = vpop.f32.mrb[0].mxu0
        %6494 = vdwg.mxu0
        %v6495 = vadd.f32 %v6293, %v6369
        %v6496 = vadd.f32 %v6294, %v6372
        %v6497 = vadd.f32 %v6295, %v6377
        %v6498 = vadd.f32 %v6296, %v6380
        %v6499 = vadd.f32 %v6297, %v6385
        %v6500 = vadd.f32 %v6298, %v6388
        %v6501 = vadd.f32 %v6299, %v6393
        %v6502 = vadd.f32 %v6300, %v6396
        %v6503 = vadd.f32 %v6301, %v6401
        %v6504 = vadd.f32 %v6302, %v6404
        %v6505 = vadd.f32 %v6303, %v6409
        %v6506 = vadd.f32 %v6304, %v6412
        %v6507 = vadd.f32 %v6305, %v6417
        %v6508 = vadd.f32 %v6306, %v6420
        %v6509 = vadd.f32 %v6307, %v6425
        %v6510 = vadd.f32 %v6308, %v6428
        %v6511 = vadd.f32 %v6309, %v6433
        %v6512 = vadd.f32 %v6310, %v6436
        %v6513 = vadd.f32 %v6311, %v6441
        %v6514 = vadd.f32 %v6312, %v6444
        %v6515 = vadd.f32 %v6313, %v6449
        %v6516 = vadd.f32 %v6314, %v6452
        %v6517 = vadd.f32 %v6315, %v6457
        %v6518 = vadd.f32 %v6316, %v6460
        %v6519 = vadd.f32 %v6317, %v6465
        %v6520 = vadd.f32 %v6318, %v6468
        %v6521 = vadd.f32 %v6319, %v6473
        %v6522 = vadd.f32 %v6320, %v6476
        %v6523 = vadd.f32 %v6321, %v6481
        %v6524 = vadd.f32 %v6322, %v6484
        %v6525 = vadd.f32 %v6323, %v6489
        %v6526 = vadd.f32 %v6324, %v6492
        %v6527 = vrot.slane %v3214, 1
        %v6528 = vrot.slane %v3215, 1
        %v6529 = vsel %vm1442, %v6527, %v6528
        %v6530 = vsel %vm1442, %v6528, %v1443
        %s6533 = scalar_lea.vmem %s7, 13
        %v6534 = vld [vmem:[%s6533] sm:$0x1]
        %v6535 = vpack.c.bf16 %v6530, %v6529
        %v6537 = vsel %vm3347, %v6535, 0
        %v6540 = vsel %vm693, %v6534, 0
        %6542 = vmatprep.subr.bf16.mxu0 0
        %6543 = vmatpush1.bf16.msra.mxu0 %v6540
        %6544 = vmatprep.subr.bf16.mxu0 0
        %6545 = vmatpush1.bf16.msra.mxu0 0
        %6546 = vmatprep.subr.bf16.mxu0 0
        %6547 = vmatpush1.bf16.msra.mxu0 0
        %6548 = vmatprep.subr.bf16.mxu0 0
        %6549 = vmatpush1.bf16.msra.mxu0 0
        %6550 = vmatprep.subr.bf16.mxu0 0
        %6551 = vmatpush1.bf16.msra.mxu0 0
        %6552 = vmatprep.subr.bf16.mxu0 0
        %6553 = vmatpush1.bf16.msra.mxu0 0
        %6554 = vmatprep.subr.bf16.mxu0 0
        %6555 = vmatpush1.bf16.msra.mxu0 0
        %6556 = vmatprep.subr.bf16.mxu0 0
        %6557 = vmatpush1.bf16.msra.mxu0 0
        %6558 = vmatprep.subr.bf16.mxu0 0
        %6559 = vmatpush1.bf16.msra.mxu0 0
        %6560 = vmatprep.subr.bf16.mxu0 0
        %6561 = vmatpush1.bf16.msra.mxu0 0
        %6562 = vmatprep.subr.bf16.mxu0 0
        %6563 = vmatpush1.bf16.msra.mxu0 0
        %6564 = vmatprep.subr.bf16.mxu0 0
        %6565 = vmatpush1.bf16.msra.mxu0 0
        %6566 = vmatprep.subr.bf16.mxu0 0
        %6567 = vmatpush1.bf16.msra.mxu0 0
        %6568 = vmatprep.subr.bf16.mxu0 0
        %6569 = vmatpush1.bf16.msra.mxu0 0
        %6570 = vmatprep.subr.bf16.mxu0 0
        %6571 = vmatpush1.bf16.msra.mxu0 0
        %6572 = vmatprep.subr.bf16.mxu0 0
        %6573 = vmatpush1.bf16.msra.mxu0 0
        %6574 = vmatprep.mubr.bf16.mxu0 0
        %6575 = vmatmul.mubr.bf16.gmra.mrb[0].mxu0 %v4288
        %v6576 = vpop.f32.mrb[0].mxu0
        %v6577 = vadd.f32 0.0, %v6576
        %v6578 = vpop.f32.mrb[0].mxu0
        %v6579 = vpop.f32.mrb[0].mxu0
        %v6580 = vadd.f32 0.0, %v6579
        %v6581 = vpop.f32.mrb[0].mxu0
        %6582 = vmatprep.mubr.bf16.mxu0 0
        %6583 = vmatmul.mubr.bf16.gmra.mrb[0].mxu0 %v4291
        %v6584 = vpop.f32.mrb[0].mxu0
        %v6585 = vadd.f32 0.0, %v6584
        %v6586 = vpop.f32.mrb[0].mxu0
        %v6587 = vpop.f32.mrb[0].mxu0
        %v6588 = vadd.f32 0.0, %v6587
        %v6589 = vpop.f32.mrb[0].mxu0
        %6590 = vmatprep.mubr.bf16.mxu0 0
        %6591 = vmatmul.mubr.bf16.gmra.mrb[0].mxu0 %v4294
        %v6592 = vpop.f32.mrb[0].mxu0
        %v6593 = vadd.f32 0.0, %v6592
        %v6594 = vpop.f32.mrb[0].mxu0
        %v6595 = vpop.f32.mrb[0].mxu0
        %v6596 = vadd.f32 0.0, %v6595
        %v6597 = vpop.f32.mrb[0].mxu0
        %6598 = vmatprep.mubr.bf16.mxu0 0
        %6599 = vmatmul.mubr.bf16.gmra.mrb[0].mxu0 %v4297
        %v6600 = vpop.f32.mrb[0].mxu0
        %v6601 = vadd.f32 0.0, %v6600
        %v6602 = vpop.f32.mrb[0].mxu0
        %v6603 = vpop.f32.mrb[0].mxu0
        %v6604 = vadd.f32 0.0, %v6603
        %v6605 = vpop.f32.mrb[0].mxu0
        %6606 = vmatprep.mubr.bf16.mxu0 0
        %6607 = vmatmul.mubr.bf16.gmra.mrb[0].mxu0 %v4300
        %v6608 = vpop.f32.mrb[0].mxu0
        %v6609 = vadd.f32 0.0, %v6608
        %v6610 = vpop.f32.mrb[0].mxu0
        %v6611 = vpop.f32.mrb[0].mxu0
        %v6612 = vadd.f32 0.0, %v6611
        %v6613 = vpop.f32.mrb[0].mxu0
        %6614 = vmatprep.mubr.bf16.mxu0 0
        %6615 = vmatmul.mubr.bf16.gmra.mrb[0].mxu0 %v4303
        %v6616 = vpop.f32.mrb[0].mxu0
        %v6617 = vadd.f32 0.0, %v6616
        %v6618 = vpop.f32.mrb[0].mxu0
        %v6619 = vpop.f32.mrb[0].mxu0
        %v6620 = vadd.f32 0.0, %v6619
        %v6621 = vpop.f32.mrb[0].mxu0
        %6622 = vmatprep.mubr.bf16.mxu0 0
        %6623 = vmatmul.mubr.bf16.gmra.mrb[0].mxu0 %v4306
        %v6624 = vpop.f32.mrb[0].mxu0
        %v6625 = vadd.f32 0.0, %v6624
        %v6626 = vpop.f32.mrb[0].mxu0
        %v6627 = vpop.f32.mrb[0].mxu0
        %v6628 = vadd.f32 0.0, %v6627
        %v6629 = vpop.f32.mrb[0].mxu0
        %6630 = vmatprep.mubr.bf16.mxu0 0
        %6631 = vmatmul.mubr.bf16.gmra.mrb[0].mxu0 %v4309
        %v6632 = vpop.f32.mrb[0].mxu0
        %v6633 = vadd.f32 0.0, %v6632
        %v6634 = vpop.f32.mrb[0].mxu0
        %v6635 = vpop.f32.mrb[0].mxu0
        %v6636 = vadd.f32 0.0, %v6635
        %v6637 = vpop.f32.mrb[0].mxu0
        %6638 = vmatprep.mubr.bf16.mxu0 0
        %6639 = vmatmul.mubr.bf16.gmra.mrb[0].mxu0 %v4312
        %v6640 = vpop.f32.mrb[0].mxu0
        %v6641 = vadd.f32 0.0, %v6640
        %v6642 = vpop.f32.mrb[0].mxu0
        %v6643 = vpop.f32.mrb[0].mxu0
        %v6644 = vadd.f32 0.0, %v6643
        %v6645 = vpop.f32.mrb[0].mxu0
        %6646 = vmatprep.mubr.bf16.mxu0 0
        %6647 = vmatmul.mubr.bf16.gmra.mrb[0].mxu0 %v4315
        %v6648 = vpop.f32.mrb[0].mxu0
        %v6649 = vadd.f32 0.0, %v6648
        %v6650 = vpop.f32.mrb[0].mxu0
        %v6651 = vpop.f32.mrb[0].mxu0
        %v6652 = vadd.f32 0.0, %v6651
        %v6653 = vpop.f32.mrb[0].mxu0
        %6654 = vmatprep.mubr.bf16.mxu0 0
        %6655 = vmatmul.mubr.bf16.gmra.mrb[0].mxu0 %v4318
        %v6656 = vpop.f32.mrb[0].mxu0
        %v6657 = vadd.f32 0.0, %v6656
        %v6658 = vpop.f32.mrb[0].mxu0
        %v6659 = vpop.f32.mrb[0].mxu0
        %v6660 = vadd.f32 0.0, %v6659
        %v6661 = vpop.f32.mrb[0].mxu0
        %6662 = vmatprep.mubr.bf16.mxu0 0
        %6663 = vmatmul.mubr.bf16.gmra.mrb[0].mxu0 %v4321
        %v6664 = vpop.f32.mrb[0].mxu0
        %v6665 = vadd.f32 0.0, %v6664
        %v6666 = vpop.f32.mrb[0].mxu0
        %v6667 = vpop.f32.mrb[0].mxu0
        %v6668 = vadd.f32 0.0, %v6667
        %v6669 = vpop.f32.mrb[0].mxu0
        %6670 = vmatprep.mubr.bf16.mxu0 0
        %6671 = vmatmul.mubr.bf16.gmra.mrb[0].mxu0 %v4324
        %v6672 = vpop.f32.mrb[0].mxu0
        %v6673 = vadd.f32 0.0, %v6672
        %v6674 = vpop.f32.mrb[0].mxu0
        %v6675 = vpop.f32.mrb[0].mxu0
        %v6676 = vadd.f32 0.0, %v6675
        %v6677 = vpop.f32.mrb[0].mxu0
        %6678 = vmatprep.mubr.bf16.mxu0 0
        %6679 = vmatmul.mubr.bf16.gmra.mrb[0].mxu0 %v4327
        %v6680 = vpop.f32.mrb[0].mxu0
        %v6681 = vadd.f32 0.0, %v6680
        %v6682 = vpop.f32.mrb[0].mxu0
        %v6683 = vpop.f32.mrb[0].mxu0
        %v6684 = vadd.f32 0.0, %v6683
        %v6685 = vpop.f32.mrb[0].mxu0
        %6686 = vmatprep.mubr.bf16.mxu0 0
        %6687 = vmatmul.mubr.bf16.gmra.mrb[0].mxu0 %v5501
        %v6688 = vpop.f32.mrb[0].mxu0
        %v6689 = vadd.f32 0.0, %v6688
        %v6690 = vpop.f32.mrb[0].mxu0
        %v6691 = vpop.f32.mrb[0].mxu0
        %v6692 = vadd.f32 0.0, %v6691
        %v6693 = vpop.f32.mrb[0].mxu0
        %6694 = vmatprep.mubr.bf16.mxu0 0
        %6695 = vmatmul.mubr.bf16.gmra.mrb[0].mxu0 %v6537
        %v6696 = vpop.f32.mrb[0].mxu0
        %v6697 = vadd.f32 0.0, %v6696
        %v6698 = vpop.f32.mrb[0].mxu0
        %v6699 = vpop.f32.mrb[0].mxu0
        %v6700 = vadd.f32 0.0, %v6699
        %v6701 = vpop.f32.mrb[0].mxu0
        %6702 = vdwg.mxu0
        %v6703 = vadd.f32 %v6495, %v6577
        %v6704 = vadd.f32 %v6496, %v6580
        %v6705 = vadd.f32 %v6497, %v6585
        %v6706 = vadd.f32 %v6498, %v6588
        %v6707 = vadd.f32 %v6499, %v6593
        %v6708 = vadd.f32 %v6500, %v6596
        %v6709 = vadd.f32 %v6501, %v6601
        %v6710 = vadd.f32 %v6502, %v6604
        %v6711 = vadd.f32 %v6503, %v6609
        %v6712 = vadd.f32 %v6504, %v6612
        %v6713 = vadd.f32 %v6505, %v6617
        %v6714 = vadd.f32 %v6506, %v6620
        %v6715 = vadd.f32 %v6507, %v6625
        %v6716 = vadd.f32 %v6508, %v6628
        %v6717 = vadd.f32 %v6509, %v6633
        %v6718 = vadd.f32 %v6510, %v6636
        %v6719 = vadd.f32 %v6511, %v6641
        %v6720 = vadd.f32 %v6512, %v6644
        %v6721 = vadd.f32 %v6513, %v6649
        %v6722 = vadd.f32 %v6514, %v6652
        %v6723 = vadd.f32 %v6515, %v6657
        %v6724 = vadd.f32 %v6516, %v6660
        %v6725 = vadd.f32 %v6517, %v6665
        %v6726 = vadd.f32 %v6518, %v6668
        %v6727 = vadd.f32 %v6519, %v6673
        %v6728 = vadd.f32 %v6520, %v6676
        %v6729 = vadd.f32 %v6521, %v6681
        %v6730 = vadd.f32 %v6522, %v6684
        %v6731 = vadd.f32 %v6523, %v6689
        %v6732 = vadd.f32 %v6524, %v6692
        %v6733 = vadd.f32 %v6525, %v6697
        %v6734 = vadd.f32 %v6526, %v6700
        %v6735 = vrot.slane %v3214, 2
        %v6736 = vrot.slane %v3215, 2
        %v6737 = vsel %vm4525, %v6735, %v6736
        %v6738 = vsel %vm4525, %v6736, %v4526
        %s6741 = scalar_lea.vmem %s7, 14
        %v6742 = vld [vmem:[%s6741] sm:$0x1]
        %v6743 = vpack.c.bf16 %v6738, %v6737
        %v6745 = vsel %vm3347, %v6743, 0
        %v6748 = vsel %vm693, %v6742, 0
        %6750 = vmatprep.subr.bf16.mxu0 0
        %6751 = vmatpush1.bf16.msra.mxu0 %v6748
        %6752 = vmatprep.subr.bf16.mxu0 0
        %6753 = vmatpush1.bf16.msra.mxu0 0
        %6754 = vmatprep.subr.bf16.mxu0 0
        %6755 = vmatpush1.bf16.msra.mxu0 0
        %6756 = vmatprep.subr.bf16.mxu0 0
        %6757 = vmatpush1.bf16.msra.mxu0 0
        %6758 = vmatprep.subr.bf16.mxu0 0
        %6759 = vmatpush1.bf16.msra.mxu0 0
        %6760 = vmatprep.subr.bf16.mxu0 0
        %6761 = vmatpush1.bf16.msra.mxu0 0
        %6762 = vmatprep.subr.bf16.mxu0 0
        %6763 = vmatpush1.bf16.msra.mxu0 0
        %6764 = vmatprep.subr.bf16.mxu0 0
        %6765 = vmatpush1.bf16.msra.mxu0 0
        %6766 = vmatprep.subr.bf16.mxu0 0
        %6767 = vmatpush1.bf16.msra.mxu0 0
        %6768 = vmatprep.subr.bf16.mxu0 0
        %6769 = vmatpush1.bf16.msra.mxu0 0
        %6770 = vmatprep.subr.bf16.mxu0 0
        %6771 = vmatpush1.bf16.msra.mxu0 0
        %6772 = vmatprep.subr.bf16.mxu0 0
        %6773 = vmatpush1.bf16.msra.mxu0 0
        %6774 = vmatprep.subr.bf16.mxu0 0
        %6775 = vmatpush1.bf16.msra.mxu0 0
        %6776 = vmatprep.subr.bf16.mxu0 0
        %6777 = vmatpush1.bf16.msra.mxu0 0
        %6778 = vmatprep.subr.bf16.mxu0 0
        %6779 = vmatpush1.bf16.msra.mxu0 0
        %6780 = vmatprep.subr.bf16.mxu0 0
        %6781 = vmatpush1.bf16.msra.mxu0 0
        %6782 = vmatprep.mubr.bf16.mxu0 0
        %6783 = vmatmul.mubr.bf16.gmra.mrb[0].mxu0 %v4634
        %v6784 = vpop.f32.mrb[0].mxu0
        %v6785 = vadd.f32 0.0, %v6784
        %v6786 = vpop.f32.mrb[0].mxu0
        %v6787 = vpop.f32.mrb[0].mxu0
        %v6788 = vadd.f32 0.0, %v6787
        %v6789 = vpop.f32.mrb[0].mxu0
        %6790 = vmatprep.mubr.bf16.mxu0 0
        %6791 = vmatmul.mubr.bf16.gmra.mrb[0].mxu0 %v4637
        %v6792 = vpop.f32.mrb[0].mxu0
        %v6793 = vadd.f32 0.0, %v6792
        %v6794 = vpop.f32.mrb[0].mxu0
        %v6795 = vpop.f32.mrb[0].mxu0
        %v6796 = vadd.f32 0.0, %v6795
        %v6797 = vpop.f32.mrb[0].mxu0
        %6798 = vmatprep.mubr.bf16.mxu0 0
        %6799 = vmatmul.mubr.bf16.gmra.mrb[0].mxu0 %v4640
        %v6800 = vpop.f32.mrb[0].mxu0
        %v6801 = vadd.f32 0.0, %v6800
        %v6802 = vpop.f32.mrb[0].mxu0
        %v6803 = vpop.f32.mrb[0].mxu0
        %v6804 = vadd.f32 0.0, %v6803
        %v6805 = vpop.f32.mrb[0].mxu0
        %6806 = vmatprep.mubr.bf16.mxu0 0
        %6807 = vmatmul.mubr.bf16.gmra.mrb[0].mxu0 %v4643
        %v6808 = vpop.f32.mrb[0].mxu0
        %v6809 = vadd.f32 0.0, %v6808
        %v6810 = vpop.f32.mrb[0].mxu0
        %v6811 = vpop.f32.mrb[0].mxu0
        %v6812 = vadd.f32 0.0, %v6811
        %v6813 = vpop.f32.mrb[0].mxu0
        %6814 = vmatprep.mubr.bf16.mxu0 0
        %6815 = vmatmul.mubr.bf16.gmra.mrb[0].mxu0 %v4646
        %v6816 = vpop.f32.mrb[0].mxu0
        %v6817 = vadd.f32 0.0, %v6816
        %v6818 = vpop.f32.mrb[0].mxu0
        %v6819 = vpop.f32.mrb[0].mxu0
        %v6820 = vadd.f32 0.0, %v6819
        %v6821 = vpop.f32.mrb[0].mxu0
        %6822 = vmatprep.mubr.bf16.mxu0 0
        %6823 = vmatmul.mubr.bf16.gmra.mrb[0].mxu0 %v4649
        %v6824 = vpop.f32.mrb[0].mxu0
        %v6825 = vadd.f32 0.0, %v6824
        %v6826 = vpop.f32.mrb[0].mxu0
        %v6827 = vpop.f32.mrb[0].mxu0
        %v6828 = vadd.f32 0.0, %v6827
        %v6829 = vpop.f32.mrb[0].mxu0
        %6830 = vmatprep.mubr.bf16.mxu0 0
        %6831 = vmatmul.mubr.bf16.gmra.mrb[0].mxu0 %v4652
        %v6832 = vpop.f32.mrb[0].mxu0
        %v6833 = vadd.f32 0.0, %v6832
        %v6834 = vpop.f32.mrb[0].mxu0
        %v6835 = vpop.f32.mrb[0].mxu0
        %v6836 = vadd.f32 0.0, %v6835
        %v6837 = vpop.f32.mrb[0].mxu0
        %6838 = vmatprep.mubr.bf16.mxu0 0
        %6839 = vmatmul.mubr.bf16.gmra.mrb[0].mxu0 %v4655
        %v6840 = vpop.f32.mrb[0].mxu0
        %v6841 = vadd.f32 0.0, %v6840
        %v6842 = vpop.f32.mrb[0].mxu0
        %v6843 = vpop.f32.mrb[0].mxu0
        %v6844 = vadd.f32 0.0, %v6843
        %v6845 = vpop.f32.mrb[0].mxu0
        %6846 = vmatprep.mubr.bf16.mxu0 0
        %6847 = vmatmul.mubr.bf16.gmra.mrb[0].mxu0 %v4658
        %v6848 = vpop.f32.mrb[0].mxu0
        %v6849 = vadd.f32 0.0, %v6848
        %v6850 = vpop.f32.mrb[0].mxu0
        %v6851 = vpop.f32.mrb[0].mxu0
        %v6852 = vadd.f32 0.0, %v6851
        %v6853 = vpop.f32.mrb[0].mxu0
        %6854 = vmatprep.mubr.bf16.mxu0 0
        %6855 = vmatmul.mubr.bf16.gmra.mrb[0].mxu0 %v4661
        %v6856 = vpop.f32.mrb[0].mxu0
        %v6857 = vadd.f32 0.0, %v6856
        %v6858 = vpop.f32.mrb[0].mxu0
        %v6859 = vpop.f32.mrb[0].mxu0
        %v6860 = vadd.f32 0.0, %v6859
        %v6861 = vpop.f32.mrb[0].mxu0
        %6862 = vmatprep.mubr.bf16.mxu0 0
        %6863 = vmatmul.mubr.bf16.gmra.mrb[0].mxu0 %v4664
        %v6864 = vpop.f32.mrb[0].mxu0
        %v6865 = vadd.f32 0.0, %v6864
        %v6866 = vpop.f32.mrb[0].mxu0
        %v6867 = vpop.f32.mrb[0].mxu0
        %v6868 = vadd.f32 0.0, %v6867
        %v6869 = vpop.f32.mrb[0].mxu0
        %6870 = vmatprep.mubr.bf16.mxu0 0
        %6871 = vmatmul.mubr.bf16.gmra.mrb[0].mxu0 %v4667
        %v6872 = vpop.f32.mrb[0].mxu0
        %v6873 = vadd.f32 0.0, %v6872
        %v6874 = vpop.f32.mrb[0].mxu0
        %v6875 = vpop.f32.mrb[0].mxu0
        %v6876 = vadd.f32 0.0, %v6875
        %v6877 = vpop.f32.mrb[0].mxu0
        %6878 = vmatprep.mubr.bf16.mxu0 0
        %6879 = vmatmul.mubr.bf16.gmra.mrb[0].mxu0 %v4670
        %v6880 = vpop.f32.mrb[0].mxu0
        %v6881 = vadd.f32 0.0, %v6880
        %v6882 = vpop.f32.mrb[0].mxu0
        %v6883 = vpop.f32.mrb[0].mxu0
        %v6884 = vadd.f32 0.0, %v6883
        %v6885 = vpop.f32.mrb[0].mxu0
        %6886 = vmatprep.mubr.bf16.mxu0 0
        %6887 = vmatmul.mubr.bf16.gmra.mrb[0].mxu0 %v4673
        %v6888 = vpop.f32.mrb[0].mxu0
        %v6889 = vadd.f32 0.0, %v6888
        %v6890 = vpop.f32.mrb[0].mxu0
        %v6891 = vpop.f32.mrb[0].mxu0
        %v6892 = vadd.f32 0.0, %v6891
        %v6893 = vpop.f32.mrb[0].mxu0
        %6894 = vmatprep.mubr.bf16.mxu0 0
        %6895 = vmatmul.mubr.bf16.gmra.mrb[0].mxu0 %v5709
        %v6896 = vpop.f32.mrb[0].mxu0
        %v6897 = vadd.f32 0.0, %v6896
        %v6898 = vpop.f32.mrb[0].mxu0
        %v6899 = vpop.f32.mrb[0].mxu0
        %v6900 = vadd.f32 0.0, %v6899
        %v6901 = vpop.f32.mrb[0].mxu0
        %6902 = vmatprep.mubr.bf16.mxu0 0
        %6903 = vmatmul.mubr.bf16.gmra.mrb[0].mxu0 %v6745
        %v6904 = vpop.f32.mrb[0].mxu0
        %v6905 = vadd.f32 0.0, %v6904
        %v6906 = vpop.f32.mrb[0].mxu0
        %v6907 = vpop.f32.mrb[0].mxu0
        %v6908 = vadd.f32 0.0, %v6907
        %v6909 = vpop.f32.mrb[0].mxu0
        %6910 = vdwg.mxu0
        %v6911 = vadd.f32 %v6703, %v6785
        %v6912 = vadd.f32 %v6704, %v6788
        %v6913 = vadd.f32 %v6705, %v6793
        %v6914 = vadd.f32 %v6706, %v6796
        %v6915 = vadd.f32 %v6707, %v6801
        %v6916 = vadd.f32 %v6708, %v6804
        %v6917 = vadd.f32 %v6709, %v6809
        %v6918 = vadd.f32 %v6710, %v6812
        %v6919 = vadd.f32 %v6711, %v6817
        %v6920 = vadd.f32 %v6712, %v6820
        %v6921 = vadd.f32 %v6713, %v6825
        %v6922 = vadd.f32 %v6714, %v6828
        %v6923 = vadd.f32 %v6715, %v6833
        %v6924 = vadd.f32 %v6716, %v6836
        %v6925 = vadd.f32 %v6717, %v6841
        %v6926 = vadd.f32 %v6718, %v6844
        %v6927 = vadd.f32 %v6719, %v6849
        %v6928 = vadd.f32 %v6720, %v6852
        %v6929 = vadd.f32 %v6721, %v6857
        %v6930 = vadd.f32 %v6722, %v6860
        %v6931 = vadd.f32 %v6723, %v6865
        %v6932 = vadd.f32 %v6724, %v6868
        %v6933 = vadd.f32 %v6725, %v6873
        %v6934 = vadd.f32 %v6726, %v6876
        %v6935 = vadd.f32 %v6727, %v6881
        %v6936 = vadd.f32 %v6728, %v6884
        %v6937 = vadd.f32 %v6729, %v6889
        %v6938 = vadd.f32 %v6730, %v6892
        %v6939 = vadd.f32 %v6731, %v6897
        %v6940 = vadd.f32 %v6732, %v6900
        %v6941 = vadd.f32 %v6733, %v6905
        %v6942 = vadd.f32 %v6734, %v6908
        %s6943 = scalar_lea.vmem %s7, 15
        %v6944 = vld [vmem:[%s6943] sm:$0x1]
        %v6946 = vsel %vm693, %v6944, 0
        %6948 = vmatprep.subr.bf16.mxu0 0
        %6949 = vmatpush1.bf16.msra.mxu0 %v6946
        %6950 = vmatprep.subr.bf16.mxu0 0
        %6951 = vmatpush1.bf16.msra.mxu0 0
        %6952 = vmatprep.subr.bf16.mxu0 0
        %6953 = vmatpush1.bf16.msra.mxu0 0
        %6954 = vmatprep.subr.bf16.mxu0 0
        %6955 = vmatpush1.bf16.msra.mxu0 0
        %6956 = vmatprep.subr.bf16.mxu0 0
        %6957 = vmatpush1.bf16.msra.mxu0 0
        %6958 = vmatprep.subr.bf16.mxu0 0
        %6959 = vmatpush1.bf16.msra.mxu0 0
        %6960 = vmatprep.subr.bf16.mxu0 0
        %6961 = vmatpush1.bf16.msra.mxu0 0
        %6962 = vmatprep.subr.bf16.mxu0 0
        %6963 = vmatpush1.bf16.msra.mxu0 0
        %6964 = vmatprep.subr.bf16.mxu0 0
        %6965 = vmatpush1.bf16.msra.mxu0 0
        %6966 = vmatprep.subr.bf16.mxu0 0
        %6967 = vmatpush1.bf16.msra.mxu0 0
        %6968 = vmatprep.subr.bf16.mxu0 0
        %6969 = vmatpush1.bf16.msra.mxu0 0
        %6970 = vmatprep.subr.bf16.mxu0 0
        %6971 = vmatpush1.bf16.msra.mxu0 0
        %6972 = vmatprep.subr.bf16.mxu0 0
        %6973 = vmatpush1.bf16.msra.mxu0 0
        %6974 = vmatprep.subr.bf16.mxu0 0
        %6975 = vmatpush1.bf16.msra.mxu0 0
        %6976 = vmatprep.subr.bf16.mxu0 0
        %6977 = vmatpush1.bf16.msra.mxu0 0
        %6978 = vmatprep.subr.bf16.mxu0 0
        %6979 = vmatpush1.bf16.msra.mxu0 0
        %6980 = vmatprep.mubr.bf16.mxu0 0
        %6981 = vmatmul.mubr.bf16.gmra.mrb[0].mxu0 %v3355
        %v6982 = vpop.f32.mrb[0].mxu0
        %v6983 = vadd.f32 0.0, %v6982
        %v6984 = vpop.f32.mrb[0].mxu0
        %v6985 = vpop.f32.mrb[0].mxu0
        %v6986 = vadd.f32 0.0, %v6985
        %v6987 = vpop.f32.mrb[0].mxu0
        %6988 = vmatprep.mubr.bf16.mxu0 0
        %6989 = vmatmul.mubr.bf16.gmra.mrb[0].mxu0 %v3358
        %v6990 = vpop.f32.mrb[0].mxu0
        %v6991 = vadd.f32 0.0, %v6990
        %v6992 = vpop.f32.mrb[0].mxu0
        %v6993 = vpop.f32.mrb[0].mxu0
        %v6994 = vadd.f32 0.0, %v6993
        %v6995 = vpop.f32.mrb[0].mxu0
        %6996 = vmatprep.mubr.bf16.mxu0 0
        %6997 = vmatmul.mubr.bf16.gmra.mrb[0].mxu0 %v3361
        %v6998 = vpop.f32.mrb[0].mxu0
        %v6999 = vadd.f32 0.0, %v6998
        %v7000 = vpop.f32.mrb[0].mxu0
        %v7001 = vpop.f32.mrb[0].mxu0
        %v7002 = vadd.f32 0.0, %v7001
        %v7003 = vpop.f32.mrb[0].mxu0
        %7004 = vmatprep.mubr.bf16.mxu0 0
        %7005 = vmatmul.mubr.bf16.gmra.mrb[0].mxu0 %v3364
        %v7006 = vpop.f32.mrb[0].mxu0
        %v7007 = vadd.f32 0.0, %v7006
        %v7008 = vpop.f32.mrb[0].mxu0
        %v7009 = vpop.f32.mrb[0].mxu0
        %v7010 = vadd.f32 0.0, %v7009
        %v7011 = vpop.f32.mrb[0].mxu0
        %7012 = vmatprep.mubr.bf16.mxu0 0
        %7013 = vmatmul.mubr.bf16.gmra.mrb[0].mxu0 %v3367
        %v7014 = vpop.f32.mrb[0].mxu0
        %v7015 = vadd.f32 0.0, %v7014
        %v7016 = vpop.f32.mrb[0].mxu0
        %v7017 = vpop.f32.mrb[0].mxu0
        %v7018 = vadd.f32 0.0, %v7017
        %v7019 = vpop.f32.mrb[0].mxu0
        %7020 = vmatprep.mubr.bf16.mxu0 0
        %7021 = vmatmul.mubr.bf16.gmra.mrb[0].mxu0 %v3370
        %v7022 = vpop.f32.mrb[0].mxu0
        %v7023 = vadd.f32 0.0, %v7022
        %v7024 = vpop.f32.mrb[0].mxu0
        %v7025 = vpop.f32.mrb[0].mxu0
        %v7026 = vadd.f32 0.0, %v7025
        %v7027 = vpop.f32.mrb[0].mxu0
        %7028 = vmatprep.mubr.bf16.mxu0 0
        %7029 = vmatmul.mubr.bf16.gmra.mrb[0].mxu0 %v3373
        %v7030 = vpop.f32.mrb[0].mxu0
        %v7031 = vadd.f32 0.0, %v7030
        %v7032 = vpop.f32.mrb[0].mxu0
        %v7033 = vpop.f32.mrb[0].mxu0
        %v7034 = vadd.f32 0.0, %v7033
        %v7035 = vpop.f32.mrb[0].mxu0
        %7036 = vmatprep.mubr.bf16.mxu0 0
        %7037 = vmatmul.mubr.bf16.gmra.mrb[0].mxu0 %v3376
        %v7038 = vpop.f32.mrb[0].mxu0
        %v7039 = vadd.f32 0.0, %v7038
        %v7040 = vpop.f32.mrb[0].mxu0
        %v7041 = vpop.f32.mrb[0].mxu0
        %v7042 = vadd.f32 0.0, %v7041
        %v7043 = vpop.f32.mrb[0].mxu0
        %7044 = vmatprep.mubr.bf16.mxu0 0
        %7045 = vmatmul.mubr.bf16.gmra.mrb[0].mxu0 %v3379
        %v7046 = vpop.f32.mrb[0].mxu0
        %v7047 = vadd.f32 0.0, %v7046
        %v7048 = vpop.f32.mrb[0].mxu0
        %v7049 = vpop.f32.mrb[0].mxu0
        %v7050 = vadd.f32 0.0, %v7049
        %v7051 = vpop.f32.mrb[0].mxu0
        %7052 = vmatprep.mubr.bf16.mxu0 0
        %7053 = vmatmul.mubr.bf16.gmra.mrb[0].mxu0 %v3382
        %v7054 = vpop.f32.mrb[0].mxu0
        %v7055 = vadd.f32 0.0, %v7054
        %v7056 = vpop.f32.mrb[0].mxu0
        %v7057 = vpop.f32.mrb[0].mxu0
        %v7058 = vadd.f32 0.0, %v7057
        %v7059 = vpop.f32.mrb[0].mxu0
        %7060 = vmatprep.mubr.bf16.mxu0 0
        %7061 = vmatmul.mubr.bf16.gmra.mrb[0].mxu0 %v3385
        %v7062 = vpop.f32.mrb[0].mxu0
        %v7063 = vadd.f32 0.0, %v7062
        %v7064 = vpop.f32.mrb[0].mxu0
        %v7065 = vpop.f32.mrb[0].mxu0
        %v7066 = vadd.f32 0.0, %v7065
        %v7067 = vpop.f32.mrb[0].mxu0
        %7068 = vmatprep.mubr.bf16.mxu0 0
        %7069 = vmatmul.mubr.bf16.gmra.mrb[0].mxu0 %v3388
        %v7070 = vpop.f32.mrb[0].mxu0
        %v7071 = vadd.f32 0.0, %v7070
        %v7072 = vpop.f32.mrb[0].mxu0
        %v7073 = vpop.f32.mrb[0].mxu0
        %v7074 = vadd.f32 0.0, %v7073
        %v7075 = vpop.f32.mrb[0].mxu0
        %7076 = vmatprep.mubr.bf16.mxu0 0
        %7077 = vmatmul.mubr.bf16.gmra.mrb[0].mxu0 %v3391
        %v7078 = vpop.f32.mrb[0].mxu0
        %v7079 = vadd.f32 0.0, %v7078
        %v7080 = vpop.f32.mrb[0].mxu0
        %v7081 = vpop.f32.mrb[0].mxu0
        %v7082 = vadd.f32 0.0, %v7081
        %v7083 = vpop.f32.mrb[0].mxu0
        %7084 = vmatprep.mubr.bf16.mxu0 0
        %7085 = vmatmul.mubr.bf16.gmra.mrb[0].mxu0 %v4883
        %v7086 = vpop.f32.mrb[0].mxu0
        %v7087 = vadd.f32 0.0, %v7086
        %v7088 = vpop.f32.mrb[0].mxu0
        %v7089 = vpop.f32.mrb[0].mxu0
        %v7090 = vadd.f32 0.0, %v7089
        %v7091 = vpop.f32.mrb[0].mxu0
        %7092 = vmatprep.mubr.bf16.mxu0 0
        %7093 = vmatmul.mubr.bf16.gmra.mrb[0].mxu0 %v5919
        %v7094 = vpop.f32.mrb[0].mxu0
        %v7095 = vadd.f32 0.0, %v7094
        %v7096 = vpop.f32.mrb[0].mxu0
        %v7097 = vpop.f32.mrb[0].mxu0
        %v7098 = vadd.f32 0.0, %v7097
        %v7099 = vpop.f32.mrb[0].mxu0
        %7100 = vmatprep.mubr.bf16.mxu0 0
        %7101 = vmatmul.mubr.bf16.gmra.mrb[0].mxu0 %v3349
        %v7102 = vpop.f32.mrb[0].mxu0
        %v7103 = vadd.f32 0.0, %v7102
        %v7104 = vpop.f32.mrb[0].mxu0
        %v7105 = vpop.f32.mrb[0].mxu0
        %v7106 = vadd.f32 0.0, %v7105
        %v7107 = vpop.f32.mrb[0].mxu0
        %7108 = vdwg.mxu0
        %v7109 = vadd.f32 %v6911, %v6983
        %v7110 = vadd.f32 %v6912, %v6986
        %v7111 = vadd.f32 %v6913, %v6991
        %v7112 = vadd.f32 %v6914, %v6994
        %v7113 = vadd.f32 %v6915, %v6999
        %v7114 = vadd.f32 %v6916, %v7002
        %v7115 = vadd.f32 %v6917, %v7007
        %v7116 = vadd.f32 %v6918, %v7010
        %v7117 = vadd.f32 %v6919, %v7015
        %v7118 = vadd.f32 %v6920, %v7018
        %v7119 = vadd.f32 %v6921, %v7023
        %v7120 = vadd.f32 %v6922, %v7026
        %v7121 = vadd.f32 %v6923, %v7031
        %v7122 = vadd.f32 %v6924, %v7034
        %v7123 = vadd.f32 %v6925, %v7039
        %v7124 = vadd.f32 %v6926, %v7042
        %v7125 = vadd.f32 %v6927, %v7047
        %v7126 = vadd.f32 %v6928, %v7050
        %v7127 = vadd.f32 %v6929, %v7055
        %v7128 = vadd.f32 %v6930, %v7058
        %v7129 = vadd.f32 %v6931, %v7063
        %v7130 = vadd.f32 %v6932, %v7066
        %v7131 = vadd.f32 %v6933, %v7071
        %v7132 = vadd.f32 %v6934, %v7074
        %v7133 = vadd.f32 %v6935, %v7079
        %v7134 = vadd.f32 %v6936, %v7082
        %v7135 = vadd.f32 %v6937, %v7087
        %v7136 = vadd.f32 %v6938, %v7090
        %v7137 = vadd.f32 %v6939, %v7095
        %v7138 = vadd.f32 %v6940, %v7098
        %v7139 = vadd.f32 %v6941, %v7103
        %v7140 = vadd.f32 %v6942, %v7106
        %s7141 = scalar_lea.vmem %s7, 16
        %v7142 = vld [vmem:[%s7141] sm:$0x1]
        %v7144 = vsel %vm693, %v7142, 0
        %7146 = vmatprep.subr.bf16.mxu0 0
        %7147 = vmatpush1.bf16.msra.mxu0 %v7144
        %7148 = vmatprep.subr.bf16.mxu0 0
        %7149 = vmatpush1.bf16.msra.mxu0 0
        %7150 = vmatprep.subr.bf16.mxu0 0
        %7151 = vmatpush1.bf16.msra.mxu0 0
        %7152 = vmatprep.subr.bf16.mxu0 0
        %7153 = vmatpush1.bf16.msra.mxu0 0
        %7154 = vmatprep.subr.bf16.mxu0 0
        %7155 = vmatpush1.bf16.msra.mxu0 0
        %7156 = vmatprep.subr.bf16.mxu0 0
        %7157 = vmatpush1.bf16.msra.mxu0 0
        %7158 = vmatprep.subr.bf16.mxu0 0
        %7159 = vmatpush1.bf16.msra.mxu0 0
        %7160 = vmatprep.subr.bf16.mxu0 0
        %7161 = vmatpush1.bf16.msra.mxu0 0
        %7162 = vmatprep.subr.bf16.mxu0 0
        %7163 = vmatpush1.bf16.msra.mxu0 0
        %7164 = vmatprep.subr.bf16.mxu0 0
        %7165 = vmatpush1.bf16.msra.mxu0 0
        %7166 = vmatprep.subr.bf16.mxu0 0
        %7167 = vmatpush1.bf16.msra.mxu0 0
        %7168 = vmatprep.subr.bf16.mxu0 0
        %7169 = vmatpush1.bf16.msra.mxu0 0
        %7170 = vmatprep.subr.bf16.mxu0 0
        %7171 = vmatpush1.bf16.msra.mxu0 0
        %7172 = vmatprep.subr.bf16.mxu0 0
        %7173 = vmatpush1.bf16.msra.mxu0 0
        %7174 = vmatprep.subr.bf16.mxu0 0
        %7175 = vmatpush1.bf16.msra.mxu0 0
        %7176 = vmatprep.subr.bf16.mxu0 0
        %7177 = vmatpush1.bf16.msra.mxu0 0
        %7178 = vmatprep.mubr.bf16.mxu0 0
        %7179 = vmatmul.mubr.bf16.gmra.mrb[0].mxu0 %v3695
        %v7180 = vpop.f32.mrb[0].mxu0
        %v7181 = vadd.f32 0.0, %v7180
        %v7182 = vpop.f32.mrb[0].mxu0
        %v7183 = vpop.f32.mrb[0].mxu0
        %v7184 = vadd.f32 0.0, %v7183
        %v7185 = vpop.f32.mrb[0].mxu0
        %7186 = vmatprep.mubr.bf16.mxu0 0
        %7187 = vmatmul.mubr.bf16.gmra.mrb[0].mxu0 %v3698
        %v7188 = vpop.f32.mrb[0].mxu0
        %v7189 = vadd.f32 0.0, %v7188
        %v7190 = vpop.f32.mrb[0].mxu0
        %v7191 = vpop.f32.mrb[0].mxu0
        %v7192 = vadd.f32 0.0, %v7191
        %v7193 = vpop.f32.mrb[0].mxu0
        %7194 = vmatprep.mubr.bf16.mxu0 0
        %7195 = vmatmul.mubr.bf16.gmra.mrb[0].mxu0 %v3701
        %v7196 = vpop.f32.mrb[0].mxu0
        %v7197 = vadd.f32 0.0, %v7196
        %v7198 = vpop.f32.mrb[0].mxu0
        %v7199 = vpop.f32.mrb[0].mxu0
        %v7200 = vadd.f32 0.0, %v7199
        %v7201 = vpop.f32.mrb[0].mxu0
        %7202 = vmatprep.mubr.bf16.mxu0 0
        %7203 = vmatmul.mubr.bf16.gmra.mrb[0].mxu0 %v3704
        %v7204 = vpop.f32.mrb[0].mxu0
        %v7205 = vadd.f32 0.0, %v7204
        %v7206 = vpop.f32.mrb[0].mxu0
        %v7207 = vpop.f32.mrb[0].mxu0
        %v7208 = vadd.f32 0.0, %v7207
        %v7209 = vpop.f32.mrb[0].mxu0
        %7210 = vmatprep.mubr.bf16.mxu0 0
        %7211 = vmatmul.mubr.bf16.gmra.mrb[0].mxu0 %v3707
        %v7212 = vpop.f32.mrb[0].mxu0
        %v7213 = vadd.f32 0.0, %v7212
        %v7214 = vpop.f32.mrb[0].mxu0
        %v7215 = vpop.f32.mrb[0].mxu0
        %v7216 = vadd.f32 0.0, %v7215
        %v7217 = vpop.f32.mrb[0].mxu0
        %7218 = vmatprep.mubr.bf16.mxu0 0
        %7219 = vmatmul.mubr.bf16.gmra.mrb[0].mxu0 %v3710
        %v7220 = vpop.f32.mrb[0].mxu0
        %v7221 = vadd.f32 0.0, %v7220
        %v7222 = vpop.f32.mrb[0].mxu0
        %v7223 = vpop.f32.mrb[0].mxu0
        %v7224 = vadd.f32 0.0, %v7223
        %v7225 = vpop.f32.mrb[0].mxu0
        %7226 = vmatprep.mubr.bf16.mxu0 0
        %7227 = vmatmul.mubr.bf16.gmra.mrb[0].mxu0 %v3713
        %v7228 = vpop.f32.mrb[0].mxu0
        %v7229 = vadd.f32 0.0, %v7228
        %v7230 = vpop.f32.mrb[0].mxu0
        %v7231 = vpop.f32.mrb[0].mxu0
        %v7232 = vadd.f32 0.0, %v7231
        %v7233 = vpop.f32.mrb[0].mxu0
        %7234 = vmatprep.mubr.bf16.mxu0 0
        %7235 = vmatmul.mubr.bf16.gmra.mrb[0].mxu0 %v3716
        %v7236 = vpop.f32.mrb[0].mxu0
        %v7237 = vadd.f32 0.0, %v7236
        %v7238 = vpop.f32.mrb[0].mxu0
        %v7239 = vpop.f32.mrb[0].mxu0
        %v7240 = vadd.f32 0.0, %v7239
        %v7241 = vpop.f32.mrb[0].mxu0
        %7242 = vmatprep.mubr.bf16.mxu0 0
        %7243 = vmatmul.mubr.bf16.gmra.mrb[0].mxu0 %v3719
        %v7244 = vpop.f32.mrb[0].mxu0
        %v7245 = vadd.f32 0.0, %v7244
        %v7246 = vpop.f32.mrb[0].mxu0
        %v7247 = vpop.f32.mrb[0].mxu0
        %v7248 = vadd.f32 0.0, %v7247
        %v7249 = vpop.f32.mrb[0].mxu0
        %7250 = vmatprep.mubr.bf16.mxu0 0
        %7251 = vmatmul.mubr.bf16.gmra.mrb[0].mxu0 %v3722
        %v7252 = vpop.f32.mrb[0].mxu0
        %v7253 = vadd.f32 0.0, %v7252
        %v7254 = vpop.f32.mrb[0].mxu0
        %v7255 = vpop.f32.mrb[0].mxu0
        %v7256 = vadd.f32 0.0, %v7255
        %v7257 = vpop.f32.mrb[0].mxu0
        %7258 = vmatprep.mubr.bf16.mxu0 0
        %7259 = vmatmul.mubr.bf16.gmra.mrb[0].mxu0 %v3725
        %v7260 = vpop.f32.mrb[0].mxu0
        %v7261 = vadd.f32 0.0, %v7260
        %v7262 = vpop.f32.mrb[0].mxu0
        %v7263 = vpop.f32.mrb[0].mxu0
        %v7264 = vadd.f32 0.0, %v7263
        %v7265 = vpop.f32.mrb[0].mxu0
        %7266 = vmatprep.mubr.bf16.mxu0 0
        %7267 = vmatmul.mubr.bf16.gmra.mrb[0].mxu0 %v3728
        %v7268 = vpop.f32.mrb[0].mxu0
        %v7269 = vadd.f32 0.0, %v7268
        %v7270 = vpop.f32.mrb[0].mxu0
        %v7271 = vpop.f32.mrb[0].mxu0
        %v7272 = vadd.f32 0.0, %v7271
        %v7273 = vpop.f32.mrb[0].mxu0
        %7274 = vmatprep.mubr.bf16.mxu0 0
        %7275 = vmatmul.mubr.bf16.gmra.mrb[0].mxu0 %v3731
        %v7276 = vpop.f32.mrb[0].mxu0
        %v7277 = vadd.f32 0.0, %v7276
        %v7278 = vpop.f32.mrb[0].mxu0
        %v7279 = vpop.f32.mrb[0].mxu0
        %v7280 = vadd.f32 0.0, %v7279
        %v7281 = vpop.f32.mrb[0].mxu0
        %7282 = vmatprep.mubr.bf16.mxu0 0
        %7283 = vmatmul.mubr.bf16.gmra.mrb[0].mxu0 %v5091
        %v7284 = vpop.f32.mrb[0].mxu0
        %v7285 = vadd.f32 0.0, %v7284
        %v7286 = vpop.f32.mrb[0].mxu0
        %v7287 = vpop.f32.mrb[0].mxu0
        %v7288 = vadd.f32 0.0, %v7287
        %v7289 = vpop.f32.mrb[0].mxu0
        %7290 = vmatprep.mubr.bf16.mxu0 0
        %7291 = vmatmul.mubr.bf16.gmra.mrb[0].mxu0 %v6127
        %v7292 = vpop.f32.mrb[0].mxu0
        %v7293 = vadd.f32 0.0, %v7292
        %v7294 = vpop.f32.mrb[0].mxu0
        %v7295 = vpop.f32.mrb[0].mxu0
        %v7296 = vadd.f32 0.0, %v7295
        %v7297 = vpop.f32.mrb[0].mxu0
        %7298 = vmatprep.mubr.bf16.mxu0 0
        %7299 = vmatmul.mubr.bf16.gmra.mrb[0].mxu0 %v3689
        %v7300 = vpop.f32.mrb[0].mxu0
        %v7301 = vadd.f32 0.0, %v7300
        %v7302 = vpop.f32.mrb[0].mxu0
        %v7303 = vpop.f32.mrb[0].mxu0
        %v7304 = vadd.f32 0.0, %v7303
        %v7305 = vpop.f32.mrb[0].mxu0
        %7306 = vdwg.mxu0
        %v7307 = vadd.f32 %v7109, %v7181
        %v7308 = vadd.f32 %v7110, %v7184
        %v7309 = vadd.f32 %v7111, %v7189
        %v7310 = vadd.f32 %v7112, %v7192
        %v7311 = vadd.f32 %v7113, %v7197
        %v7312 = vadd.f32 %v7114, %v7200
        %v7313 = vadd.f32 %v7115, %v7205
        %v7314 = vadd.f32 %v7116, %v7208
        %v7315 = vadd.f32 %v7117, %v7213
        %v7316 = vadd.f32 %v7118, %v7216
        %v7317 = vadd.f32 %v7119, %v7221
        %v7318 = vadd.f32 %v7120, %v7224
        %v7319 = vadd.f32 %v7121, %v7229
        %v7320 = vadd.f32 %v7122, %v7232
        %v7321 = vadd.f32 %v7123, %v7237
        %v7322 = vadd.f32 %v7124, %v7240
        %v7323 = vadd.f32 %v7125, %v7245
        %v7324 = vadd.f32 %v7126, %v7248
        %v7325 = vadd.f32 %v7127, %v7253
        %v7326 = vadd.f32 %v7128, %v7256
        %v7327 = vadd.f32 %v7129, %v7261
        %v7328 = vadd.f32 %v7130, %v7264
        %v7329 = vadd.f32 %v7131, %v7269
        %v7330 = vadd.f32 %v7132, %v7272
        %v7331 = vadd.f32 %v7133, %v7277
        %v7332 = vadd.f32 %v7134, %v7280
        %v7333 = vadd.f32 %v7135, %v7285
        %v7334 = vadd.f32 %v7136, %v7288
        %v7335 = vadd.f32 %v7137, %v7293
        %v7336 = vadd.f32 %v7138, %v7296
        %v7337 = vadd.f32 %v7139, %v7301
        %v7338 = vadd.f32 %v7140, %v7304
        %s7339 = scalar_lea.vmem %s7, 17
        %v7340 = vld [vmem:[%s7339] sm:$0x1]
        %v7342 = vsel %vm693, %v7340, 0
        %7344 = vmatprep.subr.bf16.mxu0 0
        %7345 = vmatpush1.bf16.msra.mxu0 %v7342
        %7346 = vmatprep.subr.bf16.mxu0 0
        %7347 = vmatpush1.bf16.msra.mxu0 0
        %7348 = vmatprep.subr.bf16.mxu0 0
        %7349 = vmatpush1.bf16.msra.mxu0 0
        %7350 = vmatprep.subr.bf16.mxu0 0
        %7351 = vmatpush1.bf16.msra.mxu0 0
        %7352 = vmatprep.subr.bf16.mxu0 0
        %7353 = vmatpush1.bf16.msra.mxu0 0
        %7354 = vmatprep.subr.bf16.mxu0 0
        %7355 = vmatpush1.bf16.msra.mxu0 0
        %7356 = vmatprep.subr.bf16.mxu0 0
        %7357 = vmatpush1.bf16.msra.mxu0 0
        %7358 = vmatprep.subr.bf16.mxu0 0
        %7359 = vmatpush1.bf16.msra.mxu0 0
        %7360 = vmatprep.subr.bf16.mxu0 0
        %7361 = vmatpush1.bf16.msra.mxu0 0
        %7362 = vmatprep.subr.bf16.mxu0 0
        %7363 = vmatpush1.bf16.msra.mxu0 0
        %7364 = vmatprep.subr.bf16.mxu0 0
        %7365 = vmatpush1.bf16.msra.mxu0 0
        %7366 = vmatprep.subr.bf16.mxu0 0
        %7367 = vmatpush1.bf16.msra.mxu0 0
        %7368 = vmatprep.subr.bf16.mxu0 0
        %7369 = vmatpush1.bf16.msra.mxu0 0
        %7370 = vmatprep.subr.bf16.mxu0 0
        %7371 = vmatpush1.bf16.msra.mxu0 0
        %7372 = vmatprep.subr.bf16.mxu0 0
        %7373 = vmatpush1.bf16.msra.mxu0 0
        %7374 = vmatprep.subr.bf16.mxu0 0
        %7375 = vmatpush1.bf16.msra.mxu0 0
        %7376 = vmatprep.mubr.bf16.mxu0 0
        %7377 = vmatmul.mubr.bf16.gmra.mrb[0].mxu0 %v3951
        %v7378 = vpop.f32.mrb[0].mxu0
        %v7379 = vadd.f32 0.0, %v7378
        %v7380 = vpop.f32.mrb[0].mxu0
        %v7381 = vpop.f32.mrb[0].mxu0
        %v7382 = vadd.f32 0.0, %v7381
        %v7383 = vpop.f32.mrb[0].mxu0
        %7384 = vmatprep.mubr.bf16.mxu0 0
        %7385 = vmatmul.mubr.bf16.gmra.mrb[0].mxu0 %v3954
        %v7386 = vpop.f32.mrb[0].mxu0
        %v7387 = vadd.f32 0.0, %v7386
        %v7388 = vpop.f32.mrb[0].mxu0
        %v7389 = vpop.f32.mrb[0].mxu0
        %v7390 = vadd.f32 0.0, %v7389
        %v7391 = vpop.f32.mrb[0].mxu0
        %7392 = vmatprep.mubr.bf16.mxu0 0
        %7393 = vmatmul.mubr.bf16.gmra.mrb[0].mxu0 %v3957
        %v7394 = vpop.f32.mrb[0].mxu0
        %v7395 = vadd.f32 0.0, %v7394
        %v7396 = vpop.f32.mrb[0].mxu0
        %v7397 = vpop.f32.mrb[0].mxu0
        %v7398 = vadd.f32 0.0, %v7397
        %v7399 = vpop.f32.mrb[0].mxu0
        %7400 = vmatprep.mubr.bf16.mxu0 0
        %7401 = vmatmul.mubr.bf16.gmra.mrb[0].mxu0 %v3960
        %v7402 = vpop.f32.mrb[0].mxu0
        %v7403 = vadd.f32 0.0, %v7402
        %v7404 = vpop.f32.mrb[0].mxu0
        %v7405 = vpop.f32.mrb[0].mxu0
        %v7406 = vadd.f32 0.0, %v7405
        %v7407 = vpop.f32.mrb[0].mxu0
        %7408 = vmatprep.mubr.bf16.mxu0 0
        %7409 = vmatmul.mubr.bf16.gmra.mrb[0].mxu0 %v3963
        %v7410 = vpop.f32.mrb[0].mxu0
        %v7411 = vadd.f32 0.0, %v7410
        %v7412 = vpop.f32.mrb[0].mxu0
        %v7413 = vpop.f32.mrb[0].mxu0
        %v7414 = vadd.f32 0.0, %v7413
        %v7415 = vpop.f32.mrb[0].mxu0
        %7416 = vmatprep.mubr.bf16.mxu0 0
        %7417 = vmatmul.mubr.bf16.gmra.mrb[0].mxu0 %v3966
        %v7418 = vpop.f32.mrb[0].mxu0
        %v7419 = vadd.f32 0.0, %v7418
        %v7420 = vpop.f32.mrb[0].mxu0
        %v7421 = vpop.f32.mrb[0].mxu0
        %v7422 = vadd.f32 0.0, %v7421
        %v7423 = vpop.f32.mrb[0].mxu0
        %7424 = vmatprep.mubr.bf16.mxu0 0
        %7425 = vmatmul.mubr.bf16.gmra.mrb[0].mxu0 %v3969
        %v7426 = vpop.f32.mrb[0].mxu0
        %v7427 = vadd.f32 0.0, %v7426
        %v7428 = vpop.f32.mrb[0].mxu0
        %v7429 = vpop.f32.mrb[0].mxu0
        %v7430 = vadd.f32 0.0, %v7429
        %v7431 = vpop.f32.mrb[0].mxu0
        %7432 = vmatprep.mubr.bf16.mxu0 0
        %7433 = vmatmul.mubr.bf16.gmra.mrb[0].mxu0 %v3972
        %v7434 = vpop.f32.mrb[0].mxu0
        %v7435 = vadd.f32 0.0, %v7434
        %v7436 = vpop.f32.mrb[0].mxu0
        %v7437 = vpop.f32.mrb[0].mxu0
        %v7438 = vadd.f32 0.0, %v7437
        %v7439 = vpop.f32.mrb[0].mxu0
        %7440 = vmatprep.mubr.bf16.mxu0 0
        %7441 = vmatmul.mubr.bf16.gmra.mrb[0].mxu0 %v3975
        %v7442 = vpop.f32.mrb[0].mxu0
        %v7443 = vadd.f32 0.0, %v7442
        %v7444 = vpop.f32.mrb[0].mxu0
        %v7445 = vpop.f32.mrb[0].mxu0
        %v7446 = vadd.f32 0.0, %v7445
        %v7447 = vpop.f32.mrb[0].mxu0
        %7448 = vmatprep.mubr.bf16.mxu0 0
        %7449 = vmatmul.mubr.bf16.gmra.mrb[0].mxu0 %v3978
        %v7450 = vpop.f32.mrb[0].mxu0
        %v7451 = vadd.f32 0.0, %v7450
        %v7452 = vpop.f32.mrb[0].mxu0
        %v7453 = vpop.f32.mrb[0].mxu0
        %v7454 = vadd.f32 0.0, %v7453
        %v7455 = vpop.f32.mrb[0].mxu0
        %7456 = vmatprep.mubr.bf16.mxu0 0
        %7457 = vmatmul.mubr.bf16.gmra.mrb[0].mxu0 %v3981
        %v7458 = vpop.f32.mrb[0].mxu0
        %v7459 = vadd.f32 0.0, %v7458
        %v7460 = vpop.f32.mrb[0].mxu0
        %v7461 = vpop.f32.mrb[0].mxu0
        %v7462 = vadd.f32 0.0, %v7461
        %v7463 = vpop.f32.mrb[0].mxu0
        %7464 = vmatprep.mubr.bf16.mxu0 0
        %7465 = vmatmul.mubr.bf16.gmra.mrb[0].mxu0 %v3984
        %v7466 = vpop.f32.mrb[0].mxu0
        %v7467 = vadd.f32 0.0, %v7466
        %v7468 = vpop.f32.mrb[0].mxu0
        %v7469 = vpop.f32.mrb[0].mxu0
        %v7470 = vadd.f32 0.0, %v7469
        %v7471 = vpop.f32.mrb[0].mxu0
        %7472 = vmatprep.mubr.bf16.mxu0 0
        %7473 = vmatmul.mubr.bf16.gmra.mrb[0].mxu0 %v3987
        %v7474 = vpop.f32.mrb[0].mxu0
        %v7475 = vadd.f32 0.0, %v7474
        %v7476 = vpop.f32.mrb[0].mxu0
        %v7477 = vpop.f32.mrb[0].mxu0
        %v7478 = vadd.f32 0.0, %v7477
        %v7479 = vpop.f32.mrb[0].mxu0
        %7480 = vmatprep.mubr.bf16.mxu0 0
        %7481 = vmatmul.mubr.bf16.gmra.mrb[0].mxu0 %v5293
        %v7482 = vpop.f32.mrb[0].mxu0
        %v7483 = vadd.f32 0.0, %v7482
        %v7484 = vpop.f32.mrb[0].mxu0
        %v7485 = vpop.f32.mrb[0].mxu0
        %v7486 = vadd.f32 0.0, %v7485
        %v7487 = vpop.f32.mrb[0].mxu0
        %7488 = vmatprep.mubr.bf16.mxu0 0
        %7489 = vmatmul.mubr.bf16.gmra.mrb[0].mxu0 %v6329
        %v7490 = vpop.f32.mrb[0].mxu0
        %v7491 = vadd.f32 0.0, %v7490
        %v7492 = vpop.f32.mrb[0].mxu0
        %v7493 = vpop.f32.mrb[0].mxu0
        %v7494 = vadd.f32 0.0, %v7493
        %v7495 = vpop.f32.mrb[0].mxu0
        %7496 = vmatprep.mubr.bf16.mxu0 0
        %7497 = vmatmul.mubr.bf16.gmra.mrb[0].mxu0 %v3945
        %v7498 = vpop.f32.mrb[0].mxu0
        %v7499 = vadd.f32 0.0, %v7498
        %v7500 = vpop.f32.mrb[0].mxu0
        %v7501 = vpop.f32.mrb[0].mxu0
        %v7502 = vadd.f32 0.0, %v7501
        %v7503 = vpop.f32.mrb[0].mxu0
        %7504 = vdwg.mxu0
        %v7505 = vadd.f32 %v7307, %v7379
        %v7506 = vadd.f32 %v7308, %v7382
        %v7507 = vadd.f32 %v7309, %v7387
        %v7508 = vadd.f32 %v7310, %v7390
        %v7509 = vadd.f32 %v7311, %v7395
        %v7510 = vadd.f32 %v7312, %v7398
        %v7511 = vadd.f32 %v7313, %v7403
        %v7512 = vadd.f32 %v7314, %v7406
        %v7513 = vadd.f32 %v7315, %v7411
        %v7514 = vadd.f32 %v7316, %v7414
        %v7515 = vadd.f32 %v7317, %v7419
        %v7516 = vadd.f32 %v7318, %v7422
        %v7517 = vadd.f32 %v7319, %v7427
        %v7518 = vadd.f32 %v7320, %v7430
        %v7519 = vadd.f32 %v7321, %v7435
        %v7520 = vadd.f32 %v7322, %v7438
        %v7521 = vadd.f32 %v7323, %v7443
        %v7522 = vadd.f32 %v7324, %v7446
        %v7523 = vadd.f32 %v7325, %v7451
        %v7524 = vadd.f32 %v7326, %v7454
        %v7525 = vadd.f32 %v7327, %v7459
        %v7526 = vadd.f32 %v7328, %v7462
        %v7527 = vadd.f32 %v7329, %v7467
        %v7528 = vadd.f32 %v7330, %v7470
        %v7529 = vadd.f32 %v7331, %v7475
        %v7530 = vadd.f32 %v7332, %v7478
        %v7531 = vadd.f32 %v7333, %v7483
        %v7532 = vadd.f32 %v7334, %v7486
        %v7533 = vadd.f32 %v7335, %v7491
        %v7534 = vadd.f32 %v7336, %v7494
        %v7535 = vadd.f32 %v7337, %v7499
        %v7536 = vadd.f32 %v7338, %v7502
        %s7537 = scalar_lea.vmem %s7, 18
        %v7538 = vld [vmem:[%s7537] sm:$0x1]
        %v7540 = vsel %vm693, %v7538, 0
        %7542 = vmatprep.subr.bf16.mxu0 0
        %7543 = vmatpush1.bf16.msra.mxu0 %v7540
        %7544 = vmatprep.subr.bf16.mxu0 0
        %7545 = vmatpush1.bf16.msra.mxu0 0
        %7546 = vmatprep.subr.bf16.mxu0 0
        %7547 = vmatpush1.bf16.msra.mxu0 0
        %7548 = vmatprep.subr.bf16.mxu0 0
        %7549 = vmatpush1.bf16.msra.mxu0 0
        %7550 = vmatprep.subr.bf16.mxu0 0
        %7551 = vmatpush1.bf16.msra.mxu0 0
        %7552 = vmatprep.subr.bf16.mxu0 0
        %7553 = vmatpush1.bf16.msra.mxu0 0
        %7554 = vmatprep.subr.bf16.mxu0 0
        %7555 = vmatpush1.bf16.msra.mxu0 0
        %7556 = vmatprep.subr.bf16.mxu0 0
        %7557 = vmatpush1.bf16.msra.mxu0 0
        %7558 = vmatprep.subr.bf16.mxu0 0
        %7559 = vmatpush1.bf16.msra.mxu0 0
        %7560 = vmatprep.subr.bf16.mxu0 0
        %7561 = vmatpush1.bf16.msra.mxu0 0
        %7562 = vmatprep.subr.bf16.mxu0 0
        %7563 = vmatpush1.bf16.msra.mxu0 0
        %7564 = vmatprep.subr.bf16.mxu0 0
        %7565 = vmatpush1.bf16.msra.mxu0 0
        %7566 = vmatprep.subr.bf16.mxu0 0
        %7567 = vmatpush1.bf16.msra.mxu0 0
        %7568 = vmatprep.subr.bf16.mxu0 0
        %7569 = vmatpush1.bf16.msra.mxu0 0
        %7570 = vmatprep.subr.bf16.mxu0 0
        %7571 = vmatpush1.bf16.msra.mxu0 0
        %7572 = vmatprep.subr.bf16.mxu0 0
        %7573 = vmatpush1.bf16.msra.mxu0 0
        %7574 = vmatprep.mubr.bf16.mxu0 0
        %7575 = vmatmul.mubr.bf16.gmra.mrb[0].mxu0 %v4291
        %v7576 = vpop.f32.mrb[0].mxu0
        %v7577 = vadd.f32 0.0, %v7576
        %v7578 = vpop.f32.mrb[0].mxu0
        %v7579 = vpop.f32.mrb[0].mxu0
        %v7580 = vadd.f32 0.0, %v7579
        %v7581 = vpop.f32.mrb[0].mxu0
        %7582 = vmatprep.mubr.bf16.mxu0 0
        %7583 = vmatmul.mubr.bf16.gmra.mrb[0].mxu0 %v4294
        %v7584 = vpop.f32.mrb[0].mxu0
        %v7585 = vadd.f32 0.0, %v7584
        %v7586 = vpop.f32.mrb[0].mxu0
        %v7587 = vpop.f32.mrb[0].mxu0
        %v7588 = vadd.f32 0.0, %v7587
        %v7589 = vpop.f32.mrb[0].mxu0
        %7590 = vmatprep.mubr.bf16.mxu0 0
        %7591 = vmatmul.mubr.bf16.gmra.mrb[0].mxu0 %v4297
        %v7592 = vpop.f32.mrb[0].mxu0
        %v7593 = vadd.f32 0.0, %v7592
        %v7594 = vpop.f32.mrb[0].mxu0
        %v7595 = vpop.f32.mrb[0].mxu0
        %v7596 = vadd.f32 0.0, %v7595
        %v7597 = vpop.f32.mrb[0].mxu0
        %7598 = vmatprep.mubr.bf16.mxu0 0
        %7599 = vmatmul.mubr.bf16.gmra.mrb[0].mxu0 %v4300
        %v7600 = vpop.f32.mrb[0].mxu0
        %v7601 = vadd.f32 0.0, %v7600
        %v7602 = vpop.f32.mrb[0].mxu0
        %v7603 = vpop.f32.mrb[0].mxu0
        %v7604 = vadd.f32 0.0, %v7603
        %v7605 = vpop.f32.mrb[0].mxu0
        %7606 = vmatprep.mubr.bf16.mxu0 0
        %7607 = vmatmul.mubr.bf16.gmra.mrb[0].mxu0 %v4303
        %v7608 = vpop.f32.mrb[0].mxu0
        %v7609 = vadd.f32 0.0, %v7608
        %v7610 = vpop.f32.mrb[0].mxu0
        %v7611 = vpop.f32.mrb[0].mxu0
        %v7612 = vadd.f32 0.0, %v7611
        %v7613 = vpop.f32.mrb[0].mxu0
        %7614 = vmatprep.mubr.bf16.mxu0 0
        %7615 = vmatmul.mubr.bf16.gmra.mrb[0].mxu0 %v4306
        %v7616 = vpop.f32.mrb[0].mxu0
        %v7617 = vadd.f32 0.0, %v7616
        %v7618 = vpop.f32.mrb[0].mxu0
        %v7619 = vpop.f32.mrb[0].mxu0
        %v7620 = vadd.f32 0.0, %v7619
        %v7621 = vpop.f32.mrb[0].mxu0
        %7622 = vmatprep.mubr.bf16.mxu0 0
        %7623 = vmatmul.mubr.bf16.gmra.mrb[0].mxu0 %v4309
        %v7624 = vpop.f32.mrb[0].mxu0
        %v7625 = vadd.f32 0.0, %v7624
        %v7626 = vpop.f32.mrb[0].mxu0
        %v7627 = vpop.f32.mrb[0].mxu0
        %v7628 = vadd.f32 0.0, %v7627
        %v7629 = vpop.f32.mrb[0].mxu0
        %7630 = vmatprep.mubr.bf16.mxu0 0
        %7631 = vmatmul.mubr.bf16.gmra.mrb[0].mxu0 %v4312
        %v7632 = vpop.f32.mrb[0].mxu0
        %v7633 = vadd.f32 0.0, %v7632
        %v7634 = vpop.f32.mrb[0].mxu0
        %v7635 = vpop.f32.mrb[0].mxu0
        %v7636 = vadd.f32 0.0, %v7635
        %v7637 = vpop.f32.mrb[0].mxu0
        %7638 = vmatprep.mubr.bf16.mxu0 0
        %7639 = vmatmul.mubr.bf16.gmra.mrb[0].mxu0 %v4315
        %v7640 = vpop.f32.mrb[0].mxu0
        %v7641 = vadd.f32 0.0, %v7640
        %v7642 = vpop.f32.mrb[0].mxu0
        %v7643 = vpop.f32.mrb[0].mxu0
        %v7644 = vadd.f32 0.0, %v7643
        %v7645 = vpop.f32.mrb[0].mxu0
        %7646 = vmatprep.mubr.bf16.mxu0 0
        %7647 = vmatmul.mubr.bf16.gmra.mrb[0].mxu0 %v4318
        %v7648 = vpop.f32.mrb[0].mxu0
        %v7649 = vadd.f32 0.0, %v7648
        %v7650 = vpop.f32.mrb[0].mxu0
        %v7651 = vpop.f32.mrb[0].mxu0
        %v7652 = vadd.f32 0.0, %v7651
        %v7653 = vpop.f32.mrb[0].mxu0
        %7654 = vmatprep.mubr.bf16.mxu0 0
        %7655 = vmatmul.mubr.bf16.gmra.mrb[0].mxu0 %v4321
        %v7656 = vpop.f32.mrb[0].mxu0
        %v7657 = vadd.f32 0.0, %v7656
        %v7658 = vpop.f32.mrb[0].mxu0
        %v7659 = vpop.f32.mrb[0].mxu0
        %v7660 = vadd.f32 0.0, %v7659
        %v7661 = vpop.f32.mrb[0].mxu0
        %7662 = vmatprep.mubr.bf16.mxu0 0
        %7663 = vmatmul.mubr.bf16.gmra.mrb[0].mxu0 %v4324
        %v7664 = vpop.f32.mrb[0].mxu0
        %v7665 = vadd.f32 0.0, %v7664
        %v7666 = vpop.f32.mrb[0].mxu0
        %v7667 = vpop.f32.mrb[0].mxu0
        %v7668 = vadd.f32 0.0, %v7667
        %v7669 = vpop.f32.mrb[0].mxu0
        %7670 = vmatprep.mubr.bf16.mxu0 0
        %7671 = vmatmul.mubr.bf16.gmra.mrb[0].mxu0 %v4327
        %v7672 = vpop.f32.mrb[0].mxu0
        %v7673 = vadd.f32 0.0, %v7672
        %v7674 = vpop.f32.mrb[0].mxu0
        %v7675 = vpop.f32.mrb[0].mxu0
        %v7676 = vadd.f32 0.0, %v7675
        %v7677 = vpop.f32.mrb[0].mxu0
        %7678 = vmatprep.mubr.bf16.mxu0 0
        %7679 = vmatmul.mubr.bf16.gmra.mrb[0].mxu0 %v5501
        %v7680 = vpop.f32.mrb[0].mxu0
        %v7681 = vadd.f32 0.0, %v7680
        %v7682 = vpop.f32.mrb[0].mxu0
        %v7683 = vpop.f32.mrb[0].mxu0
        %v7684 = vadd.f32 0.0, %v7683
        %v7685 = vpop.f32.mrb[0].mxu0
        %7686 = vmatprep.mubr.bf16.mxu0 0
        %7687 = vmatmul.mubr.bf16.gmra.mrb[0].mxu0 %v6537
        %v7688 = vpop.f32.mrb[0].mxu0
        %v7689 = vadd.f32 0.0, %v7688
        %v7690 = vpop.f32.mrb[0].mxu0
        %v7691 = vpop.f32.mrb[0].mxu0
        %v7692 = vadd.f32 0.0, %v7691
        %v7693 = vpop.f32.mrb[0].mxu0
        %7694 = vmatprep.mubr.bf16.mxu0 0
        %7695 = vmatmul.mubr.bf16.gmra.mrb[0].mxu0 %v4285
        %v7696 = vpop.f32.mrb[0].mxu0
        %v7697 = vadd.f32 0.0, %v7696
        %v7698 = vpop.f32.mrb[0].mxu0
        %v7699 = vpop.f32.mrb[0].mxu0
        %v7700 = vadd.f32 0.0, %v7699
        %v7701 = vpop.f32.mrb[0].mxu0
        %7702 = vdwg.mxu0
        %v7703 = vadd.f32 %v7505, %v7577
        %v7704 = vadd.f32 %v7506, %v7580
        %v7705 = vadd.f32 %v7507, %v7585
        %v7706 = vadd.f32 %v7508, %v7588
        %v7707 = vadd.f32 %v7509, %v7593
        %v7708 = vadd.f32 %v7510, %v7596
        %v7709 = vadd.f32 %v7511, %v7601
        %v7710 = vadd.f32 %v7512, %v7604
        %v7711 = vadd.f32 %v7513, %v7609
        %v7712 = vadd.f32 %v7514, %v7612
        %v7713 = vadd.f32 %v7515, %v7617
        %v7714 = vadd.f32 %v7516, %v7620
        %v7715 = vadd.f32 %v7517, %v7625
        %v7716 = vadd.f32 %v7518, %v7628
        %v7717 = vadd.f32 %v7519, %v7633
        %v7718 = vadd.f32 %v7520, %v7636
        %v7719 = vadd.f32 %v7521, %v7641
        %v7720 = vadd.f32 %v7522, %v7644
        %v7721 = vadd.f32 %v7523, %v7649
        %v7722 = vadd.f32 %v7524, %v7652
        %v7723 = vadd.f32 %v7525, %v7657
        %v7724 = vadd.f32 %v7526, %v7660
        %v7725 = vadd.f32 %v7527, %v7665
        %v7726 = vadd.f32 %v7528, %v7668
        %v7727 = vadd.f32 %v7529, %v7673
        %v7728 = vadd.f32 %v7530, %v7676
        %v7729 = vadd.f32 %v7531, %v7681
        %v7730 = vadd.f32 %v7532, %v7684
        %v7731 = vadd.f32 %v7533, %v7689
        %v7732 = vadd.f32 %v7534, %v7692
        %v7733 = vadd.f32 %v7535, %v7697
        %v7734 = vadd.f32 %v7536, %v7700
        %s7735 = scalar_lea.vmem %s7, 19
        %v7736 = vld [vmem:[%s7735] sm:$0x1]
        %v7738 = vsel %vm693, %v7736, 0
        %7740 = vmatprep.subr.bf16.mxu0 0
        %7741 = vmatpush1.bf16.msra.mxu0 %v7738
        %7742 = vmatprep.subr.bf16.mxu0 0
        %7743 = vmatpush1.bf16.msra.mxu0 0
        %7744 = vmatprep.subr.bf16.mxu0 0
        %7745 = vmatpush1.bf16.msra.mxu0 0
        %7746 = vmatprep.subr.bf16.mxu0 0
        %7747 = vmatpush1.bf16.msra.mxu0 0
        %7748 = vmatprep.subr.bf16.mxu0 0
        %7749 = vmatpush1.bf16.msra.mxu0 0
        %7750 = vmatprep.subr.bf16.mxu0 0
        %7751 = vmatpush1.bf16.msra.mxu0 0
        %7752 = vmatprep.subr.bf16.mxu0 0
        %7753 = vmatpush1.bf16.msra.mxu0 0
        %7754 = vmatprep.subr.bf16.mxu0 0
        %7755 = vmatpush1.bf16.msra.mxu0 0
        %7756 = vmatprep.subr.bf16.mxu0 0
        %7757 = vmatpush1.bf16.msra.mxu0 0
        %7758 = vmatprep.subr.bf16.mxu0 0
        %7759 = vmatpush1.bf16.msra.mxu0 0
        %7760 = vmatprep.subr.bf16.mxu0 0
        %7761 = vmatpush1.bf16.msra.mxu0 0
        %7762 = vmatprep.subr.bf16.mxu0 0
        %7763 = vmatpush1.bf16.msra.mxu0 0
        %7764 = vmatprep.subr.bf16.mxu0 0
        %7765 = vmatpush1.bf16.msra.mxu0 0
        %7766 = vmatprep.subr.bf16.mxu0 0
        %7767 = vmatpush1.bf16.msra.mxu0 0
        %7768 = vmatprep.subr.bf16.mxu0 0
        %7769 = vmatpush1.bf16.msra.mxu0 0
        %7770 = vmatprep.subr.bf16.mxu0 0
        %7771 = vmatpush1.bf16.msra.mxu0 0
        %7772 = vmatprep.mubr.bf16.mxu0 0
        %7773 = vmatmul.mubr.bf16.gmra.mrb[0].mxu0 %v4637
        %v7774 = vpop.f32.mrb[0].mxu0
        %v7775 = vadd.f32 0.0, %v7774
        %v7776 = vpop.f32.mrb[0].mxu0
        %v7777 = vpop.f32.mrb[0].mxu0
        %v7778 = vadd.f32 0.0, %v7777
        %v7779 = vpop.f32.mrb[0].mxu0
        %7780 = vmatprep.mubr.bf16.mxu0 0
        %7781 = vmatmul.mubr.bf16.gmra.mrb[0].mxu0 %v4640
        %v7782 = vpop.f32.mrb[0].mxu0
        %v7783 = vadd.f32 0.0, %v7782
        %v7784 = vpop.f32.mrb[0].mxu0
        %v7785 = vpop.f32.mrb[0].mxu0
        %v7786 = vadd.f32 0.0, %v7785
        %v7787 = vpop.f32.mrb[0].mxu0
        %7788 = vmatprep.mubr.bf16.mxu0 0
        %7789 = vmatmul.mubr.bf16.gmra.mrb[0].mxu0 %v4643
        %v7790 = vpop.f32.mrb[0].mxu0
        %v7791 = vadd.f32 0.0, %v7790
        %v7792 = vpop.f32.mrb[0].mxu0
        %v7793 = vpop.f32.mrb[0].mxu0
        %v7794 = vadd.f32 0.0, %v7793
        %v7795 = vpop.f32.mrb[0].mxu0
        %7796 = vmatprep.mubr.bf16.mxu0 0
        %7797 = vmatmul.mubr.bf16.gmra.mrb[0].mxu0 %v4646
        %v7798 = vpop.f32.mrb[0].mxu0
        %v7799 = vadd.f32 0.0, %v7798
        %v7800 = vpop.f32.mrb[0].mxu0
        %v7801 = vpop.f32.mrb[0].mxu0
        %v7802 = vadd.f32 0.0, %v7801
        %v7803 = vpop.f32.mrb[0].mxu0
        %7804 = vmatprep.mubr.bf16.mxu0 0
        %7805 = vmatmul.mubr.bf16.gmra.mrb[0].mxu0 %v4649
        %v7806 = vpop.f32.mrb[0].mxu0
        %v7807 = vadd.f32 0.0, %v7806
        %v7808 = vpop.f32.mrb[0].mxu0
        %v7809 = vpop.f32.mrb[0].mxu0
        %v7810 = vadd.f32 0.0, %v7809
        %v7811 = vpop.f32.mrb[0].mxu0
        %7812 = vmatprep.mubr.bf16.mxu0 0
        %7813 = vmatmul.mubr.bf16.gmra.mrb[0].mxu0 %v4652
        %v7814 = vpop.f32.mrb[0].mxu0
        %v7815 = vadd.f32 0.0, %v7814
        %v7816 = vpop.f32.mrb[0].mxu0
        %v7817 = vpop.f32.mrb[0].mxu0
        %v7818 = vadd.f32 0.0, %v7817
        %v7819 = vpop.f32.mrb[0].mxu0
        %7820 = vmatprep.mubr.bf16.mxu0 0
        %7821 = vmatmul.mubr.bf16.gmra.mrb[0].mxu0 %v4655
        %v7822 = vpop.f32.mrb[0].mxu0
        %v7823 = vadd.f32 0.0, %v7822
        %v7824 = vpop.f32.mrb[0].mxu0
        %v7825 = vpop.f32.mrb[0].mxu0
        %v7826 = vadd.f32 0.0, %v7825
        %v7827 = vpop.f32.mrb[0].mxu0
        %7828 = vmatprep.mubr.bf16.mxu0 0
        %7829 = vmatmul.mubr.bf16.gmra.mrb[0].mxu0 %v4658
        %v7830 = vpop.f32.mrb[0].mxu0
        %v7831 = vadd.f32 0.0, %v7830
        %v7832 = vpop.f32.mrb[0].mxu0
        %v7833 = vpop.f32.mrb[0].mxu0
        %v7834 = vadd.f32 0.0, %v7833
        %v7835 = vpop.f32.mrb[0].mxu0
        %7836 = vmatprep.mubr.bf16.mxu0 0
        %7837 = vmatmul.mubr.bf16.gmra.mrb[0].mxu0 %v4661
        %v7838 = vpop.f32.mrb[0].mxu0
        %v7839 = vadd.f32 0.0, %v7838
        %v7840 = vpop.f32.mrb[0].mxu0
        %v7841 = vpop.f32.mrb[0].mxu0
        %v7842 = vadd.f32 0.0, %v7841
        %v7843 = vpop.f32.mrb[0].mxu0
        %7844 = vmatprep.mubr.bf16.mxu0 0
        %7845 = vmatmul.mubr.bf16.gmra.mrb[0].mxu0 %v4664
        %v7846 = vpop.f32.mrb[0].mxu0
        %v7847 = vadd.f32 0.0, %v7846
        %v7848 = vpop.f32.mrb[0].mxu0
        %v7849 = vpop.f32.mrb[0].mxu0
        %v7850 = vadd.f32 0.0, %v7849
        %v7851 = vpop.f32.mrb[0].mxu0
        %7852 = vmatprep.mubr.bf16.mxu0 0
        %7853 = vmatmul.mubr.bf16.gmra.mrb[0].mxu0 %v4667
        %v7854 = vpop.f32.mrb[0].mxu0
        %v7855 = vadd.f32 0.0, %v7854
        %v7856 = vpop.f32.mrb[0].mxu0
        %v7857 = vpop.f32.mrb[0].mxu0
        %v7858 = vadd.f32 0.0, %v7857
        %v7859 = vpop.f32.mrb[0].mxu0
        %7860 = vmatprep.mubr.bf16.mxu0 0
        %7861 = vmatmul.mubr.bf16.gmra.mrb[0].mxu0 %v4670
        %v7862 = vpop.f32.mrb[0].mxu0
        %v7863 = vadd.f32 0.0, %v7862
        %v7864 = vpop.f32.mrb[0].mxu0
        %v7865 = vpop.f32.mrb[0].mxu0
        %v7866 = vadd.f32 0.0, %v7865
        %v7867 = vpop.f32.mrb[0].mxu0
        %7868 = vmatprep.mubr.bf16.mxu0 0
        %7869 = vmatmul.mubr.bf16.gmra.mrb[0].mxu0 %v4673
        %v7870 = vpop.f32.mrb[0].mxu0
        %v7871 = vadd.f32 0.0, %v7870
        %v7872 = vpop.f32.mrb[0].mxu0
        %v7873 = vpop.f32.mrb[0].mxu0
        %v7874 = vadd.f32 0.0, %v7873
        %v7875 = vpop.f32.mrb[0].mxu0
        %7876 = vmatprep.mubr.bf16.mxu0 0
        %7877 = vmatmul.mubr.bf16.gmra.mrb[0].mxu0 %v5709
        %v7878 = vpop.f32.mrb[0].mxu0
        %v7879 = vadd.f32 0.0, %v7878
        %v7880 = vpop.f32.mrb[0].mxu0
        %v7881 = vpop.f32.mrb[0].mxu0
        %v7882 = vadd.f32 0.0, %v7881
        %v7883 = vpop.f32.mrb[0].mxu0
        %7884 = vmatprep.mubr.bf16.mxu0 0
        %7885 = vmatmul.mubr.bf16.gmra.mrb[0].mxu0 %v6745
        %v7886 = vpop.f32.mrb[0].mxu0
        %v7887 = vadd.f32 0.0, %v7886
        %v7888 = vpop.f32.mrb[0].mxu0
        %v7889 = vpop.f32.mrb[0].mxu0
        %v7890 = vadd.f32 0.0, %v7889
        %v7891 = vpop.f32.mrb[0].mxu0
        %7892 = vmatprep.mubr.bf16.mxu0 0
        %7893 = vmatmul.mubr.bf16.gmra.mrb[0].mxu0 %v4631
        %v7894 = vpop.f32.mrb[0].mxu0
        %v7895 = vadd.f32 0.0, %v7894
        %v7896 = vpop.f32.mrb[0].mxu0
        %v7897 = vpop.f32.mrb[0].mxu0
        %v7898 = vadd.f32 0.0, %v7897
        %v7899 = vpop.f32.mrb[0].mxu0
        %7900 = vdwg.mxu0
        %v7901 = vadd.f32 %v7703, %v7775
        %v7902 = vadd.f32 %v7704, %v7778
        %v7903 = vadd.f32 %v7705, %v7783
        %v7904 = vadd.f32 %v7706, %v7786
        %v7905 = vadd.f32 %v7707, %v7791
        %v7906 = vadd.f32 %v7708, %v7794
        %v7907 = vadd.f32 %v7709, %v7799
        %v7908 = vadd.f32 %v7710, %v7802
        %v7909 = vadd.f32 %v7711, %v7807
        %v7910 = vadd.f32 %v7712, %v7810
        %v7911 = vadd.f32 %v7713, %v7815
        %v7912 = vadd.f32 %v7714, %v7818
        %v7913 = vadd.f32 %v7715, %v7823
        %v7914 = vadd.f32 %v7716, %v7826
        %v7915 = vadd.f32 %v7717, %v7831
        %v7916 = vadd.f32 %v7718, %v7834
        %v7917 = vadd.f32 %v7719, %v7839
        %v7918 = vadd.f32 %v7720, %v7842
        %v7919 = vadd.f32 %v7721, %v7847
        %v7920 = vadd.f32 %v7722, %v7850
        %v7921 = vadd.f32 %v7723, %v7855
        %v7922 = vadd.f32 %v7724, %v7858
        %v7923 = vadd.f32 %v7725, %v7863
        %v7924 = vadd.f32 %v7726, %v7866
        %v7925 = vadd.f32 %v7727, %v7871
        %v7926 = vadd.f32 %v7728, %v7874
        %v7927 = vadd.f32 %v7729, %v7879
        %v7928 = vadd.f32 %v7730, %v7882
        %v7929 = vadd.f32 %v7731, %v7887
        %v7930 = vadd.f32 %v7732, %v7890
        %v7931 = vadd.f32 %v7733, %v7895
        %v7932 = vadd.f32 %v7734, %v7898
        %s7933 = scalar_lea.vmem %s7, 20
        %v7934 = vld [vmem:[%s7933] sm:$0x1]
        %v7936 = vsel %vm693, %v7934, 0
        %7938 = vmatprep.subr.bf16.mxu0 0
        %7939 = vmatpush1.bf16.msra.mxu0 %v7936
        %7940 = vmatprep.subr.bf16.mxu0 0
        %7941 = vmatpush1.bf16.msra.mxu0 0
        %7942 = vmatprep.subr.bf16.mxu0 0
        %7943 = vmatpush1.bf16.msra.mxu0 0
        %7944 = vmatprep.subr.bf16.mxu0 0
        %7945 = vmatpush1.bf16.msra.mxu0 0
        %7946 = vmatprep.subr.bf16.mxu0 0
        %7947 = vmatpush1.bf16.msra.mxu0 0
        %7948 = vmatprep.subr.bf16.mxu0 0
        %7949 = vmatpush1.bf16.msra.mxu0 0
        %7950 = vmatprep.subr.bf16.mxu0 0
        %7951 = vmatpush1.bf16.msra.mxu0 0
        %7952 = vmatprep.subr.bf16.mxu0 0
        %7953 = vmatpush1.bf16.msra.mxu0 0
        %7954 = vmatprep.subr.bf16.mxu0 0
        %7955 = vmatpush1.bf16.msra.mxu0 0
        %7956 = vmatprep.subr.bf16.mxu0 0
        %7957 = vmatpush1.bf16.msra.mxu0 0
        %7958 = vmatprep.subr.bf16.mxu0 0
        %7959 = vmatpush1.bf16.msra.mxu0 0
        %7960 = vmatprep.subr.bf16.mxu0 0
        %7961 = vmatpush1.bf16.msra.mxu0 0
        %7962 = vmatprep.subr.bf16.mxu0 0
        %7963 = vmatpush1.bf16.msra.mxu0 0
        %7964 = vmatprep.subr.bf16.mxu0 0
        %7965 = vmatpush1.bf16.msra.mxu0 0
        %7966 = vmatprep.subr.bf16.mxu0 0
        %7967 = vmatpush1.bf16.msra.mxu0 0
        %7968 = vmatprep.subr.bf16.mxu0 0
        %7969 = vmatpush1.bf16.msra.mxu0 0
        %7970 = vmatprep.mubr.bf16.mxu0 0
        %7971 = vmatmul.mubr.bf16.gmra.mrb[0].mxu0 %v3358
        %v7972 = vpop.f32.mrb[0].mxu0
        %v7973 = vadd.f32 0.0, %v7972
        %v7974 = vpop.f32.mrb[0].mxu0
        %v7975 = vpop.f32.mrb[0].mxu0
        %v7976 = vadd.f32 0.0, %v7975
        %v7977 = vpop.f32.mrb[0].mxu0
        %7978 = vmatprep.mubr.bf16.mxu0 0
        %7979 = vmatmul.mubr.bf16.gmra.mrb[0].mxu0 %v3361
        %v7980 = vpop.f32.mrb[0].mxu0
        %v7981 = vadd.f32 0.0, %v7980
        %v7982 = vpop.f32.mrb[0].mxu0
        %v7983 = vpop.f32.mrb[0].mxu0
        %v7984 = vadd.f32 0.0, %v7983
        %v7985 = vpop.f32.mrb[0].mxu0
        %7986 = vmatprep.mubr.bf16.mxu0 0
        %7987 = vmatmul.mubr.bf16.gmra.mrb[0].mxu0 %v3364
        %v7988 = vpop.f32.mrb[0].mxu0
        %v7989 = vadd.f32 0.0, %v7988
        %v7990 = vpop.f32.mrb[0].mxu0
        %v7991 = vpop.f32.mrb[0].mxu0
        %v7992 = vadd.f32 0.0, %v7991
        %v7993 = vpop.f32.mrb[0].mxu0
        %7994 = vmatprep.mubr.bf16.mxu0 0
        %7995 = vmatmul.mubr.bf16.gmra.mrb[0].mxu0 %v3367
        %v7996 = vpop.f32.mrb[0].mxu0
        %v7997 = vadd.f32 0.0, %v7996
        %v7998 = vpop.f32.mrb[0].mxu0
        %v7999 = vpop.f32.mrb[0].mxu0
        %v8000 = vadd.f32 0.0, %v7999
        %v8001 = vpop.f32.mrb[0].mxu0
        %8002 = vmatprep.mubr.bf16.mxu0 0
        %8003 = vmatmul.mubr.bf16.gmra.mrb[0].mxu0 %v3370
        %v8004 = vpop.f32.mrb[0].mxu0
        %v8005 = vadd.f32 0.0, %v8004
        %v8006 = vpop.f32.mrb[0].mxu0
        %v8007 = vpop.f32.mrb[0].mxu0
        %v8008 = vadd.f32 0.0, %v8007
        %v8009 = vpop.f32.mrb[0].mxu0
        %8010 = vmatprep.mubr.bf16.mxu0 0
        %8011 = vmatmul.mubr.bf16.gmra.mrb[0].mxu0 %v3373
        %v8012 = vpop.f32.mrb[0].mxu0
        %v8013 = vadd.f32 0.0, %v8012
        %v8014 = vpop.f32.mrb[0].mxu0
        %v8015 = vpop.f32.mrb[0].mxu0
        %v8016 = vadd.f32 0.0, %v8015
        %v8017 = vpop.f32.mrb[0].mxu0
        %8018 = vmatprep.mubr.bf16.mxu0 0
        %8019 = vmatmul.mubr.bf16.gmra.mrb[0].mxu0 %v3376
        %v8020 = vpop.f32.mrb[0].mxu0
        %v8021 = vadd.f32 0.0, %v8020
        %v8022 = vpop.f32.mrb[0].mxu0
        %v8023 = vpop.f32.mrb[0].mxu0
        %v8024 = vadd.f32 0.0, %v8023
        %v8025 = vpop.f32.mrb[0].mxu0
        %8026 = vmatprep.mubr.bf16.mxu0 0
        %8027 = vmatmul.mubr.bf16.gmra.mrb[0].mxu0 %v3379
        %v8028 = vpop.f32.mrb[0].mxu0
        %v8029 = vadd.f32 0.0, %v8028
        %v8030 = vpop.f32.mrb[0].mxu0
        %v8031 = vpop.f32.mrb[0].mxu0
        %v8032 = vadd.f32 0.0, %v8031
        %v8033 = vpop.f32.mrb[0].mxu0
        %8034 = vmatprep.mubr.bf16.mxu0 0
        %8035 = vmatmul.mubr.bf16.gmra.mrb[0].mxu0 %v3382
        %v8036 = vpop.f32.mrb[0].mxu0
        %v8037 = vadd.f32 0.0, %v8036
        %v8038 = vpop.f32.mrb[0].mxu0
        %v8039 = vpop.f32.mrb[0].mxu0
        %v8040 = vadd.f32 0.0, %v8039
        %v8041 = vpop.f32.mrb[0].mxu0
        %8042 = vmatprep.mubr.bf16.mxu0 0
        %8043 = vmatmul.mubr.bf16.gmra.mrb[0].mxu0 %v3385
        %v8044 = vpop.f32.mrb[0].mxu0
        %v8045 = vadd.f32 0.0, %v8044
        %v8046 = vpop.f32.mrb[0].mxu0
        %v8047 = vpop.f32.mrb[0].mxu0
        %v8048 = vadd.f32 0.0, %v8047
        %v8049 = vpop.f32.mrb[0].mxu0
        %8050 = vmatprep.mubr.bf16.mxu0 0
        %8051 = vmatmul.mubr.bf16.gmra.mrb[0].mxu0 %v3388
        %v8052 = vpop.f32.mrb[0].mxu0
        %v8053 = vadd.f32 0.0, %v8052
        %v8054 = vpop.f32.mrb[0].mxu0
        %v8055 = vpop.f32.mrb[0].mxu0
        %v8056 = vadd.f32 0.0, %v8055
        %v8057 = vpop.f32.mrb[0].mxu0
        %8058 = vmatprep.mubr.bf16.mxu0 0
        %8059 = vmatmul.mubr.bf16.gmra.mrb[0].mxu0 %v3391
        %v8060 = vpop.f32.mrb[0].mxu0
        %v8061 = vadd.f32 0.0, %v8060
        %v8062 = vpop.f32.mrb[0].mxu0
        %v8063 = vpop.f32.mrb[0].mxu0
        %v8064 = vadd.f32 0.0, %v8063
        %v8065 = vpop.f32.mrb[0].mxu0
        %8066 = vmatprep.mubr.bf16.mxu0 0
        %8067 = vmatmul.mubr.bf16.gmra.mrb[0].mxu0 %v4883
        %v8068 = vpop.f32.mrb[0].mxu0
        %v8069 = vadd.f32 0.0, %v8068
        %v8070 = vpop.f32.mrb[0].mxu0
        %v8071 = vpop.f32.mrb[0].mxu0
        %v8072 = vadd.f32 0.0, %v8071
        %v8073 = vpop.f32.mrb[0].mxu0
        %8074 = vmatprep.mubr.bf16.mxu0 0
        %8075 = vmatmul.mubr.bf16.gmra.mrb[0].mxu0 %v5919
        %v8076 = vpop.f32.mrb[0].mxu0
        %v8077 = vadd.f32 0.0, %v8076
        %v8078 = vpop.f32.mrb[0].mxu0
        %v8079 = vpop.f32.mrb[0].mxu0
        %v8080 = vadd.f32 0.0, %v8079
        %v8081 = vpop.f32.mrb[0].mxu0
        %8082 = vmatprep.mubr.bf16.mxu0 0
        %8083 = vmatmul.mubr.bf16.gmra.mrb[0].mxu0 %v3349
        %v8084 = vpop.f32.mrb[0].mxu0
        %v8085 = vadd.f32 0.0, %v8084
        %v8086 = vpop.f32.mrb[0].mxu0
        %v8087 = vpop.f32.mrb[0].mxu0
        %v8088 = vadd.f32 0.0, %v8087
        %v8089 = vpop.f32.mrb[0].mxu0
        %8090 = vmatprep.mubr.bf16.mxu0 0
        %8091 = vmatmul.mubr.bf16.gmra.mrb[0].mxu0 %v3349
        %v8092 = vpop.f32.mrb[0].mxu0
        %v8093 = vadd.f32 0.0, %v8092
        %v8094 = vpop.f32.mrb[0].mxu0
        %v8095 = vpop.f32.mrb[0].mxu0
        %v8096 = vadd.f32 0.0, %v8095
        %v8097 = vpop.f32.mrb[0].mxu0
        %8098 = vdwg.mxu0
        %v8099 = vadd.f32 %v7901, %v7973
        %v8100 = vadd.f32 %v7902, %v7976
        %v8101 = vadd.f32 %v7903, %v7981
        %v8102 = vadd.f32 %v7904, %v7984
        %v8103 = vadd.f32 %v7905, %v7989
        %v8104 = vadd.f32 %v7906, %v7992
        %v8105 = vadd.f32 %v7907, %v7997
        %v8106 = vadd.f32 %v7908, %v8000
        %v8107 = vadd.f32 %v7909, %v8005
        %v8108 = vadd.f32 %v7910, %v8008
        %v8109 = vadd.f32 %v7911, %v8013
        %v8110 = vadd.f32 %v7912, %v8016
        %v8111 = vadd.f32 %v7913, %v8021
        %v8112 = vadd.f32 %v7914, %v8024
        %v8113 = vadd.f32 %v7915, %v8029
        %v8114 = vadd.f32 %v7916, %v8032
        %v8115 = vadd.f32 %v7917, %v8037
        %v8116 = vadd.f32 %v7918, %v8040
        %v8117 = vadd.f32 %v7919, %v8045
        %v8118 = vadd.f32 %v7920, %v8048
        %v8119 = vadd.f32 %v7921, %v8053
        %v8120 = vadd.f32 %v7922, %v8056
        %v8121 = vadd.f32 %v7923, %v8061
        %v8122 = vadd.f32 %v7924, %v8064
        %v8123 = vadd.f32 %v7925, %v8069
        %v8124 = vadd.f32 %v7926, %v8072
        %v8125 = vadd.f32 %v7927, %v8077
        %v8126 = vadd.f32 %v7928, %v8080
        %v8127 = vadd.f32 %v7929, %v8085
        %v8128 = vadd.f32 %v7930, %v8088
        %v8129 = vadd.f32 %v7931, %v8093
        %v8130 = vadd.f32 %v7932, %v8096
        %s8131 = scalar_lea.vmem %s7, 21
        %v8132 = vld [vmem:[%s8131] sm:$0x1]
        %v8134 = vsel %vm693, %v8132, 0
        %8136 = vmatprep.subr.bf16.mxu0 0
        %8137 = vmatpush1.bf16.msra.mxu0 %v8134
        %8138 = vmatprep.subr.bf16.mxu0 0
        %8139 = vmatpush1.bf16.msra.mxu0 0
        %8140 = vmatprep.subr.bf16.mxu0 0
        %8141 = vmatpush1.bf16.msra.mxu0 0
        %8142 = vmatprep.subr.bf16.mxu0 0
        %8143 = vmatpush1.bf16.msra.mxu0 0
        %8144 = vmatprep.subr.bf16.mxu0 0
        %8145 = vmatpush1.bf16.msra.mxu0 0
        %8146 = vmatprep.subr.bf16.mxu0 0
        %8147 = vmatpush1.bf16.msra.mxu0 0
        %8148 = vmatprep.subr.bf16.mxu0 0
        %8149 = vmatpush1.bf16.msra.mxu0 0
        %8150 = vmatprep.subr.bf16.mxu0 0
        %8151 = vmatpush1.bf16.msra.mxu0 0
        %8152 = vmatprep.subr.bf16.mxu0 0
        %8153 = vmatpush1.bf16.msra.mxu0 0
        %8154 = vmatprep.subr.bf16.mxu0 0
        %8155 = vmatpush1.bf16.msra.mxu0 0
        %8156 = vmatprep.subr.bf16.mxu0 0
        %8157 = vmatpush1.bf16.msra.mxu0 0
        %8158 = vmatprep.subr.bf16.mxu0 0
        %8159 = vmatpush1.bf16.msra.mxu0 0
        %8160 = vmatprep.subr.bf16.mxu0 0
        %8161 = vmatpush1.bf16.msra.mxu0 0
        %8162 = vmatprep.subr.bf16.mxu0 0
        %8163 = vmatpush1.bf16.msra.mxu0 0
        %8164 = vmatprep.subr.bf16.mxu0 0
        %8165 = vmatpush1.bf16.msra.mxu0 0
        %8166 = vmatprep.subr.bf16.mxu0 0
        %8167 = vmatpush1.bf16.msra.mxu0 0
        %8168 = vmatprep.mubr.bf16.mxu0 0
        %8169 = vmatmul.mubr.bf16.gmra.mrb[0].mxu0 %v3698
        %v8170 = vpop.f32.mrb[0].mxu0
        %v8171 = vadd.f32 0.0, %v8170
        %v8172 = vpop.f32.mrb[0].mxu0
        %v8173 = vpop.f32.mrb[0].mxu0
        %v8174 = vadd.f32 0.0, %v8173
        %v8175 = vpop.f32.mrb[0].mxu0
        %8176 = vmatprep.mubr.bf16.mxu0 0
        %8177 = vmatmul.mubr.bf16.gmra.mrb[0].mxu0 %v3701
        %v8178 = vpop.f32.mrb[0].mxu0
        %v8179 = vadd.f32 0.0, %v8178
        %v8180 = vpop.f32.mrb[0].mxu0
        %v8181 = vpop.f32.mrb[0].mxu0
        %v8182 = vadd.f32 0.0, %v8181
        %v8183 = vpop.f32.mrb[0].mxu0
        %8184 = vmatprep.mubr.bf16.mxu0 0
        %8185 = vmatmul.mubr.bf16.gmra.mrb[0].mxu0 %v3704
        %v8186 = vpop.f32.mrb[0].mxu0
        %v8187 = vadd.f32 0.0, %v8186
        %v8188 = vpop.f32.mrb[0].mxu0
        %v8189 = vpop.f32.mrb[0].mxu0
        %v8190 = vadd.f32 0.0, %v8189
        %v8191 = vpop.f32.mrb[0].mxu0
        %8192 = vmatprep.mubr.bf16.mxu0 0
        %8193 = vmatmul.mubr.bf16.gmra.mrb[0].mxu0 %v3707
        %v8194 = vpop.f32.mrb[0].mxu0
        %v8195 = vadd.f32 0.0, %v8194
        %v8196 = vpop.f32.mrb[0].mxu0
        %v8197 = vpop.f32.mrb[0].mxu0
        %v8198 = vadd.f32 0.0, %v8197
        %v8199 = vpop.f32.mrb[0].mxu0
        %8200 = vmatprep.mubr.bf16.mxu0 0
        %8201 = vmatmul.mubr.bf16.gmra.mrb[0].mxu0 %v3710
        %v8202 = vpop.f32.mrb[0].mxu0
        %v8203 = vadd.f32 0.0, %v8202
        %v8204 = vpop.f32.mrb[0].mxu0
        %v8205 = vpop.f32.mrb[0].mxu0
        %v8206 = vadd.f32 0.0, %v8205
        %v8207 = vpop.f32.mrb[0].mxu0
        %8208 = vmatprep.mubr.bf16.mxu0 0
        %8209 = vmatmul.mubr.bf16.gmra.mrb[0].mxu0 %v3713
        %v8210 = vpop.f32.mrb[0].mxu0
        %v8211 = vadd.f32 0.0, %v8210
        %v8212 = vpop.f32.mrb[0].mxu0
        %v8213 = vpop.f32.mrb[0].mxu0
        %v8214 = vadd.f32 0.0, %v8213
        %v8215 = vpop.f32.mrb[0].mxu0
        %8216 = vmatprep.mubr.bf16.mxu0 0
        %8217 = vmatmul.mubr.bf16.gmra.mrb[0].mxu0 %v3716
        %v8218 = vpop.f32.mrb[0].mxu0
        %v8219 = vadd.f32 0.0, %v8218
        %v8220 = vpop.f32.mrb[0].mxu0
        %v8221 = vpop.f32.mrb[0].mxu0
        %v8222 = vadd.f32 0.0, %v8221
        %v8223 = vpop.f32.mrb[0].mxu0
        %8224 = vmatprep.mubr.bf16.mxu0 0
        %8225 = vmatmul.mubr.bf16.gmra.mrb[0].mxu0 %v3719
        %v8226 = vpop.f32.mrb[0].mxu0
        %v8227 = vadd.f32 0.0, %v8226
        %v8228 = vpop.f32.mrb[0].mxu0
        %v8229 = vpop.f32.mrb[0].mxu0
        %v8230 = vadd.f32 0.0, %v8229
        %v8231 = vpop.f32.mrb[0].mxu0
        %8232 = vmatprep.mubr.bf16.mxu0 0
        %8233 = vmatmul.mubr.bf16.gmra.mrb[0].mxu0 %v3722
        %v8234 = vpop.f32.mrb[0].mxu0
        %v8235 = vadd.f32 0.0, %v8234
        %v8236 = vpop.f32.mrb[0].mxu0
        %v8237 = vpop.f32.mrb[0].mxu0
        %v8238 = vadd.f32 0.0, %v8237
        %v8239 = vpop.f32.mrb[0].mxu0
        %8240 = vmatprep.mubr.bf16.mxu0 0
        %8241 = vmatmul.mubr.bf16.gmra.mrb[0].mxu0 %v3725
        %v8242 = vpop.f32.mrb[0].mxu0
        %v8243 = vadd.f32 0.0, %v8242
        %v8244 = vpop.f32.mrb[0].mxu0
        %v8245 = vpop.f32.mrb[0].mxu0
        %v8246 = vadd.f32 0.0, %v8245
        %v8247 = vpop.f32.mrb[0].mxu0
        %8248 = vmatprep.mubr.bf16.mxu0 0
        %8249 = vmatmul.mubr.bf16.gmra.mrb[0].mxu0 %v3728
        %v8250 = vpop.f32.mrb[0].mxu0
        %v8251 = vadd.f32 0.0, %v8250
        %v8252 = vpop.f32.mrb[0].mxu0
        %v8253 = vpop.f32.mrb[0].mxu0
        %v8254 = vadd.f32 0.0, %v8253
        %v8255 = vpop.f32.mrb[0].mxu0
        %8256 = vmatprep.mubr.bf16.mxu0 0
        %8257 = vmatmul.mubr.bf16.gmra.mrb[0].mxu0 %v3731
        %v8258 = vpop.f32.mrb[0].mxu0
        %v8259 = vadd.f32 0.0, %v8258
        %v8260 = vpop.f32.mrb[0].mxu0
        %v8261 = vpop.f32.mrb[0].mxu0
        %v8262 = vadd.f32 0.0, %v8261
        %v8263 = vpop.f32.mrb[0].mxu0
        %8264 = vmatprep.mubr.bf16.mxu0 0
        %8265 = vmatmul.mubr.bf16.gmra.mrb[0].mxu0 %v5091
        %v8266 = vpop.f32.mrb[0].mxu0
        %v8267 = vadd.f32 0.0, %v8266
        %v8268 = vpop.f32.mrb[0].mxu0
        %v8269 = vpop.f32.mrb[0].mxu0
        %v8270 = vadd.f32 0.0, %v8269
        %v8271 = vpop.f32.mrb[0].mxu0
        %8272 = vmatprep.mubr.bf16.mxu0 0
        %8273 = vmatmul.mubr.bf16.gmra.mrb[0].mxu0 %v6127
        %v8274 = vpop.f32.mrb[0].mxu0
        %v8275 = vadd.f32 0.0, %v8274
        %v8276 = vpop.f32.mrb[0].mxu0
        %v8277 = vpop.f32.mrb[0].mxu0
        %v8278 = vadd.f32 0.0, %v8277
        %v8279 = vpop.f32.mrb[0].mxu0
        %8280 = vmatprep.mubr.bf16.mxu0 0
        %8281 = vmatmul.mubr.bf16.gmra.mrb[0].mxu0 %v3689
        %v8282 = vpop.f32.mrb[0].mxu0
        %v8283 = vadd.f32 0.0, %v8282
        %v8284 = vpop.f32.mrb[0].mxu0
        %v8285 = vpop.f32.mrb[0].mxu0
        %v8286 = vadd.f32 0.0, %v8285
        %v8287 = vpop.f32.mrb[0].mxu0
        %8288 = vmatprep.mubr.bf16.mxu0 0
        %8289 = vmatmul.mubr.bf16.gmra.mrb[0].mxu0 %v3689
        %v8290 = vpop.f32.mrb[0].mxu0
        %v8291 = vadd.f32 0.0, %v8290
        %v8292 = vpop.f32.mrb[0].mxu0
        %v8293 = vpop.f32.mrb[0].mxu0
        %v8294 = vadd.f32 0.0, %v8293
        %v8295 = vpop.f32.mrb[0].mxu0
        %8296 = vdwg.mxu0
        %v8297 = vadd.f32 %v8099, %v8171
        %v8298 = vadd.f32 %v8100, %v8174
        %v8299 = vadd.f32 %v8101, %v8179
        %v8300 = vadd.f32 %v8102, %v8182
        %v8301 = vadd.f32 %v8103, %v8187
        %v8302 = vadd.f32 %v8104, %v8190
        %v8303 = vadd.f32 %v8105, %v8195
        %v8304 = vadd.f32 %v8106, %v8198
        %v8305 = vadd.f32 %v8107, %v8203
        %v8306 = vadd.f32 %v8108, %v8206
        %v8307 = vadd.f32 %v8109, %v8211
        %v8308 = vadd.f32 %v8110, %v8214
        %v8309 = vadd.f32 %v8111, %v8219
        %v8310 = vadd.f32 %v8112, %v8222
        %v8311 = vadd.f32 %v8113, %v8227
        %v8312 = vadd.f32 %v8114, %v8230
        %v8313 = vadd.f32 %v8115, %v8235
        %v8314 = vadd.f32 %v8116, %v8238
        %v8315 = vadd.f32 %v8117, %v8243
        %v8316 = vadd.f32 %v8118, %v8246
        %v8317 = vadd.f32 %v8119, %v8251
        %v8318 = vadd.f32 %v8120, %v8254
        %v8319 = vadd.f32 %v8121, %v8259
        %v8320 = vadd.f32 %v8122, %v8262
        %v8321 = vadd.f32 %v8123, %v8267
        %v8322 = vadd.f32 %v8124, %v8270
        %v8323 = vadd.f32 %v8125, %v8275
        %v8324 = vadd.f32 %v8126, %v8278
        %v8325 = vadd.f32 %v8127, %v8283
        %v8326 = vadd.f32 %v8128, %v8286
        %v8327 = vadd.f32 %v8129, %v8291
        %v8328 = vadd.f32 %v8130, %v8294
        %s8329 = scalar_lea.vmem %s7, 22
        %v8330 = vld [vmem:[%s8329] sm:$0x1]
        %v8332 = vsel %vm693, %v8330, 0
        %8334 = vmatprep.subr.bf16.mxu0 0
        %8335 = vmatpush1.bf16.msra.mxu0 %v8332
        %8336 = vmatprep.subr.bf16.mxu0 0
        %8337 = vmatpush1.bf16.msra.mxu0 0
        %8338 = vmatprep.subr.bf16.mxu0 0
        %8339 = vmatpush1.bf16.msra.mxu0 0
        %8340 = vmatprep.subr.bf16.mxu0 0
        %8341 = vmatpush1.bf16.msra.mxu0 0
        %8342 = vmatprep.subr.bf16.mxu0 0
        %8343 = vmatpush1.bf16.msra.mxu0 0
        %8344 = vmatprep.subr.bf16.mxu0 0
        %8345 = vmatpush1.bf16.msra.mxu0 0
        %8346 = vmatprep.subr.bf16.mxu0 0
        %8347 = vmatpush1.bf16.msra.mxu0 0
        %8348 = vmatprep.subr.bf16.mxu0 0
        %8349 = vmatpush1.bf16.msra.mxu0 0
        %8350 = vmatprep.subr.bf16.mxu0 0
        %8351 = vmatpush1.bf16.msra.mxu0 0
        %8352 = vmatprep.subr.bf16.mxu0 0
        %8353 = vmatpush1.bf16.msra.mxu0 0
        %8354 = vmatprep.subr.bf16.mxu0 0
        %8355 = vmatpush1.bf16.msra.mxu0 0
        %8356 = vmatprep.subr.bf16.mxu0 0
        %8357 = vmatpush1.bf16.msra.mxu0 0
        %8358 = vmatprep.subr.bf16.mxu0 0
        %8359 = vmatpush1.bf16.msra.mxu0 0
        %8360 = vmatprep.subr.bf16.mxu0 0
        %8361 = vmatpush1.bf16.msra.mxu0 0
        %8362 = vmatprep.subr.bf16.mxu0 0
        %8363 = vmatpush1.bf16.msra.mxu0 0
        %8364 = vmatprep.subr.bf16.mxu0 0
        %8365 = vmatpush1.bf16.msra.mxu0 0
        %8366 = vmatprep.mubr.bf16.mxu0 0
        %8367 = vmatmul.mubr.bf16.gmra.mrb[0].mxu0 %v3954
        %v8368 = vpop.f32.mrb[0].mxu0
        %v8369 = vadd.f32 0.0, %v8368
        %v8370 = vpop.f32.mrb[0].mxu0
        %v8371 = vpop.f32.mrb[0].mxu0
        %v8372 = vadd.f32 0.0, %v8371
        %v8373 = vpop.f32.mrb[0].mxu0
        %8374 = vmatprep.mubr.bf16.mxu0 0
        %8375 = vmatmul.mubr.bf16.gmra.mrb[0].mxu0 %v3957
        %v8376 = vpop.f32.mrb[0].mxu0
        %v8377 = vadd.f32 0.0, %v8376
        %v8378 = vpop.f32.mrb[0].mxu0
        %v8379 = vpop.f32.mrb[0].mxu0
        %v8380 = vadd.f32 0.0, %v8379
        %v8381 = vpop.f32.mrb[0].mxu0
        %8382 = vmatprep.mubr.bf16.mxu0 0
        %8383 = vmatmul.mubr.bf16.gmra.mrb[0].mxu0 %v3960
        %v8384 = vpop.f32.mrb[0].mxu0
        %v8385 = vadd.f32 0.0, %v8384
        %v8386 = vpop.f32.mrb[0].mxu0
        %v8387 = vpop.f32.mrb[0].mxu0
        %v8388 = vadd.f32 0.0, %v8387
        %v8389 = vpop.f32.mrb[0].mxu0
        %8390 = vmatprep.mubr.bf16.mxu0 0
        %8391 = vmatmul.mubr.bf16.gmra.mrb[0].mxu0 %v3963
        %v8392 = vpop.f32.mrb[0].mxu0
        %v8393 = vadd.f32 0.0, %v8392
        %v8394 = vpop.f32.mrb[0].mxu0
        %v8395 = vpop.f32.mrb[0].mxu0
        %v8396 = vadd.f32 0.0, %v8395
        %v8397 = vpop.f32.mrb[0].mxu0
        %8398 = vmatprep.mubr.bf16.mxu0 0
        %8399 = vmatmul.mubr.bf16.gmra.mrb[0].mxu0 %v3966
        %v8400 = vpop.f32.mrb[0].mxu0
        %v8401 = vadd.f32 0.0, %v8400
        %v8402 = vpop.f32.mrb[0].mxu0
        %v8403 = vpop.f32.mrb[0].mxu0
        %v8404 = vadd.f32 0.0, %v8403
        %v8405 = vpop.f32.mrb[0].mxu0
        %8406 = vmatprep.mubr.bf16.mxu0 0
        %8407 = vmatmul.mubr.bf16.gmra.mrb[0].mxu0 %v3969
        %v8408 = vpop.f32.mrb[0].mxu0
        %v8409 = vadd.f32 0.0, %v8408
        %v8410 = vpop.f32.mrb[0].mxu0
        %v8411 = vpop.f32.mrb[0].mxu0
        %v8412 = vadd.f32 0.0, %v8411
        %v8413 = vpop.f32.mrb[0].mxu0
        %8414 = vmatprep.mubr.bf16.mxu0 0
        %8415 = vmatmul.mubr.bf16.gmra.mrb[0].mxu0 %v3972
        %v8416 = vpop.f32.mrb[0].mxu0
        %v8417 = vadd.f32 0.0, %v8416
        %v8418 = vpop.f32.mrb[0].mxu0
        %v8419 = vpop.f32.mrb[0].mxu0
        %v8420 = vadd.f32 0.0, %v8419
        %v8421 = vpop.f32.mrb[0].mxu0
        %8422 = vmatprep.mubr.bf16.mxu0 0
        %8423 = vmatmul.mubr.bf16.gmra.mrb[0].mxu0 %v3975
        %v8424 = vpop.f32.mrb[0].mxu0
        %v8425 = vadd.f32 0.0, %v8424
        %v8426 = vpop.f32.mrb[0].mxu0
        %v8427 = vpop.f32.mrb[0].mxu0
        %v8428 = vadd.f32 0.0, %v8427
        %v8429 = vpop.f32.mrb[0].mxu0
        %8430 = vmatprep.mubr.bf16.mxu0 0
        %8431 = vmatmul.mubr.bf16.gmra.mrb[0].mxu0 %v3978
        %v8432 = vpop.f32.mrb[0].mxu0
        %v8433 = vadd.f32 0.0, %v8432
        %v8434 = vpop.f32.mrb[0].mxu0
        %v8435 = vpop.f32.mrb[0].mxu0
        %v8436 = vadd.f32 0.0, %v8435
        %v8437 = vpop.f32.mrb[0].mxu0
        %8438 = vmatprep.mubr.bf16.mxu0 0
        %8439 = vmatmul.mubr.bf16.gmra.mrb[0].mxu0 %v3981
        %v8440 = vpop.f32.mrb[0].mxu0
        %v8441 = vadd.f32 0.0, %v8440
        %v8442 = vpop.f32.mrb[0].mxu0
        %v8443 = vpop.f32.mrb[0].mxu0
        %v8444 = vadd.f32 0.0, %v8443
        %v8445 = vpop.f32.mrb[0].mxu0
        %8446 = vmatprep.mubr.bf16.mxu0 0
        %8447 = vmatmul.mubr.bf16.gmra.mrb[0].mxu0 %v3984
        %v8448 = vpop.f32.mrb[0].mxu0
        %v8449 = vadd.f32 0.0, %v8448
        %v8450 = vpop.f32.mrb[0].mxu0
        %v8451 = vpop.f32.mrb[0].mxu0
        %v8452 = vadd.f32 0.0, %v8451
        %v8453 = vpop.f32.mrb[0].mxu0
        %8454 = vmatprep.mubr.bf16.mxu0 0
        %8455 = vmatmul.mubr.bf16.gmra.mrb[0].mxu0 %v3987
        %v8456 = vpop.f32.mrb[0].mxu0
        %v8457 = vadd.f32 0.0, %v8456
        %v8458 = vpop.f32.mrb[0].mxu0
        %v8459 = vpop.f32.mrb[0].mxu0
        %v8460 = vadd.f32 0.0, %v8459
        %v8461 = vpop.f32.mrb[0].mxu0
        %8462 = vmatprep.mubr.bf16.mxu0 0
        %8463 = vmatmul.mubr.bf16.gmra.mrb[0].mxu0 %v5293
        %v8464 = vpop.f32.mrb[0].mxu0
        %v8465 = vadd.f32 0.0, %v8464
        %v8466 = vpop.f32.mrb[0].mxu0
        %v8467 = vpop.f32.mrb[0].mxu0
        %v8468 = vadd.f32 0.0, %v8467
        %v8469 = vpop.f32.mrb[0].mxu0
        %8470 = vmatprep.mubr.bf16.mxu0 0
        %8471 = vmatmul.mubr.bf16.gmra.mrb[0].mxu0 %v6329
        %v8472 = vpop.f32.mrb[0].mxu0
        %v8473 = vadd.f32 0.0, %v8472
        %v8474 = vpop.f32.mrb[0].mxu0
        %v8475 = vpop.f32.mrb[0].mxu0
        %v8476 = vadd.f32 0.0, %v8475
        %v8477 = vpop.f32.mrb[0].mxu0
        %8478 = vmatprep.mubr.bf16.mxu0 0
        %8479 = vmatmul.mubr.bf16.gmra.mrb[0].mxu0 %v3945
        %v8480 = vpop.f32.mrb[0].mxu0
        %v8481 = vadd.f32 0.0, %v8480
        %v8482 = vpop.f32.mrb[0].mxu0
        %v8483 = vpop.f32.mrb[0].mxu0
        %v8484 = vadd.f32 0.0, %v8483
        %v8485 = vpop.f32.mrb[0].mxu0
        %8486 = vmatprep.mubr.bf16.mxu0 0
        %8487 = vmatmul.mubr.bf16.gmra.mrb[0].mxu0 %v3945
        %v8488 = vpop.f32.mrb[0].mxu0
        %v8489 = vadd.f32 0.0, %v8488
        %v8490 = vpop.f32.mrb[0].mxu0
        %v8491 = vpop.f32.mrb[0].mxu0
        %v8492 = vadd.f32 0.0, %v8491
        %v8493 = vpop.f32.mrb[0].mxu0
        %8494 = vdwg.mxu0
        %v8495 = vadd.f32 %v8297, %v8369
        %v8496 = vadd.f32 %v8298, %v8372
        %v8497 = vadd.f32 %v8299, %v8377
        %v8498 = vadd.f32 %v8300, %v8380
        %v8499 = vadd.f32 %v8301, %v8385
        %v8500 = vadd.f32 %v8302, %v8388
        %v8501 = vadd.f32 %v8303, %v8393
        %v8502 = vadd.f32 %v8304, %v8396
        %v8503 = vadd.f32 %v8305, %v8401
        %v8504 = vadd.f32 %v8306, %v8404
        %v8505 = vadd.f32 %v8307, %v8409
        %v8506 = vadd.f32 %v8308, %v8412
        %v8507 = vadd.f32 %v8309, %v8417
        %v8508 = vadd.f32 %v8310, %v8420
        %v8509 = vadd.f32 %v8311, %v8425
        %v8510 = vadd.f32 %v8312, %v8428
        %v8511 = vadd.f32 %v8313, %v8433
        %v8512 = vadd.f32 %v8314, %v8436
        %v8513 = vadd.f32 %v8315, %v8441
        %v8514 = vadd.f32 %v8316, %v8444
        %v8515 = vadd.f32 %v8317, %v8449
        %v8516 = vadd.f32 %v8318, %v8452
        %v8517 = vadd.f32 %v8319, %v8457
        %v8518 = vadd.f32 %v8320, %v8460
        %v8519 = vadd.f32 %v8321, %v8465
        %v8520 = vadd.f32 %v8322, %v8468
        %v8521 = vadd.f32 %v8323, %v8473
        %v8522 = vadd.f32 %v8324, %v8476
        %v8523 = vadd.f32 %v8325, %v8481
        %v8524 = vadd.f32 %v8326, %v8484
        %v8525 = vadd.f32 %v8327, %v8489
        %v8526 = vadd.f32 %v8328, %v8492
        %s8527 = scalar_lea.vmem %s7, 23
        %v8528 = vld [vmem:[%s8527] sm:$0x1]
        %v8530 = vsel %vm693, %v8528, 0
        %8532 = vmatprep.subr.bf16.mxu0 0
        %8533 = vmatpush1.bf16.msra.mxu0 %v8530
        %8534 = vmatprep.subr.bf16.mxu0 0
        %8535 = vmatpush1.bf16.msra.mxu0 0
        %8536 = vmatprep.subr.bf16.mxu0 0
        %8537 = vmatpush1.bf16.msra.mxu0 0
        %8538 = vmatprep.subr.bf16.mxu0 0
        %8539 = vmatpush1.bf16.msra.mxu0 0
        %8540 = vmatprep.subr.bf16.mxu0 0
        %8541 = vmatpush1.bf16.msra.mxu0 0
        %8542 = vmatprep.subr.bf16.mxu0 0
        %8543 = vmatpush1.bf16.msra.mxu0 0
        %8544 = vmatprep.subr.bf16.mxu0 0
        %8545 = vmatpush1.bf16.msra.mxu0 0
        %8546 = vmatprep.subr.bf16.mxu0 0
        %8547 = vmatpush1.bf16.msra.mxu0 0
        %8548 = vmatprep.subr.bf16.mxu0 0
        %8549 = vmatpush1.bf16.msra.mxu0 0
        %8550 = vmatprep.subr.bf16.mxu0 0
        %8551 = vmatpush1.bf16.msra.mxu0 0
        %8552 = vmatprep.subr.bf16.mxu0 0
        %8553 = vmatpush1.bf16.msra.mxu0 0
        %8554 = vmatprep.subr.bf16.mxu0 0
        %8555 = vmatpush1.bf16.msra.mxu0 0
        %8556 = vmatprep.subr.bf16.mxu0 0
        %8557 = vmatpush1.bf16.msra.mxu0 0
        %8558 = vmatprep.subr.bf16.mxu0 0
        %8559 = vmatpush1.bf16.msra.mxu0 0
        %8560 = vmatprep.subr.bf16.mxu0 0
        %8561 = vmatpush1.bf16.msra.mxu0 0
        %8562 = vmatprep.subr.bf16.mxu0 0
        %8563 = vmatpush1.bf16.msra.mxu0 0
        %8564 = vmatprep.mubr.bf16.mxu0 0
        %8565 = vmatmul.mubr.bf16.gmra.mrb[0].mxu0 %v4294
        %v8566 = vpop.f32.mrb[0].mxu0
        %v8567 = vadd.f32 0.0, %v8566
        %v8568 = vpop.f32.mrb[0].mxu0
        %v8569 = vpop.f32.mrb[0].mxu0
        %v8570 = vadd.f32 0.0, %v8569
        %v8571 = vpop.f32.mrb[0].mxu0
        %8572 = vmatprep.mubr.bf16.mxu0 0
        %8573 = vmatmul.mubr.bf16.gmra.mrb[0].mxu0 %v4297
        %v8574 = vpop.f32.mrb[0].mxu0
        %v8575 = vadd.f32 0.0, %v8574
        %v8576 = vpop.f32.mrb[0].mxu0
        %v8577 = vpop.f32.mrb[0].mxu0
        %v8578 = vadd.f32 0.0, %v8577
        %v8579 = vpop.f32.mrb[0].mxu0
        %8580 = vmatprep.mubr.bf16.mxu0 0
        %8581 = vmatmul.mubr.bf16.gmra.mrb[0].mxu0 %v4300
        %v8582 = vpop.f32.mrb[0].mxu0
        %v8583 = vadd.f32 0.0, %v8582
        %v8584 = vpop.f32.mrb[0].mxu0
        %v8585 = vpop.f32.mrb[0].mxu0
        %v8586 = vadd.f32 0.0, %v8585
        %v8587 = vpop.f32.mrb[0].mxu0
        %8588 = vmatprep.mubr.bf16.mxu0 0
        %8589 = vmatmul.mubr.bf16.gmra.mrb[0].mxu0 %v4303
        %v8590 = vpop.f32.mrb[0].mxu0
        %v8591 = vadd.f32 0.0, %v8590
        %v8592 = vpop.f32.mrb[0].mxu0
        %v8593 = vpop.f32.mrb[0].mxu0
        %v8594 = vadd.f32 0.0, %v8593
        %v8595 = vpop.f32.mrb[0].mxu0
        %8596 = vmatprep.mubr.bf16.mxu0 0
        %8597 = vmatmul.mubr.bf16.gmra.mrb[0].mxu0 %v4306
        %v8598 = vpop.f32.mrb[0].mxu0
        %v8599 = vadd.f32 0.0, %v8598
        %v8600 = vpop.f32.mrb[0].mxu0
        %v8601 = vpop.f32.mrb[0].mxu0
        %v8602 = vadd.f32 0.0, %v8601
        %v8603 = vpop.f32.mrb[0].mxu0
        %8604 = vmatprep.mubr.bf16.mxu0 0
        %8605 = vmatmul.mubr.bf16.gmra.mrb[0].mxu0 %v4309
        %v8606 = vpop.f32.mrb[0].mxu0
        %v8607 = vadd.f32 0.0, %v8606
        %v8608 = vpop.f32.mrb[0].mxu0
        %v8609 = vpop.f32.mrb[0].mxu0
        %v8610 = vadd.f32 0.0, %v8609
        %v8611 = vpop.f32.mrb[0].mxu0
        %8612 = vmatprep.mubr.bf16.mxu0 0
        %8613 = vmatmul.mubr.bf16.gmra.mrb[0].mxu0 %v4312
        %v8614 = vpop.f32.mrb[0].mxu0
        %v8615 = vadd.f32 0.0, %v8614
        %v8616 = vpop.f32.mrb[0].mxu0
        %v8617 = vpop.f32.mrb[0].mxu0
        %v8618 = vadd.f32 0.0, %v8617
        %v8619 = vpop.f32.mrb[0].mxu0
        %8620 = vmatprep.mubr.bf16.mxu0 0
        %8621 = vmatmul.mubr.bf16.gmra.mrb[0].mxu0 %v4315
        %v8622 = vpop.f32.mrb[0].mxu0
        %v8623 = vadd.f32 0.0, %v8622
        %v8624 = vpop.f32.mrb[0].mxu0
        %v8625 = vpop.f32.mrb[0].mxu0
        %v8626 = vadd.f32 0.0, %v8625
        %v8627 = vpop.f32.mrb[0].mxu0
        %8628 = vmatprep.mubr.bf16.mxu0 0
        %8629 = vmatmul.mubr.bf16.gmra.mrb[0].mxu0 %v4318
        %v8630 = vpop.f32.mrb[0].mxu0
        %v8631 = vadd.f32 0.0, %v8630
        %v8632 = vpop.f32.mrb[0].mxu0
        %v8633 = vpop.f32.mrb[0].mxu0
        %v8634 = vadd.f32 0.0, %v8633
        %v8635 = vpop.f32.mrb[0].mxu0
        %8636 = vmatprep.mubr.bf16.mxu0 0
        %8637 = vmatmul.mubr.bf16.gmra.mrb[0].mxu0 %v4321
        %v8638 = vpop.f32.mrb[0].mxu0
        %v8639 = vadd.f32 0.0, %v8638
        %v8640 = vpop.f32.mrb[0].mxu0
        %v8641 = vpop.f32.mrb[0].mxu0
        %v8642 = vadd.f32 0.0, %v8641
        %v8643 = vpop.f32.mrb[0].mxu0
        %8644 = vmatprep.mubr.bf16.mxu0 0
        %8645 = vmatmul.mubr.bf16.gmra.mrb[0].mxu0 %v4324
        %v8646 = vpop.f32.mrb[0].mxu0
        %v8647 = vadd.f32 0.0, %v8646
        %v8648 = vpop.f32.mrb[0].mxu0
        %v8649 = vpop.f32.mrb[0].mxu0
        %v8650 = vadd.f32 0.0, %v8649
        %v8651 = vpop.f32.mrb[0].mxu0
        %8652 = vmatprep.mubr.bf16.mxu0 0
        %8653 = vmatmul.mubr.bf16.gmra.mrb[0].mxu0 %v4327
        %v8654 = vpop.f32.mrb[0].mxu0
        %v8655 = vadd.f32 0.0, %v8654
        %v8656 = vpop.f32.mrb[0].mxu0
        %v8657 = vpop.f32.mrb[0].mxu0
        %v8658 = vadd.f32 0.0, %v8657
        %v8659 = vpop.f32.mrb[0].mxu0
        %8660 = vmatprep.mubr.bf16.mxu0 0
        %8661 = vmatmul.mubr.bf16.gmra.mrb[0].mxu0 %v5501
        %v8662 = vpop.f32.mrb[0].mxu0
        %v8663 = vadd.f32 0.0, %v8662
        %v8664 = vpop.f32.mrb[0].mxu0
        %v8665 = vpop.f32.mrb[0].mxu0
        %v8666 = vadd.f32 0.0, %v8665
        %v8667 = vpop.f32.mrb[0].mxu0
        %8668 = vmatprep.mubr.bf16.mxu0 0
        %8669 = vmatmul.mubr.bf16.gmra.mrb[0].mxu0 %v6537
        %v8670 = vpop.f32.mrb[0].mxu0
        %v8671 = vadd.f32 0.0, %v8670
        %v8672 = vpop.f32.mrb[0].mxu0
        %v8673 = vpop.f32.mrb[0].mxu0
        %v8674 = vadd.f32 0.0, %v8673
        %v8675 = vpop.f32.mrb[0].mxu0
        %8676 = vmatprep.mubr.bf16.mxu0 0
        %8677 = vmatmul.mubr.bf16.gmra.mrb[0].mxu0 %v4285
        %v8678 = vpop.f32.mrb[0].mxu0
        %v8679 = vadd.f32 0.0, %v8678
        %v8680 = vpop.f32.mrb[0].mxu0
        %v8681 = vpop.f32.mrb[0].mxu0
        %v8682 = vadd.f32 0.0, %v8681
        %v8683 = vpop.f32.mrb[0].mxu0
        %8684 = vmatprep.mubr.bf16.mxu0 0
        %8685 = vmatmul.mubr.bf16.gmra.mrb[0].mxu0 %v4285
        %v8686 = vpop.f32.mrb[0].mxu0
        %v8687 = vadd.f32 0.0, %v8686
        %v8688 = vpop.f32.mrb[0].mxu0
        %v8689 = vpop.f32.mrb[0].mxu0
        %v8690 = vadd.f32 0.0, %v8689
        %v8691 = vpop.f32.mrb[0].mxu0
        %8692 = vdwg.mxu0
        %v8693 = vadd.f32 %v8495, %v8567
        %v8694 = vadd.f32 %v8496, %v8570
        %v8695 = vadd.f32 %v8497, %v8575
        %v8696 = vadd.f32 %v8498, %v8578
        %v8697 = vadd.f32 %v8499, %v8583
        %v8698 = vadd.f32 %v8500, %v8586
        %v8699 = vadd.f32 %v8501, %v8591
        %v8700 = vadd.f32 %v8502, %v8594
        %v8701 = vadd.f32 %v8503, %v8599
        %v8702 = vadd.f32 %v8504, %v8602
        %v8703 = vadd.f32 %v8505, %v8607
        %v8704 = vadd.f32 %v8506, %v8610
        %v8705 = vadd.f32 %v8507, %v8615
        %v8706 = vadd.f32 %v8508, %v8618
        %v8707 = vadd.f32 %v8509, %v8623
        %v8708 = vadd.f32 %v8510, %v8626
        %v8709 = vadd.f32 %v8511, %v8631
        %v8710 = vadd.f32 %v8512, %v8634
        %v8711 = vadd.f32 %v8513, %v8639
        %v8712 = vadd.f32 %v8514, %v8642
        %v8713 = vadd.f32 %v8515, %v8647
        %v8714 = vadd.f32 %v8516, %v8650
        %v8715 = vadd.f32 %v8517, %v8655
        %v8716 = vadd.f32 %v8518, %v8658
        %v8717 = vadd.f32 %v8519, %v8663
        %v8718 = vadd.f32 %v8520, %v8666
        %v8719 = vadd.f32 %v8521, %v8671
        %v8720 = vadd.f32 %v8522, %v8674
        %v8721 = vadd.f32 %v8523, %v8679
        %v8722 = vadd.f32 %v8524, %v8682
        %v8723 = vadd.f32 %v8525, %v8687
        %v8724 = vadd.f32 %v8526, %v8690
        %s8725 = scalar_lea.vmem %s7, 24
        %v8726 = vld [vmem:[%s8725] sm:$0x1]
        %v8728 = vsel %vm693, %v8726, 0
        %8730 = vmatprep.subr.bf16.mxu0 0
        %8731 = vmatpush1.bf16.msra.mxu0 %v8728
        %8732 = vmatprep.subr.bf16.mxu0 0
        %8733 = vmatpush1.bf16.msra.mxu0 0
        %8734 = vmatprep.subr.bf16.mxu0 0
        %8735 = vmatpush1.bf16.msra.mxu0 0
        %8736 = vmatprep.subr.bf16.mxu0 0
        %8737 = vmatpush1.bf16.msra.mxu0 0
        %8738 = vmatprep.subr.bf16.mxu0 0
        %8739 = vmatpush1.bf16.msra.mxu0 0
        %8740 = vmatprep.subr.bf16.mxu0 0
        %8741 = vmatpush1.bf16.msra.mxu0 0
        %8742 = vmatprep.subr.bf16.mxu0 0
        %8743 = vmatpush1.bf16.msra.mxu0 0
        %8744 = vmatprep.subr.bf16.mxu0 0
        %8745 = vmatpush1.bf16.msra.mxu0 0
        %8746 = vmatprep.subr.bf16.mxu0 0
        %8747 = vmatpush1.bf16.msra.mxu0 0
        %8748 = vmatprep.subr.bf16.mxu0 0
        %8749 = vmatpush1.bf16.msra.mxu0 0
        %8750 = vmatprep.subr.bf16.mxu0 0
        %8751 = vmatpush1.bf16.msra.mxu0 0
        %8752 = vmatprep.subr.bf16.mxu0 0
        %8753 = vmatpush1.bf16.msra.mxu0 0
        %8754 = vmatprep.subr.bf16.mxu0 0
        %8755 = vmatpush1.bf16.msra.mxu0 0
        %8756 = vmatprep.subr.bf16.mxu0 0
        %8757 = vmatpush1.bf16.msra.mxu0 0
        %8758 = vmatprep.subr.bf16.mxu0 0
        %8759 = vmatpush1.bf16.msra.mxu0 0
        %8760 = vmatprep.subr.bf16.mxu0 0
        %8761 = vmatpush1.bf16.msra.mxu0 0
        %8762 = vmatprep.mubr.bf16.mxu0 0
        %8763 = vmatmul.mubr.bf16.gmra.mrb[0].mxu0 %v4640
        %v8764 = vpop.f32.mrb[0].mxu0
        %v8765 = vadd.f32 0.0, %v8764
        %v8766 = vpop.f32.mrb[0].mxu0
        %v8767 = vpop.f32.mrb[0].mxu0
        %v8768 = vadd.f32 0.0, %v8767
        %v8769 = vpop.f32.mrb[0].mxu0
        %8770 = vmatprep.mubr.bf16.mxu0 0
        %8771 = vmatmul.mubr.bf16.gmra.mrb[0].mxu0 %v4643
        %v8772 = vpop.f32.mrb[0].mxu0
        %v8773 = vadd.f32 0.0, %v8772
        %v8774 = vpop.f32.mrb[0].mxu0
        %v8775 = vpop.f32.mrb[0].mxu0
        %v8776 = vadd.f32 0.0, %v8775
        %v8777 = vpop.f32.mrb[0].mxu0
        %8778 = vmatprep.mubr.bf16.mxu0 0
        %8779 = vmatmul.mubr.bf16.gmra.mrb[0].mxu0 %v4646
        %v8780 = vpop.f32.mrb[0].mxu0
        %v8781 = vadd.f32 0.0, %v8780
        %v8782 = vpop.f32.mrb[0].mxu0
        %v8783 = vpop.f32.mrb[0].mxu0
        %v8784 = vadd.f32 0.0, %v8783
        %v8785 = vpop.f32.mrb[0].mxu0
        %8786 = vmatprep.mubr.bf16.mxu0 0
        %8787 = vmatmul.mubr.bf16.gmra.mrb[0].mxu0 %v4649
        %v8788 = vpop.f32.mrb[0].mxu0
        %v8789 = vadd.f32 0.0, %v8788
        %v8790 = vpop.f32.mrb[0].mxu0
        %v8791 = vpop.f32.mrb[0].mxu0
        %v8792 = vadd.f32 0.0, %v8791
        %v8793 = vpop.f32.mrb[0].mxu0
        %8794 = vmatprep.mubr.bf16.mxu0 0
        %8795 = vmatmul.mubr.bf16.gmra.mrb[0].mxu0 %v4652
        %v8796 = vpop.f32.mrb[0].mxu0
        %v8797 = vadd.f32 0.0, %v8796
        %v8798 = vpop.f32.mrb[0].mxu0
        %v8799 = vpop.f32.mrb[0].mxu0
        %v8800 = vadd.f32 0.0, %v8799
        %v8801 = vpop.f32.mrb[0].mxu0
        %8802 = vmatprep.mubr.bf16.mxu0 0
        %8803 = vmatmul.mubr.bf16.gmra.mrb[0].mxu0 %v4655
        %v8804 = vpop.f32.mrb[0].mxu0
        %v8805 = vadd.f32 0.0, %v8804
        %v8806 = vpop.f32.mrb[0].mxu0
        %v8807 = vpop.f32.mrb[0].mxu0
        %v8808 = vadd.f32 0.0, %v8807
        %v8809 = vpop.f32.mrb[0].mxu0
        %8810 = vmatprep.mubr.bf16.mxu0 0
        %8811 = vmatmul.mubr.bf16.gmra.mrb[0].mxu0 %v4658
        %v8812 = vpop.f32.mrb[0].mxu0
        %v8813 = vadd.f32 0.0, %v8812
        %v8814 = vpop.f32.mrb[0].mxu0
        %v8815 = vpop.f32.mrb[0].mxu0
        %v8816 = vadd.f32 0.0, %v8815
        %v8817 = vpop.f32.mrb[0].mxu0
        %8818 = vmatprep.mubr.bf16.mxu0 0
        %8819 = vmatmul.mubr.bf16.gmra.mrb[0].mxu0 %v4661
        %v8820 = vpop.f32.mrb[0].mxu0
        %v8821 = vadd.f32 0.0, %v8820
        %v8822 = vpop.f32.mrb[0].mxu0
        %v8823 = vpop.f32.mrb[0].mxu0
        %v8824 = vadd.f32 0.0, %v8823
        %v8825 = vpop.f32.mrb[0].mxu0
        %8826 = vmatprep.mubr.bf16.mxu0 0
        %8827 = vmatmul.mubr.bf16.gmra.mrb[0].mxu0 %v4664
        %v8828 = vpop.f32.mrb[0].mxu0
        %v8829 = vadd.f32 0.0, %v8828
        %v8830 = vpop.f32.mrb[0].mxu0
        %v8831 = vpop.f32.mrb[0].mxu0
        %v8832 = vadd.f32 0.0, %v8831
        %v8833 = vpop.f32.mrb[0].mxu0
        %8834 = vmatprep.mubr.bf16.mxu0 0
        %8835 = vmatmul.mubr.bf16.gmra.mrb[0].mxu0 %v4667
        %v8836 = vpop.f32.mrb[0].mxu0
        %v8837 = vadd.f32 0.0, %v8836
        %v8838 = vpop.f32.mrb[0].mxu0
        %v8839 = vpop.f32.mrb[0].mxu0
        %v8840 = vadd.f32 0.0, %v8839
        %v8841 = vpop.f32.mrb[0].mxu0
        %8842 = vmatprep.mubr.bf16.mxu0 0
        %8843 = vmatmul.mubr.bf16.gmra.mrb[0].mxu0 %v4670
        %v8844 = vpop.f32.mrb[0].mxu0
        %v8845 = vadd.f32 0.0, %v8844
        %v8846 = vpop.f32.mrb[0].mxu0
        %v8847 = vpop.f32.mrb[0].mxu0
        %v8848 = vadd.f32 0.0, %v8847
        %v8849 = vpop.f32.mrb[0].mxu0
        %8850 = vmatprep.mubr.bf16.mxu0 0
        %8851 = vmatmul.mubr.bf16.gmra.mrb[0].mxu0 %v4673
        %v8852 = vpop.f32.mrb[0].mxu0
        %v8853 = vadd.f32 0.0, %v8852
        %v8854 = vpop.f32.mrb[0].mxu0
        %v8855 = vpop.f32.mrb[0].mxu0
        %v8856 = vadd.f32 0.0, %v8855
        %v8857 = vpop.f32.mrb[0].mxu0
        %8858 = vmatprep.mubr.bf16.mxu0 0
        %8859 = vmatmul.mubr.bf16.gmra.mrb[0].mxu0 %v5709
        %v8860 = vpop.f32.mrb[0].mxu0
        %v8861 = vadd.f32 0.0, %v8860
        %v8862 = vpop.f32.mrb[0].mxu0
        %v8863 = vpop.f32.mrb[0].mxu0
        %v8864 = vadd.f32 0.0, %v8863
        %v8865 = vpop.f32.mrb[0].mxu0
        %8866 = vmatprep.mubr.bf16.mxu0 0
        %8867 = vmatmul.mubr.bf16.gmra.mrb[0].mxu0 %v6745
        %v8868 = vpop.f32.mrb[0].mxu0
        %v8869 = vadd.f32 0.0, %v8868
        %v8870 = vpop.f32.mrb[0].mxu0
        %v8871 = vpop.f32.mrb[0].mxu0
        %v8872 = vadd.f32 0.0, %v8871
        %v8873 = vpop.f32.mrb[0].mxu0
        %8874 = vmatprep.mubr.bf16.mxu0 0
        %8875 = vmatmul.mubr.bf16.gmra.mrb[0].mxu0 %v4631
        %v8876 = vpop.f32.mrb[0].mxu0
        %v8877 = vadd.f32 0.0, %v8876
        %v8878 = vpop.f32.mrb[0].mxu0
        %v8879 = vpop.f32.mrb[0].mxu0
        %v8880 = vadd.f32 0.0, %v8879
        %v8881 = vpop.f32.mrb[0].mxu0
        %8882 = vmatprep.mubr.bf16.mxu0 0
        %8883 = vmatmul.mubr.bf16.gmra.mrb[0].mxu0 %v4631
        %v8884 = vpop.f32.mrb[0].mxu0
        %v8885 = vadd.f32 0.0, %v8884
        %v8886 = vpop.f32.mrb[0].mxu0
        %v8887 = vpop.f32.mrb[0].mxu0
        %v8888 = vadd.f32 0.0, %v8887
        %v8889 = vpop.f32.mrb[0].mxu0
        %8890 = vdwg.mxu0
        %v8891 = vadd.f32 %v8693, %v8765
        %v8892 = vadd.f32 %v8694, %v8768
        %v8893 = vadd.f32 %v8695, %v8773
        %v8894 = vadd.f32 %v8696, %v8776
        %v8895 = vadd.f32 %v8697, %v8781
        %v8896 = vadd.f32 %v8698, %v8784
        %v8897 = vadd.f32 %v8699, %v8789
        %v8898 = vadd.f32 %v8700, %v8792
        %v8899 = vadd.f32 %v8701, %v8797
        %v8900 = vadd.f32 %v8702, %v8800
        %v8901 = vadd.f32 %v8703, %v8805
        %v8902 = vadd.f32 %v8704, %v8808
        %v8903 = vadd.f32 %v8705, %v8813
        %v8904 = vadd.f32 %v8706, %v8816
        %v8905 = vadd.f32 %v8707, %v8821
        %v8906 = vadd.f32 %v8708, %v8824
        %v8907 = vadd.f32 %v8709, %v8829
        %v8908 = vadd.f32 %v8710, %v8832
        %v8909 = vadd.f32 %v8711, %v8837
        %v8910 = vadd.f32 %v8712, %v8840
        %v8911 = vadd.f32 %v8713, %v8845
        %v8912 = vadd.f32 %v8714, %v8848
        %v8913 = vadd.f32 %v8715, %v8853
        %v8914 = vadd.f32 %v8716, %v8856
        %v8915 = vadd.f32 %v8717, %v8861
        %v8916 = vadd.f32 %v8718, %v8864
        %v8917 = vadd.f32 %v8719, %v8869
        %v8918 = vadd.f32 %v8720, %v8872
        %v8919 = vadd.f32 %v8721, %v8877
        %v8920 = vadd.f32 %v8722, %v8880
        %v8921 = vadd.f32 %v8723, %v8885
        %v8922 = vadd.f32 %v8724, %v8888
        %v8954 = vrot.slane -inf, 1
        %v8955 = vsel %vm1442, %v8954, %v8954
        %v8956 = vrot.slane %v359, 1
        %v8957 = vrot.slane %v360, 1
        %v8958 = vsel %vm1442, %v8956, %v8957
        %v8959 = vrot.slane %v361, 1
        %v8960 = vrot.slane %v362, 1
        %v8961 = vsel %vm1442, %v8959, %v8960
        %v8962 = vrot.slane %v363, 1
        %v8963 = vrot.slane %v364, 1
        %v8964 = vsel %vm1442, %v8962, %v8963
        %v8965 = vrot.slane %v365, 1
        %v8966 = vrot.slane %v366, 1
        %v8967 = vsel %vm1442, %v8965, %v8966
        %v8968 = vrot.slane %v367, 1
        %v8969 = vrot.slane %v368, 1
        %v8970 = vsel %vm1442, %v8968, %v8969
        %v8971 = vrot.slane %v369, 1
        %v8972 = vrot.slane %v370, 1
        %v8973 = vsel %vm1442, %v8971, %v8972
        %v8974 = vrot.slane %v371, 1
        %v8975 = vrot.slane %v372, 1
        %v8976 = vsel %vm1442, %v8974, %v8975
        %v8977 = vrot.slane %v373, 1
        %v8978 = vrot.slane %v374, 1
        %v8979 = vsel %vm1442, %v8977, %v8978
        %v8980 = vrot.slane %v375, 1
        %v8981 = vrot.slane %v376, 1
        %v8982 = vsel %vm1442, %v8980, %v8981
        %v8983 = vrot.slane %v377, 1
        %v8984 = vrot.slane %v378, 1
        %v8985 = vsel %vm1442, %v8983, %v8984
        %v8986 = vrot.slane %v379, 1
        %v8987 = vrot.slane %v380, 1
        %v8988 = vsel %vm1442, %v8986, %v8987
        %v8989 = vrot.slane %v381, 1
        %v8990 = vrot.slane %v382, 1
        %v8991 = vsel %vm1442, %v8989, %v8990
        %v8992 = vrot.slane %v383, 1
        %v8993 = vrot.slane %v384, 1
        %v8994 = vsel %vm1442, %v8992, %v8993
        %v8995 = vrot.slane %v385, 1
        %v8996 = vrot.slane %v386, 1
        %v8997 = vsel %vm1442, %v8995, %v8996
        %v8998 = vrot.slane %v387, 1
        %v8999 = vrot.slane %v388, 1
        %v9000 = vsel %vm1442, %v8998, %v8999
        %v9048 = vmax.f32 %v359, %v8958
        %v9049 = vmax.f32 %v360, %v8957
        %v9050 = vmax.f32 %v361, %v8961
        %v9051 = vmax.f32 %v362, %v8960
        %v9052 = vmax.f32 %v363, %v8964
        %v9053 = vmax.f32 %v364, %v8963
        %v9054 = vmax.f32 %v365, %v8967
        %v9055 = vmax.f32 %v366, %v8966
        %v9056 = vmax.f32 %v367, %v8970
        %v9057 = vmax.f32 %v368, %v8969
        %v9058 = vmax.f32 %v369, %v8973
        %v9059 = vmax.f32 %v370, %v8972
        %v9060 = vmax.f32 %v371, %v8976
        %v9061 = vmax.f32 %v372, %v8975
        %v9062 = vmax.f32 %v373, %v8979
        %v9063 = vmax.f32 %v374, %v8978
        %v9064 = vmax.f32 %v375, %v8982
        %v9065 = vmax.f32 %v376, %v8981
        %v9066 = vmax.f32 %v377, %v8985
        %v9067 = vmax.f32 %v378, %v8984
        %v9068 = vmax.f32 %v379, %v8988
        %v9069 = vmax.f32 %v380, %v8987
        %v9070 = vmax.f32 %v381, %v8991
        %v9071 = vmax.f32 %v382, %v8990
        %v9072 = vmax.f32 %v383, %v8994
        %v9073 = vmax.f32 %v384, %v8993
        %v9074 = vmax.f32 %v385, %v8997
        %v9075 = vmax.f32 %v386, %v8996
        %v9076 = vmax.f32 %v387, %v9000
        %v9077 = vmax.f32 %v388, %v8999
        %v9078 = vrot.slane -inf, 2
        %v9079 = vsel %vm4525, %v9078, %v9078
        %v9080 = vrot.slane %v359, 2
        %v9081 = vrot.slane %v360, 2
        %v9082 = vsel %vm4525, %v9080, %v9081
        %v9083 = vsel %vm4525, %v9081, %v9078
        %v9084 = vrot.slane %v361, 2
        %v9085 = vrot.slane %v362, 2
        %v9086 = vsel %vm4525, %v9084, %v9085
        %v9087 = vsel %vm4525, %v9085, %v9078
        %v9088 = vrot.slane %v363, 2
        %v9089 = vrot.slane %v364, 2
        %v9090 = vsel %vm4525, %v9088, %v9089
        %v9091 = vsel %vm4525, %v9089, %v9078
        %v9092 = vrot.slane %v365, 2
        %v9093 = vrot.slane %v366, 2
        %v9094 = vsel %vm4525, %v9092, %v9093
        %v9095 = vsel %vm4525, %v9093, %v9078
        %v9096 = vrot.slane %v367, 2
        %v9097 = vrot.slane %v368, 2
        %v9098 = vsel %vm4525, %v9096, %v9097
        %v9099 = vsel %vm4525, %v9097, %v9078
        %v9100 = vrot.slane %v369, 2
        %v9101 = vrot.slane %v370, 2
        %v9102 = vsel %vm4525, %v9100, %v9101
        %v9103 = vsel %vm4525, %v9101, %v9078
        %v9104 = vrot.slane %v371, 2
        %v9105 = vrot.slane %v372, 2
        %v9106 = vsel %vm4525, %v9104, %v9105
        %v9107 = vsel %vm4525, %v9105, %v9078
        %v9108 = vrot.slane %v373, 2
        %v9109 = vrot.slane %v374, 2
        %v9110 = vsel %vm4525, %v9108, %v9109
        %v9111 = vsel %vm4525, %v9109, %v9078
        %v9112 = vrot.slane %v375, 2
        %v9113 = vrot.slane %v376, 2
        %v9114 = vsel %vm4525, %v9112, %v9113
        %v9115 = vsel %vm4525, %v9113, %v9078
        %v9116 = vrot.slane %v377, 2
        %v9117 = vrot.slane %v378, 2
        %v9118 = vsel %vm4525, %v9116, %v9117
        %v9119 = vsel %vm4525, %v9117, %v9078
        %v9120 = vrot.slane %v379, 2
        %v9121 = vrot.slane %v380, 2
        %v9122 = vsel %vm4525, %v9120, %v9121
        %v9123 = vsel %vm4525, %v9121, %v9078
        %v9124 = vrot.slane %v381, 2
        %v9125 = vrot.slane %v382, 2
        %v9126 = vsel %vm4525, %v9124, %v9125
        %v9127 = vsel %vm4525, %v9125, %v9078
        %v9128 = vrot.slane %v383, 2
        %v9129 = vrot.slane %v384, 2
        %v9130 = vsel %vm4525, %v9128, %v9129
        %v9131 = vsel %vm4525, %v9129, %v9078
        %v9132 = vrot.slane %v385, 2
        %v9133 = vrot.slane %v386, 2
        %v9134 = vsel %vm4525, %v9132, %v9133
        %v9135 = vsel %vm4525, %v9133, %v9078
        %v9136 = vrot.slane %v387, 2
        %v9137 = vrot.slane %v388, 2
        %v9138 = vsel %vm4525, %v9136, %v9137
        %v9139 = vsel %vm4525, %v9137, %v9078
        %v9187 = vmax.f32 %v8954, %v9078
        %v9188 = vmax.f32 %v8955, %v9079
        %v9189 = vmax.f32 %v8954, %v9079
        %v9190 = vmax.f32 %v8956, %v9080
        %v9191 = vmax.f32 %v9048, %v9082
        %v9192 = vmax.f32 %v9049, %v9083
        %v9193 = vmax.f32 %v8959, %v9084
        %v9194 = vmax.f32 %v9050, %v9086
        %v9195 = vmax.f32 %v9051, %v9087
        %v9196 = vmax.f32 %v8962, %v9088
        %v9197 = vmax.f32 %v9052, %v9090
        %v9198 = vmax.f32 %v9053, %v9091
        %v9199 = vmax.f32 %v8965, %v9092
        %v9200 = vmax.f32 %v9054, %v9094
        %v9201 = vmax.f32 %v9055, %v9095
        %v9202 = vmax.f32 %v8968, %v9096
        %v9203 = vmax.f32 %v9056, %v9098
        %v9204 = vmax.f32 %v9057, %v9099
        %v9205 = vmax.f32 %v8971, %v9100
        %v9206 = vmax.f32 %v9058, %v9102
        %v9207 = vmax.f32 %v9059, %v9103
        %v9208 = vmax.f32 %v8974, %v9104
        %v9209 = vmax.f32 %v9060, %v9106
        %v9210 = vmax.f32 %v9061, %v9107
        %v9211 = vmax.f32 %v8977, %v9108
        %v9212 = vmax.f32 %v9062, %v9110
        %v9213 = vmax.f32 %v9063, %v9111
        %v9214 = vmax.f32 %v8980, %v9112
        %v9215 = vmax.f32 %v9064, %v9114
        %v9216 = vmax.f32 %v9065, %v9115
        %v9217 = vmax.f32 %v8983, %v9116
        %v9218 = vmax.f32 %v9066, %v9118
        %v9219 = vmax.f32 %v9067, %v9119
        %v9220 = vmax.f32 %v8986, %v9120
        %v9221 = vmax.f32 %v9068, %v9122
        %v9222 = vmax.f32 %v9069, %v9123
        %v9223 = vmax.f32 %v8989, %v9124
        %v9224 = vmax.f32 %v9070, %v9126
        %v9225 = vmax.f32 %v9071, %v9127
        %v9226 = vmax.f32 %v8992, %v9128
        %v9227 = vmax.f32 %v9072, %v9130
        %v9228 = vmax.f32 %v9073, %v9131
        %v9229 = vmax.f32 %v8995, %v9132
        %v9230 = vmax.f32 %v9074, %v9134
        %v9231 = vmax.f32 %v9075, %v9135
        %v9232 = vmax.f32 %v8998, %v9136
        %v9233 = vmax.f32 %v9076, %v9138
        %v9234 = vmax.f32 %v9077, %v9139
        %v9235 = vmax.f32 %v9188, %v359
        %v9236 = vmax.f32 %v9189, %v360
        %v9237 = vmax.f32 %v9191, %v361
        %v9238 = vmax.f32 %v9192, %v362
        %v9239 = vmax.f32 %v9194, %v363
        %v9240 = vmax.f32 %v9195, %v364
        %v9241 = vmax.f32 %v9197, %v365
        %v9242 = vmax.f32 %v9198, %v366
        %v9243 = vmax.f32 %v9200, %v367
        %v9244 = vmax.f32 %v9201, %v368
        %v9245 = vmax.f32 %v9203, %v369
        %v9246 = vmax.f32 %v9204, %v370
        %v9247 = vmax.f32 %v9206, %v371
        %v9248 = vmax.f32 %v9207, %v372
        %v9249 = vmax.f32 %v9209, %v373
        %v9250 = vmax.f32 %v9210, %v374
        %v9251 = vmax.f32 %v9212, %v375
        %v9252 = vmax.f32 %v9213, %v376
        %v9253 = vmax.f32 %v9215, %v377
        %v9254 = vmax.f32 %v9216, %v378
        %v9255 = vmax.f32 %v9218, %v379
        %v9256 = vmax.f32 %v9219, %v380
        %v9257 = vmax.f32 %v9221, %v381
        %v9258 = vmax.f32 %v9222, %v382
        %v9259 = vmax.f32 %v9224, %v383
        %v9260 = vmax.f32 %v9225, %v384
        %v9261 = vmax.f32 %v9227, %v385
        %v9262 = vmax.f32 %v9228, %v386
        %v9263 = vmax.f32 %v9230, %v387
        %v9264 = vmax.f32 %v9231, %v388
        %v9265 = vmax.f32 %v9233, %v389
        %v9266 = vmax.f32 %v9234, %v390
        %v9269 = vrot.slane %v389, 1
        %v9270 = vrot.slane %v390, 1
        %v9271 = vsel %vm1442, %v9269, %v9270
        %v9275 = vmax.f32 %v9187, %v8956
        %v9276 = vmax.f32 %v9235, %v8958
        %v9277 = vmax.f32 %v9236, %v8957
        %v9278 = vmax.f32 %v9190, %v8959
        %v9279 = vmax.f32 %v9237, %v8961
        %v9280 = vmax.f32 %v9238, %v8960
        %v9281 = vmax.f32 %v9193, %v8962
        %v9282 = vmax.f32 %v9239, %v8964
        %v9283 = vmax.f32 %v9240, %v8963
        %v9284 = vmax.f32 %v9196, %v8965
        %v9285 = vmax.f32 %v9241, %v8967
        %v9286 = vmax.f32 %v9242, %v8966
        %v9287 = vmax.f32 %v9199, %v8968
        %v9288 = vmax.f32 %v9243, %v8970
        %v9289 = vmax.f32 %v9244, %v8969
        %v9290 = vmax.f32 %v9202, %v8971
        %v9291 = vmax.f32 %v9245, %v8973
        %v9292 = vmax.f32 %v9246, %v8972
        %v9293 = vmax.f32 %v9205, %v8974
        %v9294 = vmax.f32 %v9247, %v8976
        %v9295 = vmax.f32 %v9248, %v8975
        %v9296 = vmax.f32 %v9208, %v8977
        %v9297 = vmax.f32 %v9249, %v8979
        %v9298 = vmax.f32 %v9250, %v8978
        %v9299 = vmax.f32 %v9211, %v8980
        %v9300 = vmax.f32 %v9251, %v8982
        %v9301 = vmax.f32 %v9252, %v8981
        %v9302 = vmax.f32 %v9214, %v8983
        %v9303 = vmax.f32 %v9253, %v8985
        %v9304 = vmax.f32 %v9254, %v8984
        %v9305 = vmax.f32 %v9217, %v8986
        %v9306 = vmax.f32 %v9255, %v8988
        %v9307 = vmax.f32 %v9256, %v8987
        %v9308 = vmax.f32 %v9220, %v8989
        %v9309 = vmax.f32 %v9257, %v8991
        %v9310 = vmax.f32 %v9258, %v8990
        %v9311 = vmax.f32 %v9223, %v8992
        %v9312 = vmax.f32 %v9259, %v8994
        %v9313 = vmax.f32 %v9260, %v8993
        %v9314 = vmax.f32 %v9226, %v8995
        %v9315 = vmax.f32 %v9261, %v8997
        %v9316 = vmax.f32 %v9262, %v8996
        %v9317 = vmax.f32 %v9229, %v8998
        %v9318 = vmax.f32 %v9263, %v9000
        %v9319 = vmax.f32 %v9264, %v8999
        %v9320 = vmax.f32 %v9232, %v9269
        %v9321 = vmax.f32 %v9265, %v9271
        %v9322 = vmax.f32 %v9266, %v9270
        %v9323 = vrot.slane %v389, 2
        %v9324 = vrot.slane %v390, 2
        %v9325 = vsel %vm4525, %v9323, %v9324
        %v9326 = vsel %vm4525, %v9324, %v9078
        %v9330 = vmax.f32 %v9275, %v9080
        %v9331 = vmax.f32 %v9276, %v9082
        %v9332 = vmax.f32 %v9277, %v9083
        %v9333 = vmax.f32 %v9278, %v9084
        %v9334 = vmax.f32 %v9279, %v9086
        %v9335 = vmax.f32 %v9280, %v9087
        %v9336 = vmax.f32 %v9281, %v9088
        %v9337 = vmax.f32 %v9282, %v9090
        %v9338 = vmax.f32 %v9283, %v9091
        %v9339 = vmax.f32 %v9284, %v9092
        %v9340 = vmax.f32 %v9285, %v9094
        %v9341 = vmax.f32 %v9286, %v9095
        %v9342 = vmax.f32 %v9287, %v9096
        %v9343 = vmax.f32 %v9288, %v9098
        %v9344 = vmax.f32 %v9289, %v9099
        %v9345 = vmax.f32 %v9290, %v9100
        %v9346 = vmax.f32 %v9291, %v9102
        %v9347 = vmax.f32 %v9292, %v9103
        %v9348 = vmax.f32 %v9293, %v9104
        %v9349 = vmax.f32 %v9294, %v9106
        %v9350 = vmax.f32 %v9295, %v9107
        %v9351 = vmax.f32 %v9296, %v9108
        %v9352 = vmax.f32 %v9297, %v9110
        %v9353 = vmax.f32 %v9298, %v9111
        %v9354 = vmax.f32 %v9299, %v9112
        %v9355 = vmax.f32 %v9300, %v9114
        %v9356 = vmax.f32 %v9301, %v9115
        %v9357 = vmax.f32 %v9302, %v9116
        %v9358 = vmax.f32 %v9303, %v9118
        %v9359 = vmax.f32 %v9304, %v9119
        %v9360 = vmax.f32 %v9305, %v9120
        %v9361 = vmax.f32 %v9306, %v9122
        %v9362 = vmax.f32 %v9307, %v9123
        %v9363 = vmax.f32 %v9308, %v9124
        %v9364 = vmax.f32 %v9309, %v9126
        %v9365 = vmax.f32 %v9310, %v9127
        %v9366 = vmax.f32 %v9311, %v9128
        %v9367 = vmax.f32 %v9312, %v9130
        %v9368 = vmax.f32 %v9313, %v9131
        %v9369 = vmax.f32 %v9314, %v9132
        %v9370 = vmax.f32 %v9315, %v9134
        %v9371 = vmax.f32 %v9316, %v9135
        %v9372 = vmax.f32 %v9317, %v9136
        %v9373 = vmax.f32 %v9318, %v9138
        %v9374 = vmax.f32 %v9319, %v9139
        %v9375 = vmax.f32 %v9320, %v9323
        %v9376 = vmax.f32 %v9321, %v9325
        %v9377 = vmax.f32 %v9322, %v9326
        %v9378 = vmax.f32 %v9331, %v361
        %v9379 = vmax.f32 %v9332, %v362
        %v9380 = vmax.f32 %v9334, %v363
        %v9381 = vmax.f32 %v9335, %v364
        %v9382 = vmax.f32 %v9337, %v365
        %v9383 = vmax.f32 %v9338, %v366
        %v9384 = vmax.f32 %v9340, %v367
        %v9385 = vmax.f32 %v9341, %v368
        %v9386 = vmax.f32 %v9343, %v369
        %v9387 = vmax.f32 %v9344, %v370
        %v9388 = vmax.f32 %v9346, %v371
        %v9389 = vmax.f32 %v9347, %v372
        %v9390 = vmax.f32 %v9349, %v373
        %v9391 = vmax.f32 %v9350, %v374
        %v9392 = vmax.f32 %v9352, %v375
        %v9393 = vmax.f32 %v9353, %v376
        %v9394 = vmax.f32 %v9355, %v377
        %v9395 = vmax.f32 %v9356, %v378
        %v9396 = vmax.f32 %v9358, %v379
        %v9397 = vmax.f32 %v9359, %v380
        %v9398 = vmax.f32 %v9361, %v381
        %v9399 = vmax.f32 %v9362, %v382
        %v9400 = vmax.f32 %v9364, %v383
        %v9401 = vmax.f32 %v9365, %v384
        %v9402 = vmax.f32 %v9367, %v385
        %v9403 = vmax.f32 %v9368, %v386
        %v9404 = vmax.f32 %v9370, %v387
        %v9405 = vmax.f32 %v9371, %v388
        %v9406 = vmax.f32 %v9373, %v389
        %v9407 = vmax.f32 %v9374, %v390
        %v9408 = vmax.f32 %v9330, %v8959
        %v9409 = vmax.f32 %v9378, %v8961
        %v9410 = vmax.f32 %v9379, %v8960
        %v9411 = vmax.f32 %v9333, %v8962
        %v9412 = vmax.f32 %v9380, %v8964
        %v9413 = vmax.f32 %v9381, %v8963
        %v9414 = vmax.f32 %v9336, %v8965
        %v9415 = vmax.f32 %v9382, %v8967
        %v9416 = vmax.f32 %v9383, %v8966
        %v9417 = vmax.f32 %v9339, %v8968
        %v9418 = vmax.f32 %v9384, %v8970
        %v9419 = vmax.f32 %v9385, %v8969
        %v9420 = vmax.f32 %v9342, %v8971
        %v9421 = vmax.f32 %v9386, %v8973
        %v9422 = vmax.f32 %v9387, %v8972
        %v9423 = vmax.f32 %v9345, %v8974
        %v9424 = vmax.f32 %v9388, %v8976
        %v9425 = vmax.f32 %v9389, %v8975
        %v9426 = vmax.f32 %v9348, %v8977
        %v9427 = vmax.f32 %v9390, %v8979
        %v9428 = vmax.f32 %v9391, %v8978
        %v9429 = vmax.f32 %v9351, %v8980
        %v9430 = vmax.f32 %v9392, %v8982
        %v9431 = vmax.f32 %v9393, %v8981
        %v9432 = vmax.f32 %v9354, %v8983
        %v9433 = vmax.f32 %v9394, %v8985
        %v9434 = vmax.f32 %v9395, %v8984
        %v9435 = vmax.f32 %v9357, %v8986
        %v9436 = vmax.f32 %v9396, %v8988
        %v9437 = vmax.f32 %v9397, %v8987
        %v9438 = vmax.f32 %v9360, %v8989
        %v9439 = vmax.f32 %v9398, %v8991
        %v9440 = vmax.f32 %v9399, %v8990
        %v9441 = vmax.f32 %v9363, %v8992
        %v9442 = vmax.f32 %v9400, %v8994
        %v9443 = vmax.f32 %v9401, %v8993
        %v9444 = vmax.f32 %v9366, %v8995
        %v9445 = vmax.f32 %v9402, %v8997
        %v9446 = vmax.f32 %v9403, %v8996
        %v9447 = vmax.f32 %v9369, %v8998
        %v9448 = vmax.f32 %v9404, %v9000
        %v9449 = vmax.f32 %v9405, %v8999
        %v9450 = vmax.f32 %v9372, %v9269
        %v9451 = vmax.f32 %v9406, %v9271
        %v9452 = vmax.f32 %v9407, %v9270
        %v9453 = vmax.f32 %v9375, %v8954
        %v9454 = vmax.f32 %v9376, %v8955
        %v9455 = vmax.f32 %v9377, %v8954
        %v9456 = vmax.f32 %v9408, %v9084
        %v9457 = vmax.f32 %v9409, %v9086
        %v9458 = vmax.f32 %v9410, %v9087
        %v9459 = vmax.f32 %v9411, %v9088
        %v9460 = vmax.f32 %v9412, %v9090
        %v9461 = vmax.f32 %v9413, %v9091
        %v9462 = vmax.f32 %v9414, %v9092
        %v9463 = vmax.f32 %v9415, %v9094
        %v9464 = vmax.f32 %v9416, %v9095
        %v9465 = vmax.f32 %v9417, %v9096
        %v9466 = vmax.f32 %v9418, %v9098
        %v9467 = vmax.f32 %v9419, %v9099
        %v9468 = vmax.f32 %v9420, %v9100
        %v9469 = vmax.f32 %v9421, %v9102
        %v9470 = vmax.f32 %v9422, %v9103
        %v9471 = vmax.f32 %v9423, %v9104
        %v9472 = vmax.f32 %v9424, %v9106
        %v9473 = vmax.f32 %v9425, %v9107
        %v9474 = vmax.f32 %v9426, %v9108
        %v9475 = vmax.f32 %v9427, %v9110
        %v9476 = vmax.f32 %v9428, %v9111
        %v9477 = vmax.f32 %v9429, %v9112
        %v9478 = vmax.f32 %v9430, %v9114
        %v9479 = vmax.f32 %v9431, %v9115
        %v9480 = vmax.f32 %v9432, %v9116
        %v9481 = vmax.f32 %v9433, %v9118
        %v9482 = vmax.f32 %v9434, %v9119
        %v9483 = vmax.f32 %v9435, %v9120
        %v9484 = vmax.f32 %v9436, %v9122
        %v9485 = vmax.f32 %v9437, %v9123
        %v9486 = vmax.f32 %v9438, %v9124
        %v9487 = vmax.f32 %v9439, %v9126
        %v9488 = vmax.f32 %v9440, %v9127
        %v9489 = vmax.f32 %v9441, %v9128
        %v9490 = vmax.f32 %v9442, %v9130
        %v9491 = vmax.f32 %v9443, %v9131
        %v9492 = vmax.f32 %v9444, %v9132
        %v9493 = vmax.f32 %v9445, %v9134
        %v9494 = vmax.f32 %v9446, %v9135
        %v9495 = vmax.f32 %v9447, %v9136
        %v9496 = vmax.f32 %v9448, %v9138
        %v9497 = vmax.f32 %v9449, %v9139
        %v9498 = vmax.f32 %v9450, %v9323
        %v9499 = vmax.f32 %v9451, %v9325
        %v9500 = vmax.f32 %v9452, %v9326
        %v9501 = vmax.f32 %v9453, %v9078
        %v9502 = vmax.f32 %v9454, %v9079
        %v9503 = vmax.f32 %v9455, %v9079
        %v9552 = vrot.slane %v9456, 7
        %v9553 = vrot.slane %v9457, 7
        %v9554 = vsel %vm693, %v9552, %v9553
        %v9555 = vrot.slane %v9458, 7
        %v9556 = vsel %vm693, %v9553, %v9555
        %v9557 = vrot.slane %v9459, 7
        %v9558 = vrot.slane %v9460, 7
        %v9559 = vsel %vm693, %v9557, %v9558
        %v9560 = vrot.slane %v9461, 7
        %v9561 = vsel %vm693, %v9558, %v9560
        %v9562 = vrot.slane %v9462, 7
        %v9563 = vrot.slane %v9463, 7
        %v9564 = vsel %vm693, %v9562, %v9563
        %v9565 = vrot.slane %v9464, 7
        %v9566 = vsel %vm693, %v9563, %v9565
        %v9567 = vrot.slane %v9465, 7
        %v9568 = vrot.slane %v9466, 7
        %v9569 = vsel %vm693, %v9567, %v9568
        %v9570 = vrot.slane %v9467, 7
        %v9571 = vsel %vm693, %v9568, %v9570
        %v9572 = vrot.slane %v9468, 7
        %v9573 = vrot.slane %v9469, 7
        %v9574 = vsel %vm693, %v9572, %v9573
        %v9575 = vrot.slane %v9470, 7
        %v9576 = vsel %vm693, %v9573, %v9575
        %v9577 = vrot.slane %v9471, 7
        %v9578 = vrot.slane %v9472, 7
        %v9579 = vsel %vm693, %v9577, %v9578
        %v9580 = vrot.slane %v9473, 7
        %v9581 = vsel %vm693, %v9578, %v9580
        %v9582 = vrot.slane %v9474, 7
        %v9583 = vrot.slane %v9475, 7
        %v9584 = vsel %vm693, %v9582, %v9583
        %v9585 = vrot.slane %v9476, 7
        %v9586 = vsel %vm693, %v9583, %v9585
        %v9587 = vrot.slane %v9477, 7
        %v9588 = vrot.slane %v9478, 7
        %v9589 = vsel %vm693, %v9587, %v9588
        %v9590 = vrot.slane %v9479, 7
        %v9591 = vsel %vm693, %v9588, %v9590
        %v9592 = vrot.slane %v9480, 7
        %v9593 = vrot.slane %v9481, 7
        %v9594 = vsel %vm693, %v9592, %v9593
        %v9595 = vrot.slane %v9482, 7
        %v9596 = vsel %vm693, %v9593, %v9595
        %v9597 = vrot.slane %v9483, 7
        %v9598 = vrot.slane %v9484, 7
        %v9599 = vsel %vm693, %v9597, %v9598
        %v9600 = vrot.slane %v9485, 7
        %v9601 = vsel %vm693, %v9598, %v9600
        %v9602 = vrot.slane %v9486, 7
        %v9603 = vrot.slane %v9487, 7
        %v9604 = vsel %vm693, %v9602, %v9603
        %v9605 = vrot.slane %v9488, 7
        %v9606 = vsel %vm693, %v9603, %v9605
        %v9607 = vrot.slane %v9489, 7
        %v9608 = vrot.slane %v9490, 7
        %v9609 = vsel %vm693, %v9607, %v9608
        %v9610 = vrot.slane %v9491, 7
        %v9611 = vsel %vm693, %v9608, %v9610
        %v9612 = vrot.slane %v9492, 7
        %v9613 = vrot.slane %v9493, 7
        %v9614 = vsel %vm693, %v9612, %v9613
        %v9615 = vrot.slane %v9494, 7
        %v9616 = vsel %vm693, %v9613, %v9615
        %v9617 = vrot.slane %v9495, 7
        %v9618 = vrot.slane %v9496, 7
        %v9619 = vsel %vm693, %v9617, %v9618
        %v9620 = vrot.slane %v9497, 7
        %v9621 = vsel %vm693, %v9618, %v9620
        %v9622 = vrot.slane %v9498, 7
        %v9623 = vrot.slane %v9499, 7
        %v9624 = vsel %vm693, %v9622, %v9623
        %v9625 = vrot.slane %v9500, 7
        %v9626 = vsel %vm693, %v9623, %v9625
        %v9627 = vrot.slane %v9501, 7
        %v9628 = vrot.slane %v9502, 7
        %v9629 = vsel %vm693, %v9627, %v9628
        %v9630 = vrot.slane %v9503, 7
        %v9631 = vsel %vm693, %v9628, %v9630
        %v9664 = vld [vmem:[%s8] sm:$0x3]
        %v9665 = vpack.c.bf16 %v9556, %v9554
        %v9666 = vpack.c.bf16 %v9561, %v9559
        %v9667 = vpack.c.bf16 %v9566, %v9564
        %v9668 = vpack.c.bf16 %v9571, %v9569
        %v9669 = vpack.c.bf16 %v9576, %v9574
        %v9670 = vpack.c.bf16 %v9581, %v9579
        %v9671 = vpack.c.bf16 %v9586, %v9584
        %v9672 = vpack.c.bf16 %v9591, %v9589
        %v9673 = vpack.c.bf16 %v9596, %v9594
        %v9674 = vpack.c.bf16 %v9601, %v9599
        %v9675 = vpack.c.bf16 %v9606, %v9604
        %v9676 = vpack.c.bf16 %v9611, %v9609
        %v9677 = vpack.c.bf16 %v9616, %v9614
        %v9678 = vpack.c.bf16 %v9621, %v9619
        %v9679 = vpack.c.bf16 %v9626, %v9624
        %v9680 = vpack.c.bf16 %v9631, %v9629
        %v9682 = vsel %vm416, %v9665, 0
        %v9685 = vsel %vm416, %v9666, 0
        %v9688 = vsel %vm416, %v9667, 0
        %v9691 = vsel %vm416, %v9668, 0
        %v9694 = vsel %vm416, %v9669, 0
        %v9697 = vsel %vm416, %v9670, 0
        %v9700 = vsel %vm416, %v9671, 0
        %v9703 = vsel %vm416, %v9672, 0
        %v9706 = vsel %vm416, %v9673, 0
        %v9709 = vsel %vm416, %v9674, 0
        %v9712 = vsel %vm416, %v9675, 0
        %v9715 = vsel %vm416, %v9676, 0
        %v9718 = vsel %vm416, %v9677, 0
        %v9721 = vsel %vm416, %v9678, 0
        %v9724 = vsel %vm416, %v9679, 0
        %v9727 = vsel %vm416, %v9680, 0
        %v9730 = vsel %vm465, %v9664, 0
        %9732 = vmatprep.subr.bf16.mxu0 0
        %9733 = vmatpush1.bf16.msra.mxu0 %v9730
        %9734 = vmatprep.subr.bf16.mxu0 0
        %9735 = vmatpush1.bf16.msra.mxu0 0
        %9736 = vmatprep.subr.bf16.mxu0 0
        %9737 = vmatpush1.bf16.msra.mxu0 0
        %9738 = vmatprep.subr.bf16.mxu0 0
        %9739 = vmatpush1.bf16.msra.mxu0 0
        %9740 = vmatprep.subr.bf16.mxu0 0
        %9741 = vmatpush1.bf16.msra.mxu0 0
        %9742 = vmatprep.subr.bf16.mxu0 0
        %9743 = vmatpush1.bf16.msra.mxu0 0
        %9744 = vmatprep.subr.bf16.mxu0 0
        %9745 = vmatpush1.bf16.msra.mxu0 0
        %9746 = vmatprep.subr.bf16.mxu0 0
        %9747 = vmatpush1.bf16.msra.mxu0 0
        %9748 = vmatprep.subr.bf16.mxu0 0
        %9749 = vmatpush1.bf16.msra.mxu0 0
        %9750 = vmatprep.subr.bf16.mxu0 0
        %9751 = vmatpush1.bf16.msra.mxu0 0
        %9752 = vmatprep.subr.bf16.mxu0 0
        %9753 = vmatpush1.bf16.msra.mxu0 0
        %9754 = vmatprep.subr.bf16.mxu0 0
        %9755 = vmatpush1.bf16.msra.mxu0 0
        %9756 = vmatprep.subr.bf16.mxu0 0
        %9757 = vmatpush1.bf16.msra.mxu0 0
        %9758 = vmatprep.subr.bf16.mxu0 0
        %9759 = vmatpush1.bf16.msra.mxu0 0
        %9760 = vmatprep.subr.bf16.mxu0 0
        %9761 = vmatpush1.bf16.msra.mxu0 0
        %9762 = vmatprep.subr.bf16.mxu0 0
        %9763 = vmatpush1.bf16.msra.mxu0 0
        %9764 = vmatprep.mubr.bf16.mxu0 0
        %9765 = vmatmul.mubr.bf16.gmra.mrb[0].mxu0 %v9682
        %v9766 = vpop.f32.mrb[0].mxu0
        %v9767 = vadd.f32 0.0, %v9766
        %v9768 = vpop.f32.mrb[0].mxu0
        %v9769 = vpop.f32.mrb[0].mxu0
        %v9770 = vadd.f32 0.0, %v9769
        %v9771 = vpop.f32.mrb[0].mxu0
        %9772 = vmatprep.mubr.bf16.mxu0 0
        %9773 = vmatmul.mubr.bf16.gmra.mrb[0].mxu0 %v9685
        %v9774 = vpop.f32.mrb[0].mxu0
        %v9775 = vadd.f32 0.0, %v9774
        %v9776 = vpop.f32.mrb[0].mxu0
        %v9777 = vpop.f32.mrb[0].mxu0
        %v9778 = vadd.f32 0.0, %v9777
        %v9779 = vpop.f32.mrb[0].mxu0
        %9780 = vmatprep.mubr.bf16.mxu0 0
        %9781 = vmatmul.mubr.bf16.gmra.mrb[0].mxu0 %v9688
        %v9782 = vpop.f32.mrb[0].mxu0
        %v9783 = vadd.f32 0.0, %v9782
        %v9784 = vpop.f32.mrb[0].mxu0
        %v9785 = vpop.f32.mrb[0].mxu0
        %v9786 = vadd.f32 0.0, %v9785
        %v9787 = vpop.f32.mrb[0].mxu0
        %9788 = vmatprep.mubr.bf16.mxu0 0
        %9789 = vmatmul.mubr.bf16.gmra.mrb[0].mxu0 %v9691
        %v9790 = vpop.f32.mrb[0].mxu0
        %v9791 = vadd.f32 0.0, %v9790
        %v9792 = vpop.f32.mrb[0].mxu0
        %v9793 = vpop.f32.mrb[0].mxu0
        %v9794 = vadd.f32 0.0, %v9793
        %v9795 = vpop.f32.mrb[0].mxu0
        %9796 = vmatprep.mubr.bf16.mxu0 0
        %9797 = vmatmul.mubr.bf16.gmra.mrb[0].mxu0 %v9694
        %v9798 = vpop.f32.mrb[0].mxu0
        %v9799 = vadd.f32 0.0, %v9798
        %v9800 = vpop.f32.mrb[0].mxu0
        %v9801 = vpop.f32.mrb[0].mxu0
        %v9802 = vadd.f32 0.0, %v9801
        %v9803 = vpop.f32.mrb[0].mxu0
        %9804 = vmatprep.mubr.bf16.mxu0 0
        %9805 = vmatmul.mubr.bf16.gmra.mrb[0].mxu0 %v9697
        %v9806 = vpop.f32.mrb[0].mxu0
        %v9807 = vadd.f32 0.0, %v9806
        %v9808 = vpop.f32.mrb[0].mxu0
        %v9809 = vpop.f32.mrb[0].mxu0
        %v9810 = vadd.f32 0.0, %v9809
        %v9811 = vpop.f32.mrb[0].mxu0
        %9812 = vmatprep.mubr.bf16.mxu0 0
        %9813 = vmatmul.mubr.bf16.gmra.mrb[0].mxu0 %v9700
        %v9814 = vpop.f32.mrb[0].mxu0
        %v9815 = vadd.f32 0.0, %v9814
        %v9816 = vpop.f32.mrb[0].mxu0
        %v9817 = vpop.f32.mrb[0].mxu0
        %v9818 = vadd.f32 0.0, %v9817
        %v9819 = vpop.f32.mrb[0].mxu0
        %9820 = vmatprep.mubr.bf16.mxu0 0
        %9821 = vmatmul.mubr.bf16.gmra.mrb[0].mxu0 %v9703
        %v9822 = vpop.f32.mrb[0].mxu0
        %v9823 = vadd.f32 0.0, %v9822
        %v9824 = vpop.f32.mrb[0].mxu0
        %v9825 = vpop.f32.mrb[0].mxu0
        %v9826 = vadd.f32 0.0, %v9825
        %v9827 = vpop.f32.mrb[0].mxu0
        %9828 = vmatprep.mubr.bf16.mxu0 0
        %9829 = vmatmul.mubr.bf16.gmra.mrb[0].mxu0 %v9706
        %v9830 = vpop.f32.mrb[0].mxu0
        %v9831 = vadd.f32 0.0, %v9830
        %v9832 = vpop.f32.mrb[0].mxu0
        %v9833 = vpop.f32.mrb[0].mxu0
        %v9834 = vadd.f32 0.0, %v9833
        %v9835 = vpop.f32.mrb[0].mxu0
        %9836 = vmatprep.mubr.bf16.mxu0 0
        %9837 = vmatmul.mubr.bf16.gmra.mrb[0].mxu0 %v9709
        %v9838 = vpop.f32.mrb[0].mxu0
        %v9839 = vadd.f32 0.0, %v9838
        %v9840 = vpop.f32.mrb[0].mxu0
        %v9841 = vpop.f32.mrb[0].mxu0
        %v9842 = vadd.f32 0.0, %v9841
        %v9843 = vpop.f32.mrb[0].mxu0
        %9844 = vmatprep.mubr.bf16.mxu0 0
        %9845 = vmatmul.mubr.bf16.gmra.mrb[0].mxu0 %v9712
        %v9846 = vpop.f32.mrb[0].mxu0
        %v9847 = vadd.f32 0.0, %v9846
        %v9848 = vpop.f32.mrb[0].mxu0
        %v9849 = vpop.f32.mrb[0].mxu0
        %v9850 = vadd.f32 0.0, %v9849
        %v9851 = vpop.f32.mrb[0].mxu0
        %9852 = vmatprep.mubr.bf16.mxu0 0
        %9853 = vmatmul.mubr.bf16.gmra.mrb[0].mxu0 %v9715
        %v9854 = vpop.f32.mrb[0].mxu0
        %v9855 = vadd.f32 0.0, %v9854
        %v9856 = vpop.f32.mrb[0].mxu0
        %v9857 = vpop.f32.mrb[0].mxu0
        %v9858 = vadd.f32 0.0, %v9857
        %v9859 = vpop.f32.mrb[0].mxu0
        %9860 = vmatprep.mubr.bf16.mxu0 0
        %9861 = vmatmul.mubr.bf16.gmra.mrb[0].mxu0 %v9718
        %v9862 = vpop.f32.mrb[0].mxu0
        %v9863 = vadd.f32 0.0, %v9862
        %v9864 = vpop.f32.mrb[0].mxu0
        %v9865 = vpop.f32.mrb[0].mxu0
        %v9866 = vadd.f32 0.0, %v9865
        %v9867 = vpop.f32.mrb[0].mxu0
        %9868 = vmatprep.mubr.bf16.mxu0 0
        %9869 = vmatmul.mubr.bf16.gmra.mrb[0].mxu0 %v9721
        %v9870 = vpop.f32.mrb[0].mxu0
        %v9871 = vadd.f32 0.0, %v9870
        %v9872 = vpop.f32.mrb[0].mxu0
        %v9873 = vpop.f32.mrb[0].mxu0
        %v9874 = vadd.f32 0.0, %v9873
        %v9875 = vpop.f32.mrb[0].mxu0
        %9876 = vmatprep.mubr.bf16.mxu0 0
        %9877 = vmatmul.mubr.bf16.gmra.mrb[0].mxu0 %v9724
        %v9878 = vpop.f32.mrb[0].mxu0
        %v9879 = vadd.f32 0.0, %v9878
        %v9880 = vpop.f32.mrb[0].mxu0
        %v9881 = vpop.f32.mrb[0].mxu0
        %v9882 = vadd.f32 0.0, %v9881
        %v9883 = vpop.f32.mrb[0].mxu0
        %9884 = vmatprep.mubr.bf16.mxu0 0
        %9885 = vmatmul.mubr.bf16.gmra.mrb[0].mxu0 %v9727
        %v9886 = vpop.f32.mrb[0].mxu0
        %v9887 = vadd.f32 0.0, %v9886
        %v9888 = vpop.f32.mrb[0].mxu0
        %v9889 = vpop.f32.mrb[0].mxu0
        %v9890 = vadd.f32 0.0, %v9889
        %v9891 = vpop.f32.mrb[0].mxu0
        %9892 = vdwg.mxu0
        %v9893 = vadd.f32 %v8891, %v9767
        %v9894 = vadd.f32 %v8892, %v9770
        %v9895 = vadd.f32 %v8893, %v9775
        %v9896 = vadd.f32 %v8894, %v9778
        %v9897 = vadd.f32 %v8895, %v9783
        %v9898 = vadd.f32 %v8896, %v9786
        %v9899 = vadd.f32 %v8897, %v9791
        %v9900 = vadd.f32 %v8898, %v9794
        %v9901 = vadd.f32 %v8899, %v9799
        %v9902 = vadd.f32 %v8900, %v9802
        %v9903 = vadd.f32 %v8901, %v9807
        %v9904 = vadd.f32 %v8902, %v9810
        %v9905 = vadd.f32 %v8903, %v9815
        %v9906 = vadd.f32 %v8904, %v9818
        %v9907 = vadd.f32 %v8905, %v9823
        %v9908 = vadd.f32 %v8906, %v9826
        %v9909 = vadd.f32 %v8907, %v9831
        %v9910 = vadd.f32 %v8908, %v9834
        %v9911 = vadd.f32 %v8909, %v9839
        %v9912 = vadd.f32 %v8910, %v9842
        %v9913 = vadd.f32 %v8911, %v9847
        %v9914 = vadd.f32 %v8912, %v9850
        %v9915 = vadd.f32 %v8913, %v9855
        %v9916 = vadd.f32 %v8914, %v9858
        %v9917 = vadd.f32 %v8915, %v9863
        %v9918 = vadd.f32 %v8916, %v9866
        %v9919 = vadd.f32 %v8917, %v9871
        %v9920 = vadd.f32 %v8918, %v9874
        %v9921 = vadd.f32 %v8919, %v9879
        %v9922 = vadd.f32 %v8920, %v9882
        %v9923 = vadd.f32 %v8921, %v9887
        %v9924 = vadd.f32 %v8922, %v9890
        %v9925 = vld [vmem:[%s9] sm:$0x1]
        %v9927 = vlaneseq
        %v9928 = vshrl.u32 %v9927, 7
        %v9929 = vsub.s32 0, %v9928
        %v9930 = vrot.slane %v9925, %v9929
        %v9932 = vadd.f32 %v9893, %v9930
        %v9933 = vadd.f32 %v9894, %v9930
        %v9934 = vadd.f32 %v9895, %v9930
        %v9935 = vadd.f32 %v9896, %v9930
        %v9936 = vadd.f32 %v9897, %v9930
        %v9937 = vadd.f32 %v9898, %v9930
        %v9938 = vadd.f32 %v9899, %v9930
        %v9939 = vadd.f32 %v9900, %v9930
        %v9940 = vadd.f32 %v9901, %v9930
        %v9941 = vadd.f32 %v9902, %v9930
        %v9942 = vadd.f32 %v9903, %v9930
        %v9943 = vadd.f32 %v9904, %v9930
        %v9944 = vadd.f32 %v9905, %v9930
        %v9945 = vadd.f32 %v9906, %v9930
        %v9946 = vadd.f32 %v9907, %v9930
        %v9947 = vadd.f32 %v9908, %v9930
        %v9948 = vadd.f32 %v9909, %v9930
        %v9949 = vadd.f32 %v9910, %v9930
        %v9950 = vadd.f32 %v9911, %v9930
        %v9951 = vadd.f32 %v9912, %v9930
        %v9952 = vadd.f32 %v9913, %v9930
        %v9953 = vadd.f32 %v9914, %v9930
        %v9954 = vadd.f32 %v9915, %v9930
        %v9955 = vadd.f32 %v9916, %v9930
        %v9956 = vadd.f32 %v9917, %v9930
        %v9957 = vadd.f32 %v9918, %v9930
        %v9958 = vadd.f32 %v9919, %v9930
        %v9959 = vadd.f32 %v9920, %v9930
        %v9960 = vadd.f32 %v9921, %v9930
        %v9961 = vadd.f32 %v9922, %v9930
        %v9962 = vadd.f32 %v9923, %v9930
        %v9963 = vadd.f32 %v9924, %v9930
        %v9964 = vmax.f32 %v9932, 0.0
        %v9965 = vmax.f32 %v9933, 0.0
        %v9966 = vmax.f32 %v9934, 0.0
        %v9967 = vmax.f32 %v9935, 0.0
        %v9968 = vmax.f32 %v9936, 0.0
        %v9969 = vmax.f32 %v9937, 0.0
        %v9970 = vmax.f32 %v9938, 0.0
        %v9971 = vmax.f32 %v9939, 0.0
        %v9972 = vmax.f32 %v9940, 0.0
        %v9973 = vmax.f32 %v9941, 0.0
        %v9974 = vmax.f32 %v9942, 0.0
        %v9975 = vmax.f32 %v9943, 0.0
        %v9976 = vmax.f32 %v9944, 0.0
        %v9977 = vmax.f32 %v9945, 0.0
        %v9978 = vmax.f32 %v9946, 0.0
        %v9979 = vmax.f32 %v9947, 0.0
        %v9980 = vmax.f32 %v9948, 0.0
        %v9981 = vmax.f32 %v9949, 0.0
        %v9982 = vmax.f32 %v9950, 0.0
        %v9983 = vmax.f32 %v9951, 0.0
        %v9984 = vmax.f32 %v9952, 0.0
        %v9985 = vmax.f32 %v9953, 0.0
        %v9986 = vmax.f32 %v9954, 0.0
        %v9987 = vmax.f32 %v9955, 0.0
        %v9988 = vmax.f32 %v9956, 0.0
        %v9989 = vmax.f32 %v9957, 0.0
        %v9990 = vmax.f32 %v9958, 0.0
        %v9991 = vmax.f32 %v9959, 0.0
        %v9992 = vmax.f32 %v9960, 0.0
        %v9993 = vmax.f32 %v9961, 0.0
        %v9994 = vmax.f32 %v9962, 0.0
        %v9995 = vmax.f32 %v9963, 0.0
        %vm9996 = vcmask 162816
        %9997 = vst.msk [vmem:[%s352] sm:$0xff] %vm9996, %v9964
        %9998 = vst.msk [vmem:[%s352 + $0x8] sm:$0xff] %vm9996, %v9965
        %9999 = vst.msk [vmem:[%s352 + $0x10] sm:$0xff] %vm9996, %v9966
        %10000 = vst.msk [vmem:[%s352 + $0x18] sm:$0xff] %vm9996, %v9967
        %10001 = vst.msk [vmem:[%s352 + $0x20] sm:$0xff] %vm9996, %v9968
        %10002 = vst.msk [vmem:[%s352 + $0x28] sm:$0xff] %vm9996, %v9969
        %10003 = vst.msk [vmem:[%s352 + $0x30] sm:$0xff] %vm9996, %v9970
        %10004 = vst.msk [vmem:[%s352 + $0x38] sm:$0xff] %vm9996, %v9971
        %10005 = vst.msk [vmem:[%s352 + $0x40] sm:$0xff] %vm9996, %v9972
        %10006 = vst.msk [vmem:[%s352 + $0x48] sm:$0xff] %vm9996, %v9973
        %10007 = vst.msk [vmem:[%s352 + $0x50] sm:$0xff] %vm9996, %v9974
        %10008 = vst.msk [vmem:[%s352 + $0x58] sm:$0xff] %vm9996, %v9975
        %10009 = vst.msk [vmem:[%s352 + $0x60] sm:$0xff] %vm9996, %v9976
        %10010 = vst.msk [vmem:[%s352 + $0x68] sm:$0xff] %vm9996, %v9977
        %10011 = vst.msk [vmem:[%s352 + $0x70] sm:$0xff] %vm9996, %v9978
        %10012 = vst.msk [vmem:[%s352 + $0x78] sm:$0xff] %vm9996, %v9979
        %10013 = vst.msk [vmem:[%s352 + $0x80] sm:$0xff] %vm9996, %v9980
        %10014 = vst.msk [vmem:[%s352 + $0x88] sm:$0xff] %vm9996, %v9981
        %10015 = vst.msk [vmem:[%s352 + $0x90] sm:$0xff] %vm9996, %v9982
        %10016 = vst.msk [vmem:[%s352 + $0x98] sm:$0xff] %vm9996, %v9983
        %10017 = vst.msk [vmem:[%s352 + $0xa0] sm:$0xff] %vm9996, %v9984
        %10018 = vst.msk [vmem:[%s352 + $0xa8] sm:$0xff] %vm9996, %v9985
        %10019 = vst.msk [vmem:[%s352 + $0xb0] sm:$0xff] %vm9996, %v9986
        %10020 = vst.msk [vmem:[%s352 + $0xb8] sm:$0xff] %vm9996, %v9987
        %10021 = vst.msk [vmem:[%s352 + $0xc0] sm:$0xff] %vm9996, %v9988
        %10022 = vst.msk [vmem:[%s352 + $0xc8] sm:$0xff] %vm9996, %v9989
        %10023 = vst.msk [vmem:[%s352 + $0xd0] sm:$0xff] %vm9996, %v9990
        %10024 = vst.msk [vmem:[%s352 + $0xd8] sm:$0xff] %vm9996, %v9991
        %10025 = vst.msk [vmem:[%s352 + $0xe0] sm:$0xff] %vm9996, %v9992
        %10026 = vst.msk [vmem:[%s352 + $0xe8] sm:$0xff] %vm9996, %v9993
        %10027 = vst.msk [vmem:[%s352 + $0xf0] sm:$0xff] %vm9996, %v9994
        %10028 = vst.msk [vmem:[%s352 + $0xf8] sm:$0xff] %vm9996, %v9995
        %s10029 = sand.u32 %s247, 1
        %s10030 = scalar_lea.sflag [#allocation3], %s10029
        %s10031 = sand.u32 %s247, 1
        %s10032 = smul.addr %s10031, 256
        %s10033 = scalar_lea.vmem [#allocation2], %s10032
        // Predicated region
        $region61: #{inception_forward.1} parent=59 // pred_check
          %p10034 = pneg %p257
        $region62: #{inception_forward.1} parent=59 // pred_check_branch
          %10036 = sbr.rel (%p10034) target = $region64
        $region63: #{inception_forward.1} parent=59 // pred_region
          %s10038 = ssub.s32 4096, 4096
          %10039 = vsyncadd %s10030, %s10038
          %s10040 = smul.addr %s24, 32
          %s10041 = smul.addr %s10040, 128
          %s10042 = scalar_lea.hbm %s10, %s10041
          %s10043 = sshll.u32 %s10033, 4
          %s10044 = int_to_ptr.vmem [resolvable:$true] %s10043
          %10049 = dma.vmem_to_hbm [thread:$0]  %s10044, 4096, %s10042, %s10030, 128, 128, 8
        $region64: #{inception_forward.1} parent=59 // pred_fallthru
          _
      $region60: #{inception_forward.1} parent=5 // pred_fallthru
        _
      %p10050 = scmp.le.s32.totalorder 2, %s19
      // Predicated region
      $region65: #{inception_forward.1} parent=5 // pred_check
        %p10051 = pneg %p10050
      $region66: #{inception_forward.1} parent=5 // pred_check_branch
        %10053 = sbr.rel (%p10051) target = $region68
      $region67: #{inception_forward.1} parent=5 // pred_region
        %s10054 = ssub.s32 %s19, 2
        // Predicated region
        $region69: #{inception_forward.1} parent=67 // pred_check
          %p10055 = pneg %p263
        $region70: #{inception_forward.1} parent=67 // pred_check_branch
          %10057 = sbr.rel (%p10055) target = $region72
        $region71: #{inception_forward.1} parent=67 // pred_region
          %s10058 = sand.u32 %s248, 1
          %s10059 = scalar_lea.sflag [#allocation3], %s10058
          %s10060 = sand.u32 %s248, 1
          %s10061 = smul.addr %s10060, 256
          %s10062 = scalar_lea.vmem [#allocation2], %s10061
          %10063 = dma.done %s10059, 4096
        $region72: #{inception_forward.1} parent=67 // pred_fallthru
          _
      $region68: #{inception_forward.1} parent=5 // pred_fallthru
        _
    $region6: #{inception_forward.1} parent=1 // loop_footer
      %s23 = sadd.s32 1, %s19
    $region7: #{inception_forward.1} parent=1 // loop_footer_branch
      %18 = sbr.rel target = $region3
    $region8: #{inception_forward.1} parent=1 // loop_exit
      _
    %10064 = vsyncpa [#allocation3], 1
    %s10065 = scalar_lea.sflag [#allocation3], 1
    %10066 = vsyncpa %s10065, 1

</llo_original>
